<compile_context>
chip_gen: v7x
topology: tpu7x:2x2x1
jax: 0.10.0
libtpu: 0.0.40
codegen_flags: <defaults>
</compile_context>

<pallas_src>
import functools

import jax
import jax.numpy as jnp
from jax.experimental import pallas as pl
from jax.experimental.pallas import tpu as pltpu


def _round_up(x, m):
    return ((x + m - 1) // m) * m


@functools.lru_cache(maxsize=None)
def _tpu_cfg():
    """Generation-gated tiling / VMEM budget (v7x: 64 MiB VMEM, v5e/v6e: 128 MiB)."""
    vmem = 128 * 1024 * 1024
    try:
        info = pltpu.get_tpu_info()
        vmem = int(getattr(info, "vmem_capacity_bytes", vmem))
    except Exception:
        pass
    if vmem <= 64 * 1024 * 1024:          # v7x-class: small VMEM, stay conservative
        return dict(tm=256, tn=256, tk=512, vmem_limit=32 * 1024 * 1024)
    return dict(tm=512, tn=512, tk=768, vmem_limit=64 * 1024 * 1024)


# ------------------ fused (LN->) matmul + bias + act (+residual) ------------------

def _mm_kernel(x_ref, w_ref, b_ref, *rest, act, has_ln, has_res, eps):
    off = 2 if has_ln else 0
    g_ref = rest[0] if has_ln else None
    bt_ref = rest[1] if has_ln else None
    r_ref = rest[off] if has_res else None
    o_ref = rest[off + (1 if has_res else 0)]
    acc_ref = rest[off + (1 if has_res else 0) + 1]

    k = pl.program_id(2)

    @pl.when(k == 0)
    def _():
        acc_ref[...] = jnp.zeros_like(acc_ref)

    xv = x_ref[...]
    if has_ln:
        # Full row (bk == K) is resident in this tile: LayerNorm prologue in f32.
        xf = xv.astype(jnp.float32)
        mu = jnp.mean(xf, axis=-1, keepdims=True)
        var = jnp.mean(jnp.square(xf - mu), axis=-1, keepdims=True)
        xn = (xf - mu) * jax.lax.rsqrt(var + eps)
        xn = xn * g_ref[...].astype(jnp.float32) + bt_ref[...].astype(jnp.float32)
        xb = xn.astype(jnp.bfloat16)
    else:
        xb = xv.astype(jnp.bfloat16)      # no-op when already bf16

    acc_ref[...] += jnp.dot(xb, w_ref[...].astype(jnp.bfloat16),
                            preferred_element_type=jnp.float32)

    @pl.when(k == pl.num_programs(2) - 1)
    def _():
        y = acc_ref[...] + b_ref[...]
        if act == "relu":
            y = jnp.maximum(y, 0.0)
        elif act == "gelu":
            # TODO(synk): timm ViT uses exact erf GELU; tanh approximation for robust lowering.
            y = 0.5 * y * (1.0 + jnp.tanh(0.7978845608028654 * (y + 0.044715 * y * y * y)))
        if has_res:
            y = y + r_ref[...].astype(jnp.float32)
        o_ref[...] = y.astype(o_ref.dtype)


def matmul_bias_act(x, w, b, act="none", residual=None, ln=None, ln_eps=1e-6,
                    out_dtype=jnp.float32, keep_padded_cols=False):
    """y = act(LN?(x) @ w + b) [+ residual].

    x:[M,K]  w:[K,N]  b:[N]  residual:[M,N]  ln: (gamma[K], beta[K]) or None.
    When ln is given, the whole K dim lives in one block so LN is computed as a
    prologue inside the kernel (removes a standalone LN slab round trip).
    bf16 MXU operands, f32 accumulation, f32 epilogue; output dtype = out_dtype.
    """
    M, K = x.shape
    K2, N = w.shape
    assert K == K2
    cfgp = _tpu_cfg()
    tm, tn, tk = cfgp["tm"], cfgp["tn"], cfgp["tk"]

    has_ln = ln is not None
    if has_ln:
        bk, Kp = K, K                      # full row per tile (required for LN stats)
    else:
        x = x.astype(jnp.bfloat16)         # halve HBM->VMEM traffic for x tiles
        if K <= tk:
            bk, Kp = K, K
        else:
            bk = tk
            Kp = _round_up(K, bk)
    w = w.astype(jnp.bfloat16)

    bm = min(tm, _round_up(M, 8))
    Mp = _round_up(M, bm)
    bn = min(tn, _round_up(N, 128))        # lane-dense output blocks (>=128)
    Np = _round_up(N, bn)

    xp = x if (Mp == M and Kp == K) else jnp.pad(x, ((0, Mp - M), (0, Kp - K)))
    wp = w if (Kp == K and Np == N) else jnp.pad(w, ((0, Kp - K), (0, Np - N)))
    bp = (b if Np == N else jnp.pad(b, (0, Np - N))).reshape(1, Np).astype(jnp.float32)

    grid = (Mp // bm, Np // bn, Kp // bk)

    in_specs = [pl.BlockSpec((bm, bk), lambda i, j, k: (i, k)),
                pl.BlockSpec((bk, bn), lambda i, j, k: (k, j)),
                pl.BlockSpec((1, bn), lambda i, j, k: (0, j))]
    args = [xp, wp, bp]
    if has_ln:
        g, bt = ln
        in_specs += [pl.BlockSpec((1, K), lambda i, j, k: (0, 0)),
                     pl.BlockSpec((1, K), lambda i, j, k: (0, 0))]
        args += [g.reshape(1, K).astype(jnp.float32),
                 bt.reshape(1, K).astype(jnp.float32)]
    if residual is not None:
        rp = residual if (Mp == M and Np == N) else jnp.pad(
            residual, ((0, Mp - M), (0, Np - N)))
        in_specs.append(pl.BlockSpec((bm, bn), lambda i, j, k: (i, j)))
        args.append(rp)

    kernel = functools.partial(_mm_kernel, act=act, has_ln=has_ln,
                               has_res=residual is not None, eps=ln_eps)
    cost = pl.CostEstimate(
        flops=2 * M * N * K,
        transcendentals=(M * N) if act == "gelu" else 0,
        bytes_accessed=2 * (M * K + K * N) + 4 * M * N
                       + (4 * M * N if residual is not None else 0),
    )

    out = pl.pallas_call(
        kernel,
        out_shape=jax.ShapeDtypeStruct((Mp, Np), out_dtype),
        grid=grid,
        in_specs=in_specs,
        out_specs=pl.BlockSpec((bm, bn), lambda i, j, k: (i, j)),
        scratch_shapes=[pltpu.VMEM((bm, bn), jnp.float32)],
        compiler_params=pltpu.CompilerParams(
            dimension_semantics=("parallel", "parallel", "arbitrary"),
            vmem_limit_bytes=cfgp["vmem_limit"],
        ),
        cost_estimate=cost,
    )(*args)

    if Mp != M:
        out = out[:M]
    if (not keep_padded_cols) and Np != N:
        out = out[:, :N]
    return out


# ------------------------------- attention -------------------------------

def _attention_kernel(qkv_ref, o_ref, *, heads, dh, scale, valid_s):
    Sp = o_ref.shape[0]
    d = heads * dh
    blk = qkv_ref[...]                                     # (Sp, W>=3D) bf16
    outs = []
    for hd in range(heads):                                # static unroll over heads
        q = blk[:, hd * dh:(hd + 1) * dh]
        k = blk[:, d + hd * dh:d + (hd + 1) * dh]
        v = blk[:, 2 * d + hd * dh:2 * d + (hd + 1) * dh]
        # q @ k^T without an in-kernel transpose (contract the head dims).
        s = jax.lax.dot_general(q, k, (((1,), (1,)), ((), ())),
                                preferred_element_type=jnp.float32) * scale
        if valid_s < Sp:                                   # mask padded key tokens
            kidx = jax.lax.broadcasted_iota(jnp.int32, (Sp, Sp), 1)
            s = jnp.where(kidx < valid_s, s, -1e30)
        s = s - jnp.max(s, axis=-1, keepdims=True)
        p = jnp.exp(s)
        p = p * pl.reciprocal(jnp.sum(p, axis=-1, keepdims=True), approx=True)
        outs.append(jnp.dot(p.astype(jnp.bfloat16), v,
                            preferred_element_type=jnp.float32))
    # single lane-dense store of the whole (Sp, D) block
    o_ref[...] = jnp.concatenate(outs, axis=1).astype(o_ref.dtype)


def attention_from_qkv(qkv_slab, B, Sp, heads, dh, scale, valid_s):
    """qkv_slab: [>=B*Sp, W>=3*heads*dh] bf16 (cols = q|k|v, head-major inside each).
    Output: [B*Sp, heads*dh] bf16 written directly as the proj-matmul input slab."""
    W = qkv_slab.shape[1]
    D = heads * dh
    cfgp = _tpu_cfg()
    return pl.pallas_call(
        functools.partial(_attention_kernel, heads=heads, dh=dh, scale=scale,
                          valid_s=valid_s),
        out_shape=jax.ShapeDtypeStruct((B * Sp, D), jnp.bfloat16),
        grid=(B,),
        in_specs=[pl.BlockSpec((Sp, W), lambda b: (b, 0))],
        out_specs=pl.BlockSpec((Sp, D), lambda b: (b, 0)),
        compiler_params=pltpu.CompilerParams(
            dimension_semantics=("parallel",),
            vmem_limit_bytes=cfgp["vmem_limit"],
        ),
        cost_estimate=pl.CostEstimate(
            flops=4 * B * heads * Sp * Sp * dh,
            transcendentals=B * heads * Sp * Sp,
            bytes_accessed=2 * B * Sp * (W + D)),
    )(qkv_slab)


# ----------------------------- parameters -----------------------------

def init_params(key, cfg):
    C, p, D = cfg["in_ch"], cfg["patch"], cfg["embed"]
    depth, mlp = cfg["depth"], cfg["mlp_ratio"]
    N = (cfg["img"] // p) ** 2
    dec = cfg["dec_channels"]
    nc = cfg["num_classes"]

    keys = iter(jax.random.split(key, 64))
    nrm = lambda shape, std: std * jax.random.normal(next(keys), shape, jnp.float32)

    params = {
        "patch_w": nrm((C * p * p, D), 0.02),
        "patch_b": jnp.zeros((D,), jnp.float32),
        "cls_token": nrm((1, 1, D), 0.02),
        "pos_embed": nrm((1, N + 1, D), 0.02),
        "norm_g": jnp.ones((D,), jnp.float32),
        "norm_b": jnp.zeros((D,), jnp.float32),
        "blocks": [],
        "deconvs": [],
    }
    for _ in range(depth):
        params["blocks"].append({
            "ln1_g": jnp.ones((D,), jnp.float32), "ln1_b": jnp.zeros((D,), jnp.float32),
            "qkv_w": nrm((D, 3 * D), 0.02), "qkv_b": jnp.zeros((3 * D,), jnp.float32),
            "proj_w": nrm((D, D), 0.02), "proj_b": jnp.zeros((D,), jnp.float32),
            "ln2_g": jnp.ones((D,), jnp.float32), "ln2_b": jnp.zeros((D,), jnp.float32),
            "fc1_w": nrm((D, mlp * D), 0.02), "fc1_b": jnp.zeros((mlp * D,), jnp.float32),
            "fc2_w": nrm((mlp * D, D), 0.02), "fc2_b": jnp.zeros((D,), jnp.float32),
        })

    # decoder ConvTranspose2d weights [Cin, Cout, 2, 2], kaiming_normal(fan_out), zero bias
    chans = [D] + list(dec)
    for cin, cout in zip(chans[:-1], chans[1:]):
        std = (2.0 / (cin * 4)) ** 0.5
        params["deconvs"].append((nrm((cin, cout, 2, 2), std),
                                  jnp.zeros((cout,), jnp.float32)))
    # final 1x1 Conv2d weight [nc, Cin, 1, 1]
    params["final_w"] = nrm((nc, dec[-1], 1, 1), (2.0 / max(nc, 1)) ** 0.5)
    params["final_b"] = jnp.zeros((nc,), jnp.float32)
    return params


# ----------------------------- forward -----------------------------

def trans_unet_forward(params, x, cfg):
    B, C, H, W = x.shape
    p, D, heads = cfg["patch"], cfg["embed"], cfg["heads"]
    h = H // p
    N = h * h
    S = N + 1
    Sp = _round_up(S, 8)                 # pad seq to sublane multiple
    Dh = D // heads
    scale = Dh ** -0.5

    # --- patch embed: Conv2d(k=p, s=p) as a matmul over extracted patches ---
    # TODO(synk): patch extraction / cls concat kept as XLA reshape+transpose.
    patches = (x.reshape(B, C, h, p, h, p)
                 .transpose(0, 2, 4, 1, 3, 5)              # (B, i, j, C, a, b)
                 .reshape(B * N, C * p * p))
    tok = matmul_bias_act(patches, params["patch_w"], params["patch_b"],
                          out_dtype=jnp.float32).reshape(B, N, D)

    cls = jnp.broadcast_to(params["cls_token"], (B, 1, D))
    xt = jnp.concatenate([cls, tok], axis=1) + params["pos_embed"]   # (B, S, D)
    if Sp != S:
        xt = jnp.pad(xt, ((0, 0), (0, Sp - S), (0, 0)))
    xt = xt.reshape(B * Sp, D)            # f32 residual carrier, rows = (b, s)

    # --- transformer encoder blocks (pre-LN) ---
    # LN fused into qkv / fc1 prologue; residual adds fused into proj / fc2 epilogue;
    # qkv slab is consumed by attention directly (no head split/merge transposes).
    for blk in params["blocks"]:
        qkv = matmul_bias_act(xt, blk["qkv_w"], blk["qkv_b"],
                              ln=(blk["ln1_g"], blk["ln1_b"]),
                              out_dtype=jnp.bfloat16, keep_padded_cols=True)
        o = attention_from_qkv(qkv, B, Sp, heads, Dh, scale, valid_s=S)
        xt = matmul_bias_act(o, blk["proj_w"], blk["proj_b"], residual=xt,
                             out_dtype=jnp.float32)

        hdn = matmul_bias_act(xt, blk["fc1_w"], blk["fc1_b"], act="gelu",
                              ln=(blk["ln2_g"], blk["ln2_b"]),
                              out_dtype=jnp.bfloat16)
        xt = matmul_bias_act(hdn, blk["fc2_w"], blk["fc2_b"], residual=xt,
                             out_dtype=jnp.float32)

    # --- drop cls + padding tokens -> spatial feature rows (b, i, j), channels-last ---
    feat = xt.reshape(B, Sp, D)[:, 1:N + 1, :].reshape(B * N, D)     # f32

    # --- decoder: 4 x (ConvTranspose2d(k=2,s=2) + ReLU) as per-row matmuls ---
    # The pixel shuffle is deferred: each stage only does a free row-major reshape
    # [rows, 4*Cout] -> [4*rows, Cout]; the spatial permutation is applied once at
    # the very end fused with the NCHW transpose.  The encoder's final LayerNorm is
    # fused into the first deconv matmul's prologue.
    nd = len(params["deconvs"])
    rows = B * N
    cur = feat
    for t, (w_t, b_t) in enumerate(params["deconvs"]):
        Cin, Cout = w_t.shape[0], w_t.shape[1]
        wm = w_t.transpose(0, 2, 3, 1).reshape(Cin, 4 * Cout)        # cols (kh, kw, co)
        bv = jnp.tile(b_t, 4)
        ln = (params["norm_g"], params["norm_b"]) if t == 0 else None
        y = matmul_bias_act(cur, wm, bv, act="relu", ln=ln,
                            out_dtype=jnp.bfloat16)                  # [rows, 4*Cout]
        rows *= 4
        cur = y.reshape(rows, Cout)       # rows gain (kh, kw) as fastest factors

    # --- final 1x1 conv (lane-padded to 128 cols inside the kernel) ---
    wf, bf = params["final_w"], params["final_b"]
    nc = wf.shape[0]
    wflat = wf.reshape(nc, wf.shape[1]).T                            # (Cin, nc)
    out_flat = matmul_bias_act(cur, wflat, bf, out_dtype=jnp.float32)  # [rows, nc]

    # single combined pixel-shuffle + NCHW permutation
    out = out_flat.reshape((B, h, h) + (2, 2) * nd + (nc,))
    perm = [0, 3 + 2 * nd, 1] + [3 + 2 * t for t in range(nd)] \
           + [2] + [4 + 2 * t for t in range(nd)]
    out = out.transpose(perm).reshape(B, nc, h * (2 ** nd), h * (2 ** nd))
    return out


# ----------------------------- main -----------------------------

if __name__ == "__main__":
    cfg = dict(
        num_classes=1,
        img=16,          # small analogue of img_size=224
        patch=4,         # small analogue of patch_size=16  -> enc_feat_size = 4
        in_ch=3,
        embed=32,        # small analogue of ViT-Base embed_dim=768
        depth=2,
        heads=4,
        mlp_ratio=4,
        dec_channels=[32, 16, 8, 8],   # small analogue of [256, 128, 64, 32]
    )

    key = jax.random.PRNGKey(0)
    pkey, xkey = jax.random.split(key)
    params = init_params(pkey, cfg)
    x = jax.random.normal(xkey, (2, cfg["in_ch"], cfg["img"], cfg["img"]), jnp.float32)

    fwd = jax.jit(lambda p_, x_: trans_unet_forward(p_, x_, cfg))
    out = fwd(params, x)
    jax.block_until_ready(out)

    # 4 stride-2 upsamples: enc_feat_size * 16 = 4 * 16 = 64
    assert out.shape == (2, cfg["num_classes"], 64, 64), out.shape
    assert out.dtype == jnp.float32
    assert bool(jnp.all(jnp.isfinite(out)))
    print("KERNEL_OK")
</pallas_src>

<mosaic_0001>
module attributes {stable_mosaic.version = 11 : i64} {
  func.func @_mm_kernel(%arg0: i32, %arg1: i32, %arg2: i32, %arg3: memref<32x48xbf16, #tpu.memory_space<vmem>>, %arg4: memref<48x128xbf16, #tpu.memory_space<vmem>>, %arg5: memref<1x128xf32, #tpu.memory_space<vmem>>, %arg6: memref<32x128xf32, #tpu.memory_space<vmem>>, %arg7: memref<32x128xf32, #tpu.memory_space<vmem>>) attributes {dimension_semantics = [#tpu.dimension_semantics<parallel>, #tpu.dimension_semantics<parallel>, #tpu.dimension_semantics<arbitrary>], iteration_bounds = array<i64: 1, 1, 1>, scalar_prefetch = 0 : i64, scratch_operands = 1 : i64, tpu.core_type = #tpu.core_type<tc>, window_params = [{transform_indices = @transform_0, window_bounds = array<i64: 32, 48>}, {transform_indices = @transform_1, window_bounds = array<i64: 48, 128>}, {transform_indices = @transform_2, window_bounds = array<i64: 1, 128>}, {transform_indices = @transform_3, window_bounds = array<i64: 32, 128>}]} {
    %c0_i32 = arith.constant 0 : i32
    %0 = arith.cmpi eq, %arg2, %c0_i32 : i32
    %1 = arith.extui %0 : i1 to i32
    %c0_i32_0 = arith.constant 0 : i32
    %2 = arith.cmpi ne, %1, %c0_i32_0 : i32
    scf.if %2 {
      %cst_10 = arith.constant 0.000000e+00 : f32
      %12 = vector.broadcast %cst_10 : f32 to vector<32x128xf32>
      %c0_11 = arith.constant 0 : index
      %c0_12 = arith.constant 0 : index
      %13 = vector.load %arg7[%c0_11, %c0_12] : memref<32x128xf32, #tpu.memory_space<vmem>>, vector<32x128xf32>
      tpu.vector_store %arg7[%c0_11, %c0_12], %12 {strides = array<i32>} : memref<32x128xf32, #tpu.memory_space<vmem>>, vector<32x128xf32>,
    } else {
    }
    %c0 = arith.constant 0 : index
    %c0_1 = arith.constant 0 : index
    %3 = vector.load %arg3[%c0, %c0_1] : memref<32x48xbf16, #tpu.memory_space<vmem>>, vector<32x48xbf16>
    %c0_2 = arith.constant 0 : index
    %c0_3 = arith.constant 0 : index
    %4 = vector.load %arg7[%c0_2, %c0_3] : memref<32x128xf32, #tpu.memory_space<vmem>>, vector<32x128xf32>
    %c0_4 = arith.constant 0 : index
    %c0_5 = arith.constant 0 : index
    %5 = vector.load %arg4[%c0_4, %c0_5] : memref<48x128xbf16, #tpu.memory_space<vmem>>, vector<48x128xbf16>
    %cst = arith.constant dense<0.000000e+00> : vector<32x128xf32>
    %6 = tpu.matmul %3, %5, %cst {dimension_numbers = #tpu.dot_dimension_numbers<[1], [0], [0], [1], [0, 0, 1, 1], [], []>} : vector<32x48xbf16>, vector<48x128xbf16>, vector<32x128xf32> -> vector<32x128xf32>
    %7 = arith.addf %4, %6 : vector<32x128xf32>
    %c0_6 = arith.constant 0 : index
    %c0_7 = arith.constant 0 : index
    %8 = vector.load %arg7[%c0_6, %c0_7] : memref<32x128xf32, #tpu.memory_space<vmem>>, vector<32x128xf32>
    tpu.vector_store %arg7[%c0_6, %c0_7], %7 {strides = array<i32>} : memref<32x128xf32, #tpu.memory_space<vmem>>, vector<32x128xf32>,
    %c0_i32_8 = arith.constant 0 : i32
    %9 = arith.cmpi eq, %arg2, %c0_i32_8 : i32
    %10 = arith.extui %9 : i1 to i32
    %c0_i32_9 = arith.constant 0 : i32
    %11 = arith.cmpi ne, %10, %c0_i32_9 : i32
    scf.if %11 {
      %c0_10 = arith.constant 0 : index
      %c0_11 = arith.constant 0 : index
      %12 = vector.load %arg7[%c0_10, %c0_11] : memref<32x128xf32, #tpu.memory_space<vmem>>, vector<32x128xf32>
      %c0_12 = arith.constant 0 : index
      %c0_13 = arith.constant 0 : index
      %13 = vector.load %arg5[%c0_12, %c0_13] : memref<1x128xf32, #tpu.memory_space<vmem>>, vector<1x128xf32>
      %14 = vector.broadcast %13 : vector<1x128xf32> to vector<32x128xf32>
      %15 = arith.addf %12, %14 : vector<32x128xf32>
      %c0_14 = arith.constant 0 : index
      %c0_15 = arith.constant 0 : index
      %16 = vector.load %arg6[%c0_14, %c0_15] : memref<32x128xf32, #tpu.memory_space<vmem>>, vector<32x128xf32>
      tpu.vector_store %arg6[%c0_14, %c0_15], %15 {strides = array<i32>} : memref<32x128xf32, #tpu.memory_space<vmem>>, vector<32x128xf32>,
    } else {
    }
    return
  }
  func.func @transform_0(%arg0: i32, %arg1: i32, %arg2: i32) -> (i32, i32) {
    %c0_i32 = arith.constant 0 : i32
    return %arg0, %arg2 : i32, i32
  }
  func.func @transform_1(%arg0: i32, %arg1: i32, %arg2: i32) -> (i32, i32) {
    %c0_i32 = arith.constant 0 : i32
    return %arg2, %arg1 : i32, i32
  }
  func.func @transform_2(%arg0: i32, %arg1: i32, %arg2: i32) -> (i32, i32) {
    %c0_i32 = arith.constant 0 : i32
    %c0_i32_0 = arith.constant 0 : i32
    return %c0_i32, %arg1 : i32, i32
  }
  func.func @transform_3(%arg0: i32, %arg1: i32, %arg2: i32) -> (i32, i32) {
    %c0_i32 = arith.constant 0 : i32
    return %arg0, %arg1 : i32, i32
  }
}

module attributes {stable_mosaic.version = 11 : i64} {
  func.func @_mm_kernel(%arg0: i32, %arg1: i32, %arg2: i32, %arg3: memref<48x32xf32, #tpu.memory_space<vmem>>, %arg4: memref<32x128xbf16, #tpu.memory_space<vmem>>, %arg5: memref<1x128xf32, #tpu.memory_space<vmem>>, %arg6: memref<1x32xf32, #tpu.memory_space<vmem>>, %arg7: memref<1x32xf32, #tpu.memory_space<vmem>>, %arg8: memref<48x128xbf16, #tpu.memory_space<vmem>>, %arg9: memref<48x128xf32, #tpu.memory_space<vmem>>) attributes {dimension_semantics = [#tpu.dimension_semantics<parallel>, #tpu.dimension_semantics<parallel>, #tpu.dimension_semantics<arbitrary>], iteration_bounds = array<i64: 1, 1, 1>, scalar_prefetch = 0 : i64, scratch_operands = 1 : i64, tpu.core_type = #tpu.core_type<tc>, window_params = [{transform_indices = @transform_0, window_bounds = array<i64: 48, 32>}, {transform_indices = @transform_1, window_bounds = array<i64: 32, 128>}, {transform_indices = @transform_2, window_bounds = array<i64: 1, 128>}, {pipeline_mode = #tpu.pipeline_mode<synchronous>, transform_indices = @transform_3, window_bounds = array<i64: 1, 32>}, {pipeline_mode = #tpu.pipeline_mode<synchronous>, transform_indices = @transform_4, window_bounds = array<i64: 1, 32>}, {transform_indices = @transform_5, window_bounds = array<i64: 48, 128>}]} {
    %c0_i32 = arith.constant 0 : i32
    %0 = arith.cmpi eq, %arg2, %c0_i32 : i32
    %1 = arith.extui %0 : i1 to i32
    %c0_i32_0 = arith.constant 0 : i32
    %2 = arith.cmpi ne, %1, %c0_i32_0 : i32
    scf.if %2 {
      %cst_19 = arith.constant 0.000000e+00 : f32
      %37 = vector.broadcast %cst_19 : f32 to vector<48x128xf32>
      %c0_20 = arith.constant 0 : index
      %c0_21 = arith.constant 0 : index
      %38 = vector.load %arg9[%c0_20, %c0_21] : memref<48x128xf32, #tpu.memory_space<vmem>>, vector<48x128xf32>
      tpu.vector_store %arg9[%c0_20, %c0_21], %37 {strides = array<i32>} : memref<48x128xf32, #tpu.memory_space<vmem>>, vector<48x128xf32>,
    } else {
    }
    %c0 = arith.constant 0 : index
    %c0_1 = arith.constant 0 : index
    %3 = vector.load %arg3[%c0, %c0_1] : memref<48x32xf32, #tpu.memory_space<vmem>>, vector<48x32xf32>
    %cst = arith.constant dense<0.000000e+00> : vector<48xf32>
    %4 = vector.multi_reduction <add>, %3, %cst [1] : vector<48x32xf32> to vector<48xf32>
    %5 = vector.shape_cast %4 : vector<48xf32> to vector<48x1xf32>
    %cst_2 = arith.constant 3.200000e+01 : f32
    %6 = vector.broadcast %cst_2 : f32 to vector<48x1xf32>
    %7 = arith.divf %5, %6 : vector<48x1xf32>
    %8 = vector.broadcast %7 : vector<48x1xf32> to vector<48x32xf32>
    %9 = arith.subf %3, %8 : vector<48x32xf32>
    %10 = arith.mulf %9, %9 : vector<48x32xf32>
    %cst_3 = arith.constant dense<0.000000e+00> : vector<48xf32>
    %11 = vector.multi_reduction <add>, %10, %cst_3 [1] : vector<48x32xf32> to vector<48xf32>
    %12 = vector.shape_cast %11 : vector<48xf32> to vector<48x1xf32>
    %cst_4 = arith.constant 3.200000e+01 : f32
    %13 = vector.broadcast %cst_4 : f32 to vector<48x1xf32>
    %14 = arith.divf %12, %13 : vector<48x1xf32>
    %15 = vector.broadcast %7 : vector<48x1xf32> to vector<48x32xf32>
    %16 = arith.subf %3, %15 : vector<48x32xf32>
    %cst_5 = arith.constant 9.99999997E-7 : f32
    %17 = vector.broadcast %cst_5 : f32 to vector<48x1xf32>
    %18 = arith.addf %14, %17 : vector<48x1xf32>
    %19 = math.rsqrt %18 : vector<48x1xf32>
    %20 = vector.broadcast %19 : vector<48x1xf32> to vector<48x32xf32>
    %21 = arith.mulf %16, %20 : vector<48x32xf32>
    %c0_6 = arith.constant 0 : index
    %c0_7 = arith.constant 0 : index
    %22 = vector.load %arg6[%c0_6, %c0_7] : memref<1x32xf32, #tpu.memory_space<vmem>>, vector<1x32xf32>
    %23 = vector.broadcast %22 : vector<1x32xf32> to vector<48x32xf32>
    %24 = arith.mulf %21, %23 : vector<48x32xf32>
    %c0_8 = arith.constant 0 : index
    %c0_9 = arith.constant 0 : index
    %25 = vector.load %arg7[%c0_8, %c0_9] : memref<1x32xf32, #tpu.memory_space<vmem>>, vector<1x32xf32>
    %26 = vector.broadcast %25 : vector<1x32xf32> to vector<48x32xf32>
    %27 = arith.addf %24, %26 : vector<48x32xf32>
    %28 = arith.truncf %27 : vector<48x32xf32> to vector<48x32xbf16>
    %c0_10 = arith.constant 0 : index
    %c0_11 = arith.constant 0 : index
    %29 = vector.load %arg9[%c0_10, %c0_11] : memref<48x128xf32, #tpu.memory_space<vmem>>, vector<48x128xf32>
    %c0_12 = arith.constant 0 : index
    %c0_13 = arith.constant 0 : index
    %30 = vector.load %arg4[%c0_12, %c0_13] : memref<32x128xbf16, #tpu.memory_space<vmem>>, vector<32x128xbf16>
    %cst_14 = arith.constant dense<0.000000e+00> : vector<48x128xf32>
    %31 = tpu.matmul %28, %30, %cst_14 {dimension_numbers = #tpu.dot_dimension_numbers<[1], [0], [0], [1], [0, 0, 1, 1], [], []>} : vector<48x32xbf16>, vector<32x128xbf16>, vector<48x128xf32> -> vector<48x128xf32>
    %32 = arith.addf %29, %31 : vector<48x128xf32>
    %c0_15 = arith.constant 0 : index
    %c0_16 = arith.constant 0 : index
    %33 = vector.load %arg9[%c0_15, %c0_16] : memref<48x128xf32, #tpu.memory_space<vmem>>, vector<48x128xf32>
    tpu.vector_store %arg9[%c0_15, %c0_16], %32 {strides = array<i32>} : memref<48x128xf32, #tpu.memory_space<vmem>>, vector<48x128xf32>,
    %c0_i32_17 = arith.constant 0 : i32
    %34 = arith.cmpi eq, %arg2, %c0_i32_17 : i32
    %35 = arith.extui %34 : i1 to i32
    %c0_i32_18 = arith.constant 0 : i32
    %36 = arith.cmpi ne, %35, %c0_i32_18 : i32
    scf.if %36 {
      %c0_19 = arith.constant 0 : index
      %c0_20 = arith.constant 0 : index
      %37 = vector.load %arg9[%c0_19, %c0_20] : memref<48x128xf32, #tpu.memory_space<vmem>>, vector<48x128xf32>
      %c0_21 = arith.constant 0 : index
      %c0_22 = arith.constant 0 : index
      %38 = vector.load %arg5[%c0_21, %c0_22] : memref<1x128xf32, #tpu.memory_space<vmem>>, vector<1x128xf32>
      %39 = vector.broadcast %38 : vector<1x128xf32> to vector<48x128xf32>
      %40 = arith.addf %37, %39 : vector<48x128xf32>
      %41 = arith.truncf %40 : vector<48x128xf32> to vector<48x128xbf16>
      %c0_23 = arith.constant 0 : index
      %c0_24 = arith.constant 0 : index
      %42 = vector.load %arg8[%c0_23, %c0_24] : memref<48x128xbf16, #tpu.memory_space<vmem>>, vector<48x128xbf16>
      tpu.vector_store %arg8[%c0_23, %c0_24], %41 {strides = array<i32>} : memref<48x128xbf16, #tpu.memory_space<vmem>>, vector<48x128xbf16>,
    } else {
    }
    return
  }
  func.func @transform_0(%arg0: i32, %arg1: i32, %arg2: i32) -> (i32, i32) {
    %c0_i32 = arith.constant 0 : i32
    return %arg0, %arg2 : i32, i32
  }
  func.func @transform_1(%arg0: i32, %arg1: i32, %arg2: i32) -> (i32, i32) {
    %c0_i32 = arith.constant 0 : i32
    return %arg2, %arg1 : i32, i32
  }
  func.func @transform_2(%arg0: i32, %arg1: i32, %arg2: i32) -> (i32, i32) {
    %c0_i32 = arith.constant 0 : i32
    %c0_i32_0 = arith.constant 0 : i32
    return %c0_i32, %arg1 : i32, i32
  }
  func.func @transform_3(%arg0: i32, %arg1: i32, %arg2: i32) -> (i32, i32) {
    %c0_i32 = arith.constant 0 : i32
    %c0_i32_0 = arith.constant 0 : i32
    %c0_i32_1 = arith.constant 0 : i32
    return %c0_i32, %c0_i32_0 : i32, i32
  }
  func.func @transform_4(%arg0: i32, %arg1: i32, %arg2: i32) -> (i32, i32) {
    %c0_i32 = arith.constant 0 : i32
    %c0_i32_0 = arith.constant 0 : i32
    %c0_i32_1 = arith.constant 0 : i32
    return %c0_i32, %c0_i32_0 : i32, i32
  }
  func.func @transform_5(%arg0: i32, %arg1: i32, %arg2: i32) -> (i32, i32) {
    %c0_i32 = arith.constant 0 : i32
    return %arg0, %arg1 : i32, i32
  }
}

module attributes {stable_mosaic.version = 11 : i64} {
  func.func @_mm_kernel(%arg0: i32, %arg1: i32, %arg2: i32, %arg3: memref<48x32xbf16, #tpu.memory_space<vmem>>, %arg4: memref<32x128xbf16, #tpu.memory_space<vmem>>, %arg5: memref<1x128xf32, #tpu.memory_space<vmem>>, %arg6: memref<48x128xf32, #tpu.memory_space<vmem>>, %arg7: memref<48x128xf32, #tpu.memory_space<vmem>>, %arg8: memref<48x128xf32, #tpu.memory_space<vmem>>) attributes {dimension_semantics = [#tpu.dimension_semantics<parallel>, #tpu.dimension_semantics<parallel>, #tpu.dimension_semantics<arbitrary>], iteration_bounds = array<i64: 1, 1, 1>, scalar_prefetch = 0 : i64, scratch_operands = 1 : i64, tpu.core_type = #tpu.core_type<tc>, window_params = [{transform_indices = @transform_0, window_bounds = array<i64: 48, 32>}, {transform_indices = @transform_1, window_bounds = array<i64: 32, 128>}, {transform_indices = @transform_2, window_bounds = array<i64: 1, 128>}, {transform_indices = @transform_3, window_bounds = array<i64: 48, 128>}, {transform_indices = @transform_4, window_bounds = array<i64: 48, 128>}]} {
    %c0_i32 = arith.constant 0 : i32
    %0 = arith.cmpi eq, %arg2, %c0_i32 : i32
    %1 = arith.extui %0 : i1 to i32
    %c0_i32_0 = arith.constant 0 : i32
    %2 = arith.cmpi ne, %1, %c0_i32_0 : i32
    scf.if %2 {
      %cst_10 = arith.constant 0.000000e+00 : f32
      %12 = vector.broadcast %cst_10 : f32 to vector<48x128xf32>
      %c0_11 = arith.constant 0 : index
      %c0_12 = arith.constant 0 : index
      %13 = vector.load %arg8[%c0_11, %c0_12] : memref<48x128xf32, #tpu.memory_space<vmem>>, vector<48x128xf32>
      tpu.vector_store %arg8[%c0_11, %c0_12], %12 {strides = array<i32>} : memref<48x128xf32, #tpu.memory_space<vmem>>, vector<48x128xf32>,
    } else {
    }
    %c0 = arith.constant 0 : index
    %c0_1 = arith.constant 0 : index
    %3 = vector.load %arg3[%c0, %c0_1] : memref<48x32xbf16, #tpu.memory_space<vmem>>, vector<48x32xbf16>
    %c0_2 = arith.constant 0 : index
    %c0_3 = arith.constant 0 : index
    %4 = vector.load %arg8[%c0_2, %c0_3] : memref<48x128xf32, #tpu.memory_space<vmem>>, vector<48x128xf32>
    %c0_4 = arith.constant 0 : index
    %c0_5 = arith.constant 0 : index
    %5 = vector.load %arg4[%c0_4, %c0_5] : memref<32x128xbf16, #tpu.memory_space<vmem>>, vector<32x128xbf16>
    %cst = arith.constant dense<0.000000e+00> : vector<48x128xf32>
    %6 = tpu.matmul %3, %5, %cst {dimension_numbers = #tpu.dot_dimension_numbers<[1], [0], [0], [1], [0, 0, 1, 1], [], []>} : vector<48x32xbf16>, vector<32x128xbf16>, vector<48x128xf32> -> vector<48x128xf32>
    %7 = arith.addf %4, %6 : vector<48x128xf32>
    %c0_6 = arith.constant 0 : index
    %c0_7 = arith.constant 0 : index
    %8 = vector.load %arg8[%c0_6, %c0_7] : memref<48x128xf32, #tpu.memory_space<vmem>>, vector<48x128xf32>
    tpu.vector_store %arg8[%c0_6, %c0_7], %7 {strides = array<i32>} : memref<48x128xf32, #tpu.memory_space<vmem>>, vector<48x128xf32>,
    %c0_i32_8 = arith.constant 0 : i32
    %9 = arith.cmpi eq, %arg2, %c0_i32_8 : i32
    %10 = arith.extui %9 : i1 to i32
    %c0_i32_9 = arith.constant 0 : i32
    %11 = arith.cmpi ne, %10, %c0_i32_9 : i32
    scf.if %11 {
      %c0_10 = arith.constant 0 : index
      %c0_11 = arith.constant 0 : index
      %12 = vector.load %arg8[%c0_10, %c0_11] : memref<48x128xf32, #tpu.memory_space<vmem>>, vector<48x128xf32>
      %c0_12 = arith.constant 0 : index
      %c0_13 = arith.constant 0 : index
      %13 = vector.load %arg5[%c0_12, %c0_13] : memref<1x128xf32, #tpu.memory_space<vmem>>, vector<1x128xf32>
      %14 = vector.broadcast %13 : vector<1x128xf32> to vector<48x128xf32>
      %15 = arith.addf %12, %14 : vector<48x128xf32>
      %c0_14 = arith.constant 0 : index
      %c0_15 = arith.constant 0 : index
      %16 = vector.load %arg6[%c0_14, %c0_15] : memref<48x128xf32, #tpu.memory_space<vmem>>, vector<48x128xf32>
      %17 = arith.addf %15, %16 : vector<48x128xf32>
      %c0_16 = arith.constant 0 : index
      %c0_17 = arith.constant 0 : index
      %18 = vector.load %arg7[%c0_16, %c0_17] : memref<48x128xf32, #tpu.memory_space<vmem>>, vector<48x128xf32>
      tpu.vector_store %arg7[%c0_16, %c0_17], %17 {strides = array<i32>} : memref<48x128xf32, #tpu.memory_space<vmem>>, vector<48x128xf32>,
    } else {
    }
    return
  }
  func.func @transform_0(%arg0: i32, %arg1: i32, %arg2: i32) -> (i32, i32) {
    %c0_i32 = arith.constant 0 : i32
    return %arg0, %arg2 : i32, i32
  }
  func.func @transform_1(%arg0: i32, %arg1: i32, %arg2: i32) -> (i32, i32) {
    %c0_i32 = arith.constant 0 : i32
    return %arg2, %arg1 : i32, i32
  }
  func.func @transform_2(%arg0: i32, %arg1: i32, %arg2: i32) -> (i32, i32) {
    %c0_i32 = arith.constant 0 : i32
    %c0_i32_0 = arith.constant 0 : i32
    return %c0_i32, %arg1 : i32, i32
  }
  func.func @transform_3(%arg0: i32, %arg1: i32, %arg2: i32) -> (i32, i32) {
    %c0_i32 = arith.constant 0 : i32
    return %arg0, %arg1 : i32, i32
  }
  func.func @transform_4(%arg0: i32, %arg1: i32, %arg2: i32) -> (i32, i32) {
    %c0_i32 = arith.constant 0 : i32
    return %arg0, %arg1 : i32, i32
  }
}

module attributes {stable_mosaic.version = 11 : i64} {
  func.func @_attention_kernel(%arg0: i32, %arg1: memref<24x128xbf16, #tpu.memory_space<vmem>>, %arg2: memref<24x32xbf16, #tpu.memory_space<vmem>>) attributes {dimension_semantics = [#tpu.dimension_semantics<parallel>], iteration_bounds = array<i64: 2>, scalar_prefetch = 0 : i64, scratch_operands = 0 : i64, tpu.core_type = #tpu.core_type<tc>, window_params = [{transform_indices = @transform_0, window_bounds = array<i64: 24, 128>}, {transform_indices = @transform_1, window_bounds = array<i64: 24, 32>}]} {
    %c0 = arith.constant 0 : index
    %c0_0 = arith.constant 0 : index
    %0 = vector.load %arg1[%c0, %c0_0] : memref<24x128xbf16, #tpu.memory_space<vmem>>, vector<24x128xbf16>
    %1 = vector.extract_strided_slice %0 {offsets = [0, 0], sizes = [24, 8], strides = [1, 1]} : vector<24x128xbf16> to vector<24x8xbf16>
    %2 = vector.extract_strided_slice %0 {offsets = [0, 32], sizes = [24, 8], strides = [1, 1]} : vector<24x128xbf16> to vector<24x8xbf16>
    %3 = vector.extract_strided_slice %0 {offsets = [0, 64], sizes = [24, 8], strides = [1, 1]} : vector<24x128xbf16> to vector<24x8xbf16>
    %cst = arith.constant dense<0.000000e+00> : vector<24x24xf32>
    %4 = tpu.matmul %1, %2, %cst {dimension_numbers = #tpu.dot_dimension_numbers<[1], [1], [0], [0], [0, 0, 1, 0], [], []>} : vector<24x8xbf16>, vector<24x8xbf16>, vector<24x24xf32> -> vector<24x24xf32>
    %cst_1 = arith.constant 0.353553385 : f32
    %5 = vector.broadcast %cst_1 : f32 to vector<24x24xf32>
    %6 = arith.mulf %4, %5 : vector<24x24xf32>
    %7 = tpu.iota {dimensions = array<i32: 1>} : vector<24x24xi32>
    %c17_i32 = arith.constant 17 : i32
    %8 = vector.broadcast %c17_i32 : i32 to vector<24x24xi32>
    %9 = arith.cmpi slt, %7, %8 : vector<24x24xi32>
    %cst_2 = arith.constant -1.000000e+30 : f32
    %10 = vector.broadcast %cst_2 : f32 to vector<24x24xf32>
    %11 = arith.select %9, %6, %10 : vector<24x24xi1>, vector<24x24xf32>
    %cst_3 = arith.constant dense<0xFF800000> : vector<24xf32>
    %12 = vector.multi_reduction <maximumf>, %11, %cst_3 [1] : vector<24x24xf32> to vector<24xf32>
    %13 = vector.shape_cast %12 : vector<24xf32> to vector<24x1xf32>
    %14 = vector.broadcast %13 : vector<24x1xf32> to vector<24x24xf32>
    %15 = arith.subf %11, %14 : vector<24x24xf32>
    %16 = math.exp %15 : vector<24x24xf32>
    %cst_4 = arith.constant dense<0.000000e+00> : vector<24xf32>
    %17 = vector.multi_reduction <add>, %16, %cst_4 [1] : vector<24x24xf32> to vector<24xf32>
    %18 = vector.shape_cast %17 : vector<24xf32> to vector<24x1xf32>
    %19 = tpu.reciprocal %18 {approx = true} : vector<24x1xf32> -> vector<24x1xf32>
    %20 = vector.broadcast %19 : vector<24x1xf32> to vector<24x24xf32>
    %21 = arith.mulf %16, %20 : vector<24x24xf32>
    %22 = arith.truncf %21 : vector<24x24xf32> to vector<24x24xbf16>
    %cst_5 = arith.constant dense<0.000000e+00> : vector<24x8xf32>
    %23 = tpu.matmul %22, %3, %cst_5 {dimension_numbers = #tpu.dot_dimension_numbers<[1], [0], [0], [1], [0, 0, 1, 1], [], []>} : vector<24x24xbf16>, vector<24x8xbf16>, vector<24x8xf32> -> vector<24x8xf32>
    %24 = vector.extract_strided_slice %0 {offsets = [0, 8], sizes = [24, 8], strides = [1, 1]} : vector<24x128xbf16> to vector<24x8xbf16>
    %25 = vector.extract_strided_slice %0 {offsets = [0, 40], sizes = [24, 8], strides = [1, 1]} : vector<24x128xbf16> to vector<24x8xbf16>
    %26 = vector.extract_strided_slice %0 {offsets = [0, 72], sizes = [24, 8], strides = [1, 1]} : vector<24x128xbf16> to vector<24x8xbf16>
    %cst_6 = arith.constant dense<0.000000e+00> : vector<24x24xf32>
    %27 = tpu.matmul %24, %25, %cst_6 {dimension_numbers = #tpu.dot_dimension_numbers<[1], [1], [0], [0], [0, 0, 1, 0], [], []>} : vector<24x8xbf16>, vector<24x8xbf16>, vector<24x24xf32> -> vector<24x24xf32>
    %cst_7 = arith.constant 0.353553385 : f32
    %28 = vector.broadcast %cst_7 : f32 to vector<24x24xf32>
    %29 = arith.mulf %27, %28 : vector<24x24xf32>
    %30 = tpu.iota {dimensions = array<i32: 1>} : vector<24x24xi32>
    %c17_i32_8 = arith.constant 17 : i32
    %31 = vector.broadcast %c17_i32_8 : i32 to vector<24x24xi32>
    %32 = arith.cmpi slt, %30, %31 : vector<24x24xi32>
    %cst_9 = arith.constant -1.000000e+30 : f32
    %33 = vector.broadcast %cst_9 : f32 to vector<24x24xf32>
    %34 = arith.select %32, %29, %33 : vector<24x24xi1>, vector<24x24xf32>
    %cst_10 = arith.constant dense<0xFF800000> : vector<24xf32>
    %35 = vector.multi_reduction <maximumf>, %34, %cst_10 [1] : vector<24x24xf32> to vector<24xf32>
    %36 = vector.shape_cast %35 : vector<24xf32> to vector<24x1xf32>
    %37 = vector.broadcast %36 : vector<24x1xf32> to vector<24x24xf32>
    %38 = arith.subf %34, %37 : vector<24x24xf32>
    %39 = math.exp %38 : vector<24x24xf32>
    %cst_11 = arith.constant dense<0.000000e+00> : vector<24xf32>
    %40 = vector.multi_reduction <add>, %39, %cst_11 [1] : vector<24x24xf32> to vector<24xf32>
    %41 = vector.shape_cast %40 : vector<24xf32> to vector<24x1xf32>
    %42 = tpu.reciprocal %41 {approx = true} : vector<24x1xf32> -> vector<24x1xf32>
    %43 = vector.broadcast %42 : vector<24x1xf32> to vector<24x24xf32>
    %44 = arith.mulf %39, %43 : vector<24x24xf32>
    %45 = arith.truncf %44 : vector<24x24xf32> to vector<24x24xbf16>
    %cst_12 = arith.constant dense<0.000000e+00> : vector<24x8xf32>
    %46 = tpu.matmul %45, %26, %cst_12 {dimension_numbers = #tpu.dot_dimension_numbers<[1], [0], [0], [1], [0, 0, 1, 1], [], []>} : vector<24x24xbf16>, vector<24x8xbf16>, vector<24x8xf32> -> vector<24x8xf32>
    %47 = vector.extract_strided_slice %0 {offsets = [0, 16], sizes = [24, 8], strides = [1, 1]} : vector<24x128xbf16> to vector<24x8xbf16>
    %48 = vector.extract_strided_slice %0 {offsets = [0, 48], sizes = [24, 8], strides = [1, 1]} : vector<24x128xbf16> to vector<24x8xbf16>
    %49 = vector.extract_strided_slice %0 {offsets = [0, 80], sizes = [24, 8], strides = [1, 1]} : vector<24x128xbf16> to vector<24x8xbf16>
    %cst_13 = arith.constant dense<0.000000e+00> : vector<24x24xf32>
    %50 = tpu.matmul %47, %48, %cst_13 {dimension_numbers = #tpu.dot_dimension_numbers<[1], [1], [0], [0], [0, 0, 1, 0], [], []>} : vector<24x8xbf16>, vector<24x8xbf16>, vector<24x24xf32> -> vector<24x24xf32>
    %cst_14 = arith.constant 0.353553385 : f32
    %51 = vector.broadcast %cst_14 : f32 to vector<24x24xf32>
    %52 = arith.mulf %50, %51 : vector<24x24xf32>
    %53 = tpu.iota {dimensions = array<i32: 1>} : vector<24x24xi32>
    %c17_i32_15 = arith.constant 17 : i32
    %54 = vector.broadcast %c17_i32_15 : i32 to vector<24x24xi32>
    %55 = arith.cmpi slt, %53, %54 : vector<24x24xi32>
    %cst_16 = arith.constant -1.000000e+30 : f32
    %56 = vector.broadcast %cst_16 : f32 to vector<24x24xf32>
    %57 = arith.select %55, %52, %56 : vector<24x24xi1>, vector<24x24xf32>
    %cst_17 = arith.constant dense<0xFF800000> : vector<24xf32>
    %58 = vector.multi_reduction <maximumf>, %57, %cst_17 [1] : vector<24x24xf32> to vector<24xf32>
    %59 = vector.shape_cast %58 : vector<24xf32> to vector<24x1xf32>
    %60 = vector.broadcast %59 : vector<24x1xf32> to vector<24x24xf32>
    %61 = arith.subf %57, %60 : vector<24x24xf32>
    %62 = math.exp %61 : vector<24x24xf32>
    %cst_18 = arith.constant dense<0.000000e+00> : vector<24xf32>
    %63 = vector.multi_reduction <add>, %62, %cst_18 [1] : vector<24x24xf32> to vector<24xf32>
    %64 = vector.shape_cast %63 : vector<24xf32> to vector<24x1xf32>
    %65 = tpu.reciprocal %64 {approx = true} : vector<24x1xf32> -> vector<24x1xf32>
    %66 = vector.broadcast %65 : vector<24x1xf32> to vector<24x24xf32>
    %67 = arith.mulf %62, %66 : vector<24x24xf32>
    %68 = arith.truncf %67 : vector<24x24xf32> to vector<24x24xbf16>
    %cst_19 = arith.constant dense<0.000000e+00> : vector<24x8xf32>
    %69 = tpu.matmul %68, %49, %cst_19 {dimension_numbers = #tpu.dot_dimension_numbers<[1], [0], [0], [1], [0, 0, 1, 1], [], []>} : vector<24x24xbf16>, vector<24x8xbf16>, vector<24x8xf32> -> vector<24x8xf32>
    %70 = vector.extract_strided_slice %0 {offsets = [0, 24], sizes = [24, 8], strides = [1, 1]} : vector<24x128xbf16> to vector<24x8xbf16>
    %71 = vector.extract_strided_slice %0 {offsets = [0, 56], sizes = [24, 8], strides = [1, 1]} : vector<24x128xbf16> to vector<24x8xbf16>
    %72 = vector.extract_strided_slice %0 {offsets = [0, 88], sizes = [24, 8], strides = [1, 1]} : vector<24x128xbf16> to vector<24x8xbf16>
    %cst_20 = arith.constant dense<0.000000e+00> : vector<24x24xf32>
    %73 = tpu.matmul %70, %71, %cst_20 {dimension_numbers = #tpu.dot_dimension_numbers<[1], [1], [0], [0], [0, 0, 1, 0], [], []>} : vector<24x8xbf16>, vector<24x8xbf16>, vector<24x24xf32> -> vector<24x24xf32>
    %cst_21 = arith.constant 0.353553385 : f32
    %74 = vector.broadcast %cst_21 : f32 to vector<24x24xf32>
    %75 = arith.mulf %73, %74 : vector<24x24xf32>
    %76 = tpu.iota {dimensions = array<i32: 1>} : vector<24x24xi32>
    %c17_i32_22 = arith.constant 17 : i32
    %77 = vector.broadcast %c17_i32_22 : i32 to vector<24x24xi32>
    %78 = arith.cmpi slt, %76, %77 : vector<24x24xi32>
    %cst_23 = arith.constant -1.000000e+30 : f32
    %79 = vector.broadcast %cst_23 : f32 to vector<24x24xf32>
    %80 = arith.select %78, %75, %79 : vector<24x24xi1>, vector<24x24xf32>
    %cst_24 = arith.constant dense<0xFF800000> : vector<24xf32>
    %81 = vector.multi_reduction <maximumf>, %80, %cst_24 [1] : vector<24x24xf32> to vector<24xf32>
    %82 = vector.shape_cast %81 : vector<24xf32> to vector<24x1xf32>
    %83 = vector.broadcast %82 : vector<24x1xf32> to vector<24x24xf32>
    %84 = arith.subf %80, %83 : vector<24x24xf32>
    %85 = math.exp %84 : vector<24x24xf32>
    %cst_25 = arith.constant dense<0.000000e+00> : vector<24xf32>
    %86 = vector.multi_reduction <add>, %85, %cst_25 [1] : vector<24x24xf32> to vector<24xf32>
    %87 = vector.shape_cast %86 : vector<24xf32> to vector<24x1xf32>
    %88 = tpu.reciprocal %87 {approx = true} : vector<24x1xf32> -> vector<24x1xf32>
    %89 = vector.broadcast %88 : vector<24x1xf32> to vector<24x24xf32>
    %90 = arith.mulf %85, %89 : vector<24x24xf32>
    %91 = arith.truncf %90 : vector<24x24xf32> to vector<24x24xbf16>
    %cst_26 = arith.constant dense<0.000000e+00> : vector<24x8xf32>
    %92 = tpu.matmul %91, %72, %cst_26 {dimension_numbers = #tpu.dot_dimension_numbers<[1], [0], [0], [1], [0, 0, 1, 1], [], []>} : vector<24x24xbf16>, vector<24x8xbf16>, vector<24x8xf32> -> vector<24x8xf32>
    %93 = tpu.concatenate %23, %46, %69, %92 in 1 : vector<24x8xf32>, vector<24x8xf32>, vector<24x8xf32>, vector<24x8xf32> -> vector<24x32xf32>
    %94 = arith.truncf %93 : vector<24x32xf32> to vector<24x32xbf16>
    %c0_27 = arith.constant 0 : index
    %c0_28 = arith.constant 0 : index
    %95 = vector.load %arg2[%c0_27, %c0_28] : memref<24x32xbf16, #tpu.memory_space<vmem>>, vector<24x32xbf16>
    tpu.vector_store %arg2[%c0_27, %c0_28], %94 {strides = array<i32>} : memref<24x32xbf16, #tpu.memory_space<vmem>>, vector<24x32xbf16>,
    return
  }
  func.func @transform_0(%arg0: i32) -> (i32, i32) {
    %c0_i32 = arith.constant 0 : i32
    %c0_i32_0 = arith.constant 0 : i32
    return %arg0, %c0_i32 : i32, i32
  }
  func.func @transform_1(%arg0: i32) -> (i32, i32) {
    %c0_i32 = arith.constant 0 : i32
    %c0_i32_0 = arith.constant 0 : i32
    return %arg0, %c0_i32 : i32, i32
  }
}

module attributes {stable_mosaic.version = 11 : i64} {
  func.func @_mm_kernel(%arg0: i32, %arg1: i32, %arg2: i32, %arg3: memref<48x32xf32, #tpu.memory_space<vmem>>, %arg4: memref<32x128xbf16, #tpu.memory_space<vmem>>, %arg5: memref<1x128xf32, #tpu.memory_space<vmem>>, %arg6: memref<1x32xf32, #tpu.memory_space<vmem>>, %arg7: memref<1x32xf32, #tpu.memory_space<vmem>>, %arg8: memref<48x128xbf16, #tpu.memory_space<vmem>>, %arg9: memref<48x128xf32, #tpu.memory_space<vmem>>) attributes {dimension_semantics = [#tpu.dimension_semantics<parallel>, #tpu.dimension_semantics<parallel>, #tpu.dimension_semantics<arbitrary>], iteration_bounds = array<i64: 1, 1, 1>, scalar_prefetch = 0 : i64, scratch_operands = 1 : i64, tpu.core_type = #tpu.core_type<tc>, window_params = [{transform_indices = @transform_0, window_bounds = array<i64: 48, 32>}, {transform_indices = @transform_1, window_bounds = array<i64: 32, 128>}, {transform_indices = @transform_2, window_bounds = array<i64: 1, 128>}, {pipeline_mode = #tpu.pipeline_mode<synchronous>, transform_indices = @transform_3, window_bounds = array<i64: 1, 32>}, {pipeline_mode = #tpu.pipeline_mode<synchronous>, transform_indices = @transform_4, window_bounds = array<i64: 1, 32>}, {transform_indices = @transform_5, window_bounds = array<i64: 48, 128>}]} {
    %c0_i32 = arith.constant 0 : i32
    %0 = arith.cmpi eq, %arg2, %c0_i32 : i32
    %1 = arith.extui %0 : i1 to i32
    %c0_i32_0 = arith.constant 0 : i32
    %2 = arith.cmpi ne, %1, %c0_i32_0 : i32
    scf.if %2 {
      %cst_19 = arith.constant 0.000000e+00 : f32
      %37 = vector.broadcast %cst_19 : f32 to vector<48x128xf32>
      %c0_20 = arith.constant 0 : index
      %c0_21 = arith.constant 0 : index
      %38 = vector.load %arg9[%c0_20, %c0_21] : memref<48x128xf32, #tpu.memory_space<vmem>>, vector<48x128xf32>
      tpu.vector_store %arg9[%c0_20, %c0_21], %37 {strides = array<i32>} : memref<48x128xf32, #tpu.memory_space<vmem>>, vector<48x128xf32>,
    } else {
    }
    %c0 = arith.constant 0 : index
    %c0_1 = arith.constant 0 : index
    %3 = vector.load %arg3[%c0, %c0_1] : memref<48x32xf32, #tpu.memory_space<vmem>>, vector<48x32xf32>
    %cst = arith.constant dense<0.000000e+00> : vector<48xf32>
    %4 = vector.multi_reduction <add>, %3, %cst [1] : vector<48x32xf32> to vector<48xf32>
    %5 = vector.shape_cast %4 : vector<48xf32> to vector<48x1xf32>
    %cst_2 = arith.constant 3.200000e+01 : f32
    %6 = vector.broadcast %cst_2 : f32 to vector<48x1xf32>
    %7 = arith.divf %5, %6 : vector<48x1xf32>
    %8 = vector.broadcast %7 : vector<48x1xf32> to vector<48x32xf32>
    %9 = arith.subf %3, %8 : vector<48x32xf32>
    %10 = arith.mulf %9, %9 : vector<48x32xf32>
    %cst_3 = arith.constant dense<0.000000e+00> : vector<48xf32>
    %11 = vector.multi_reduction <add>, %10, %cst_3 [1] : vector<48x32xf32> to vector<48xf32>
    %12 = vector.shape_cast %11 : vector<48xf32> to vector<48x1xf32>
    %cst_4 = arith.constant 3.200000e+01 : f32
    %13 = vector.broadcast %cst_4 : f32 to vector<48x1xf32>
    %14 = arith.divf %12, %13 : vector<48x1xf32>
    %15 = vector.broadcast %7 : vector<48x1xf32> to vector<48x32xf32>
    %16 = arith.subf %3, %15 : vector<48x32xf32>
    %cst_5 = arith.constant 9.99999997E-7 : f32
    %17 = vector.broadcast %cst_5 : f32 to vector<48x1xf32>
    %18 = arith.addf %14, %17 : vector<48x1xf32>
    %19 = math.rsqrt %18 : vector<48x1xf32>
    %20 = vector.broadcast %19 : vector<48x1xf32> to vector<48x32xf32>
    %21 = arith.mulf %16, %20 : vector<48x32xf32>
    %c0_6 = arith.constant 0 : index
    %c0_7 = arith.constant 0 : index
    %22 = vector.load %arg6[%c0_6, %c0_7] : memref<1x32xf32, #tpu.memory_space<vmem>>, vector<1x32xf32>
    %23 = vector.broadcast %22 : vector<1x32xf32> to vector<48x32xf32>
    %24 = arith.mulf %21, %23 : vector<48x32xf32>
    %c0_8 = arith.constant 0 : index
    %c0_9 = arith.constant 0 : index
    %25 = vector.load %arg7[%c0_8, %c0_9] : memref<1x32xf32, #tpu.memory_space<vmem>>, vector<1x32xf32>
    %26 = vector.broadcast %25 : vector<1x32xf32> to vector<48x32xf32>
    %27 = arith.addf %24, %26 : vector<48x32xf32>
    %28 = arith.truncf %27 : vector<48x32xf32> to vector<48x32xbf16>
    %c0_10 = arith.constant 0 : index
    %c0_11 = arith.constant 0 : index
    %29 = vector.load %arg9[%c0_10, %c0_11] : memref<48x128xf32, #tpu.memory_space<vmem>>, vector<48x128xf32>
    %c0_12 = arith.constant 0 : index
    %c0_13 = arith.constant 0 : index
    %30 = vector.load %arg4[%c0_12, %c0_13] : memref<32x128xbf16, #tpu.memory_space<vmem>>, vector<32x128xbf16>
    %cst_14 = arith.constant dense<0.000000e+00> : vector<48x128xf32>
    %31 = tpu.matmul %28, %30, %cst_14 {dimension_numbers = #tpu.dot_dimension_numbers<[1], [0], [0], [1], [0, 0, 1, 1], [], []>} : vector<48x32xbf16>, vector<32x128xbf16>, vector<48x128xf32> -> vector<48x128xf32>
    %32 = arith.addf %29, %31 : vector<48x128xf32>
    %c0_15 = arith.constant 0 : index
    %c0_16 = arith.constant 0 : index
    %33 = vector.load %arg9[%c0_15, %c0_16] : memref<48x128xf32, #tpu.memory_space<vmem>>, vector<48x128xf32>
    tpu.vector_store %arg9[%c0_15, %c0_16], %32 {strides = array<i32>} : memref<48x128xf32, #tpu.memory_space<vmem>>, vector<48x128xf32>,
    %c0_i32_17 = arith.constant 0 : i32
    %34 = arith.cmpi eq, %arg2, %c0_i32_17 : i32
    %35 = arith.extui %34 : i1 to i32
    %c0_i32_18 = arith.constant 0 : i32
    %36 = arith.cmpi ne, %35, %c0_i32_18 : i32
    scf.if %36 {
      %c0_19 = arith.constant 0 : index
      %c0_20 = arith.constant 0 : index
      %37 = vector.load %arg9[%c0_19, %c0_20] : memref<48x128xf32, #tpu.memory_space<vmem>>, vector<48x128xf32>
      %c0_21 = arith.constant 0 : index
      %c0_22 = arith.constant 0 : index
      %38 = vector.load %arg5[%c0_21, %c0_22] : memref<1x128xf32, #tpu.memory_space<vmem>>, vector<1x128xf32>
      %39 = vector.broadcast %38 : vector<1x128xf32> to vector<48x128xf32>
      %40 = arith.addf %37, %39 : vector<48x128xf32>
      %cst_23 = arith.constant 5.000000e-01 : f32
      %41 = vector.broadcast %cst_23 : f32 to vector<48x128xf32>
      %42 = arith.mulf %41, %40 : vector<48x128xf32>
      %cst_24 = arith.constant 4.471500e-02 : f32
      %43 = vector.broadcast %cst_24 : f32 to vector<48x128xf32>
      %44 = arith.mulf %43, %40 : vector<48x128xf32>
      %45 = arith.mulf %44, %40 : vector<48x128xf32>
      %46 = arith.mulf %45, %40 : vector<48x128xf32>
      %47 = arith.addf %40, %46 : vector<48x128xf32>
      %cst_25 = arith.constant 0.797884583 : f32
      %48 = vector.broadcast %cst_25 : f32 to vector<48x128xf32>
      %49 = arith.mulf %48, %47 : vector<48x128xf32>
      %50 = math.tanh %49 : vector<48x128xf32>
      %cst_26 = arith.constant 1.000000e+00 : f32
      %51 = vector.broadcast %cst_26 : f32 to vector<48x128xf32>
      %52 = arith.addf %51, %50 : vector<48x128xf32>
      %53 = arith.mulf %42, %52 : vector<48x128xf32>
      %54 = arith.truncf %53 : vector<48x128xf32> to vector<48x128xbf16>
      %c0_27 = arith.constant 0 : index
      %c0_28 = arith.constant 0 : index
      %55 = vector.load %arg8[%c0_27, %c0_28] : memref<48x128xbf16, #tpu.memory_space<vmem>>, vector<48x128xbf16>
      tpu.vector_store %arg8[%c0_27, %c0_28], %54 {strides = array<i32>} : memref<48x128xbf16, #tpu.memory_space<vmem>>, vector<48x128xbf16>,
    } else {
    }
    return
  }
  func.func @transform_0(%arg0: i32, %arg1: i32, %arg2: i32) -> (i32, i32) {
    %c0_i32 = arith.constant 0 : i32
    return %arg0, %arg2 : i32, i32
  }
  func.func @transform_1(%arg0: i32, %arg1: i32, %arg2: i32) -> (i32, i32) {
    %c0_i32 = arith.constant 0 : i32
    return %arg2, %arg1 : i32, i32
  }
  func.func @transform_2(%arg0: i32, %arg1: i32, %arg2: i32) -> (i32, i32) {
    %c0_i32 = arith.constant 0 : i32
    %c0_i32_0 = arith.constant 0 : i32
    return %c0_i32, %arg1 : i32, i32
  }
  func.func @transform_3(%arg0: i32, %arg1: i32, %arg2: i32) -> (i32, i32) {
    %c0_i32 = arith.constant 0 : i32
    %c0_i32_0 = arith.constant 0 : i32
    %c0_i32_1 = arith.constant 0 : i32
    return %c0_i32, %c0_i32_0 : i32, i32
  }
  func.func @transform_4(%arg0: i32, %arg1: i32, %arg2: i32) -> (i32, i32) {
    %c0_i32 = arith.constant 0 : i32
    %c0_i32_0 = arith.constant 0 : i32
    %c0_i32_1 = arith.constant 0 : i32
    return %c0_i32, %c0_i32_0 : i32, i32
  }
  func.func @transform_5(%arg0: i32, %arg1: i32, %arg2: i32) -> (i32, i32) {
    %c0_i32 = arith.constant 0 : i32
    return %arg0, %arg1 : i32, i32
  }
}

module attributes {stable_mosaic.version = 11 : i64} {
  func.func @_mm_kernel(%arg0: i32, %arg1: i32, %arg2: i32, %arg3: memref<48x128xbf16, #tpu.memory_space<vmem>>, %arg4: memref<128x128xbf16, #tpu.memory_space<vmem>>, %arg5: memref<1x128xf32, #tpu.memory_space<vmem>>, %arg6: memref<48x128xf32, #tpu.memory_space<vmem>>, %arg7: memref<48x128xf32, #tpu.memory_space<vmem>>, %arg8: memref<48x128xf32, #tpu.memory_space<vmem>>) attributes {dimension_semantics = [#tpu.dimension_semantics<parallel>, #tpu.dimension_semantics<parallel>, #tpu.dimension_semantics<arbitrary>], iteration_bounds = array<i64: 1, 1, 1>, scalar_prefetch = 0 : i64, scratch_operands = 1 : i64, tpu.core_type = #tpu.core_type<tc>, window_params = [{transform_indices = @transform_0, window_bounds = array<i64: 48, 128>}, {transform_indices = @transform_1, window_bounds = array<i64: 128, 128>}, {transform_indices = @transform_2, window_bounds = array<i64: 1, 128>}, {transform_indices = @transform_3, window_bounds = array<i64: 48, 128>}, {transform_indices = @transform_4, window_bounds = array<i64: 48, 128>}]} {
    %c0_i32 = arith.constant 0 : i32
    %0 = arith.cmpi eq, %arg2, %c0_i32 : i32
    %1 = arith.extui %0 : i1 to i32
    %c0_i32_0 = arith.constant 0 : i32
    %2 = arith.cmpi ne, %1, %c0_i32_0 : i32
    scf.if %2 {
      %cst_10 = arith.constant 0.000000e+00 : f32
      %12 = vector.broadcast %cst_10 : f32 to vector<48x128xf32>
      %c0_11 = arith.constant 0 : index
      %c0_12 = arith.constant 0 : index
      %13 = vector.load %arg8[%c0_11, %c0_12] : memref<48x128xf32, #tpu.memory_space<vmem>>, vector<48x128xf32>
      tpu.vector_store %arg8[%c0_11, %c0_12], %12 {strides = array<i32>} : memref<48x128xf32, #tpu.memory_space<vmem>>, vector<48x128xf32>,
    } else {
    }
    %c0 = arith.constant 0 : index
    %c0_1 = arith.constant 0 : index
    %3 = vector.load %arg3[%c0, %c0_1] : memref<48x128xbf16, #tpu.memory_space<vmem>>, vector<48x128xbf16>
    %c0_2 = arith.constant 0 : index
    %c0_3 = arith.constant 0 : index
    %4 = vector.load %arg8[%c0_2, %c0_3] : memref<48x128xf32, #tpu.memory_space<vmem>>, vector<48x128xf32>
    %c0_4 = arith.constant 0 : index
    %c0_5 = arith.constant 0 : index
    %5 = vector.load %arg4[%c0_4, %c0_5] : memref<128x128xbf16, #tpu.memory_space<vmem>>, vector<128x128xbf16>
    %cst = arith.constant dense<0.000000e+00> : vector<48x128xf32>
    %6 = tpu.matmul %3, %5, %cst {dimension_numbers = #tpu.dot_dimension_numbers<[1], [0], [0], [1], [0, 0, 1, 1], [], []>} : vector<48x128xbf16>, vector<128x128xbf16>, vector<48x128xf32> -> vector<48x128xf32>
    %7 = arith.addf %4, %6 : vector<48x128xf32>
    %c0_6 = arith.constant 0 : index
    %c0_7 = arith.constant 0 : index
    %8 = vector.load %arg8[%c0_6, %c0_7] : memref<48x128xf32, #tpu.memory_space<vmem>>, vector<48x128xf32>
    tpu.vector_store %arg8[%c0_6, %c0_7], %7 {strides = array<i32>} : memref<48x128xf32, #tpu.memory_space<vmem>>, vector<48x128xf32>,
    %c0_i32_8 = arith.constant 0 : i32
    %9 = arith.cmpi eq, %arg2, %c0_i32_8 : i32
    %10 = arith.extui %9 : i1 to i32
    %c0_i32_9 = arith.constant 0 : i32
    %11 = arith.cmpi ne, %10, %c0_i32_9 : i32
    scf.if %11 {
      %c0_10 = arith.constant 0 : index
      %c0_11 = arith.constant 0 : index
      %12 = vector.load %arg8[%c0_10, %c0_11] : memref<48x128xf32, #tpu.memory_space<vmem>>, vector<48x128xf32>
      %c0_12 = arith.constant 0 : index
      %c0_13 = arith.constant 0 : index
      %13 = vector.load %arg5[%c0_12, %c0_13] : memref<1x128xf32, #tpu.memory_space<vmem>>, vector<1x128xf32>
      %14 = vector.broadcast %13 : vector<1x128xf32> to vector<48x128xf32>
      %15 = arith.addf %12, %14 : vector<48x128xf32>
      %c0_14 = arith.constant 0 : index
      %c0_15 = arith.constant 0 : index
      %16 = vector.load %arg6[%c0_14, %c0_15] : memref<48x128xf32, #tpu.memory_space<vmem>>, vector<48x128xf32>
      %17 = arith.addf %15, %16 : vector<48x128xf32>
      %c0_16 = arith.constant 0 : index
      %c0_17 = arith.constant 0 : index
      %18 = vector.load %arg7[%c0_16, %c0_17] : memref<48x128xf32, #tpu.memory_space<vmem>>, vector<48x128xf32>
      tpu.vector_store %arg7[%c0_16, %c0_17], %17 {strides = array<i32>} : memref<48x128xf32, #tpu.memory_space<vmem>>, vector<48x128xf32>,
    } else {
    }
    return
  }
  func.func @transform_0(%arg0: i32, %arg1: i32, %arg2: i32) -> (i32, i32) {
    %c0_i32 = arith.constant 0 : i32
    return %arg0, %arg2 : i32, i32
  }
  func.func @transform_1(%arg0: i32, %arg1: i32, %arg2: i32) -> (i32, i32) {
    %c0_i32 = arith.constant 0 : i32
    return %arg2, %arg1 : i32, i32
  }
  func.func @transform_2(%arg0: i32, %arg1: i32, %arg2: i32) -> (i32, i32) {
    %c0_i32 = arith.constant 0 : i32
    %c0_i32_0 = arith.constant 0 : i32
    return %c0_i32, %arg1 : i32, i32
  }
  func.func @transform_3(%arg0: i32, %arg1: i32, %arg2: i32) -> (i32, i32) {
    %c0_i32 = arith.constant 0 : i32
    return %arg0, %arg1 : i32, i32
  }
  func.func @transform_4(%arg0: i32, %arg1: i32, %arg2: i32) -> (i32, i32) {
    %c0_i32 = arith.constant 0 : i32
    return %arg0, %arg1 : i32, i32
  }
}

module attributes {stable_mosaic.version = 11 : i64} {
  func.func @_mm_kernel(%arg0: i32, %arg1: i32, %arg2: i32, %arg3: memref<32x32xf32, #tpu.memory_space<vmem>>, %arg4: memref<32x128xbf16, #tpu.memory_space<vmem>>, %arg5: memref<1x128xf32, #tpu.memory_space<vmem>>, %arg6: memref<1x32xf32, #tpu.memory_space<vmem>>, %arg7: memref<1x32xf32, #tpu.memory_space<vmem>>, %arg8: memref<32x128xbf16, #tpu.memory_space<vmem>>, %arg9: memref<32x128xf32, #tpu.memory_space<vmem>>) attributes {dimension_semantics = [#tpu.dimension_semantics<parallel>, #tpu.dimension_semantics<parallel>, #tpu.dimension_semantics<arbitrary>], iteration_bounds = array<i64: 1, 1, 1>, scalar_prefetch = 0 : i64, scratch_operands = 1 : i64, tpu.core_type = #tpu.core_type<tc>, window_params = [{transform_indices = @transform_0, window_bounds = array<i64: 32, 32>}, {transform_indices = @transform_1, window_bounds = array<i64: 32, 128>}, {transform_indices = @transform_2, window_bounds = array<i64: 1, 128>}, {pipeline_mode = #tpu.pipeline_mode<synchronous>, transform_indices = @transform_3, window_bounds = array<i64: 1, 32>}, {pipeline_mode = #tpu.pipeline_mode<synchronous>, transform_indices = @transform_4, window_bounds = array<i64: 1, 32>}, {transform_indices = @transform_5, window_bounds = array<i64: 32, 128>}]} {
    %c0_i32 = arith.constant 0 : i32
    %0 = arith.cmpi eq, %arg2, %c0_i32 : i32
    %1 = arith.extui %0 : i1 to i32
    %c0_i32_0 = arith.constant 0 : i32
    %2 = arith.cmpi ne, %1, %c0_i32_0 : i32
    scf.if %2 {
      %cst_19 = arith.constant 0.000000e+00 : f32
      %37 = vector.broadcast %cst_19 : f32 to vector<32x128xf32>
      %c0_20 = arith.constant 0 : index
      %c0_21 = arith.constant 0 : index
      %38 = vector.load %arg9[%c0_20, %c0_21] : memref<32x128xf32, #tpu.memory_space<vmem>>, vector<32x128xf32>
      tpu.vector_store %arg9[%c0_20, %c0_21], %37 {strides = array<i32>} : memref<32x128xf32, #tpu.memory_space<vmem>>, vector<32x128xf32>,
    } else {
    }
    %c0 = arith.constant 0 : index
    %c0_1 = arith.constant 0 : index
    %3 = vector.load %arg3[%c0, %c0_1] : memref<32x32xf32, #tpu.memory_space<vmem>>, vector<32x32xf32>
    %cst = arith.constant dense<0.000000e+00> : vector<32xf32>
    %4 = vector.multi_reduction <add>, %3, %cst [1] : vector<32x32xf32> to vector<32xf32>
    %5 = vector.shape_cast %4 : vector<32xf32> to vector<32x1xf32>
    %cst_2 = arith.constant 3.200000e+01 : f32
    %6 = vector.broadcast %cst_2 : f32 to vector<32x1xf32>
    %7 = arith.divf %5, %6 : vector<32x1xf32>
    %8 = vector.broadcast %7 : vector<32x1xf32> to vector<32x32xf32>
    %9 = arith.subf %3, %8 : vector<32x32xf32>
    %10 = arith.mulf %9, %9 : vector<32x32xf32>
    %cst_3 = arith.constant dense<0.000000e+00> : vector<32xf32>
    %11 = vector.multi_reduction <add>, %10, %cst_3 [1] : vector<32x32xf32> to vector<32xf32>
    %12 = vector.shape_cast %11 : vector<32xf32> to vector<32x1xf32>
    %cst_4 = arith.constant 3.200000e+01 : f32
    %13 = vector.broadcast %cst_4 : f32 to vector<32x1xf32>
    %14 = arith.divf %12, %13 : vector<32x1xf32>
    %15 = vector.broadcast %7 : vector<32x1xf32> to vector<32x32xf32>
    %16 = arith.subf %3, %15 : vector<32x32xf32>
    %cst_5 = arith.constant 9.99999997E-7 : f32
    %17 = vector.broadcast %cst_5 : f32 to vector<32x1xf32>
    %18 = arith.addf %14, %17 : vector<32x1xf32>
    %19 = math.rsqrt %18 : vector<32x1xf32>
    %20 = vector.broadcast %19 : vector<32x1xf32> to vector<32x32xf32>
    %21 = arith.mulf %16, %20 : vector<32x32xf32>
    %c0_6 = arith.constant 0 : index
    %c0_7 = arith.constant 0 : index
    %22 = vector.load %arg6[%c0_6, %c0_7] : memref<1x32xf32, #tpu.memory_space<vmem>>, vector<1x32xf32>
    %23 = vector.broadcast %22 : vector<1x32xf32> to vector<32x32xf32>
    %24 = arith.mulf %21, %23 : vector<32x32xf32>
    %c0_8 = arith.constant 0 : index
    %c0_9 = arith.constant 0 : index
    %25 = vector.load %arg7[%c0_8, %c0_9] : memref<1x32xf32, #tpu.memory_space<vmem>>, vector<1x32xf32>
    %26 = vector.broadcast %25 : vector<1x32xf32> to vector<32x32xf32>
    %27 = arith.addf %24, %26 : vector<32x32xf32>
    %28 = arith.truncf %27 : vector<32x32xf32> to vector<32x32xbf16>
    %c0_10 = arith.constant 0 : index
    %c0_11 = arith.constant 0 : index
    %29 = vector.load %arg9[%c0_10, %c0_11] : memref<32x128xf32, #tpu.memory_space<vmem>>, vector<32x128xf32>
    %c0_12 = arith.constant 0 : index
    %c0_13 = arith.constant 0 : index
    %30 = vector.load %arg4[%c0_12, %c0_13] : memref<32x128xbf16, #tpu.memory_space<vmem>>, vector<32x128xbf16>
    %cst_14 = arith.constant dense<0.000000e+00> : vector<32x128xf32>
    %31 = tpu.matmul %28, %30, %cst_14 {dimension_numbers = #tpu.dot_dimension_numbers<[1], [0], [0], [1], [0, 0, 1, 1], [], []>} : vector<32x32xbf16>, vector<32x128xbf16>, vector<32x128xf32> -> vector<32x128xf32>
    %32 = arith.addf %29, %31 : vector<32x128xf32>
    %c0_15 = arith.constant 0 : index
    %c0_16 = arith.constant 0 : index
    %33 = vector.load %arg9[%c0_15, %c0_16] : memref<32x128xf32, #tpu.memory_space<vmem>>, vector<32x128xf32>
    tpu.vector_store %arg9[%c0_15, %c0_16], %32 {strides = array<i32>} : memref<32x128xf32, #tpu.memory_space<vmem>>, vector<32x128xf32>,
    %c0_i32_17 = arith.constant 0 : i32
    %34 = arith.cmpi eq, %arg2, %c0_i32_17 : i32
    %35 = arith.extui %34 : i1 to i32
    %c0_i32_18 = arith.constant 0 : i32
    %36 = arith.cmpi ne, %35, %c0_i32_18 : i32
    scf.if %36 {
      %c0_19 = arith.constant 0 : index
      %c0_20 = arith.constant 0 : index
      %37 = vector.load %arg9[%c0_19, %c0_20] : memref<32x128xf32, #tpu.memory_space<vmem>>, vector<32x128xf32>
      %c0_21 = arith.constant 0 : index
      %c0_22 = arith.constant 0 : index
      %38 = vector.load %arg5[%c0_21, %c0_22] : memref<1x128xf32, #tpu.memory_space<vmem>>, vector<1x128xf32>
      %39 = vector.broadcast %38 : vector<1x128xf32> to vector<32x128xf32>
      %40 = arith.addf %37, %39 : vector<32x128xf32>
      %cst_23 = arith.constant 0.000000e+00 : f32
      %41 = vector.broadcast %cst_23 : f32 to vector<32x128xf32>
      %42 = arith.maximumf %40, %41 : vector<32x128xf32>
      %43 = arith.truncf %42 : vector<32x128xf32> to vector<32x128xbf16>
      %c0_24 = arith.constant 0 : index
      %c0_25 = arith.constant 0 : index
      %44 = vector.load %arg8[%c0_24, %c0_25] : memref<32x128xbf16, #tpu.memory_space<vmem>>, vector<32x128xbf16>
      tpu.vector_store %arg8[%c0_24, %c0_25], %43 {strides = array<i32>} : memref<32x128xbf16, #tpu.memory_space<vmem>>, vector<32x128xbf16>,
    } else {
    }
    return
  }
  func.func @transform_0(%arg0: i32, %arg1: i32, %arg2: i32) -> (i32, i32) {
    %c0_i32 = arith.constant 0 : i32
    return %arg0, %arg2 : i32, i32
  }
  func.func @transform_1(%arg0: i32, %arg1: i32, %arg2: i32) -> (i32, i32) {
    %c0_i32 = arith.constant 0 : i32
    return %arg2, %arg1 : i32, i32
  }
  func.func @transform_2(%arg0: i32, %arg1: i32, %arg2: i32) -> (i32, i32) {
    %c0_i32 = arith.constant 0 : i32
    %c0_i32_0 = arith.constant 0 : i32
    return %c0_i32, %arg1 : i32, i32
  }
  func.func @transform_3(%arg0: i32, %arg1: i32, %arg2: i32) -> (i32, i32) {
    %c0_i32 = arith.constant 0 : i32
    %c0_i32_0 = arith.constant 0 : i32
    %c0_i32_1 = arith.constant 0 : i32
    return %c0_i32, %c0_i32_0 : i32, i32
  }
  func.func @transform_4(%arg0: i32, %arg1: i32, %arg2: i32) -> (i32, i32) {
    %c0_i32 = arith.constant 0 : i32
    %c0_i32_0 = arith.constant 0 : i32
    %c0_i32_1 = arith.constant 0 : i32
    return %c0_i32, %c0_i32_0 : i32, i32
  }
  func.func @transform_5(%arg0: i32, %arg1: i32, %arg2: i32) -> (i32, i32) {
    %c0_i32 = arith.constant 0 : i32
    return %arg0, %arg1 : i32, i32
  }
}

module attributes {stable_mosaic.version = 11 : i64} {
  func.func @_mm_kernel(%arg0: i32, %arg1: i32, %arg2: i32, %arg3: memref<128x32xbf16, #tpu.memory_space<vmem>>, %arg4: memref<32x128xbf16, #tpu.memory_space<vmem>>, %arg5: memref<1x128xf32, #tpu.memory_space<vmem>>, %arg6: memref<128x128xbf16, #tpu.memory_space<vmem>>, %arg7: memref<128x128xf32, #tpu.memory_space<vmem>>) attributes {dimension_semantics = [#tpu.dimension_semantics<parallel>, #tpu.dimension_semantics<parallel>, #tpu.dimension_semantics<arbitrary>], iteration_bounds = array<i64: 1, 1, 1>, scalar_prefetch = 0 : i64, scratch_operands = 1 : i64, tpu.core_type = #tpu.core_type<tc>, window_params = [{transform_indices = @transform_0, window_bounds = array<i64: 128, 32>}, {transform_indices = @transform_1, window_bounds = array<i64: 32, 128>}, {transform_indices = @transform_2, window_bounds = array<i64: 1, 128>}, {transform_indices = @transform_3, window_bounds = array<i64: 128, 128>}]} {
    %c0_i32 = arith.constant 0 : i32
    %0 = arith.cmpi eq, %arg2, %c0_i32 : i32
    %1 = arith.extui %0 : i1 to i32
    %c0_i32_0 = arith.constant 0 : i32
    %2 = arith.cmpi ne, %1, %c0_i32_0 : i32
    scf.if %2 {
      %cst_10 = arith.constant 0.000000e+00 : f32
      %12 = vector.broadcast %cst_10 : f32 to vector<128x128xf32>
      %c0_11 = arith.constant 0 : index
      %c0_12 = arith.constant 0 : index
      %13 = vector.load %arg7[%c0_11, %c0_12] : memref<128x128xf32, #tpu.memory_space<vmem>>, vector<128x128xf32>
      tpu.vector_store %arg7[%c0_11, %c0_12], %12 {strides = array<i32>} : memref<128x128xf32, #tpu.memory_space<vmem>>, vector<128x128xf32>,
    } else {
    }
    %c0 = arith.constant 0 : index
    %c0_1 = arith.constant 0 : index
    %3 = vector.load %arg3[%c0, %c0_1] : memref<128x32xbf16, #tpu.memory_space<vmem>>, vector<128x32xbf16>
    %c0_2 = arith.constant 0 : index
    %c0_3 = arith.constant 0 : index
    %4 = vector.load %arg7[%c0_2, %c0_3] : memref<128x128xf32, #tpu.memory_space<vmem>>, vector<128x128xf32>
    %c0_4 = arith.constant 0 : index
    %c0_5 = arith.constant 0 : index
    %5 = vector.load %arg4[%c0_4, %c0_5] : memref<32x128xbf16, #tpu.memory_space<vmem>>, vector<32x128xbf16>
    %cst = arith.constant dense<0.000000e+00> : vector<128x128xf32>
    %6 = tpu.matmul %3, %5, %cst {dimension_numbers = #tpu.dot_dimension_numbers<[1], [0], [0], [1], [0, 0, 1, 1], [], []>} : vector<128x32xbf16>, vector<32x128xbf16>, vector<128x128xf32> -> vector<128x128xf32>
    %7 = arith.addf %4, %6 : vector<128x128xf32>
    %c0_6 = arith.constant 0 : index
    %c0_7 = arith.constant 0 : index
    %8 = vector.load %arg7[%c0_6, %c0_7] : memref<128x128xf32, #tpu.memory_space<vmem>>, vector<128x128xf32>
    tpu.vector_store %arg7[%c0_6, %c0_7], %7 {strides = array<i32>} : memref<128x128xf32, #tpu.memory_space<vmem>>, vector<128x128xf32>,
    %c0_i32_8 = arith.constant 0 : i32
    %9 = arith.cmpi eq, %arg2, %c0_i32_8 : i32
    %10 = arith.extui %9 : i1 to i32
    %c0_i32_9 = arith.constant 0 : i32
    %11 = arith.cmpi ne, %10, %c0_i32_9 : i32
    scf.if %11 {
      %c0_10 = arith.constant 0 : index
      %c0_11 = arith.constant 0 : index
      %12 = vector.load %arg7[%c0_10, %c0_11] : memref<128x128xf32, #tpu.memory_space<vmem>>, vector<128x128xf32>
      %c0_12 = arith.constant 0 : index
      %c0_13 = arith.constant 0 : index
      %13 = vector.load %arg5[%c0_12, %c0_13] : memref<1x128xf32, #tpu.memory_space<vmem>>, vector<1x128xf32>
      %14 = vector.broadcast %13 : vector<1x128xf32> to vector<128x128xf32>
      %15 = arith.addf %12, %14 : vector<128x128xf32>
      %cst_14 = arith.constant 0.000000e+00 : f32
      %16 = vector.broadcast %cst_14 : f32 to vector<128x128xf32>
      %17 = arith.maximumf %15, %16 : vector<128x128xf32>
      %18 = arith.truncf %17 : vector<128x128xf32> to vector<128x128xbf16>
      %c0_15 = arith.constant 0 : index
      %c0_16 = arith.constant 0 : index
      %19 = vector.load %arg6[%c0_15, %c0_16] : memref<128x128xbf16, #tpu.memory_space<vmem>>, vector<128x128xbf16>
      tpu.vector_store %arg6[%c0_15, %c0_16], %18 {strides = array<i32>} : memref<128x128xbf16, #tpu.memory_space<vmem>>, vector<128x128xbf16>,
    } else {
    }
    return
  }
  func.func @transform_0(%arg0: i32, %arg1: i32, %arg2: i32) -> (i32, i32) {
    %c0_i32 = arith.constant 0 : i32
    return %arg0, %arg2 : i32, i32
  }
  func.func @transform_1(%arg0: i32, %arg1: i32, %arg2: i32) -> (i32, i32) {
    %c0_i32 = arith.constant 0 : i32
    return %arg2, %arg1 : i32, i32
  }
  func.func @transform_2(%arg0: i32, %arg1: i32, %arg2: i32) -> (i32, i32) {
    %c0_i32 = arith.constant 0 : i32
    %c0_i32_0 = arith.constant 0 : i32
    return %c0_i32, %arg1 : i32, i32
  }
  func.func @transform_3(%arg0: i32, %arg1: i32, %arg2: i32) -> (i32, i32) {
    %c0_i32 = arith.constant 0 : i32
    return %arg0, %arg1 : i32, i32
  }
}

module attributes {stable_mosaic.version = 11 : i64} {
  func.func @_mm_kernel(%arg0: i32, %arg1: i32, %arg2: i32, %arg3: memref<512x16xbf16, #tpu.memory_space<vmem>>, %arg4: memref<16x128xbf16, #tpu.memory_space<vmem>>, %arg5: memref<1x128xf32, #tpu.memory_space<vmem>>, %arg6: memref<512x128xbf16, #tpu.memory_space<vmem>>, %arg7: memref<512x128xf32, #tpu.memory_space<vmem>>) attributes {dimension_semantics = [#tpu.dimension_semantics<parallel>, #tpu.dimension_semantics<parallel>, #tpu.dimension_semantics<arbitrary>], iteration_bounds = array<i64: 1, 1, 1>, scalar_prefetch = 0 : i64, scratch_operands = 1 : i64, tpu.core_type = #tpu.core_type<tc>, window_params = [{transform_indices = @transform_0, window_bounds = array<i64: 512, 16>}, {transform_indices = @transform_1, window_bounds = array<i64: 16, 128>}, {transform_indices = @transform_2, window_bounds = array<i64: 1, 128>}, {transform_indices = @transform_3, window_bounds = array<i64: 512, 128>}]} {
    %c0_i32 = arith.constant 0 : i32
    %0 = arith.cmpi eq, %arg2, %c0_i32 : i32
    %1 = arith.extui %0 : i1 to i32
    %c0_i32_0 = arith.constant 0 : i32
    %2 = arith.cmpi ne, %1, %c0_i32_0 : i32
    scf.if %2 {
      %cst_10 = arith.constant 0.000000e+00 : f32
      %12 = vector.broadcast %cst_10 : f32 to vector<512x128xf32>
      %c0_11 = arith.constant 0 : index
      %c0_12 = arith.constant 0 : index
      %13 = vector.load %arg7[%c0_11, %c0_12] : memref<512x128xf32, #tpu.memory_space<vmem>>, vector<512x128xf32>
      tpu.vector_store %arg7[%c0_11, %c0_12], %12 {strides = array<i32>} : memref<512x128xf32, #tpu.memory_space<vmem>>, vector<512x128xf32>,
    } else {
    }
    %c0 = arith.constant 0 : index
    %c0_1 = arith.constant 0 : index
    %3 = vector.load %arg3[%c0, %c0_1] : memref<512x16xbf16, #tpu.memory_space<vmem>>, vector<512x16xbf16>
    %c0_2 = arith.constant 0 : index
    %c0_3 = arith.constant 0 : index
    %4 = vector.load %arg7[%c0_2, %c0_3] : memref<512x128xf32, #tpu.memory_space<vmem>>, vector<512x128xf32>
    %c0_4 = arith.constant 0 : index
    %c0_5 = arith.constant 0 : index
    %5 = vector.load %arg4[%c0_4, %c0_5] : memref<16x128xbf16, #tpu.memory_space<vmem>>, vector<16x128xbf16>
    %cst = arith.constant dense<0.000000e+00> : vector<512x128xf32>
    %6 = tpu.matmul %3, %5, %cst {dimension_numbers = #tpu.dot_dimension_numbers<[1], [0], [0], [1], [0, 0, 1, 1], [], []>} : vector<512x16xbf16>, vector<16x128xbf16>, vector<512x128xf32> -> vector<512x128xf32>
    %7 = arith.addf %4, %6 : vector<512x128xf32>
    %c0_6 = arith.constant 0 : index
    %c0_7 = arith.constant 0 : index
    %8 = vector.load %arg7[%c0_6, %c0_7] : memref<512x128xf32, #tpu.memory_space<vmem>>, vector<512x128xf32>
    tpu.vector_store %arg7[%c0_6, %c0_7], %7 {strides = array<i32>} : memref<512x128xf32, #tpu.memory_space<vmem>>, vector<512x128xf32>,
    %c0_i32_8 = arith.constant 0 : i32
    %9 = arith.cmpi eq, %arg2, %c0_i32_8 : i32
    %10 = arith.extui %9 : i1 to i32
    %c0_i32_9 = arith.constant 0 : i32
    %11 = arith.cmpi ne, %10, %c0_i32_9 : i32
    scf.if %11 {
      %c0_10 = arith.constant 0 : index
      %c0_11 = arith.constant 0 : index
      %12 = vector.load %arg7[%c0_10, %c0_11] : memref<512x128xf32, #tpu.memory_space<vmem>>, vector<512x128xf32>
      %c0_12 = arith.constant 0 : index
      %c0_13 = arith.constant 0 : index
      %13 = vector.load %arg5[%c0_12, %c0_13] : memref<1x128xf32, #tpu.memory_space<vmem>>, vector<1x128xf32>
      %14 = vector.broadcast %13 : vector<1x128xf32> to vector<512x128xf32>
      %15 = arith.addf %12, %14 : vector<512x128xf32>
      %cst_14 = arith.constant 0.000000e+00 : f32
      %16 = vector.broadcast %cst_14 : f32 to vector<512x128xf32>
      %17 = arith.maximumf %15, %16 : vector<512x128xf32>
      %18 = arith.truncf %17 : vector<512x128xf32> to vector<512x128xbf16>
      %c0_15 = arith.constant 0 : index
      %c0_16 = arith.constant 0 : index
      %19 = vector.load %arg6[%c0_15, %c0_16] : memref<512x128xbf16, #tpu.memory_space<vmem>>, vector<512x128xbf16>
      tpu.vector_store %arg6[%c0_15, %c0_16], %18 {strides = array<i32>} : memref<512x128xbf16, #tpu.memory_space<vmem>>, vector<512x128xbf16>,
    } else {
    }
    return
  }
  func.func @transform_0(%arg0: i32, %arg1: i32, %arg2: i32) -> (i32, i32) {
    %c0_i32 = arith.constant 0 : i32
    return %arg0, %arg2 : i32, i32
  }
  func.func @transform_1(%arg0: i32, %arg1: i32, %arg2: i32) -> (i32, i32) {
    %c0_i32 = arith.constant 0 : i32
    return %arg2, %arg1 : i32, i32
  }
  func.func @transform_2(%arg0: i32, %arg1: i32, %arg2: i32) -> (i32, i32) {
    %c0_i32 = arith.constant 0 : i32
    %c0_i32_0 = arith.constant 0 : i32
    return %c0_i32, %arg1 : i32, i32
  }
  func.func @transform_3(%arg0: i32, %arg1: i32, %arg2: i32) -> (i32, i32) {
    %c0_i32 = arith.constant 0 : i32
    return %arg0, %arg1 : i32, i32
  }
}

module attributes {stable_mosaic.version = 11 : i64} {
  func.func @_mm_kernel(%arg0: i32, %arg1: i32, %arg2: i32, %arg3: memref<512x8xbf16, #tpu.memory_space<vmem>>, %arg4: memref<8x128xbf16, #tpu.memory_space<vmem>>, %arg5: memref<1x128xf32, #tpu.memory_space<vmem>>, %arg6: memref<512x128xbf16, #tpu.memory_space<vmem>>, %arg7: memref<512x128xf32, #tpu.memory_space<vmem>>) attributes {dimension_semantics = [#tpu.dimension_semantics<parallel>, #tpu.dimension_semantics<parallel>, #tpu.dimension_semantics<arbitrary>], iteration_bounds = array<i64: 4, 1, 1>, scalar_prefetch = 0 : i64, scratch_operands = 1 : i64, tpu.core_type = #tpu.core_type<tc>, window_params = [{transform_indices = @transform_0, window_bounds = array<i64: 512, 8>}, {transform_indices = @transform_1, window_bounds = array<i64: 8, 128>}, {transform_indices = @transform_2, window_bounds = array<i64: 1, 128>}, {transform_indices = @transform_3, window_bounds = array<i64: 512, 128>}]} {
    %c0_i32 = arith.constant 0 : i32
    %0 = arith.cmpi eq, %arg2, %c0_i32 : i32
    %1 = arith.extui %0 : i1 to i32
    %c0_i32_0 = arith.constant 0 : i32
    %2 = arith.cmpi ne, %1, %c0_i32_0 : i32
    scf.if %2 {
      %cst_10 = arith.constant 0.000000e+00 : f32
      %12 = vector.broadcast %cst_10 : f32 to vector<512x128xf32>
      %c0_11 = arith.constant 0 : index
      %c0_12 = arith.constant 0 : index
      %13 = vector.load %arg7[%c0_11, %c0_12] : memref<512x128xf32, #tpu.memory_space<vmem>>, vector<512x128xf32>
      tpu.vector_store %arg7[%c0_11, %c0_12], %12 {strides = array<i32>} : memref<512x128xf32, #tpu.memory_space<vmem>>, vector<512x128xf32>,
    } else {
    }
    %c0 = arith.constant 0 : index
    %c0_1 = arith.constant 0 : index
    %3 = vector.load %arg3[%c0, %c0_1] : memref<512x8xbf16, #tpu.memory_space<vmem>>, vector<512x8xbf16>
    %c0_2 = arith.constant 0 : index
    %c0_3 = arith.constant 0 : index
    %4 = vector.load %arg7[%c0_2, %c0_3] : memref<512x128xf32, #tpu.memory_space<vmem>>, vector<512x128xf32>
    %c0_4 = arith.constant 0 : index
    %c0_5 = arith.constant 0 : index
    %5 = vector.load %arg4[%c0_4, %c0_5] : memref<8x128xbf16, #tpu.memory_space<vmem>>, vector<8x128xbf16>
    %cst = arith.constant dense<0.000000e+00> : vector<512x128xf32>
    %6 = tpu.matmul %3, %5, %cst {dimension_numbers = #tpu.dot_dimension_numbers<[1], [0], [0], [1], [0, 0, 1, 1], [], []>} : vector<512x8xbf16>, vector<8x128xbf16>, vector<512x128xf32> -> vector<512x128xf32>
    %7 = arith.addf %4, %6 : vector<512x128xf32>
    %c0_6 = arith.constant 0 : index
    %c0_7 = arith.constant 0 : index
    %8 = vector.load %arg7[%c0_6, %c0_7] : memref<512x128xf32, #tpu.memory_space<vmem>>, vector<512x128xf32>
    tpu.vector_store %arg7[%c0_6, %c0_7], %7 {strides = array<i32>} : memref<512x128xf32, #tpu.memory_space<vmem>>, vector<512x128xf32>,
    %c0_i32_8 = arith.constant 0 : i32
    %9 = arith.cmpi eq, %arg2, %c0_i32_8 : i32
    %10 = arith.extui %9 : i1 to i32
    %c0_i32_9 = arith.constant 0 : i32
    %11 = arith.cmpi ne, %10, %c0_i32_9 : i32
    scf.if %11 {
      %c0_10 = arith.constant 0 : index
      %c0_11 = arith.constant 0 : index
      %12 = vector.load %arg7[%c0_10, %c0_11] : memref<512x128xf32, #tpu.memory_space<vmem>>, vector<512x128xf32>
      %c0_12 = arith.constant 0 : index
      %c0_13 = arith.constant 0 : index
      %13 = vector.load %arg5[%c0_12, %c0_13] : memref<1x128xf32, #tpu.memory_space<vmem>>, vector<1x128xf32>
      %14 = vector.broadcast %13 : vector<1x128xf32> to vector<512x128xf32>
      %15 = arith.addf %12, %14 : vector<512x128xf32>
      %cst_14 = arith.constant 0.000000e+00 : f32
      %16 = vector.broadcast %cst_14 : f32 to vector<512x128xf32>
      %17 = arith.maximumf %15, %16 : vector<512x128xf32>
      %18 = arith.truncf %17 : vector<512x128xf32> to vector<512x128xbf16>
      %c0_15 = arith.constant 0 : index
      %c0_16 = arith.constant 0 : index
      %19 = vector.load %arg6[%c0_15, %c0_16] : memref<512x128xbf16, #tpu.memory_space<vmem>>, vector<512x128xbf16>
      tpu.vector_store %arg6[%c0_15, %c0_16], %18 {strides = array<i32>} : memref<512x128xbf16, #tpu.memory_space<vmem>>, vector<512x128xbf16>,
    } else {
    }
    return
  }
  func.func @transform_0(%arg0: i32, %arg1: i32, %arg2: i32) -> (i32, i32) {
    %c0_i32 = arith.constant 0 : i32
    return %arg0, %arg2 : i32, i32
  }
  func.func @transform_1(%arg0: i32, %arg1: i32, %arg2: i32) -> (i32, i32) {
    %c0_i32 = arith.constant 0 : i32
    return %arg2, %arg1 : i32, i32
  }
  func.func @transform_2(%arg0: i32, %arg1: i32, %arg2: i32) -> (i32, i32) {
    %c0_i32 = arith.constant 0 : i32
    %c0_i32_0 = arith.constant 0 : i32
    return %c0_i32, %arg1 : i32, i32
  }
  func.func @transform_3(%arg0: i32, %arg1: i32, %arg2: i32) -> (i32, i32) {
    %c0_i32 = arith.constant 0 : i32
    return %arg0, %arg1 : i32, i32
  }
}

module attributes {stable_mosaic.version = 11 : i64} {
  func.func @_mm_kernel(%arg0: i32, %arg1: i32, %arg2: i32, %arg3: memref<512x8xbf16, #tpu.memory_space<vmem>>, %arg4: memref<8x128xbf16, #tpu.memory_space<vmem>>, %arg5: memref<1x128xf32, #tpu.memory_space<vmem>>, %arg6: memref<512x128xf32, #tpu.memory_space<vmem>>, %arg7: memref<512x128xf32, #tpu.memory_space<vmem>>) attributes {dimension_semantics = [#tpu.dimension_semantics<parallel>, #tpu.dimension_semantics<parallel>, #tpu.dimension_semantics<arbitrary>], iteration_bounds = array<i64: 16, 1, 1>, scalar_prefetch = 0 : i64, scratch_operands = 1 : i64, tpu.core_type = #tpu.core_type<tc>, window_params = [{transform_indices = @transform_0, window_bounds = array<i64: 512, 8>}, {transform_indices = @transform_1, window_bounds = array<i64: 8, 128>}, {transform_indices = @transform_2, window_bounds = array<i64: 1, 128>}, {transform_indices = @transform_3, window_bounds = array<i64: 512, 128>}]} {
    %c0_i32 = arith.constant 0 : i32
    %0 = arith.cmpi eq, %arg2, %c0_i32 : i32
    %1 = arith.extui %0 : i1 to i32
    %c0_i32_0 = arith.constant 0 : i32
    %2 = arith.cmpi ne, %1, %c0_i32_0 : i32
    scf.if %2 {
      %cst_10 = arith.constant 0.000000e+00 : f32
      %12 = vector.broadcast %cst_10 : f32 to vector<512x128xf32>
      %c0_11 = arith.constant 0 : index
      %c0_12 = arith.constant 0 : index
      %13 = vector.load %arg7[%c0_11, %c0_12] : memref<512x128xf32, #tpu.memory_space<vmem>>, vector<512x128xf32>
      tpu.vector_store %arg7[%c0_11, %c0_12], %12 {strides = array<i32>} : memref<512x128xf32, #tpu.memory_space<vmem>>, vector<512x128xf32>,
    } else {
    }
    %c0 = arith.constant 0 : index
    %c0_1 = arith.constant 0 : index
    %3 = vector.load %arg3[%c0, %c0_1] : memref<512x8xbf16, #tpu.memory_space<vmem>>, vector<512x8xbf16>
    %c0_2 = arith.constant 0 : index
    %c0_3 = arith.constant 0 : index
    %4 = vector.load %arg7[%c0_2, %c0_3] : memref<512x128xf32, #tpu.memory_space<vmem>>, vector<512x128xf32>
    %c0_4 = arith.constant 0 : index
    %c0_5 = arith.constant 0 : index
    %5 = vector.load %arg4[%c0_4, %c0_5] : memref<8x128xbf16, #tpu.memory_space<vmem>>, vector<8x128xbf16>
    %cst = arith.constant dense<0.000000e+00> : vector<512x128xf32>
    %6 = tpu.matmul %3, %5, %cst {dimension_numbers = #tpu.dot_dimension_numbers<[1], [0], [0], [1], [0, 0, 1, 1], [], []>} : vector<512x8xbf16>, vector<8x128xbf16>, vector<512x128xf32> -> vector<512x128xf32>
    %7 = arith.addf %4, %6 : vector<512x128xf32>
    %c0_6 = arith.constant 0 : index
    %c0_7 = arith.constant 0 : index
    %8 = vector.load %arg7[%c0_6, %c0_7] : memref<512x128xf32, #tpu.memory_space<vmem>>, vector<512x128xf32>
    tpu.vector_store %arg7[%c0_6, %c0_7], %7 {strides = array<i32>} : memref<512x128xf32, #tpu.memory_space<vmem>>, vector<512x128xf32>,
    %c0_i32_8 = arith.constant 0 : i32
    %9 = arith.cmpi eq, %arg2, %c0_i32_8 : i32
    %10 = arith.extui %9 : i1 to i32
    %c0_i32_9 = arith.constant 0 : i32
    %11 = arith.cmpi ne, %10, %c0_i32_9 : i32
    scf.if %11 {
      %c0_10 = arith.constant 0 : index
      %c0_11 = arith.constant 0 : index
      %12 = vector.load %arg7[%c0_10, %c0_11] : memref<512x128xf32, #tpu.memory_space<vmem>>, vector<512x128xf32>
      %c0_12 = arith.constant 0 : index
      %c0_13 = arith.constant 0 : index
      %13 = vector.load %arg5[%c0_12, %c0_13] : memref<1x128xf32, #tpu.memory_space<vmem>>, vector<1x128xf32>
      %14 = vector.broadcast %13 : vector<1x128xf32> to vector<512x128xf32>
      %15 = arith.addf %12, %14 : vector<512x128xf32>
      %c0_14 = arith.constant 0 : index
      %c0_15 = arith.constant 0 : index
      %16 = vector.load %arg6[%c0_14, %c0_15] : memref<512x128xf32, #tpu.memory_space<vmem>>, vector<512x128xf32>
      tpu.vector_store %arg6[%c0_14, %c0_15], %15 {strides = array<i32>} : memref<512x128xf32, #tpu.memory_space<vmem>>, vector<512x128xf32>,
    } else {
    }
    return
  }
  func.func @transform_0(%arg0: i32, %arg1: i32, %arg2: i32) -> (i32, i32) {
    %c0_i32 = arith.constant 0 : i32
    return %arg0, %arg2 : i32, i32
  }
  func.func @transform_1(%arg0: i32, %arg1: i32, %arg2: i32) -> (i32, i32) {
    %c0_i32 = arith.constant 0 : i32
    return %arg2, %arg1 : i32, i32
  }
  func.func @transform_2(%arg0: i32, %arg1: i32, %arg2: i32) -> (i32, i32) {
    %c0_i32 = arith.constant 0 : i32
    %c0_i32_0 = arith.constant 0 : i32
    return %c0_i32, %arg1 : i32, i32
  }
  func.func @transform_3(%arg0: i32, %arg1: i32, %arg2: i32) -> (i32, i32) {
    %c0_i32 = arith.constant 0 : i32
    return %arg0, %arg1 : i32, i32
  }
}

</mosaic_0001>

<llo_original>
// kernel: tile.23
$region0: #{tile.23}
  #allocation2 [shape = 's32[1]{0}', space=sflag, size = 0x4, scoped, tag = 'scoped memory for tile.23']
  %s0 = inlined_call_operand.hbm [shape: f32[32], index: 0, kind: input, shape index: {}]
  %s1 = inlined_call_operand.vmem [shape: f32[4,32], index: 1, kind: output, shape index: {}]
  $region1: #{tile.23} parent=0
    #allocation0 [shape = 'u8[512]{0}', space=vmem, size = 0x400, scoped, tag = 'operand span for operand 0']
    #allocation1 [shape = 's32[1]{0}', space=sflag, size = 0x4, scoped, tag = 'scoped memory for tile.23']
    %2 = vsyncpa [#allocation1], 0
    // Predicated region
    $region2: #{tile.23} parent=1 // pred_check
      _
    $region3: #{tile.23} parent=1 // pred_check_branch
      %4 = sbr.rel (0) target = $region5
    $region4: #{tile.23} parent=1 // pred_region
      %s6 = ssub.s32 16, 16
      %7 = vsyncadd [#allocation1], %s6
      %s9 = sshll.u32 [#allocation0], 4
      %s10 = int_to_ptr.vmem [resolvable:$true] %s9
      %12 = dma.hbm_to_vmem [thread:$0]  %s0, 16, %s10, [#allocation1]
    $region5: #{tile.23} parent=1 // pred_fallthru
      _
    // Predicated region
    $region6: #{tile.23} parent=1 // pred_check
      _
    $region7: #{tile.23} parent=1 // pred_check_branch
      %14 = sbr.rel (0) target = $region9
    $region8: #{tile.23} parent=1 // pred_region
      %15 = dma.done [#allocation1], 16
    $region9: #{tile.23} parent=1 // pred_fallthru
      _
    %v16 = vld [vmem:[#allocation0] ss:$0 sm:$0xff]
    %17 = vst [vmem:[%s1] sm:$0xf] %v16
    %18 = vsyncpa [#allocation1], 1

// kernel: tile.24
$region0: #{tile.24}
  %s0 = inlined_call_operand.vmem [shape: f32[4,32], index: 0, kind: input, shape index: {}]
  %s1 = inlined_call_operand.hbm [shape: f32[1,128], index: 1, kind: output, shape index: {}]
  $region1: #{tile.24} parent=0
    #allocation0 [shape = 'u8[512]{0}', space=vmem, size = 0x400, scoped, tag = 'operand span for operand 1']
    #allocation1 [shape = 's32[1]{0}', space=sflag, size = 0x4, scoped, tag = 'scoped memory for tile.24']
    #allocation2 [shape = 'u8[4096]{0}', space=vmem, size = 0x1000, scoped, tag = 'scoped mem for output reshape']
    #allocation3 [shape = 'u8[4096]{0}', space=vmem, size = 0x1000, scoped, tag = 'scoped mem for input reshape']
    %2 = vsyncpa [#allocation1], 0
    %s4 = sshllo.u32 0, 4
    %v5 = vld [vmem:[%s0] sm:%s4]
    %6 = vst [vmem:[#allocation3] sm:%s4] %v5
    %v7 = vld [vmem:[#allocation3] sm:$0x1]
    %vm8 = vcmask 261120
    %9 = vst.msk [vmem:[#allocation2] sm:$0x1] %vm8, %v7
    %s10 = scalar_lea.vmem [#allocation3], 3
    %v11 = vld [vmem:[%s10] sm:$0x1]
    %12 = vrot.lane.b32.xlu0 %v11, 96
    %v13 = vpop.permute.xlu0 %12
    %vm14 = vcmask 1048320
    %15 = vst.msk [vmem:[#allocation2] sm:$0x1] %vm14, %v13
    %s16 = scalar_lea.vmem [#allocation3], 2
    %v17 = vld [vmem:[%s16] sm:$0x1]
    %18 = vrot.lane.b32.xlu0 %v17, 64
    %v19 = vpop.permute.xlu0 %18
    %vm20 = vcmask 785920
    %21 = vst.msk [vmem:[#allocation2] sm:$0x1] %vm20, %v19
    %s22 = scalar_lea.vmem [#allocation3], 1
    %v23 = vld [vmem:[%s22] sm:$0x1]
    %24 = vrot.lane.b32.xlu0 %v23, 32
    %v25 = vpop.permute.xlu0 %24
    %vm26 = vcmask 523520
    %27 = vst.msk [vmem:[#allocation2] sm:$0x1] %vm26, %v25
    %s29 = sshllo.u32 0, 1
    %v31 = vld [vmem:[#allocation2] sm:%s29]
    %s32 = sshllo.u32 0, 1
    %33 = vst [vmem:[#allocation0] sm:%s32] %v31
    %s35 = ssub.s32 16, 16
    %36 = vsyncadd [#allocation1], %s35
    %s38 = sshll.u32 [#allocation0], 4
    %s39 = int_to_ptr.vmem [resolvable:$true] %s38
    %41 = dma.vmem_to_hbm [thread:$0]  %s39, 16, %s1, [#allocation1]
    %42 = dma.done [#allocation1], 16
    %43 = vsyncpa [#allocation1], 1

// kernel: tile.29
$region0: #{tile.29}
  %s0 = inlined_call_operand.vmem [shape: f32[4,16], index: 0, kind: input, shape index: {}]
  %s1 = inlined_call_operand.vmem [shape: f32[64], index: 1, kind: output, shape index: {}]
  $region1: #{tile.29} parent=0
    #allocation0 [shape = 'u8[4096]{0}', space=vmem, size = 0x1000, scoped, tag = 'scoped mem for output reshape']
    #allocation1 [shape = 'u8[4096]{0}', space=vmem, size = 0x1000, scoped, tag = 'scoped mem for input reshape']
    %s3 = sshllo.u32 0, 4
    %v4 = vld [vmem:[%s0] sm:%s3]
    %5 = vst [vmem:[#allocation1] sm:%s3] %v4
    %v6 = vld [vmem:[#allocation1] sm:$0x1]
    %vm7 = vcmask 130048
    %8 = vst.msk [vmem:[#allocation0] sm:$0x1] %vm7, %v6
    %s9 = scalar_lea.vmem [#allocation1], 3
    %v10 = vld [vmem:[%s9] sm:$0x1]
    %11 = vrot.lane.b32.xlu0 %v10, 48
    %v12 = vpop.permute.xlu0 %11
    %vm13 = vcmask 523648
    %14 = vst.msk [vmem:[#allocation0] sm:$0x1] %vm13, %v12
    %s15 = scalar_lea.vmem [#allocation1], 2
    %v16 = vld [vmem:[%s15] sm:$0x1]
    %17 = vrot.lane.b32.xlu0 %v16, 32
    %v18 = vpop.permute.xlu0 %17
    %vm19 = vcmask 392448
    %20 = vst.msk [vmem:[#allocation0] sm:$0x1] %vm19, %v18
    %s21 = scalar_lea.vmem [#allocation1], 1
    %v22 = vld [vmem:[%s21] sm:$0x1]
    %23 = vrot.lane.b32.xlu0 %v22, 16
    %v24 = vpop.permute.xlu0 %23
    %vm25 = vcmask 261248
    %26 = vst.msk [vmem:[#allocation0] sm:$0x1] %vm25, %v24
    %s28 = sshllo.u32 0, 1
    %v30 = vld [vmem:[#allocation0] sm:%s28]
    %s31 = sshllo.u32 0, 1
    %32 = vst [vmem:[%s1] sm:%s31] %v30

// kernel: tile.28
$region0: #{tile.28}
  #allocation2 [shape = 's32[1]{0}', space=sflag, size = 0x4, scoped, tag = 'scoped memory for tile.28']
  %s0 = inlined_call_operand.hbm [shape: f32[16], index: 0, kind: input, shape index: {}]
  %s1 = inlined_call_operand.vmem [shape: f32[4,16], index: 1, kind: output, shape index: {}]
  $region1: #{tile.28} parent=0
    #allocation0 [shape = 'u8[512]{0}', space=vmem, size = 0x400, scoped, tag = 'operand span for operand 0']
    #allocation1 [shape = 's32[1]{0}', space=sflag, size = 0x4, scoped, tag = 'scoped memory for tile.28']
    %2 = vsyncpa [#allocation1], 0
    // Predicated region
    $region2: #{tile.28} parent=1 // pred_check
      _
    $region3: #{tile.28} parent=1 // pred_check_branch
      %4 = sbr.rel (0) target = $region5
    $region4: #{tile.28} parent=1 // pred_region
      %s6 = ssub.s32 16, 16
      %7 = vsyncadd [#allocation1], %s6
      %s9 = sshll.u32 [#allocation0], 4
      %s10 = int_to_ptr.vmem [resolvable:$true] %s9
      %12 = dma.hbm_to_vmem [thread:$0]  %s0, 16, %s10, [#allocation1]
    $region5: #{tile.28} parent=1 // pred_fallthru
      _
    // Predicated region
    $region6: #{tile.28} parent=1 // pred_check
      _
    $region7: #{tile.28} parent=1 // pred_check_branch
      %14 = sbr.rel (0) target = $region9
    $region8: #{tile.28} parent=1 // pred_region
      %15 = dma.done [#allocation1], 16
    $region9: #{tile.28} parent=1 // pred_fallthru
      _
    %v16 = vld [vmem:[#allocation0] ss:$0 sm:$0xff]
    %17 = vst [vmem:[%s1] sm:$0xf] %v16
    %18 = vsyncpa [#allocation1], 1

// kernel: tile.33
$region0: #{tile.33}
  #allocation2 [shape = 's32[1]{0}', space=sflag, size = 0x4, scoped, tag = 'scoped memory for tile.33']
  %s0 = inlined_call_operand.hbm [shape: f32[8], index: 0, kind: input, shape index: {}]
  %s1 = inlined_call_operand.vmem [shape: f32[4,8], index: 1, kind: output, shape index: {}]
  $region1: #{tile.33} parent=0
    #allocation0 [shape = 'u8[512]{0}', space=vmem, size = 0x400, scoped, tag = 'operand span for operand 0']
    #allocation1 [shape = 's32[1]{0}', space=sflag, size = 0x4, scoped, tag = 'scoped memory for tile.33']
    %2 = vsyncpa [#allocation1], 0
    // Predicated region
    $region2: #{tile.33} parent=1 // pred_check
      _
    $region3: #{tile.33} parent=1 // pred_check_branch
      %4 = sbr.rel (0) target = $region5
    $region4: #{tile.33} parent=1 // pred_region
      %s6 = ssub.s32 16, 16
      %7 = vsyncadd [#allocation1], %s6
      %s9 = sshll.u32 [#allocation0], 4
      %s10 = int_to_ptr.vmem [resolvable:$true] %s9
      %12 = dma.hbm_to_vmem [thread:$0]  %s0, 16, %s10, [#allocation1]
    $region5: #{tile.33} parent=1 // pred_fallthru
      _
    // Predicated region
    $region6: #{tile.33} parent=1 // pred_check
      _
    $region7: #{tile.33} parent=1 // pred_check_branch
      %14 = sbr.rel (0) target = $region9
    $region8: #{tile.33} parent=1 // pred_region
      %15 = dma.done [#allocation1], 16
    $region9: #{tile.33} parent=1 // pred_fallthru
      _
    %v16 = vld [vmem:[#allocation0] ss:$0 sm:$0xff]
    %17 = vst [vmem:[%s1] sm:$0xf] %v16
    %18 = vsyncpa [#allocation1], 1

// kernel: tile.34
$region0: #{tile.34}
  %s0 = inlined_call_operand.vmem [shape: f32[4,8], index: 0, kind: input, shape index: {}]
  %s1 = inlined_call_operand.vmem [shape: f32[32], index: 1, kind: output, shape index: {}]
  $region1: #{tile.34} parent=0
    #allocation0 [shape = 'u8[4096]{0}', space=vmem, size = 0x1000, scoped, tag = 'scoped mem for output reshape']
    #allocation1 [shape = 'u8[4096]{0}', space=vmem, size = 0x1000, scoped, tag = 'scoped mem for input reshape']
    %s3 = sshllo.u32 0, 4
    %v4 = vld [vmem:[%s0] sm:%s3]
    %5 = vst [vmem:[#allocation1] sm:%s3] %v4
    %v6 = vld [vmem:[#allocation1] sm:$0x1]
    %vm7 = vcmask 64512
    %8 = vst.msk [vmem:[#allocation0] sm:$0x1] %vm7, %v6
    %s9 = scalar_lea.vmem [#allocation1], 3
    %v10 = vld [vmem:[%s9] sm:$0x1]
    %11 = vrot.lane.b32.xlu0 %v10, 24
    %v12 = vpop.permute.xlu0 %11
    %vm13 = vcmask 261312
    %14 = vst.msk [vmem:[#allocation0] sm:$0x1] %vm13, %v12
    %s15 = scalar_lea.vmem [#allocation1], 2
    %v16 = vld [vmem:[%s15] sm:$0x1]
    %17 = vrot.lane.b32.xlu0 %v16, 16
    %v18 = vpop.permute.xlu0 %17
    %vm19 = vcmask 195712
    %20 = vst.msk [vmem:[#allocation0] sm:$0x1] %vm19, %v18
    %s21 = scalar_lea.vmem [#allocation1], 1
    %v22 = vld [vmem:[%s21] sm:$0x1]
    %23 = vrot.lane.b32.xlu0 %v22, 8
    %v24 = vpop.permute.xlu0 %23
    %vm25 = vcmask 130112
    %26 = vst.msk [vmem:[#allocation0] sm:$0x1] %vm25, %v24
    %s28 = sshllo.u32 0, 1
    %v30 = vld [vmem:[#allocation0] sm:%s28]
    %s31 = sshllo.u32 0, 1
    %32 = vst [vmem:[%s1] sm:%s31] %v30

// kernel: _lambda_.16
$region0: #{_lambda_.16}
  #allocation0 [shape = 'u32[]', space=smem, size = 0x4, offset = 0x4, fixed_abs, tag = 'smem constant byte address 0x4 - core index']
  #allocation1 [shape = 'u32[144,128]{1,0:T(1,128)}', space=vmem, size = 0x12000, scoped, tag = 'internal scratch']
  #allocation2 [shape = 'f32[32,128]{1,0:T(8,128)}', space=vmem, size = 0x4000, scoped, tag = 'scratch operand']
  %s0 = inlined_call_operand.hbm [shape: bf16[32,48], index: 0, kind: input, shape index: {}]
  %s1 = inlined_call_operand.hbm [shape: bf16[48,128], index: 1, kind: input, shape index: {}]
  %s2 = inlined_call_operand.hbm [shape: f32[1,128], index: 2, kind: input, shape index: {}]
  %s3 = inlined_call_operand.hbm [shape: f32[32,128], index: 3, kind: output, shape index: {}]
  %s4 = sld [smem:[#allocation0]]
  $region42: #{_lambda_.16} parent=0
    _
  %s6 = ssub.s32 1, %s4
  %s7 = scalar_select 0, %s6, %s4
  $region1: #{_lambda_.16} parent=0
    #allocation3 [shape = 'u8[8192]{0}', space=vmem, size = 0x2000, scoped, tag = 'input window, operand 0, single buffered']
    #allocation4 [shape = 's32[1]{0}', space=sflag, size = 0x4, scoped, tag = 'scoped memory for _lambda_.16']
    #allocation5 [shape = 's32[1]{0}', space=sflag, size = 0x4, scoped, tag = 'scoped memory for _lambda_.16']
    #allocation6 [shape = 'u8[12288]{0}', space=vmem, size = 0x3000, scoped, tag = 'input window, operand 1, single buffered']
    #allocation7 [shape = 's32[1]{0}', space=sflag, size = 0x4, scoped, tag = 'scoped memory for _lambda_.16']
    #allocation8 [shape = 'u8[512]{0}', space=vmem, size = 0x400, scoped, tag = 'input window, operand 2, single buffered']
    #allocation9 [shape = 'u8[16384]{0}', space=vmem, size = 0x4000, scoped, tag = 'output window, operand 0, single buffered']
    %8 = vsyncpa [#allocation4], 0
    %9 = vsyncpa [#allocation7], 0
    %10 = vsyncpa [#allocation5], 0
    // Predicated region
    $region2: #{_lambda_.16} parent=1 // pred_check
      _
    $region3: #{_lambda_.16} parent=1 // pred_check_branch
      %12 = sbr.rel (0) target = $region5
    $region4: #{_lambda_.16} parent=1 // pred_region
      %s14 = ssub.s32 256, 256
      %15 = vsyncadd [#allocation4], %s14
      %s16 = sshll.u32 [#allocation3], 4
      %s17 = int_to_ptr.vmem [resolvable:$true] %s16
      %22 = dma.hbm_to_vmem [thread:$0]  %s0, 256, %s17, [#allocation4], 64, 64, 4
    $region5: #{_lambda_.16} parent=1 // pred_fallthru
      _
    // Predicated region
    $region6: #{_lambda_.16} parent=1 // pred_check
      _
    $region7: #{_lambda_.16} parent=1 // pred_check_branch
      %24 = sbr.rel (0) target = $region9
    $region8: #{_lambda_.16} parent=1 // pred_region
      %s26 = ssub.s32 384, 384
      %27 = vsyncadd [#allocation7], %s26
      %s28 = sshll.u32 [#allocation6], 4
      %s29 = int_to_ptr.vmem [resolvable:$true] %s28
      %34 = dma.hbm_to_vmem [thread:$0]  %s1, 384, %s29, [#allocation7], 64, 64, 4
    $region9: #{_lambda_.16} parent=1 // pred_fallthru
      _
    // Predicated region
    $region10: #{_lambda_.16} parent=1 // pred_check
      _
    $region11: #{_lambda_.16} parent=1 // pred_check_branch
      %36 = sbr.rel (0) target = $region13
    $region12: #{_lambda_.16} parent=1 // pred_region
      %s38 = ssub.s32 16, 16
      %39 = vsyncadd [#allocation7], %s38
      %s41 = sshll.u32 [#allocation8], 4
      %s42 = int_to_ptr.vmem [resolvable:$true] %s41
      %44 = dma.hbm_to_vmem [thread:$0]  %s2, 16, %s42, [#allocation7]
    $region13: #{_lambda_.16} parent=1 // pred_fallthru
      _
    // Predicated region
    $region14: #{_lambda_.16} parent=1 // pred_check
      _
    $region15: #{_lambda_.16} parent=1 // pred_check_branch
      %46 = sbr.rel (0) target = $region17
    $region16: #{_lambda_.16} parent=1 // pred_region
      %47 = dma.done [#allocation4], 256
    $region17: #{_lambda_.16} parent=1 // pred_fallthru
      _
    // Predicated region
    $region18: #{_lambda_.16} parent=1 // pred_check
      _
    $region19: #{_lambda_.16} parent=1 // pred_check_branch
      %49 = sbr.rel (0) target = $region21
    $region20: #{_lambda_.16} parent=1 // pred_region
      %50 = dma.done [#allocation7], 384
    $region21: #{_lambda_.16} parent=1 // pred_fallthru
      _
    // Predicated region
    $region22: #{_lambda_.16} parent=1 // pred_check
      _
    $region23: #{_lambda_.16} parent=1 // pred_check_branch
      %52 = sbr.rel (0) target = $region25
    $region24: #{_lambda_.16} parent=1 // pred_region
      %53 = dma.done [#allocation7], 16
    $region25: #{_lambda_.16} parent=1 // pred_fallthru
      _
    %p55 = scmp.eq.s32.totalorder 0, 0
    // Predicated region
    $region26: #{_lambda_.16} parent=1 // pred_check
      %p56 = pneg %p55
    $region27: #{_lambda_.16} parent=1 // pred_check_branch
      %58 = sbr.rel (%p56) target = $region29
    $region28: #{_lambda_.16} parent=1 // pred_region
      %59 = vst [vmem:[#allocation2] sm:$0xff] 0.0
      %60 = vst [vmem:[#allocation2 + $0x8] sm:$0xff] 0.0
      %61 = vst [vmem:[#allocation2 + $0x10] sm:$0xff] 0.0
      %62 = vst [vmem:[#allocation2 + $0x18] sm:$0xff] 0.0
    $region29: #{_lambda_.16} parent=1 // pred_fallthru
      _
    %v63 = vld [vmem:[#allocation3] sm:$0xf]
    %v64 = vld [vmem:[#allocation3 + $0x4] sm:$0xf]
    %v65 = vld [vmem:[#allocation3 + $0x8] sm:$0xf]
    %v66 = vld [vmem:[#allocation3 + $0xc] sm:$0xf]
    %v67 = vld [vmem:[#allocation2] sm:$0xff]
    %v68 = vld [vmem:[#allocation2 + $0x8] sm:$0xff]
    %v69 = vld [vmem:[#allocation2 + $0x10] sm:$0xff]
    %v70 = vld [vmem:[#allocation2 + $0x18] sm:$0xff]
    %v71 = vld [vmem:[#allocation6] sm:$0xf]
    %v72 = vld [vmem:[#allocation6 + $0x4] sm:$0xf]
    %v73 = vld [vmem:[#allocation6 + $0x8] sm:$0xf]
    %v74 = vld [vmem:[#allocation6 + $0xc] sm:$0xf]
    %v75 = vld [vmem:[#allocation6 + $0x10] sm:$0xf]
    %v76 = vld [vmem:[#allocation6 + $0x14] sm:$0xf]
    %v81 = vunpack.c.l.b16 %v63
    %v82 = vunpack.c.l.b16 %v64
    %v83 = vunpack.c.l.b16 %v65
    %v84 = vunpack.c.l.b16 %v66
    %v85 = vpack.c.b16 %v82, %v81
    %v86 = vpack.c.b16 %v84, %v83
    %v93 = vunpack.c.l.b16 %v71
    %v94 = vunpack.c.l.b16 %v72
    %v95 = vunpack.c.l.b16 %v73
    %v96 = vunpack.c.l.b16 %v74
    %v97 = vunpack.c.l.b16 %v75
    %v98 = vunpack.c.l.b16 %v76
    %v99 = vpack.c.b16 %v94, %v93
    %v100 = vpack.c.b16 %v96, %v95
    %v101 = vpack.c.b16 %v98, %v97
    %vm105 = vcmask 392192
    %v107 = vsel %vm105, %v85, 0
    %v110 = vsel %vm105, %v86, 0
    %112 = vmatprep.subr.bf16.mxu0 0
    %113 = vmatpush1.bf16.msra.mxu0 %v99
    %114 = vmatprep.subr.bf16.mxu0 0
    %115 = vmatpush1.bf16.msra.mxu0 %v100
    %116 = vmatprep.subr.bf16.mxu0 0
    %117 = vmatpush1.bf16.msra.mxu0 %v101
    %118 = vmatprep.subr.bf16.mxu0 0
    %119 = vmatpush1.bf16.msra.mxu0 0
    %120 = vmatprep.subr.bf16.mxu0 0
    %121 = vmatpush1.bf16.msra.mxu0 0
    %122 = vmatprep.subr.bf16.mxu0 0
    %123 = vmatpush1.bf16.msra.mxu0 0
    %124 = vmatprep.subr.bf16.mxu0 0
    %125 = vmatpush1.bf16.msra.mxu0 0
    %126 = vmatprep.subr.bf16.mxu0 0
    %127 = vmatpush1.bf16.msra.mxu0 0
    %128 = vmatprep.subr.bf16.mxu0 0
    %129 = vmatpush1.bf16.msra.mxu0 0
    %130 = vmatprep.subr.bf16.mxu0 0
    %131 = vmatpush1.bf16.msra.mxu0 0
    %132 = vmatprep.subr.bf16.mxu0 0
    %133 = vmatpush1.bf16.msra.mxu0 0
    %134 = vmatprep.subr.bf16.mxu0 0
    %135 = vmatpush1.bf16.msra.mxu0 0
    %136 = vmatprep.subr.bf16.mxu0 0
    %137 = vmatpush1.bf16.msra.mxu0 0
    %138 = vmatprep.subr.bf16.mxu0 0
    %139 = vmatpush1.bf16.msra.mxu0 0
    %140 = vmatprep.subr.bf16.mxu0 0
    %141 = vmatpush1.bf16.msra.mxu0 0
    %142 = vmatprep.subr.bf16.mxu0 0
    %143 = vmatpush1.bf16.msra.mxu0 0
    %144 = vmatprep.mubr.bf16.mxu0 0
    %145 = vmatmul.mubr.bf16.gmra.mrb[0].mxu0 %v107
    %v146 = vpop.f32.mrb[0].mxu0
    %v147 = vadd.f32 0.0, %v146
    %v148 = vpop.f32.mrb[0].mxu0
    %v149 = vpop.f32.mrb[0].mxu0
    %v150 = vadd.f32 0.0, %v149
    %v151 = vpop.f32.mrb[0].mxu0
    %152 = vmatprep.mubr.bf16.mxu0 0
    %153 = vmatmul.mubr.bf16.gmra.mrb[0].mxu0 %v110
    %v154 = vpop.f32.mrb[0].mxu0
    %v155 = vadd.f32 0.0, %v154
    %v156 = vpop.f32.mrb[0].mxu0
    %v157 = vpop.f32.mrb[0].mxu0
    %v158 = vadd.f32 0.0, %v157
    %v159 = vpop.f32.mrb[0].mxu0
    %160 = vdwg.mxu0
    %v161 = vadd.f32 %v67, %v147
    %v162 = vadd.f32 %v68, %v150
    %v163 = vadd.f32 %v69, %v155
    %v164 = vadd.f32 %v70, %v158
    %165 = vst [vmem:[#allocation2] sm:$0xff] %v161
    %166 = vst [vmem:[#allocation2 + $0x8] sm:$0xff] %v162
    %167 = vst [vmem:[#allocation2 + $0x10] sm:$0xff] %v163
    %168 = vst [vmem:[#allocation2 + $0x18] sm:$0xff] %v164
    // Predicated region
    $region30: #{_lambda_.16} parent=1 // pred_check
      %p169 = pneg %p55
    $region31: #{_lambda_.16} parent=1 // pred_check_branch
      %171 = sbr.rel (%p169) target = $region33
    $region32: #{_lambda_.16} parent=1 // pred_region
      %v172 = vld [vmem:[#allocation2] sm:$0xff]
      %v173 = vld [vmem:[#allocation2 + $0x8] sm:$0xff]
      %v174 = vld [vmem:[#allocation2 + $0x10] sm:$0xff]
      %v175 = vld [vmem:[#allocation2 + $0x18] sm:$0xff]
      %v176 = vld [vmem:[#allocation8] sm:$0x1]
      %v178 = vlaneseq
      %v179 = vshrl.u32 %v178, 7
      %v180 = vsub.s32 0, %v179
      %v181 = vrot.slane %v176, %v180
      %v183 = vadd.f32 %v172, %v181
      %v184 = vadd.f32 %v173, %v181
      %v185 = vadd.f32 %v174, %v181
      %v186 = vadd.f32 %v175, %v181
      %187 = vst [vmem:[#allocation9] sm:$0xff] %v183
      %188 = vst [vmem:[#allocation9 + $0x8] sm:$0xff] %v184
      %189 = vst [vmem:[#allocation9 + $0x10] sm:$0xff] %v185
      %190 = vst [vmem:[#allocation9 + $0x18] sm:$0xff] %v186
    $region33: #{_lambda_.16} parent=1 // pred_fallthru
      _
    // Predicated region
    $region34: #{_lambda_.16} parent=1 // pred_check
      _
    $region35: #{_lambda_.16} parent=1 // pred_check_branch
      %192 = sbr.rel (0) target = $region37
    $region36: #{_lambda_.16} parent=1 // pred_region
      %s194 = ssub.s32 512, 512
      %195 = vsyncadd [#allocation5], %s194
      %s196 = sshll.u32 [#allocation9], 4
      %s197 = int_to_ptr.vmem [resolvable:$true] %s196
      %202 = dma.vmem_to_hbm [thread:$0]  %s197, 512, %s3, [#allocation5], 128, 128, 8
    $region37: #{_lambda_.16} parent=1 // pred_fallthru
      _
    // Predicated region
    $region38: #{_lambda_.16} parent=1 // pred_check
      _
    $region39: #{_lambda_.16} parent=1 // pred_check_branch
      %204 = sbr.rel (0) target = $region41
    $region40: #{_lambda_.16} parent=1 // pred_region
      %205 = dma.done [#allocation5], 512
    $region41: #{_lambda_.16} parent=1 // pred_fallthru
      _
    %206 = vsyncpa [#allocation4], 1
    %207 = vsyncpa [#allocation7], 1
    %208 = vsyncpa [#allocation5], 1

// kernel: _lambda_.19
$region0: #{_lambda_.19}
  #allocation0 [shape = 'u32[]', space=smem, size = 0x4, offset = 0x4, fixed_abs, tag = 'smem constant byte address 0x4 - core index']
  #allocation1 [shape = 'u32[144,128]{1,0:T(1,128)}', space=vmem, size = 0x12000, scoped, tag = 'internal scratch']
  #allocation2 [shape = 'f32[48,128]{1,0:T(8,128)}', space=vmem, size = 0x6000, scoped, tag = 'scratch operand']
  %s0 = inlined_call_operand.hbm [shape: bf16[48,32], index: 0, kind: input, shape index: {}]
  %s1 = inlined_call_operand.hbm [shape: bf16[32,128], index: 1, kind: input, shape index: {}]
  %s2 = inlined_call_operand.hbm [shape: f32[1,128], index: 2, kind: input, shape index: {}]
  %s3 = inlined_call_operand.hbm [shape: f32[48,128], index: 3, kind: input, shape index: {}]
  %s4 = inlined_call_operand.hbm [shape: f32[48,128], index: 4, kind: output, shape index: {}]
  %s5 = sld [smem:[#allocation0]]
  $region50: #{_lambda_.19} parent=0
    _
  %s7 = ssub.s32 1, %s5
  %s8 = scalar_select 0, %s7, %s5
  $region1: #{_lambda_.19} parent=0
    #allocation3 [shape = 'u8[12288]{0}', space=vmem, size = 0x3000, scoped, tag = 'input window, operand 0, single buffered']
    #allocation4 [shape = 's32[1]{0}', space=sflag, size = 0x4, scoped, tag = 'scoped memory for _lambda_.19']
    #allocation5 [shape = 's32[1]{0}', space=sflag, size = 0x4, scoped, tag = 'scoped memory for _lambda_.19']
    #allocation6 [shape = 'u8[8192]{0}', space=vmem, size = 0x2000, scoped, tag = 'input window, operand 1, single buffered']
    #allocation7 [shape = 's32[1]{0}', space=sflag, size = 0x4, scoped, tag = 'scoped memory for _lambda_.19']
    #allocation8 [shape = 'u8[512]{0}', space=vmem, size = 0x400, scoped, tag = 'input window, operand 2, single buffered']
    #allocation9 [shape = 'u8[24576]{0}', space=vmem, size = 0x6000, scoped, tag = 'input window, operand 3, single buffered']
    #allocation10 [shape = 's32[1]{0}', space=sflag, size = 0x4, scoped, tag = 'scoped memory for _lambda_.19']
    #allocation11 [shape = 'u8[24576]{0}', space=vmem, size = 0x6000, scoped, tag = 'output window, operand 0, single buffered']
    %9 = vsyncpa [#allocation4], 0
    %10 = vsyncpa [#allocation7], 0
    %11 = vsyncpa [#allocation10], 0
    %12 = vsyncpa [#allocation5], 0
    // Predicated region
    $region2: #{_lambda_.19} parent=1 // pred_check
      _
    $region3: #{_lambda_.19} parent=1 // pred_check_branch
      %14 = sbr.rel (0) target = $region5
    $region4: #{_lambda_.19} parent=1 // pred_region
      %s16 = ssub.s32 384, 384
      %17 = vsyncadd [#allocation4], %s16
      %s18 = sshll.u32 [#allocation3], 4
      %s19 = int_to_ptr.vmem [resolvable:$true] %s18
      %24 = dma.hbm_to_vmem [thread:$0]  %s0, 384, %s19, [#allocation4], 64, 64, 4
    $region5: #{_lambda_.19} parent=1 // pred_fallthru
      _
    // Predicated region
    $region6: #{_lambda_.19} parent=1 // pred_check
      _
    $region7: #{_lambda_.19} parent=1 // pred_check_branch
      %26 = sbr.rel (0) target = $region9
    $region8: #{_lambda_.19} parent=1 // pred_region
      %s28 = ssub.s32 256, 256
      %29 = vsyncadd [#allocation7], %s28
      %s30 = sshll.u32 [#allocation6], 4
      %s31 = int_to_ptr.vmem [resolvable:$true] %s30
      %36 = dma.hbm_to_vmem [thread:$0]  %s1, 256, %s31, [#allocation7], 64, 64, 4
    $region9: #{_lambda_.19} parent=1 // pred_fallthru
      _
    // Predicated region
    $region10: #{_lambda_.19} parent=1 // pred_check
      _
    $region11: #{_lambda_.19} parent=1 // pred_check_branch
      %38 = sbr.rel (0) target = $region13
    $region12: #{_lambda_.19} parent=1 // pred_region
      %s40 = ssub.s32 16, 16
      %41 = vsyncadd [#allocation7], %s40
      %s43 = sshll.u32 [#allocation8], 4
      %s44 = int_to_ptr.vmem [resolvable:$true] %s43
      %46 = dma.hbm_to_vmem [thread:$0]  %s2, 16, %s44, [#allocation7]
    $region13: #{_lambda_.19} parent=1 // pred_fallthru
      _
    // Predicated region
    $region14: #{_lambda_.19} parent=1 // pred_check
      _
    $region15: #{_lambda_.19} parent=1 // pred_check_branch
      %48 = sbr.rel (0) target = $region17
    $region16: #{_lambda_.19} parent=1 // pred_region
      %s50 = ssub.s32 768, 768
      %51 = vsyncadd [#allocation10], %s50
      %s52 = sshll.u32 [#allocation9], 4
      %s53 = int_to_ptr.vmem [resolvable:$true] %s52
      %58 = dma.hbm_to_vmem [thread:$0]  %s3, 768, %s53, [#allocation10], 128, 128, 8
    $region17: #{_lambda_.19} parent=1 // pred_fallthru
      _
    // Predicated region
    $region18: #{_lambda_.19} parent=1 // pred_check
      _
    $region19: #{_lambda_.19} parent=1 // pred_check_branch
      %60 = sbr.rel (0) target = $region21
    $region20: #{_lambda_.19} parent=1 // pred_region
      %61 = dma.done [#allocation4], 384
    $region21: #{_lambda_.19} parent=1 // pred_fallthru
      _
    // Predicated region
    $region22: #{_lambda_.19} parent=1 // pred_check
      _
    $region23: #{_lambda_.19} parent=1 // pred_check_branch
      %63 = sbr.rel (0) target = $region25
    $region24: #{_lambda_.19} parent=1 // pred_region
      %64 = dma.done [#allocation7], 256
    $region25: #{_lambda_.19} parent=1 // pred_fallthru
      _
    // Predicated region
    $region26: #{_lambda_.19} parent=1 // pred_check
      _
    $region27: #{_lambda_.19} parent=1 // pred_check_branch
      %66 = sbr.rel (0) target = $region29
    $region28: #{_lambda_.19} parent=1 // pred_region
      %67 = dma.done [#allocation7], 16
    $region29: #{_lambda_.19} parent=1 // pred_fallthru
      _
    // Predicated region
    $region30: #{_lambda_.19} parent=1 // pred_check
      _
    $region31: #{_lambda_.19} parent=1 // pred_check_branch
      %69 = sbr.rel (0) target = $region33
    $region32: #{_lambda_.19} parent=1 // pred_region
      %70 = dma.done [#allocation10], 768
    $region33: #{_lambda_.19} parent=1 // pred_fallthru
      _
    %p72 = scmp.eq.s32.totalorder 0, 0
    // Predicated region
    $region34: #{_lambda_.19} parent=1 // pred_check
      %p73 = pneg %p72
    $region35: #{_lambda_.19} parent=1 // pred_check_branch
      %75 = sbr.rel (%p73) target = $region37
    $region36: #{_lambda_.19} parent=1 // pred_region
      %76 = vst [vmem:[#allocation2] sm:$0xff] 0.0
      %77 = vst [vmem:[#allocation2 + $0x8] sm:$0xff] 0.0
      %78 = vst [vmem:[#allocation2 + $0x10] sm:$0xff] 0.0
      %79 = vst [vmem:[#allocation2 + $0x18] sm:$0xff] 0.0
      %80 = vst [vmem:[#allocation2 + $0x20] sm:$0xff] 0.0
      %81 = vst [vmem:[#allocation2 + $0x28] sm:$0xff] 0.0
    $region37: #{_lambda_.19} parent=1 // pred_fallthru
      _
    %v82 = vld [vmem:[#allocation3] sm:$0xf]
    %v83 = vld [vmem:[#allocation3 + $0x4] sm:$0xf]
    %v84 = vld [vmem:[#allocation3 + $0x8] sm:$0xf]
    %v85 = vld [vmem:[#allocation3 + $0xc] sm:$0xf]
    %v86 = vld [vmem:[#allocation3 + $0x10] sm:$0xf]
    %v87 = vld [vmem:[#allocation3 + $0x14] sm:$0xf]
    %v88 = vld [vmem:[#allocation2] sm:$0xff]
    %v89 = vld [vmem:[#allocation2 + $0x8] sm:$0xff]
    %v90 = vld [vmem:[#allocation2 + $0x10] sm:$0xff]
    %v91 = vld [vmem:[#allocation2 + $0x18] sm:$0xff]
    %v92 = vld [vmem:[#allocation2 + $0x20] sm:$0xff]
    %v93 = vld [vmem:[#allocation2 + $0x28] sm:$0xff]
    %v94 = vld [vmem:[#allocation6] sm:$0xf]
    %v95 = vld [vmem:[#allocation6 + $0x4] sm:$0xf]
    %v96 = vld [vmem:[#allocation6 + $0x8] sm:$0xf]
    %v97 = vld [vmem:[#allocation6 + $0xc] sm:$0xf]
    %v104 = vunpack.c.l.b16 %v82
    %v105 = vunpack.c.l.b16 %v83
    %v106 = vunpack.c.l.b16 %v84
    %v107 = vunpack.c.l.b16 %v85
    %v108 = vunpack.c.l.b16 %v86
    %v109 = vunpack.c.l.b16 %v87
    %v110 = vpack.c.b16 %v105, %v104
    %v111 = vpack.c.b16 %v107, %v106
    %v112 = vpack.c.b16 %v109, %v108
    %v117 = vunpack.c.l.b16 %v94
    %v118 = vunpack.c.l.b16 %v95
    %v119 = vunpack.c.l.b16 %v96
    %v120 = vunpack.c.l.b16 %v97
    %v121 = vpack.c.b16 %v118, %v117
    %v122 = vpack.c.b16 %v120, %v119
    %vm125 = vcmask 261120
    %v127 = vsel %vm125, %v110, 0
    %v130 = vsel %vm125, %v111, 0
    %v133 = vsel %vm125, %v112, 0
    %135 = vmatprep.subr.bf16.mxu0 0
    %136 = vmatpush1.bf16.msra.mxu0 %v121
    %137 = vmatprep.subr.bf16.mxu0 0
    %138 = vmatpush1.bf16.msra.mxu0 %v122
    %139 = vmatprep.subr.bf16.mxu0 0
    %140 = vmatpush1.bf16.msra.mxu0 0
    %141 = vmatprep.subr.bf16.mxu0 0
    %142 = vmatpush1.bf16.msra.mxu0 0
    %143 = vmatprep.subr.bf16.mxu0 0
    %144 = vmatpush1.bf16.msra.mxu0 0
    %145 = vmatprep.subr.bf16.mxu0 0
    %146 = vmatpush1.bf16.msra.mxu0 0
    %147 = vmatprep.subr.bf16.mxu0 0
    %148 = vmatpush1.bf16.msra.mxu0 0
    %149 = vmatprep.subr.bf16.mxu0 0
    %150 = vmatpush1.bf16.msra.mxu0 0
    %151 = vmatprep.subr.bf16.mxu0 0
    %152 = vmatpush1.bf16.msra.mxu0 0
    %153 = vmatprep.subr.bf16.mxu0 0
    %154 = vmatpush1.bf16.msra.mxu0 0
    %155 = vmatprep.subr.bf16.mxu0 0
    %156 = vmatpush1.bf16.msra.mxu0 0
    %157 = vmatprep.subr.bf16.mxu0 0
    %158 = vmatpush1.bf16.msra.mxu0 0
    %159 = vmatprep.subr.bf16.mxu0 0
    %160 = vmatpush1.bf16.msra.mxu0 0
    %161 = vmatprep.subr.bf16.mxu0 0
    %162 = vmatpush1.bf16.msra.mxu0 0
    %163 = vmatprep.subr.bf16.mxu0 0
    %164 = vmatpush1.bf16.msra.mxu0 0
    %165 = vmatprep.subr.bf16.mxu0 0
    %166 = vmatpush1.bf16.msra.mxu0 0
    %167 = vmatprep.mubr.bf16.mxu0 0
    %168 = vmatmul.mubr.bf16.gmra.mrb[0].mxu0 %v127
    %v169 = vpop.f32.mrb[0].mxu0
    %v170 = vadd.f32 0.0, %v169
    %v171 = vpop.f32.mrb[0].mxu0
    %v172 = vpop.f32.mrb[0].mxu0
    %v173 = vadd.f32 0.0, %v172
    %v174 = vpop.f32.mrb[0].mxu0
    %175 = vmatprep.mubr.bf16.mxu0 0
    %176 = vmatmul.mubr.bf16.gmra.mrb[0].mxu0 %v130
    %v177 = vpop.f32.mrb[0].mxu0
    %v178 = vadd.f32 0.0, %v177
    %v179 = vpop.f32.mrb[0].mxu0
    %v180 = vpop.f32.mrb[0].mxu0
    %v181 = vadd.f32 0.0, %v180
    %v182 = vpop.f32.mrb[0].mxu0
    %183 = vmatprep.mubr.bf16.mxu0 0
    %184 = vmatmul.mubr.bf16.gmra.mrb[0].mxu0 %v133
    %v185 = vpop.f32.mrb[0].mxu0
    %v186 = vadd.f32 0.0, %v185
    %v187 = vpop.f32.mrb[0].mxu0
    %v188 = vpop.f32.mrb[0].mxu0
    %v189 = vadd.f32 0.0, %v188
    %v190 = vpop.f32.mrb[0].mxu0
    %191 = vdwg.mxu0
    %v192 = vadd.f32 %v88, %v170
    %v193 = vadd.f32 %v89, %v173
    %v194 = vadd.f32 %v90, %v178
    %v195 = vadd.f32 %v91, %v181
    %v196 = vadd.f32 %v92, %v186
    %v197 = vadd.f32 %v93, %v189
    %198 = vst [vmem:[#allocation2] sm:$0xff] %v192
    %199 = vst [vmem:[#allocation2 + $0x8] sm:$0xff] %v193
    %200 = vst [vmem:[#allocation2 + $0x10] sm:$0xff] %v194
    %201 = vst [vmem:[#allocation2 + $0x18] sm:$0xff] %v195
    %202 = vst [vmem:[#allocation2 + $0x20] sm:$0xff] %v196
    %203 = vst [vmem:[#allocation2 + $0x28] sm:$0xff] %v197
    // Predicated region
    $region38: #{_lambda_.19} parent=1 // pred_check
      %p204 = pneg %p72
    $region39: #{_lambda_.19} parent=1 // pred_check_branch
      %206 = sbr.rel (%p204) target = $region41
    $region40: #{_lambda_.19} parent=1 // pred_region
      %v207 = vld [vmem:[#allocation2] sm:$0xff]
      %v208 = vld [vmem:[#allocation2 + $0x8] sm:$0xff]
      %v209 = vld [vmem:[#allocation2 + $0x10] sm:$0xff]
      %v210 = vld [vmem:[#allocation2 + $0x18] sm:$0xff]
      %v211 = vld [vmem:[#allocation2 + $0x20] sm:$0xff]
      %v212 = vld [vmem:[#allocation2 + $0x28] sm:$0xff]
      %v213 = vld [vmem:[#allocation8] sm:$0x1]
      %v215 = vlaneseq
      %v216 = vshrl.u32 %v215, 7
      %v217 = vsub.s32 0, %v216
      %v218 = vrot.slane %v213, %v217
      %v220 = vadd.f32 %v207, %v218
      %v221 = vadd.f32 %v208, %v218
      %v222 = vadd.f32 %v209, %v218
      %v223 = vadd.f32 %v210, %v218
      %v224 = vadd.f32 %v211, %v218
      %v225 = vadd.f32 %v212, %v218
      %v226 = vld [vmem:[#allocation9] sm:$0xff]
      %v227 = vld [vmem:[#allocation9 + $0x8] sm:$0xff]
      %v228 = vld [vmem:[#allocation9 + $0x10] sm:$0xff]
      %v229 = vld [vmem:[#allocation9 + $0x18] sm:$0xff]
      %v230 = vld [vmem:[#allocation9 + $0x20] sm:$0xff]
      %v231 = vld [vmem:[#allocation9 + $0x28] sm:$0xff]
      %v232 = vadd.f32 %v220, %v226
      %v233 = vadd.f32 %v221, %v227
      %v234 = vadd.f32 %v222, %v228
      %v235 = vadd.f32 %v223, %v229
      %v236 = vadd.f32 %v224, %v230
      %v237 = vadd.f32 %v225, %v231
      %238 = vst [vmem:[#allocation11] sm:$0xff] %v232
      %239 = vst [vmem:[#allocation11 + $0x8] sm:$0xff] %v233
      %240 = vst [vmem:[#allocation11 + $0x10] sm:$0xff] %v234
      %241 = vst [vmem:[#allocation11 + $0x18] sm:$0xff] %v235
      %242 = vst [vmem:[#allocation11 + $0x20] sm:$0xff] %v236
      %243 = vst [vmem:[#allocation11 + $0x28] sm:$0xff] %v237
    $region41: #{_lambda_.19} parent=1 // pred_fallthru
      _
    // Predicated region
    $region42: #{_lambda_.19} parent=1 // pred_check
      _
    $region43: #{_lambda_.19} parent=1 // pred_check_branch
      %245 = sbr.rel (0) target = $region45
    $region44: #{_lambda_.19} parent=1 // pred_region
      %s247 = ssub.s32 768, 768
      %248 = vsyncadd [#allocation5], %s247
      %s249 = sshll.u32 [#allocation11], 4
      %s250 = int_to_ptr.vmem [resolvable:$true] %s249
      %255 = dma.vmem_to_hbm [thread:$0]  %s250, 768, %s4, [#allocation5], 128, 128, 8
    $region45: #{_lambda_.19} parent=1 // pred_fallthru
      _
    // Predicated region
    $region46: #{_lambda_.19} parent=1 // pred_check
      _
    $region47: #{_lambda_.19} parent=1 // pred_check_branch
      %257 = sbr.rel (0) target = $region49
    $region48: #{_lambda_.19} parent=1 // pred_region
      %258 = dma.done [#allocation5], 768
    $region49: #{_lambda_.19} parent=1 // pred_fallthru
      _
    %259 = vsyncpa [#allocation4], 1
    %260 = vsyncpa [#allocation7], 1
    %261 = vsyncpa [#allocation10], 1
    %262 = vsyncpa [#allocation5], 1

// kernel: _lambda_.17
$region0: #{_lambda_.17}
  #allocation0 [shape = 'u32[]', space=smem, size = 0x4, offset = 0x4, fixed_abs, tag = 'smem constant byte address 0x4 - core index']
  #allocation1 [shape = 'u32[144,128]{1,0:T(1,128)}', space=vmem, size = 0x12000, scoped, tag = 'internal scratch']
  #allocation2 [shape = 'f32[48,128]{1,0:T(8,128)}', space=vmem, size = 0x6000, scoped, tag = 'scratch operand']
  %s0 = inlined_call_operand.hbm [shape: f32[48,32], index: 0, kind: input, shape index: {}]
  %s1 = inlined_call_operand.hbm [shape: bf16[32,128], index: 1, kind: input, shape index: {}]
  %s2 = inlined_call_operand.hbm [shape: f32[1,128], index: 2, kind: input, shape index: {}]
  %s3 = inlined_call_operand.hbm [shape: f32[1,32], index: 3, kind: input, shape index: {}]
  %s4 = inlined_call_operand.hbm [shape: f32[1,32], index: 4, kind: input, shape index: {}]
  %s5 = inlined_call_operand.hbm [shape: bf16[48,128], index: 5, kind: output, shape index: {}]
  %s6 = sld [smem:[#allocation0]]
  $region58: #{_lambda_.17} parent=0
    _
  %s8 = ssub.s32 1, %s6
  %s9 = scalar_select 0, %s8, %s6
  $region1: #{_lambda_.17} parent=0
    #allocation3 [shape = 'u8[24576]{0}', space=vmem, size = 0x6000, scoped, tag = 'input window, operand 0, single buffered']
    #allocation4 [shape = 's32[1]{0}', space=sflag, size = 0x4, scoped, tag = 'scoped memory for _lambda_.17']
    #allocation5 [shape = 's32[1]{0}', space=sflag, size = 0x4, scoped, tag = 'scoped memory for _lambda_.17']
    #allocation6 [shape = 'u8[8192]{0}', space=vmem, size = 0x2000, scoped, tag = 'input window, operand 1, single buffered']
    #allocation7 [shape = 's32[1]{0}', space=sflag, size = 0x4, scoped, tag = 'scoped memory for _lambda_.17']
    #allocation8 [shape = 'u8[512]{0}', space=vmem, size = 0x400, scoped, tag = 'input window, operand 2, single buffered']
    #allocation9 [shape = 'u8[512]{0}', space=vmem, size = 0x400, scoped, tag = 'input window, operand 3, single buffered']
    #allocation10 [shape = 's32[1]{0}', space=sflag, size = 0x4, scoped, tag = 'scoped memory for _lambda_.17']
    #allocation11 [shape = 'u8[512]{0}', space=vmem, size = 0x400, scoped, tag = 'input window, operand 4, single buffered']
    #allocation12 [shape = 'u8[12288]{0}', space=vmem, size = 0x3000, scoped, tag = 'output window, operand 0, single buffered']
    %10 = vsyncpa [#allocation4], 0
    %11 = vsyncpa [#allocation7], 0
    %12 = vsyncpa [#allocation10], 0
    %13 = vsyncpa [#allocation5], 0
    // Predicated region
    $region2: #{_lambda_.17} parent=1 // pred_check
      _
    $region3: #{_lambda_.17} parent=1 // pred_check_branch
      %15 = sbr.rel (0) target = $region5
    $region4: #{_lambda_.17} parent=1 // pred_region
      %s17 = ssub.s32 768, 768
      %18 = vsyncadd [#allocation4], %s17
      %s19 = sshll.u32 [#allocation3], 4
      %s20 = int_to_ptr.vmem [resolvable:$true] %s19
      %25 = dma.hbm_to_vmem [thread:$0]  %s0, 768, %s20, [#allocation4], 128, 128, 8
    $region5: #{_lambda_.17} parent=1 // pred_fallthru
      _
    // Predicated region
    $region6: #{_lambda_.17} parent=1 // pred_check
      _
    $region7: #{_lambda_.17} parent=1 // pred_check_branch
      %27 = sbr.rel (0) target = $region9
    $region8: #{_lambda_.17} parent=1 // pred_region
      %s29 = ssub.s32 256, 256
      %30 = vsyncadd [#allocation7], %s29
      %s31 = sshll.u32 [#allocation6], 4
      %s32 = int_to_ptr.vmem [resolvable:$true] %s31
      %37 = dma.hbm_to_vmem [thread:$0]  %s1, 256, %s32, [#allocation7], 64, 64, 4
    $region9: #{_lambda_.17} parent=1 // pred_fallthru
      _
    // Predicated region
    $region10: #{_lambda_.17} parent=1 // pred_check
      _
    $region11: #{_lambda_.17} parent=1 // pred_check_branch
      %39 = sbr.rel (0) target = $region13
    $region12: #{_lambda_.17} parent=1 // pred_region
      %s41 = ssub.s32 16, 16
      %42 = vsyncadd [#allocation7], %s41
      %s44 = sshll.u32 [#allocation8], 4
      %s45 = int_to_ptr.vmem [resolvable:$true] %s44
      %47 = dma.hbm_to_vmem [thread:$0]  %s2, 16, %s45, [#allocation7]
    $region13: #{_lambda_.17} parent=1 // pred_fallthru
      _
    // Predicated region
    $region14: #{_lambda_.17} parent=1 // pred_check
      _
    $region15: #{_lambda_.17} parent=1 // pred_check_branch
      %49 = sbr.rel (0) target = $region17
    $region16: #{_lambda_.17} parent=1 // pred_region
      %s51 = ssub.s32 16, 16
      %52 = vsyncadd [#allocation10], %s51
      %s54 = sshll.u32 [#allocation9], 4
      %s55 = int_to_ptr.vmem [resolvable:$true] %s54
      %57 = dma.hbm_to_vmem [thread:$0]  %s3, 16, %s55, [#allocation10]
    $region17: #{_lambda_.17} parent=1 // pred_fallthru
      _
    // Predicated region
    $region18: #{_lambda_.17} parent=1 // pred_check
      _
    $region19: #{_lambda_.17} parent=1 // pred_check_branch
      %59 = sbr.rel (0) target = $region21
    $region20: #{_lambda_.17} parent=1 // pred_region
      %s61 = ssub.s32 16, 16
      %62 = vsyncadd [#allocation10], %s61
      %s64 = sshll.u32 [#allocation11], 4
      %s65 = int_to_ptr.vmem [resolvable:$true] %s64
      %67 = dma.hbm_to_vmem [thread:$0]  %s4, 16, %s65, [#allocation10]
    $region21: #{_lambda_.17} parent=1 // pred_fallthru
      _
    // Predicated region
    $region22: #{_lambda_.17} parent=1 // pred_check
      _
    $region23: #{_lambda_.17} parent=1 // pred_check_branch
      %69 = sbr.rel (0) target = $region25
    $region24: #{_lambda_.17} parent=1 // pred_region
      %70 = dma.done [#allocation4], 768
    $region25: #{_lambda_.17} parent=1 // pred_fallthru
      _
    // Predicated region
    $region26: #{_lambda_.17} parent=1 // pred_check
      _
    $region27: #{_lambda_.17} parent=1 // pred_check_branch
      %72 = sbr.rel (0) target = $region29
    $region28: #{_lambda_.17} parent=1 // pred_region
      %73 = dma.done [#allocation7], 256
    $region29: #{_lambda_.17} parent=1 // pred_fallthru
      _
    // Predicated region
    $region30: #{_lambda_.17} parent=1 // pred_check
      _
    $region31: #{_lambda_.17} parent=1 // pred_check_branch
      %75 = sbr.rel (0) target = $region33
    $region32: #{_lambda_.17} parent=1 // pred_region
      %76 = dma.done [#allocation7], 16
    $region33: #{_lambda_.17} parent=1 // pred_fallthru
      _
    // Predicated region
    $region34: #{_lambda_.17} parent=1 // pred_check
      _
    $region35: #{_lambda_.17} parent=1 // pred_check_branch
      %78 = sbr.rel (0) target = $region37
    $region36: #{_lambda_.17} parent=1 // pred_region
      %79 = dma.done [#allocation10], 16
    $region37: #{_lambda_.17} parent=1 // pred_fallthru
      _
    // Predicated region
    $region38: #{_lambda_.17} parent=1 // pred_check
      _
    $region39: #{_lambda_.17} parent=1 // pred_check_branch
      %81 = sbr.rel (0) target = $region41
    $region40: #{_lambda_.17} parent=1 // pred_region
      %82 = dma.done [#allocation10], 16
    $region41: #{_lambda_.17} parent=1 // pred_fallthru
      _
    %p84 = scmp.eq.s32.totalorder 0, 0
    // Predicated region
    $region42: #{_lambda_.17} parent=1 // pred_check
      %p85 = pneg %p84
    $region43: #{_lambda_.17} parent=1 // pred_check_branch
      %87 = sbr.rel (%p85) target = $region45
    $region44: #{_lambda_.17} parent=1 // pred_region
      %88 = vst [vmem:[#allocation2] sm:$0xff] 0.0
      %89 = vst [vmem:[#allocation2 + $0x8] sm:$0xff] 0.0
      %90 = vst [vmem:[#allocation2 + $0x10] sm:$0xff] 0.0
      %91 = vst [vmem:[#allocation2 + $0x18] sm:$0xff] 0.0
      %92 = vst [vmem:[#allocation2 + $0x20] sm:$0xff] 0.0
      %93 = vst [vmem:[#allocation2 + $0x28] sm:$0xff] 0.0
    $region45: #{_lambda_.17} parent=1 // pred_fallthru
      _
    %v94 = vld [vmem:[#allocation3] sm:$0xff]
    %v95 = vld [vmem:[#allocation3 + $0x8] sm:$0xff]
    %v96 = vld [vmem:[#allocation3 + $0x10] sm:$0xff]
    %v97 = vld [vmem:[#allocation3 + $0x18] sm:$0xff]
    %v98 = vld [vmem:[#allocation3 + $0x20] sm:$0xff]
    %v99 = vld [vmem:[#allocation3 + $0x28] sm:$0xff]
    %vm100 = vcmask 261120
    %v101 = vsel %vm100, %v94, 0.0
    %102 = vadd.xlane.f32.xlu0 %v101
    %v103 = vpop.xlane.xlu0 %102
    %v104 = vsel %vm100, %v95, 0.0
    %105 = vadd.xlane.f32.xlu0 %v104
    %v106 = vpop.xlane.xlu0 %105
    %v107 = vsel %vm100, %v96, 0.0
    %108 = vadd.xlane.f32.xlu0 %v107
    %v109 = vpop.xlane.xlu0 %108
    %v110 = vsel %vm100, %v97, 0.0
    %111 = vadd.xlane.f32.xlu0 %v110
    %v112 = vpop.xlane.xlu0 %111
    %v113 = vsel %vm100, %v98, 0.0
    %114 = vadd.xlane.f32.xlu0 %v113
    %v115 = vpop.xlane.xlu0 %114
    %v116 = vsel %vm100, %v99, 0.0
    %117 = vadd.xlane.f32.xlu0 %v116
    %v118 = vpop.xlane.xlu0 %117
    %v119 = vrcp.pop 32.0
    %v120 = vmul.f32 %v103, %v119
    %v121 = vmul.f32 %v106, %v119
    %v122 = vmul.f32 %v109, %v119
    %v123 = vmul.f32 %v112, %v119
    %v124 = vmul.f32 %v115, %v119
    %v125 = vmul.f32 %v118, %v119
    %v126 = vsub.f32 %v94, %v120
    %v127 = vsub.f32 %v95, %v121
    %v128 = vsub.f32 %v96, %v122
    %v129 = vsub.f32 %v97, %v123
    %v130 = vsub.f32 %v98, %v124
    %v131 = vsub.f32 %v99, %v125
    %v132 = vmul.f32 %v126, %v126
    %v133 = vmul.f32 %v127, %v127
    %v134 = vmul.f32 %v128, %v128
    %v135 = vmul.f32 %v129, %v129
    %v136 = vmul.f32 %v130, %v130
    %v137 = vmul.f32 %v131, %v131
    %v138 = vsel %vm100, %v132, 0.0
    %139 = vadd.xlane.f32.xlu0 %v138
    %v140 = vpop.xlane.xlu0 %139
    %v141 = vsel %vm100, %v133, 0.0
    %142 = vadd.xlane.f32.xlu0 %v141
    %v143 = vpop.xlane.xlu0 %142
    %v144 = vsel %vm100, %v134, 0.0
    %145 = vadd.xlane.f32.xlu0 %v144
    %v146 = vpop.xlane.xlu0 %145
    %v147 = vsel %vm100, %v135, 0.0
    %148 = vadd.xlane.f32.xlu0 %v147
    %v149 = vpop.xlane.xlu0 %148
    %v150 = vsel %vm100, %v136, 0.0
    %151 = vadd.xlane.f32.xlu0 %v150
    %v152 = vpop.xlane.xlu0 %151
    %v153 = vsel %vm100, %v137, 0.0
    %154 = vadd.xlane.f32.xlu0 %v153
    %v155 = vpop.xlane.xlu0 %154
    %v156 = vmul.f32 %v140, %v119
    %v157 = vmul.f32 %v143, %v119
    %v158 = vmul.f32 %v146, %v119
    %v159 = vmul.f32 %v149, %v119
    %v160 = vmul.f32 %v152, %v119
    %v161 = vmul.f32 %v155, %v119
    %v162 = vadd.f32 %v156, 1e-06
    %v163 = vadd.f32 %v157, 1e-06
    %v164 = vadd.f32 %v158, 1e-06
    %v165 = vadd.f32 %v159, 1e-06
    %v166 = vadd.f32 %v160, 1e-06
    %v167 = vadd.f32 %v161, 1e-06
    %v168 = vrsqrt.pop %v162
    %v169 = vrsqrt.pop %v163
    %v170 = vrsqrt.pop %v164
    %v171 = vrsqrt.pop %v165
    %v172 = vrsqrt.pop %v166
    %v173 = vrsqrt.pop %v167
    %v174 = vmul.f32 %v126, %v168
    %v175 = vmul.f32 %v127, %v169
    %v176 = vmul.f32 %v128, %v170
    %v177 = vmul.f32 %v129, %v171
    %v178 = vmul.f32 %v130, %v172
    %v179 = vmul.f32 %v131, %v173
    %v180 = vld [vmem:[#allocation9] sm:$0x1]
    %v182 = vlaneseq
    %v183 = vshrl.u32 %v182, 7
    %v184 = vsub.s32 0, %v183
    %v185 = vrot.slane %v180, %v184
    %v187 = vmul.f32 %v174, %v185
    %v188 = vmul.f32 %v175, %v185
    %v189 = vmul.f32 %v176, %v185
    %v190 = vmul.f32 %v177, %v185
    %v191 = vmul.f32 %v178, %v185
    %v192 = vmul.f32 %v179, %v185
    %v193 = vld [vmem:[#allocation11] sm:$0x1]
    %v195 = vlaneseq
    %v196 = vshrl.u32 %v195, 7
    %v197 = vsub.s32 0, %v196
    %v198 = vrot.slane %v193, %v197
    %v200 = vadd.f32 %v187, %v198
    %v201 = vadd.f32 %v188, %v198
    %v202 = vadd.f32 %v189, %v198
    %v203 = vadd.f32 %v190, %v198
    %v204 = vadd.f32 %v191, %v198
    %v205 = vadd.f32 %v192, %v198
    %v206 = vpack.c.bf16 %v201, %v200
    %v207 = vpack.c.bf16 %v203, %v202
    %v208 = vpack.c.bf16 %v205, %v204
    %v209 = vld [vmem:[#allocation2] sm:$0xff]
    %v210 = vld [vmem:[#allocation2 + $0x8] sm:$0xff]
    %v211 = vld [vmem:[#allocation2 + $0x10] sm:$0xff]
    %v212 = vld [vmem:[#allocation2 + $0x18] sm:$0xff]
    %v213 = vld [vmem:[#allocation2 + $0x20] sm:$0xff]
    %v214 = vld [vmem:[#allocation2 + $0x28] sm:$0xff]
    %v215 = vld [vmem:[#allocation6] sm:$0xf]
    %v216 = vld [vmem:[#allocation6 + $0x4] sm:$0xf]
    %v217 = vld [vmem:[#allocation6 + $0x8] sm:$0xf]
    %v218 = vld [vmem:[#allocation6 + $0xc] sm:$0xf]
    %v223 = vunpack.c.l.b16 %v215
    %v224 = vunpack.c.l.b16 %v216
    %v225 = vunpack.c.l.b16 %v217
    %v226 = vunpack.c.l.b16 %v218
    %v227 = vpack.c.b16 %v224, %v223
    %v228 = vpack.c.b16 %v226, %v225
    %v232 = vsel %vm100, %v206, 0
    %v235 = vsel %vm100, %v207, 0
    %v238 = vsel %vm100, %v208, 0
    %240 = vmatprep.subr.bf16.mxu0 0
    %241 = vmatpush1.bf16.msra.mxu0 %v227
    %242 = vmatprep.subr.bf16.mxu0 0
    %243 = vmatpush1.bf16.msra.mxu0 %v228
    %244 = vmatprep.subr.bf16.mxu0 0
    %245 = vmatpush1.bf16.msra.mxu0 0
    %246 = vmatprep.subr.bf16.mxu0 0
    %247 = vmatpush1.bf16.msra.mxu0 0
    %248 = vmatprep.subr.bf16.mxu0 0
    %249 = vmatpush1.bf16.msra.mxu0 0
    %250 = vmatprep.subr.bf16.mxu0 0
    %251 = vmatpush1.bf16.msra.mxu0 0
    %252 = vmatprep.subr.bf16.mxu0 0
    %253 = vmatpush1.bf16.msra.mxu0 0
    %254 = vmatprep.subr.bf16.mxu0 0
    %255 = vmatpush1.bf16.msra.mxu0 0
    %256 = vmatprep.subr.bf16.mxu0 0
    %257 = vmatpush1.bf16.msra.mxu0 0
    %258 = vmatprep.subr.bf16.mxu0 0
    %259 = vmatpush1.bf16.msra.mxu0 0
    %260 = vmatprep.subr.bf16.mxu0 0
    %261 = vmatpush1.bf16.msra.mxu0 0
    %262 = vmatprep.subr.bf16.mxu0 0
    %263 = vmatpush1.bf16.msra.mxu0 0
    %264 = vmatprep.subr.bf16.mxu0 0
    %265 = vmatpush1.bf16.msra.mxu0 0
    %266 = vmatprep.subr.bf16.mxu0 0
    %267 = vmatpush1.bf16.msra.mxu0 0
    %268 = vmatprep.subr.bf16.mxu0 0
    %269 = vmatpush1.bf16.msra.mxu0 0
    %270 = vmatprep.subr.bf16.mxu0 0
    %271 = vmatpush1.bf16.msra.mxu0 0
    %272 = vmatprep.mubr.bf16.mxu0 0
    %273 = vmatmul.mubr.bf16.gmra.mrb[0].mxu0 %v232
    %v274 = vpop.f32.mrb[0].mxu0
    %v275 = vadd.f32 0.0, %v274
    %v276 = vpop.f32.mrb[0].mxu0
    %v277 = vpop.f32.mrb[0].mxu0
    %v278 = vadd.f32 0.0, %v277
    %v279 = vpop.f32.mrb[0].mxu0
    %280 = vmatprep.mubr.bf16.mxu0 0
    %281 = vmatmul.mubr.bf16.gmra.mrb[0].mxu0 %v235
    %v282 = vpop.f32.mrb[0].mxu0
    %v283 = vadd.f32 0.0, %v282
    %v284 = vpop.f32.mrb[0].mxu0
    %v285 = vpop.f32.mrb[0].mxu0
    %v286 = vadd.f32 0.0, %v285
    %v287 = vpop.f32.mrb[0].mxu0
    %288 = vmatprep.mubr.bf16.mxu0 0
    %289 = vmatmul.mubr.bf16.gmra.mrb[0].mxu0 %v238
    %v290 = vpop.f32.mrb[0].mxu0
    %v291 = vadd.f32 0.0, %v290
    %v292 = vpop.f32.mrb[0].mxu0
    %v293 = vpop.f32.mrb[0].mxu0
    %v294 = vadd.f32 0.0, %v293
    %v295 = vpop.f32.mrb[0].mxu0
    %296 = vdwg.mxu0
    %v297 = vadd.f32 %v209, %v275
    %v298 = vadd.f32 %v210, %v278
    %v299 = vadd.f32 %v211, %v283
    %v300 = vadd.f32 %v212, %v286
    %v301 = vadd.f32 %v213, %v291
    %v302 = vadd.f32 %v214, %v294
    %303 = vst [vmem:[#allocation2] sm:$0xff] %v297
    %304 = vst [vmem:[#allocation2 + $0x8] sm:$0xff] %v298
    %305 = vst [vmem:[#allocation2 + $0x10] sm:$0xff] %v299
    %306 = vst [vmem:[#allocation2 + $0x18] sm:$0xff] %v300
    %307 = vst [vmem:[#allocation2 + $0x20] sm:$0xff] %v301
    %308 = vst [vmem:[#allocation2 + $0x28] sm:$0xff] %v302
    // Predicated region
    $region46: #{_lambda_.17} parent=1 // pred_check
      %p309 = pneg %p84
    $region47: #{_lambda_.17} parent=1 // pred_check_branch
      %311 = sbr.rel (%p309) target = $region49
    $region48: #{_lambda_.17} parent=1 // pred_region
      %v312 = vld [vmem:[#allocation2] sm:$0xff]
      %v313 = vld [vmem:[#allocation2 + $0x8] sm:$0xff]
      %v314 = vld [vmem:[#allocation2 + $0x10] sm:$0xff]
      %v315 = vld [vmem:[#allocation2 + $0x18] sm:$0xff]
      %v316 = vld [vmem:[#allocation2 + $0x20] sm:$0xff]
      %v317 = vld [vmem:[#allocation2 + $0x28] sm:$0xff]
      %v318 = vld [vmem:[#allocation8] sm:$0x1]
      %v320 = vlaneseq
      %v321 = vshrl.u32 %v320, 7
      %v322 = vsub.s32 0, %v321
      %v323 = vrot.slane %v318, %v322
      %v325 = vadd.f32 %v312, %v323
      %v326 = vadd.f32 %v313, %v323
      %v327 = vadd.f32 %v314, %v323
      %v328 = vadd.f32 %v315, %v323
      %v329 = vadd.f32 %v316, %v323
      %v330 = vadd.f32 %v317, %v323
      %v331 = vpack.c.bf16 %v326, %v325
      %v332 = vpack.c.bf16 %v328, %v327
      %v333 = vpack.c.bf16 %v330, %v329
      %v337 = vunpack.c.l.b16 %v331
      %v338 = vunpack.c.h.b16 %v331
      %v339 = vunpack.c.l.b16 %v332
      %v340 = vunpack.c.h.b16 %v332
      %v341 = vunpack.c.l.b16 %v333
      %v342 = vunpack.c.h.b16 %v333
      %v343 = vpack.c.b16 %v337, %v337
      %v344 = vpack.c.b16 %v338, %v338
      %v345 = vpack.c.b16 %v339, %v339
      %v346 = vpack.c.b16 %v340, %v340
      %v347 = vpack.c.b16 %v341, %v341
      %v348 = vpack.c.b16 %v342, %v342
      %355 = vst [vmem:[#allocation12] sm:$0xf] %v343
      %356 = vst [vmem:[#allocation12 + $0x4] sm:$0xf] %v344
      %357 = vst [vmem:[#allocation12 + $0x8] sm:$0xf] %v345
      %358 = vst [vmem:[#allocation12 + $0xc] sm:$0xf] %v346
      %359 = vst [vmem:[#allocation12 + $0x10] sm:$0xf] %v347
      %360 = vst [vmem:[#allocation12 + $0x14] sm:$0xf] %v348
    $region49: #{_lambda_.17} parent=1 // pred_fallthru
      _
    // Predicated region
    $region50: #{_lambda_.17} parent=1 // pred_check
      _
    $region51: #{_lambda_.17} parent=1 // pred_check_branch
      %362 = sbr.rel (0) target = $region53
    $region52: #{_lambda_.17} parent=1 // pred_region
      %s364 = ssub.s32 384, 384
      %365 = vsyncadd [#allocation5], %s364
      %s366 = sshll.u32 [#allocation12], 4
      %s367 = int_to_ptr.vmem [resolvable:$true] %s366
      %372 = dma.vmem_to_hbm [thread:$0]  %s367, 384, %s5, [#allocation5], 64, 64, 4
    $region53: #{_lambda_.17} parent=1 // pred_fallthru
      _
    // Predicated region
    $region54: #{_lambda_.17} parent=1 // pred_check
      _
    $region55: #{_lambda_.17} parent=1 // pred_check_branch
      %374 = sbr.rel (0) target = $region57
    $region56: #{_lambda_.17} parent=1 // pred_region
      %375 = dma.done [#allocation5], 384
    $region57: #{_lambda_.17} parent=1 // pred_fallthru
      _
    %376 = vsyncpa [#allocation4], 1
    %377 = vsyncpa [#allocation7], 1
    %378 = vsyncpa [#allocation10], 1
    %379 = vsyncpa [#allocation5], 1

// kernel: _lambda_.18
$region0: #{_lambda_.18}
  #allocation0 [shape = 'u32[]', space=smem, size = 0x4, offset = 0x4, fixed_abs, tag = 'smem constant byte address 0x4 - core index']
  #allocation1 [shape = 'u32[144,128]{1,0:T(1,128)}', space=vmem, size = 0x12000, scoped, tag = 'internal scratch']
  %s0 = inlined_call_operand.hbm [shape: bf16[48,128], index: 0, kind: input, shape index: {}]
  %s1 = inlined_call_operand.hbm [shape: bf16[48,32], index: 1, kind: output, shape index: {}]
  %s2 = sld [smem:[#allocation0]]
  $region41: #{_lambda_.18} parent=0
    _
  %s4 = ssub.s32 1, %s2
  %s5 = scalar_select 0, %s4, %s2
  $region1: #{_lambda_.18} parent=0
    #allocation2 [shape = 'u8[12288]{0}', space=vmem, size = 0x3000, scoped, tag = 'input window, operand 0']
    #allocation3 [shape = 's32[2]{0}', space=sflag, size = 0x8, scoped, tag = 'scoped memory for _lambda_.18']
    #allocation4 [shape = 's32[2]{0}', space=sflag, size = 0x8, scoped, tag = 'scoped memory for _lambda_.18']
    #allocation5 [shape = 'u8[12288]{0}', space=vmem, size = 0x3000, scoped, tag = 'output window, operand 0']
    %6 = vsyncpa [#allocation3], 0
    %s7 = scalar_lea.sflag [#allocation3], 1
    %8 = vsyncpa %s7, 0
    %9 = vsyncpa [#allocation4], 0
    %s10 = scalar_lea.sflag [#allocation4], 1
    %11 = vsyncpa %s10, 0
    loop: start=0, step=1, limit=4
    $region2: #{_lambda_.18} parent=1 // loop_pre_header
      _
    $region3: #{_lambda_.18} parent=1 // loop_header
      %s13 = sphi 0, %s17
      %p14 = scmp.ge.s32.totalorder %s13, 4
      %s23 = sphi 0, %s25
      %s26 = sphi 0, %s23
      %s27 = sphi 0, %s26
      %s43 = sphi 0, %s27
      %s49 = sphi 0, %s51
      %s52 = sphi 0, %s49
      %s53 = sphi 0, %s52
      %s69 = sphi 0, %s53
    $region4: #{_lambda_.18} parent=1 // loop_header_branch
      %16 = sbr.rel (%p14) target = $region8
    $region5: #{_lambda_.18} parent=1 // loop_body
      %s18 = ssub.s32 %s13, 1
      %s19 = ssub.s32 %s13, 2
      %s20 = sadd.s32 %s13, 1
      %s21 = ssub.s32 %s13, %s20
      %p22 = scmp.eq.s32.totalorder %s21, 0
      %s24 = sadd.s32 %s23, 1
      %s25 = scalar_select %p22, %s23, %s24
      %p28 = pneg %p22
      %p29 = scmp.eq.s32.totalorder %s13, 1
      %p30 = por %p28, %p29
      %p31 = scmp.ne.s32.totalorder %s23, %s26
      %p32 = scmp.eq.s32.totalorder %s13, 0
      %p33 = por %p31, %p32
      %p34 = scmp.ne.s32.totalorder %s23, %s26
      %p35 = scmp.eq.s32.totalorder %s18, 1
      %p36 = por %p34, %p35
      %p37 = scmp.ne.s32.totalorder %s26, %s27
      %p38 = scmp.eq.s32.totalorder %s18, 0
      %p39 = por %p37, %p38
      %p40 = scmp.ne.s32.totalorder %s26, %s27
      %p41 = scmp.eq.s32.totalorder %s19, 1
      %p42 = por %p40, %p41
      %p44 = scmp.ne.s32.totalorder %s27, %s43
      %p45 = scmp.eq.s32.totalorder %s19, 0
      %p46 = por %p44, %p45
      %s47 = ssub.s32 %s13, %s20
      %p48 = scmp.eq.s32.totalorder %s47, 0
      %s50 = sadd.s32 %s49, 1
      %s51 = scalar_select %p48, %s49, %s50
      %p54 = pneg %p48
      %p55 = scmp.eq.s32.totalorder %s13, 1
      %p56 = por %p54, %p55
      %p57 = scmp.ne.s32.totalorder %s49, %s52
      %p58 = scmp.eq.s32.totalorder %s13, 0
      %p59 = por %p57, %p58
      %p60 = scmp.ne.s32.totalorder %s49, %s52
      %p61 = scmp.eq.s32.totalorder %s18, 1
      %p62 = por %p60, %p61
      %p63 = scmp.ne.s32.totalorder %s52, %s53
      %p64 = scmp.eq.s32.totalorder %s18, 0
      %p65 = por %p63, %p64
      %p66 = scmp.ne.s32.totalorder %s52, %s53
      %p67 = scmp.eq.s32.totalorder %s19, 1
      %p68 = por %p66, %p67
      %p70 = scmp.ne.s32.totalorder %s53, %s69
      %p71 = scmp.eq.s32.totalorder %s19, 0
      %p72 = por %p70, %p71
      %p73 = scmp.le.s32.totalorder 1, %s13
      %p74 = scmp.lt.s32.totalorder %s13, 3
      %p75 = pnand %p73, %p74
      %p76 = pneg %p75
      // Predicated region
      $region9: #{_lambda_.18} parent=5 // pred_check
        _
      $region10: #{_lambda_.18} parent=5 // pred_check_branch
        %78 = sbr.rel (%p75) target = $region12
      $region11: #{_lambda_.18} parent=5 // pred_region
        %s79 = ssub.s32 %s13, 1
      $region12: #{_lambda_.18} parent=5 // pred_fallthru
        _
      %p80 = scmp.lt.s32.totalorder %s13, 2
      // Predicated region
      $region13: #{_lambda_.18} parent=5 // pred_check
        %p81 = pneg %p80
      $region14: #{_lambda_.18} parent=5 // pred_check_branch
        %83 = sbr.rel (%p81) target = $region16
      $region15: #{_lambda_.18} parent=5 // pred_region
        // Predicated region
        $region17: #{_lambda_.18} parent=15 // pred_check
          %p84 = pneg %p33
        $region18: #{_lambda_.18} parent=15 // pred_check_branch
          %86 = sbr.rel (%p84) target = $region20
        $region19: #{_lambda_.18} parent=15 // pred_region
          %s87 = sand.u32 %s23, 1
          %s88 = scalar_lea.sflag [#allocation3], %s87
          %s89 = sand.u32 %s23, 1
          %s90 = smul.addr %s89, 12
          %s91 = scalar_lea.vmem [#allocation2], %s90
          %s92 = smul.u32 3, %s13
          %s94 = ssub.s32 192, 192
          %95 = vsyncadd %s88, %s94
          %s96 = smul.addr %s92, 64
          %s97 = scalar_lea.hbm %s0, %s96
          %s98 = sshll.u32 %s91, 4
          %s99 = int_to_ptr.vmem [resolvable:$true] %s98
          %104 = dma.hbm_to_vmem [thread:$0]  %s97, 192, %s99, %s88, 64, 64, 4
        $region20: #{_lambda_.18} parent=15 // pred_fallthru
          _
      $region16: #{_lambda_.18} parent=5 // pred_fallthru
        _
      %p105 = scmp.le.s32.totalorder 1, %s13
      %p106 = scmp.lt.s32.totalorder %s13, 3
      %p107 = pnand %p105, %p106
      %p108 = pneg %p107
      // Predicated region
      $region21: #{_lambda_.18} parent=5 // pred_check
        _
      $region22: #{_lambda_.18} parent=5 // pred_check_branch
        %110 = sbr.rel (%p107) target = $region24
      $region23: #{_lambda_.18} parent=5 // pred_region
        %s111 = ssub.s32 %s13, 1
        %s112 = sand.u32 %s26, 1
        %s113 = scalar_lea.sflag [#allocation3], %s112
        %s114 = sand.u32 %s26, 1
        %s115 = smul.addr %s114, 12
        %s116 = scalar_lea.vmem [#allocation2], %s115
        // Predicated region
        $region25: #{_lambda_.18} parent=23 // pred_check
          %p117 = pneg %p39
        $region26: #{_lambda_.18} parent=23 // pred_check_branch
          %119 = sbr.rel (%p117) target = $region28
        $region27: #{_lambda_.18} parent=23 // pred_region
          %120 = dma.done %s113, 192
        $region28: #{_lambda_.18} parent=23 // pred_fallthru
          _
        %s121 = sand.u32 %s26, 1
        %s122 = scalar_lea.sflag [#allocation3], %s121
        %s123 = sand.u32 %s26, 1
        %s124 = smul.addr %s123, 12
        %s125 = scalar_lea.vmem [#allocation2], %s124
        %p126 = pneg %p39
        %p127 = pneg %p36
        %p128 = pneg %p65
        %p129 = pneg %p62
        %s130 = sand.u32 %s52, 1
        %s131 = scalar_lea.sflag [#allocation4], %s130
        %s132 = sand.u32 %s52, 1
        %s133 = smul.addr %s132, 12
        %s134 = scalar_lea.vmem [#allocation5], %s133
        %s135 = smul.u32 3, %s18
        %s136 = smul.u32 3, %s18
        %v138 = vld [vmem:[%s116] sm:$0xf]
        %v139 = vld [vmem:[%s116 + $0x4] sm:$0xf]
        %v140 = vld [vmem:[%s116 + $0x8] sm:$0xf]
        %v144 = vunpack.c.l.b16 %v138
        %v145 = vunpack.c.l.b16 %v139
        %v146 = vunpack.c.l.b16 %v140
        %v147 = vpack.c.b16 %v145, %v144
        %v148 = vpack.c.b16 %v146, %v146
        %149 = vrot.lane.b32.xlu0 %v147, 96
        %v150 = vpop.permute.xlu0 %149
        %151 = vrot.lane.b32.xlu0 %v148, 96
        %v152 = vpop.permute.xlu0 %151
        %vm153 = vcmask 64512
        %v155 = vsel %vm153, %v147, 0
        %v158 = vsel %vm153, %v148, 0
        %v161 = vsel %vm153, %v150, 0
        %v164 = vsel %vm153, %v152, 0
        %166 = vmatprep.subr.bf16.mxu0 0
        %167 = vmatpush1.bf16.xpose.msra.mxu0 %v161
        %168 = vmatprep.subr.bf16.mxu0 0
        %169 = vmatpush1.bf16.xpose.msra.mxu0 %v164
        %170 = vmatprep.subr.bf16.mxu0 0
        %171 = vmatpush1.bf16.xpose.msra.mxu0 0
        %172 = vmatprep.subr.bf16.mxu0 0
        %173 = vmatpush1.bf16.xpose.msra.mxu0 0
        %174 = vmatprep.subr.bf16.mxu0 0
        %175 = vmatpush1.bf16.xpose.msra.mxu0 0
        %176 = vmatprep.subr.bf16.mxu0 0
        %177 = vmatpush1.bf16.xpose.msra.mxu0 0
        %178 = vmatprep.subr.bf16.mxu0 0
        %179 = vmatpush1.bf16.xpose.msra.mxu0 0
        %180 = vmatprep.subr.bf16.mxu0 0
        %181 = vmatpush1.bf16.xpose.msra.mxu0 0
        %182 = vmatprep.subr.bf16.mxu0 0
        %183 = vmatpush1.bf16.xpose.msra.mxu0 0
        %184 = vmatprep.subr.bf16.mxu0 0
        %185 = vmatpush1.bf16.xpose.msra.mxu0 0
        %186 = vmatprep.subr.bf16.mxu0 0
        %187 = vmatpush1.bf16.xpose.msra.mxu0 0
        %188 = vmatprep.subr.bf16.mxu0 0
        %189 = vmatpush1.bf16.xpose.msra.mxu0 0
        %190 = vmatprep.subr.bf16.mxu0 0
        %191 = vmatpush1.bf16.xpose.msra.mxu0 0
        %192 = vmatprep.subr.bf16.mxu0 0
        %193 = vmatpush1.bf16.xpose.msra.mxu0 0
        %194 = vmatprep.subr.bf16.mxu0 0
        %195 = vmatpush1.bf16.xpose.msra.mxu0 0
        %196 = vmatprep.subr.bf16.mxu0 0
        %197 = vmatpush1.bf16.xpose.msra.mxu0 0
        %198 = vmatprep.mubr.bf16.mxu0 0
        %199 = vmatmul.mubr.bf16.gmra.mrb[0].mxu0 %v155
        %v200 = vpop.f32.mrb[0].mxu0
        %v201 = vadd.f32 0.0, %v200
        %v202 = vpop.f32.mrb[0].mxu0
        %v203 = vpop.f32.mrb[0].mxu0
        %v204 = vadd.f32 0.0, %v203
        %v205 = vpop.f32.mrb[0].mxu0
        %206 = vmatprep.mubr.bf16.mxu0 0
        %207 = vmatmul.mubr.bf16.gmra.mrb[0].mxu0 %v158
        %v208 = vpop.f32.mrb[0].mxu0
        %v209 = vadd.f32 0.0, %v208
        %v210 = vpop.f32.mrb[0].mxu0
        %v211 = vpop.f32.mrb[0].mxu0
        %v212 = vpop.f32.mrb[0].mxu0
        %213 = vdwg.mxu0
        %v214 = vmul.f32 %v201, 0.35355338
        %v215 = vmul.f32 %v204, 0.35355338
        %v216 = vmul.f32 %v209, 0.35355338
        %v217 = vlaneseq
        %v218 = vand.u32 %v217, 127
        %vm219 = vcmp.lt.s32.totalorder %v218, 17
        %v220 = vsel %vm219, %v214, -1e+30
        %v221 = vsel %vm219, %v215, -1e+30
        %v222 = vsel %vm219, %v216, -1e+30
        %vm223 = vcmask 195584
        %v224 = vsel %vm223, %v220, -inf
        %225 = vmax.xlane.f32.xlu0 %v224
        %v226 = vpop.xlane.xlu0 %225
        %v227 = vsel %vm223, %v221, -inf
        %228 = vmax.xlane.f32.xlu0 %v227
        %v229 = vpop.xlane.xlu0 %228
        %v230 = vsel %vm223, %v222, -inf
        %231 = vmax.xlane.f32.xlu0 %v230
        %v232 = vpop.xlane.xlu0 %231
        %v233 = vsub.f32 %v220, %v226
        %v234 = vsub.f32 %v221, %v229
        %v235 = vsub.f32 %v222, %v232
        %v236 = vmul.f32 %v233, 1.442695
        %v237 = vpow.pop %v236
        %v238 = vmul.f32 %v234, 1.442695
        %v239 = vpow.pop %v238
        %v240 = vmul.f32 %v235, 1.442695
        %v241 = vpow.pop %v240
        %v242 = vsel %vm223, %v237, 0.0
        %243 = vadd.xlane.f32.xlu0 %v242
        %v244 = vpop.xlane.xlu0 %243
        %v245 = vsel %vm223, %v239, 0.0
        %246 = vadd.xlane.f32.xlu0 %v245
        %v247 = vpop.xlane.xlu0 %246
        %v248 = vsel %vm223, %v241, 0.0
        %249 = vadd.xlane.f32.xlu0 %v248
        %v250 = vpop.xlane.xlu0 %249
        %v251 = vrcp.pop %v244
        %v252 = vrcp.pop %v247
        %v253 = vrcp.pop %v250
        %v254 = vmul.f32 %v237, %v251
        %v255 = vmul.f32 %v239, %v252
        %v256 = vmul.f32 %v241, %v253
        %v257 = vpack.c.bf16 %v255, %v254
        %v258 = vpack.c.bf16 %v256, %v256
        %259 = vrot.lane.b32.xlu0 %v147, 64
        %v260 = vpop.permute.xlu0 %259
        %261 = vrot.lane.b32.xlu0 %v148, 64
        %v262 = vpop.permute.xlu0 %261
        %v265 = vsel %vm223, %v257, 0
        %v268 = vsel %vm223, %v258, 0
        %vm270 = vcmask 1043456
        %v272 = vsel %vm270, %v262, 0
        %274 = vmatprep.subr.bf16.mxu0 0
        %275 = vmatpush1.bf16.msra.mxu0 %v260
        %276 = vmatprep.subr.bf16.mxu0 0
        %277 = vmatpush1.bf16.msra.mxu0 %v272
        %278 = vmatprep.subr.bf16.mxu0 0
        %279 = vmatpush1.bf16.msra.mxu0 0
        %280 = vmatprep.subr.bf16.mxu0 0
        %281 = vmatpush1.bf16.msra.mxu0 0
        %282 = vmatprep.subr.bf16.mxu0 0
        %283 = vmatpush1.bf16.msra.mxu0 0
        %284 = vmatprep.subr.bf16.mxu0 0
        %285 = vmatpush1.bf16.msra.mxu0 0
        %286 = vmatprep.subr.bf16.mxu0 0
        %287 = vmatpush1.bf16.msra.mxu0 0
        %288 = vmatprep.subr.bf16.mxu0 0
        %289 = vmatpush1.bf16.msra.mxu0 0
        %290 = vmatprep.subr.bf16.mxu0 0
        %291 = vmatpush1.bf16.msra.mxu0 0
        %292 = vmatprep.subr.bf16.mxu0 0
        %293 = vmatpush1.bf16.msra.mxu0 0
        %294 = vmatprep.subr.bf16.mxu0 0
        %295 = vmatpush1.bf16.msra.mxu0 0
        %296 = vmatprep.subr.bf16.mxu0 0
        %297 = vmatpush1.bf16.msra.mxu0 0
        %298 = vmatprep.subr.bf16.mxu0 0
        %299 = vmatpush1.bf16.msra.mxu0 0
        %300 = vmatprep.subr.bf16.mxu0 0
        %301 = vmatpush1.bf16.msra.mxu0 0
        %302 = vmatprep.subr.bf16.mxu0 0
        %303 = vmatpush1.bf16.msra.mxu0 0
        %304 = vmatprep.subr.bf16.mxu0 0
        %305 = vmatpush1.bf16.msra.mxu0 0
        %306 = vmatprep.mubr.bf16.mxu0 0
        %307 = vmatmul.mubr.bf16.gmra.mrb[0].mxu0 %v265
        %v308 = vpop.f32.mrb[0].mxu0
        %v309 = vadd.f32 0.0, %v308
        %v310 = vpop.f32.mrb[0].mxu0
        %v311 = vpop.f32.mrb[0].mxu0
        %v312 = vadd.f32 0.0, %v311
        %v313 = vpop.f32.mrb[0].mxu0
        %314 = vmatprep.mubr.bf16.mxu0 0
        %315 = vmatmul.mubr.bf16.gmra.mrb[0].mxu0 %v268
        %v316 = vpop.f32.mrb[0].mxu0
        %v317 = vadd.f32 0.0, %v316
        %v318 = vpop.f32.mrb[0].mxu0
        %v319 = vpop.f32.mrb[0].mxu0
        %v320 = vpop.f32.mrb[0].mxu0
        %321 = vdwg.mxu0
        %322 = vrot.lane.b32.xlu0 %v147, 120
        %v323 = vpop.permute.xlu0 %322
        %324 = vrot.lane.b32.xlu0 %v148, 120
        %v325 = vpop.permute.xlu0 %324
        %326 = vrot.lane.b32.xlu0 %v147, 88
        %v327 = vpop.permute.xlu0 %326
        %328 = vrot.lane.b32.xlu0 %v148, 88
        %v329 = vpop.permute.xlu0 %328
        %v331 = vsel %vm153, %v323, 0
        %v334 = vsel %vm153, %v325, 0
        %v337 = vsel %vm153, %v327, 0
        %v340 = vsel %vm153, %v329, 0
        %342 = vmatprep.subr.bf16.mxu0 0
        %343 = vmatpush1.bf16.xpose.msra.mxu0 %v337
        %344 = vmatprep.subr.bf16.mxu0 0
        %345 = vmatpush1.bf16.xpose.msra.mxu0 %v340
        %346 = vmatprep.subr.bf16.mxu0 0
        %347 = vmatpush1.bf16.xpose.msra.mxu0 0
        %348 = vmatprep.subr.bf16.mxu0 0
        %349 = vmatpush1.bf16.xpose.msra.mxu0 0
        %350 = vmatprep.subr.bf16.mxu0 0
        %351 = vmatpush1.bf16.xpose.msra.mxu0 0
        %352 = vmatprep.subr.bf16.mxu0 0
        %353 = vmatpush1.bf16.xpose.msra.mxu0 0
        %354 = vmatprep.subr.bf16.mxu0 0
        %355 = vmatpush1.bf16.xpose.msra.mxu0 0
        %356 = vmatprep.subr.bf16.mxu0 0
        %357 = vmatpush1.bf16.xpose.msra.mxu0 0
        %358 = vmatprep.subr.bf16.mxu0 0
        %359 = vmatpush1.bf16.xpose.msra.mxu0 0
        %360 = vmatprep.subr.bf16.mxu0 0
        %361 = vmatpush1.bf16.xpose.msra.mxu0 0
        %362 = vmatprep.subr.bf16.mxu0 0
        %363 = vmatpush1.bf16.xpose.msra.mxu0 0
        %364 = vmatprep.subr.bf16.mxu0 0
        %365 = vmatpush1.bf16.xpose.msra.mxu0 0
        %366 = vmatprep.subr.bf16.mxu0 0
        %367 = vmatpush1.bf16.xpose.msra.mxu0 0
        %368 = vmatprep.subr.bf16.mxu0 0
        %369 = vmatpush1.bf16.xpose.msra.mxu0 0
        %370 = vmatprep.subr.bf16.mxu0 0
        %371 = vmatpush1.bf16.xpose.msra.mxu0 0
        %372 = vmatprep.subr.bf16.mxu0 0
        %373 = vmatpush1.bf16.xpose.msra.mxu0 0
        %374 = vmatprep.mubr.bf16.mxu0 0
        %375 = vmatmul.mubr.bf16.gmra.mrb[0].mxu0 %v331
        %v376 = vpop.f32.mrb[0].mxu0
        %v377 = vadd.f32 0.0, %v376
        %v378 = vpop.f32.mrb[0].mxu0
        %v379 = vpop.f32.mrb[0].mxu0
        %v380 = vadd.f32 0.0, %v379
        %v381 = vpop.f32.mrb[0].mxu0
        %382 = vmatprep.mubr.bf16.mxu0 0
        %383 = vmatmul.mubr.bf16.gmra.mrb[0].mxu0 %v334
        %v384 = vpop.f32.mrb[0].mxu0
        %v385 = vadd.f32 0.0, %v384
        %v386 = vpop.f32.mrb[0].mxu0
        %v387 = vpop.f32.mrb[0].mxu0
        %v388 = vpop.f32.mrb[0].mxu0
        %389 = vdwg.mxu0
        %v390 = vmul.f32 %v377, 0.35355338
        %v391 = vmul.f32 %v380, 0.35355338
        %v392 = vmul.f32 %v385, 0.35355338
        %v393 = vsel %vm219, %v390, -1e+30
        %v394 = vsel %vm219, %v391, -1e+30
        %v395 = vsel %vm219, %v392, -1e+30
        %v396 = vsel %vm223, %v393, -inf
        %397 = vmax.xlane.f32.xlu0 %v396
        %v398 = vpop.xlane.xlu0 %397
        %v399 = vsel %vm223, %v394, -inf
        %400 = vmax.xlane.f32.xlu0 %v399
        %v401 = vpop.xlane.xlu0 %400
        %v402 = vsel %vm223, %v395, -inf
        %403 = vmax.xlane.f32.xlu0 %v402
        %v404 = vpop.xlane.xlu0 %403
        %v405 = vsub.f32 %v393, %v398
        %v406 = vsub.f32 %v394, %v401
        %v407 = vsub.f32 %v395, %v404
        %v408 = vmul.f32 %v405, 1.442695
        %v409 = vpow.pop %v408
        %v410 = vmul.f32 %v406, 1.442695
        %v411 = vpow.pop %v410
        %v412 = vmul.f32 %v407, 1.442695
        %v413 = vpow.pop %v412
        %v414 = vsel %vm223, %v409, 0.0
        %415 = vadd.xlane.f32.xlu0 %v414
        %v416 = vpop.xlane.xlu0 %415
        %v417 = vsel %vm223, %v411, 0.0
        %418 = vadd.xlane.f32.xlu0 %v417
        %v419 = vpop.xlane.xlu0 %418
        %v420 = vsel %vm223, %v413, 0.0
        %421 = vadd.xlane.f32.xlu0 %v420
        %v422 = vpop.xlane.xlu0 %421
        %v423 = vrcp.pop %v416
        %v424 = vrcp.pop %v419
        %v425 = vrcp.pop %v422
        %v426 = vmul.f32 %v409, %v423
        %v427 = vmul.f32 %v411, %v424
        %v428 = vmul.f32 %v413, %v425
        %v429 = vpack.c.bf16 %v427, %v426
        %v430 = vpack.c.bf16 %v428, %v428
        %431 = vrot.lane.b32.xlu0 %v147, 56
        %v432 = vpop.permute.xlu0 %431
        %433 = vrot.lane.b32.xlu0 %v148, 56
        %v434 = vpop.permute.xlu0 %433
        %v437 = vsel %vm223, %v429, 0
        %v440 = vsel %vm223, %v430, 0
        %v443 = vsel %vm270, %v434, 0
        %445 = vmatprep.subr.bf16.mxu0 0
        %446 = vmatpush1.bf16.msra.mxu0 %v432
        %447 = vmatprep.subr.bf16.mxu0 0
        %448 = vmatpush1.bf16.msra.mxu0 %v443
        %449 = vmatprep.subr.bf16.mxu0 0
        %450 = vmatpush1.bf16.msra.mxu0 0
        %451 = vmatprep.subr.bf16.mxu0 0
        %452 = vmatpush1.bf16.msra.mxu0 0
        %453 = vmatprep.subr.bf16.mxu0 0
        %454 = vmatpush1.bf16.msra.mxu0 0
        %455 = vmatprep.subr.bf16.mxu0 0
        %456 = vmatpush1.bf16.msra.mxu0 0
        %457 = vmatprep.subr.bf16.mxu0 0
        %458 = vmatpush1.bf16.msra.mxu0 0
        %459 = vmatprep.subr.bf16.mxu0 0
        %460 = vmatpush1.bf16.msra.mxu0 0
        %461 = vmatprep.subr.bf16.mxu0 0
        %462 = vmatpush1.bf16.msra.mxu0 0
        %463 = vmatprep.subr.bf16.mxu0 0
        %464 = vmatpush1.bf16.msra.mxu0 0
        %465 = vmatprep.subr.bf16.mxu0 0
        %466 = vmatpush1.bf16.msra.mxu0 0
        %467 = vmatprep.subr.bf16.mxu0 0
        %468 = vmatpush1.bf16.msra.mxu0 0
        %469 = vmatprep.subr.bf16.mxu0 0
        %470 = vmatpush1.bf16.msra.mxu0 0
        %471 = vmatprep.subr.bf16.mxu0 0
        %472 = vmatpush1.bf16.msra.mxu0 0
        %473 = vmatprep.subr.bf16.mxu0 0
        %474 = vmatpush1.bf16.msra.mxu0 0
        %475 = vmatprep.subr.bf16.mxu0 0
        %476 = vmatpush1.bf16.msra.mxu0 0
        %477 = vmatprep.mubr.bf16.mxu0 0
        %478 = vmatmul.mubr.bf16.gmra.mrb[0].mxu0 %v437
        %v479 = vpop.f32.mrb[0].mxu0
        %v480 = vadd.f32 0.0, %v479
        %v481 = vpop.f32.mrb[0].mxu0
        %v482 = vpop.f32.mrb[0].mxu0
        %v483 = vadd.f32 0.0, %v482
        %v484 = vpop.f32.mrb[0].mxu0
        %485 = vmatprep.mubr.bf16.mxu0 0
        %486 = vmatmul.mubr.bf16.gmra.mrb[0].mxu0 %v440
        %v487 = vpop.f32.mrb[0].mxu0
        %v488 = vadd.f32 0.0, %v487
        %v489 = vpop.f32.mrb[0].mxu0
        %v490 = vpop.f32.mrb[0].mxu0
        %v491 = vpop.f32.mrb[0].mxu0
        %492 = vdwg.mxu0
        %493 = vrot.lane.b32.xlu0 %v147, 112
        %v494 = vpop.permute.xlu0 %493
        %495 = vrot.lane.b32.xlu0 %v148, 112
        %v496 = vpop.permute.xlu0 %495
        %497 = vrot.lane.b32.xlu0 %v147, 80
        %v498 = vpop.permute.xlu0 %497
        %499 = vrot.lane.b32.xlu0 %v148, 80
        %v500 = vpop.permute.xlu0 %499
        %v502 = vsel %vm153, %v494, 0
        %v505 = vsel %vm153, %v496, 0
        %v508 = vsel %vm153, %v498, 0
        %v511 = vsel %vm153, %v500, 0
        %513 = vmatprep.subr.bf16.mxu0 0
        %514 = vmatpush1.bf16.xpose.msra.mxu0 %v508
        %515 = vmatprep.subr.bf16.mxu0 0
        %516 = vmatpush1.bf16.xpose.msra.mxu0 %v511
        %517 = vmatprep.subr.bf16.mxu0 0
        %518 = vmatpush1.bf16.xpose.msra.mxu0 0
        %519 = vmatprep.subr.bf16.mxu0 0
        %520 = vmatpush1.bf16.xpose.msra.mxu0 0
        %521 = vmatprep.subr.bf16.mxu0 0
        %522 = vmatpush1.bf16.xpose.msra.mxu0 0
        %523 = vmatprep.subr.bf16.mxu0 0
        %524 = vmatpush1.bf16.xpose.msra.mxu0 0
        %525 = vmatprep.subr.bf16.mxu0 0
        %526 = vmatpush1.bf16.xpose.msra.mxu0 0
        %527 = vmatprep.subr.bf16.mxu0 0
        %528 = vmatpush1.bf16.xpose.msra.mxu0 0
        %529 = vmatprep.subr.bf16.mxu0 0
        %530 = vmatpush1.bf16.xpose.msra.mxu0 0
        %531 = vmatprep.subr.bf16.mxu0 0
        %532 = vmatpush1.bf16.xpose.msra.mxu0 0
        %533 = vmatprep.subr.bf16.mxu0 0
        %534 = vmatpush1.bf16.xpose.msra.mxu0 0
        %535 = vmatprep.subr.bf16.mxu0 0
        %536 = vmatpush1.bf16.xpose.msra.mxu0 0
        %537 = vmatprep.subr.bf16.mxu0 0
        %538 = vmatpush1.bf16.xpose.msra.mxu0 0
        %539 = vmatprep.subr.bf16.mxu0 0
        %540 = vmatpush1.bf16.xpose.msra.mxu0 0
        %541 = vmatprep.subr.bf16.mxu0 0
        %542 = vmatpush1.bf16.xpose.msra.mxu0 0
        %543 = vmatprep.subr.bf16.mxu0 0
        %544 = vmatpush1.bf16.xpose.msra.mxu0 0
        %545 = vmatprep.mubr.bf16.mxu0 0
        %546 = vmatmul.mubr.bf16.gmra.mrb[0].mxu0 %v502
        %v547 = vpop.f32.mrb[0].mxu0
        %v548 = vadd.f32 0.0, %v547
        %v549 = vpop.f32.mrb[0].mxu0
        %v550 = vpop.f32.mrb[0].mxu0
        %v551 = vadd.f32 0.0, %v550
        %v552 = vpop.f32.mrb[0].mxu0
        %553 = vmatprep.mubr.bf16.mxu0 0
        %554 = vmatmul.mubr.bf16.gmra.mrb[0].mxu0 %v505
        %v555 = vpop.f32.mrb[0].mxu0
        %v556 = vadd.f32 0.0, %v555
        %v557 = vpop.f32.mrb[0].mxu0
        %v558 = vpop.f32.mrb[0].mxu0
        %v559 = vpop.f32.mrb[0].mxu0
        %560 = vdwg.mxu0
        %v561 = vmul.f32 %v548, 0.35355338
        %v562 = vmul.f32 %v551, 0.35355338
        %v563 = vmul.f32 %v556, 0.35355338
        %v564 = vsel %vm219, %v561, -1e+30
        %v565 = vsel %vm219, %v562, -1e+30
        %v566 = vsel %vm219, %v563, -1e+30
        %v567 = vsel %vm223, %v564, -inf
        %568 = vmax.xlane.f32.xlu0 %v567
        %v569 = vpop.xlane.xlu0 %568
        %v570 = vsel %vm223, %v565, -inf
        %571 = vmax.xlane.f32.xlu0 %v570
        %v572 = vpop.xlane.xlu0 %571
        %v573 = vsel %vm223, %v566, -inf
        %574 = vmax.xlane.f32.xlu0 %v573
        %v575 = vpop.xlane.xlu0 %574
        %v576 = vsub.f32 %v564, %v569
        %v577 = vsub.f32 %v565, %v572
        %v578 = vsub.f32 %v566, %v575
        %v579 = vmul.f32 %v576, 1.442695
        %v580 = vpow.pop %v579
        %v581 = vmul.f32 %v577, 1.442695
        %v582 = vpow.pop %v581
        %v583 = vmul.f32 %v578, 1.442695
        %v584 = vpow.pop %v583
        %v585 = vsel %vm223, %v580, 0.0
        %586 = vadd.xlane.f32.xlu0 %v585
        %v587 = vpop.xlane.xlu0 %586
        %v588 = vsel %vm223, %v582, 0.0
        %589 = vadd.xlane.f32.xlu0 %v588
        %v590 = vpop.xlane.xlu0 %589
        %v591 = vsel %vm223, %v584, 0.0
        %592 = vadd.xlane.f32.xlu0 %v591
        %v593 = vpop.xlane.xlu0 %592
        %v594 = vrcp.pop %v587
        %v595 = vrcp.pop %v590
        %v596 = vrcp.pop %v593
        %v597 = vmul.f32 %v580, %v594
        %v598 = vmul.f32 %v582, %v595
        %v599 = vmul.f32 %v584, %v596
        %v600 = vpack.c.bf16 %v598, %v597
        %v601 = vpack.c.bf16 %v599, %v599
        %602 = vrot.lane.b32.xlu0 %v147, 48
        %v603 = vpop.permute.xlu0 %602
        %604 = vrot.lane.b32.xlu0 %v148, 48
        %v605 = vpop.permute.xlu0 %604
        %v608 = vsel %vm223, %v600, 0
        %v611 = vsel %vm223, %v601, 0
        %v614 = vsel %vm270, %v605, 0
        %616 = vmatprep.subr.bf16.mxu0 0
        %617 = vmatpush1.bf16.msra.mxu0 %v603
        %618 = vmatprep.subr.bf16.mxu0 0
        %619 = vmatpush1.bf16.msra.mxu0 %v614
        %620 = vmatprep.subr.bf16.mxu0 0
        %621 = vmatpush1.bf16.msra.mxu0 0
        %622 = vmatprep.subr.bf16.mxu0 0
        %623 = vmatpush1.bf16.msra.mxu0 0
        %624 = vmatprep.subr.bf16.mxu0 0
        %625 = vmatpush1.bf16.msra.mxu0 0
        %626 = vmatprep.subr.bf16.mxu0 0
        %627 = vmatpush1.bf16.msra.mxu0 0
        %628 = vmatprep.subr.bf16.mxu0 0
        %629 = vmatpush1.bf16.msra.mxu0 0
        %630 = vmatprep.subr.bf16.mxu0 0
        %631 = vmatpush1.bf16.msra.mxu0 0
        %632 = vmatprep.subr.bf16.mxu0 0
        %633 = vmatpush1.bf16.msra.mxu0 0
        %634 = vmatprep.subr.bf16.mxu0 0
        %635 = vmatpush1.bf16.msra.mxu0 0
        %636 = vmatprep.subr.bf16.mxu0 0
        %637 = vmatpush1.bf16.msra.mxu0 0
        %638 = vmatprep.subr.bf16.mxu0 0
        %639 = vmatpush1.bf16.msra.mxu0 0
        %640 = vmatprep.subr.bf16.mxu0 0
        %641 = vmatpush1.bf16.msra.mxu0 0
        %642 = vmatprep.subr.bf16.mxu0 0
        %643 = vmatpush1.bf16.msra.mxu0 0
        %644 = vmatprep.subr.bf16.mxu0 0
        %645 = vmatpush1.bf16.msra.mxu0 0
        %646 = vmatprep.subr.bf16.mxu0 0
        %647 = vmatpush1.bf16.msra.mxu0 0
        %648 = vmatprep.mubr.bf16.mxu0 0
        %649 = vmatmul.mubr.bf16.gmra.mrb[0].mxu0 %v608
        %v650 = vpop.f32.mrb[0].mxu0
        %v651 = vadd.f32 0.0, %v650
        %v652 = vpop.f32.mrb[0].mxu0
        %v653 = vpop.f32.mrb[0].mxu0
        %v654 = vadd.f32 0.0, %v653
        %v655 = vpop.f32.mrb[0].mxu0
        %656 = vmatprep.mubr.bf16.mxu0 0
        %657 = vmatmul.mubr.bf16.gmra.mrb[0].mxu0 %v611
        %v658 = vpop.f32.mrb[0].mxu0
        %v659 = vadd.f32 0.0, %v658
        %v660 = vpop.f32.mrb[0].mxu0
        %v661 = vpop.f32.mrb[0].mxu0
        %v662 = vpop.f32.mrb[0].mxu0
        %663 = vdwg.mxu0
        %664 = vrot.lane.b32.xlu0 %v147, 104
        %v665 = vpop.permute.xlu0 %664
        %666 = vrot.lane.b32.xlu0 %v148, 104
        %v667 = vpop.permute.xlu0 %666
        %668 = vrot.lane.b32.xlu0 %v147, 72
        %v669 = vpop.permute.xlu0 %668
        %670 = vrot.lane.b32.xlu0 %v148, 72
        %v671 = vpop.permute.xlu0 %670
        %v673 = vsel %vm153, %v665, 0
        %v676 = vsel %vm153, %v667, 0
        %v679 = vsel %vm153, %v669, 0
        %v682 = vsel %vm153, %v671, 0
        %684 = vmatprep.subr.bf16.mxu0 0
        %685 = vmatpush1.bf16.xpose.msra.mxu0 %v679
        %686 = vmatprep.subr.bf16.mxu0 0
        %687 = vmatpush1.bf16.xpose.msra.mxu0 %v682
        %688 = vmatprep.subr.bf16.mxu0 0
        %689 = vmatpush1.bf16.xpose.msra.mxu0 0
        %690 = vmatprep.subr.bf16.mxu0 0
        %691 = vmatpush1.bf16.xpose.msra.mxu0 0
        %692 = vmatprep.subr.bf16.mxu0 0
        %693 = vmatpush1.bf16.xpose.msra.mxu0 0
        %694 = vmatprep.subr.bf16.mxu0 0
        %695 = vmatpush1.bf16.xpose.msra.mxu0 0
        %696 = vmatprep.subr.bf16.mxu0 0
        %697 = vmatpush1.bf16.xpose.msra.mxu0 0
        %698 = vmatprep.subr.bf16.mxu0 0
        %699 = vmatpush1.bf16.xpose.msra.mxu0 0
        %700 = vmatprep.subr.bf16.mxu0 0
        %701 = vmatpush1.bf16.xpose.msra.mxu0 0
        %702 = vmatprep.subr.bf16.mxu0 0
        %703 = vmatpush1.bf16.xpose.msra.mxu0 0
        %704 = vmatprep.subr.bf16.mxu0 0
        %705 = vmatpush1.bf16.xpose.msra.mxu0 0
        %706 = vmatprep.subr.bf16.mxu0 0
        %707 = vmatpush1.bf16.xpose.msra.mxu0 0
        %708 = vmatprep.subr.bf16.mxu0 0
        %709 = vmatpush1.bf16.xpose.msra.mxu0 0
        %710 = vmatprep.subr.bf16.mxu0 0
        %711 = vmatpush1.bf16.xpose.msra.mxu0 0
        %712 = vmatprep.subr.bf16.mxu0 0
        %713 = vmatpush1.bf16.xpose.msra.mxu0 0
        %714 = vmatprep.subr.bf16.mxu0 0
        %715 = vmatpush1.bf16.xpose.msra.mxu0 0
        %716 = vmatprep.mubr.bf16.mxu0 0
        %717 = vmatmul.mubr.bf16.gmra.mrb[0].mxu0 %v673
        %v718 = vpop.f32.mrb[0].mxu0
        %v719 = vadd.f32 0.0, %v718
        %v720 = vpop.f32.mrb[0].mxu0
        %v721 = vpop.f32.mrb[0].mxu0
        %v722 = vadd.f32 0.0, %v721
        %v723 = vpop.f32.mrb[0].mxu0
        %724 = vmatprep.mubr.bf16.mxu0 0
        %725 = vmatmul.mubr.bf16.gmra.mrb[0].mxu0 %v676
        %v726 = vpop.f32.mrb[0].mxu0
        %v727 = vadd.f32 0.0, %v726
        %v728 = vpop.f32.mrb[0].mxu0
        %v729 = vpop.f32.mrb[0].mxu0
        %v730 = vpop.f32.mrb[0].mxu0
        %731 = vdwg.mxu0
        %v732 = vmul.f32 %v719, 0.35355338
        %v733 = vmul.f32 %v722, 0.35355338
        %v734 = vmul.f32 %v727, 0.35355338
        %v735 = vsel %vm219, %v732, -1e+30
        %v736 = vsel %vm219, %v733, -1e+30
        %v737 = vsel %vm219, %v734, -1e+30
        %v738 = vsel %vm223, %v735, -inf
        %739 = vmax.xlane.f32.xlu0 %v738
        %v740 = vpop.xlane.xlu0 %739
        %v741 = vsel %vm223, %v736, -inf
        %742 = vmax.xlane.f32.xlu0 %v741
        %v743 = vpop.xlane.xlu0 %742
        %v744 = vsel %vm223, %v737, -inf
        %745 = vmax.xlane.f32.xlu0 %v744
        %v746 = vpop.xlane.xlu0 %745
        %v747 = vsub.f32 %v735, %v740
        %v748 = vsub.f32 %v736, %v743
        %v749 = vsub.f32 %v737, %v746
        %v750 = vmul.f32 %v747, 1.442695
        %v751 = vpow.pop %v750
        %v752 = vmul.f32 %v748, 1.442695
        %v753 = vpow.pop %v752
        %v754 = vmul.f32 %v749, 1.442695
        %v755 = vpow.pop %v754
        %v756 = vsel %vm223, %v751, 0.0
        %757 = vadd.xlane.f32.xlu0 %v756
        %v758 = vpop.xlane.xlu0 %757
        %v759 = vsel %vm223, %v753, 0.0
        %760 = vadd.xlane.f32.xlu0 %v759
        %v761 = vpop.xlane.xlu0 %760
        %v762 = vsel %vm223, %v755, 0.0
        %763 = vadd.xlane.f32.xlu0 %v762
        %v764 = vpop.xlane.xlu0 %763
        %v765 = vrcp.pop %v758
        %v766 = vrcp.pop %v761
        %v767 = vrcp.pop %v764
        %v768 = vmul.f32 %v751, %v765
        %v769 = vmul.f32 %v753, %v766
        %v770 = vmul.f32 %v755, %v767
        %v771 = vpack.c.bf16 %v769, %v768
        %v772 = vpack.c.bf16 %v770, %v770
        %773 = vrot.lane.b32.xlu0 %v147, 40
        %v774 = vpop.permute.xlu0 %773
        %775 = vrot.lane.b32.xlu0 %v148, 40
        %v776 = vpop.permute.xlu0 %775
        %v779 = vsel %vm223, %v771, 0
        %v782 = vsel %vm223, %v772, 0
        %v785 = vsel %vm270, %v776, 0
        %787 = vmatprep.subr.bf16.mxu0 0
        %788 = vmatpush1.bf16.msra.mxu0 %v774
        %789 = vmatprep.subr.bf16.mxu0 0
        %790 = vmatpush1.bf16.msra.mxu0 %v785
        %791 = vmatprep.subr.bf16.mxu0 0
        %792 = vmatpush1.bf16.msra.mxu0 0
        %793 = vmatprep.subr.bf16.mxu0 0
        %794 = vmatpush1.bf16.msra.mxu0 0
        %795 = vmatprep.subr.bf16.mxu0 0
        %796 = vmatpush1.bf16.msra.mxu0 0
        %797 = vmatprep.subr.bf16.mxu0 0
        %798 = vmatpush1.bf16.msra.mxu0 0
        %799 = vmatprep.subr.bf16.mxu0 0
        %800 = vmatpush1.bf16.msra.mxu0 0
        %801 = vmatprep.subr.bf16.mxu0 0
        %802 = vmatpush1.bf16.msra.mxu0 0
        %803 = vmatprep.subr.bf16.mxu0 0
        %804 = vmatpush1.bf16.msra.mxu0 0
        %805 = vmatprep.subr.bf16.mxu0 0
        %806 = vmatpush1.bf16.msra.mxu0 0
        %807 = vmatprep.subr.bf16.mxu0 0
        %808 = vmatpush1.bf16.msra.mxu0 0
        %809 = vmatprep.subr.bf16.mxu0 0
        %810 = vmatpush1.bf16.msra.mxu0 0
        %811 = vmatprep.subr.bf16.mxu0 0
        %812 = vmatpush1.bf16.msra.mxu0 0
        %813 = vmatprep.subr.bf16.mxu0 0
        %814 = vmatpush1.bf16.msra.mxu0 0
        %815 = vmatprep.subr.bf16.mxu0 0
        %816 = vmatpush1.bf16.msra.mxu0 0
        %817 = vmatprep.subr.bf16.mxu0 0
        %818 = vmatpush1.bf16.msra.mxu0 0
        %819 = vmatprep.mubr.bf16.mxu0 0
        %820 = vmatmul.mubr.bf16.gmra.mrb[0].mxu0 %v779
        %v821 = vpop.f32.mrb[0].mxu0
        %v822 = vadd.f32 0.0, %v821
        %v823 = vpop.f32.mrb[0].mxu0
        %v824 = vpop.f32.mrb[0].mxu0
        %v825 = vadd.f32 0.0, %v824
        %v826 = vpop.f32.mrb[0].mxu0
        %827 = vmatprep.mubr.bf16.mxu0 0
        %828 = vmatmul.mubr.bf16.gmra.mrb[0].mxu0 %v782
        %v829 = vpop.f32.mrb[0].mxu0
        %v830 = vadd.f32 0.0, %v829
        %v831 = vpop.f32.mrb[0].mxu0
        %v832 = vpop.f32.mrb[0].mxu0
        %v833 = vpop.f32.mrb[0].mxu0
        %834 = vdwg.mxu0
        %838 = vrot.lane.b32.xlu0 %v480, 8
        %v839 = vpop.permute.xlu0 %838
        %840 = vrot.lane.b32.xlu0 %v483, 8
        %v841 = vpop.permute.xlu0 %840
        %842 = vrot.lane.b32.xlu0 %v488, 8
        %v843 = vpop.permute.xlu0 %842
        %850 = vrot.lane.b32.xlu0 %v651, 16
        %v851 = vpop.permute.xlu0 %850
        %852 = vrot.lane.b32.xlu0 %v654, 16
        %v853 = vpop.permute.xlu0 %852
        %854 = vrot.lane.b32.xlu0 %v659, 16
        %v855 = vpop.permute.xlu0 %854
        %862 = vrot.lane.b32.xlu0 %v822, 24
        %v863 = vpop.permute.xlu0 %862
        %864 = vrot.lane.b32.xlu0 %v825, 24
        %v865 = vpop.permute.xlu0 %864
        %866 = vrot.lane.b32.xlu0 %v830, 24
        %v867 = vpop.permute.xlu0 %866
        %v871 = vsel %vm153, %v309, %v839
        %v872 = vsel %vm153, %v312, %v841
        %v873 = vsel %vm153, %v317, %v843
        %vm874 = vcmask 130048
        %v875 = vsel %vm874, %v871, %v851
        %v876 = vsel %vm874, %v872, %v853
        %v877 = vsel %vm874, %v873, %v855
        %v878 = vsel %vm223, %v875, %v863
        %v879 = vsel %vm223, %v876, %v865
        %v880 = vsel %vm223, %v877, %v867
        %v881 = vpack.c.bf16 %v879, %v878
        %v882 = vpack.c.bf16 %v880, %v880
        %v885 = vunpack.c.l.b16 %v881
        %v886 = vunpack.c.h.b16 %v881
        %v887 = vunpack.c.l.b16 %v882
        %v888 = vpack.c.b16 %v885, %v885
        %v889 = vpack.c.b16 %v886, %v886
        %v890 = vpack.c.b16 %v887, %v887
        %vm894 = vcmask 257024
        %895 = vst.msk [vmem:[%s134] sm:$0xf] %vm894, %v888
        %896 = vst.msk [vmem:[%s134 + $0x4] sm:$0xf] %vm894, %v889
        %897 = vst.msk [vmem:[%s134 + $0x8] sm:$0xf] %vm894, %v890
        %s898 = sand.u32 %s52, 1
        %s899 = scalar_lea.sflag [#allocation4], %s898
        %s900 = sand.u32 %s52, 1
        %s901 = smul.addr %s900, 12
        %s902 = scalar_lea.vmem [#allocation5], %s901
        // Predicated region
        $region29: #{_lambda_.18} parent=23 // pred_check
          %p903 = pneg %p62
        $region30: #{_lambda_.18} parent=23 // pred_check_branch
          %905 = sbr.rel (%p903) target = $region32
        $region31: #{_lambda_.18} parent=23 // pred_region
          %s906 = smul.u32 3, %s18
          %s908 = ssub.s32 192, 192
          %909 = vsyncadd %s899, %s908
          %s910 = smul.addr %s906, 64
          %s911 = scalar_lea.hbm %s1, %s910
          %s912 = sshll.u32 %s902, 4
          %s913 = int_to_ptr.vmem [resolvable:$true] %s912
          %918 = dma.vmem_to_hbm [thread:$0]  %s913, 192, %s911, %s899, 64, 64, 4
        $region32: #{_lambda_.18} parent=23 // pred_fallthru
          _
      $region24: #{_lambda_.18} parent=5 // pred_fallthru
        _
      %p919 = scmp.le.s32.totalorder 2, %s13
      // Predicated region
      $region33: #{_lambda_.18} parent=5 // pred_check
        %p920 = pneg %p919
      $region34: #{_lambda_.18} parent=5 // pred_check_branch
        %922 = sbr.rel (%p920) target = $region36
      $region35: #{_lambda_.18} parent=5 // pred_region
        %s923 = ssub.s32 %s13, 2
        // Predicated region
        $region37: #{_lambda_.18} parent=35 // pred_check
          %p924 = pneg %p68
        $region38: #{_lambda_.18} parent=35 // pred_check_branch
          %926 = sbr.rel (%p924) target = $region40
        $region39: #{_lambda_.18} parent=35 // pred_region
          %s927 = sand.u32 %s53, 1
          %s928 = scalar_lea.sflag [#allocation4], %s927
          %s929 = sand.u32 %s53, 1
          %s930 = smul.addr %s929, 12
          %s931 = scalar_lea.vmem [#allocation5], %s930
          %932 = dma.done %s928, 192
        $region40: #{_lambda_.18} parent=35 // pred_fallthru
          _
      $region36: #{_lambda_.18} parent=5 // pred_fallthru
        _
    $region6: #{_lambda_.18} parent=1 // loop_footer
      %s17 = sadd.s32 1, %s13
    $region7: #{_lambda_.18} parent=1 // loop_footer_branch
      %12 = sbr.rel target = $region3
    $region8: #{_lambda_.18} parent=1 // loop_exit
      _
    %933 = vsyncpa [#allocation3], 1
    %s934 = scalar_lea.sflag [#allocation3], 1
    %935 = vsyncpa %s934, 1
    %936 = vsyncpa [#allocation4], 1
    %s937 = scalar_lea.sflag [#allocation4], 1
    %938 = vsyncpa %s937, 1

// kernel: _lambda_.21
$region0: #{_lambda_.21}
  #allocation0 [shape = 'u32[]', space=smem, size = 0x4, offset = 0x4, fixed_abs, tag = 'smem constant byte address 0x4 - core index']
  #allocation1 [shape = 'u32[144,128]{1,0:T(1,128)}', space=vmem, size = 0x12000, scoped, tag = 'internal scratch']
  #allocation2 [shape = 'f32[48,128]{1,0:T(8,128)}', space=vmem, size = 0x6000, scoped, tag = 'scratch operand']
  %s0 = inlined_call_operand.hbm [shape: bf16[48,128], index: 0, kind: input, shape index: {}]
  %s1 = inlined_call_operand.hbm [shape: bf16[128,128], index: 1, kind: input, shape index: {}]
  %s2 = inlined_call_operand.hbm [shape: f32[1,128], index: 2, kind: input, shape index: {}]
  %s3 = inlined_call_operand.hbm [shape: f32[48,128], index: 3, kind: input, shape index: {}]
  %s4 = inlined_call_operand.hbm [shape: f32[48,128], index: 4, kind: output, shape index: {}]
  %s5 = sld [smem:[#allocation0]]
  $region50: #{_lambda_.21} parent=0
    _
  %s7 = ssub.s32 1, %s5
  %s8 = scalar_select 0, %s7, %s5
  $region1: #{_lambda_.21} parent=0
    #allocation3 [shape = 'u8[12288]{0}', space=vmem, size = 0x3000, scoped, tag = 'input window, operand 0, single buffered']
    #allocation4 [shape = 's32[1]{0}', space=sflag, size = 0x4, scoped, tag = 'scoped memory for _lambda_.21']
    #allocation5 [shape = 's32[1]{0}', space=sflag, size = 0x4, scoped, tag = 'scoped memory for _lambda_.21']
    #allocation6 [shape = 'u8[32768]{0}', space=vmem, size = 0x8000, scoped, tag = 'input window, operand 1, single buffered']
    #allocation7 [shape = 's32[1]{0}', space=sflag, size = 0x4, scoped, tag = 'scoped memory for _lambda_.21']
    #allocation8 [shape = 'u8[512]{0}', space=vmem, size = 0x400, scoped, tag = 'input window, operand 2, single buffered']
    #allocation9 [shape = 'u8[24576]{0}', space=vmem, size = 0x6000, scoped, tag = 'input window, operand 3, single buffered']
    #allocation10 [shape = 's32[1]{0}', space=sflag, size = 0x4, scoped, tag = 'scoped memory for _lambda_.21']
    #allocation11 [shape = 'u8[24576]{0}', space=vmem, size = 0x6000, scoped, tag = 'output window, operand 0, single buffered']
    %9 = vsyncpa [#allocation4], 0
    %10 = vsyncpa [#allocation7], 0
    %11 = vsyncpa [#allocation10], 0
    %12 = vsyncpa [#allocation5], 0
    // Predicated region
    $region2: #{_lambda_.21} parent=1 // pred_check
      _
    $region3: #{_lambda_.21} parent=1 // pred_check_branch
      %14 = sbr.rel (0) target = $region5
    $region4: #{_lambda_.21} parent=1 // pred_region
      %s16 = ssub.s32 384, 384
      %17 = vsyncadd [#allocation4], %s16
      %s18 = sshll.u32 [#allocation3], 4
      %s19 = int_to_ptr.vmem [resolvable:$true] %s18
      %24 = dma.hbm_to_vmem [thread:$0]  %s0, 384, %s19, [#allocation4], 64, 64, 4
    $region5: #{_lambda_.21} parent=1 // pred_fallthru
      _
    // Predicated region
    $region6: #{_lambda_.21} parent=1 // pred_check
      _
    $region7: #{_lambda_.21} parent=1 // pred_check_branch
      %26 = sbr.rel (0) target = $region9
    $region8: #{_lambda_.21} parent=1 // pred_region
      %s28 = ssub.s32 1024, 1024
      %29 = vsyncadd [#allocation7], %s28
      %s30 = sshll.u32 [#allocation6], 4
      %s31 = int_to_ptr.vmem [resolvable:$true] %s30
      %36 = dma.hbm_to_vmem [thread:$0]  %s1, 1024, %s31, [#allocation7], 64, 64, 4
    $region9: #{_lambda_.21} parent=1 // pred_fallthru
      _
    // Predicated region
    $region10: #{_lambda_.21} parent=1 // pred_check
      _
    $region11: #{_lambda_.21} parent=1 // pred_check_branch
      %38 = sbr.rel (0) target = $region13
    $region12: #{_lambda_.21} parent=1 // pred_region
      %s40 = ssub.s32 16, 16
      %41 = vsyncadd [#allocation7], %s40
      %s43 = sshll.u32 [#allocation8], 4
      %s44 = int_to_ptr.vmem [resolvable:$true] %s43
      %46 = dma.hbm_to_vmem [thread:$0]  %s2, 16, %s44, [#allocation7]
    $region13: #{_lambda_.21} parent=1 // pred_fallthru
      _
    // Predicated region
    $region14: #{_lambda_.21} parent=1 // pred_check
      _
    $region15: #{_lambda_.21} parent=1 // pred_check_branch
      %48 = sbr.rel (0) target = $region17
    $region16: #{_lambda_.21} parent=1 // pred_region
      %s50 = ssub.s32 768, 768
      %51 = vsyncadd [#allocation10], %s50
      %s52 = sshll.u32 [#allocation9], 4
      %s53 = int_to_ptr.vmem [resolvable:$true] %s52
      %58 = dma.hbm_to_vmem [thread:$0]  %s3, 768, %s53, [#allocation10], 128, 128, 8
    $region17: #{_lambda_.21} parent=1 // pred_fallthru
      _
    // Predicated region
    $region18: #{_lambda_.21} parent=1 // pred_check
      _
    $region19: #{_lambda_.21} parent=1 // pred_check_branch
      %60 = sbr.rel (0) target = $region21
    $region20: #{_lambda_.21} parent=1 // pred_region
      %61 = dma.done [#allocation4], 384
    $region21: #{_lambda_.21} parent=1 // pred_fallthru
      _
    // Predicated region
    $region22: #{_lambda_.21} parent=1 // pred_check
      _
    $region23: #{_lambda_.21} parent=1 // pred_check_branch
      %63 = sbr.rel (0) target = $region25
    $region24: #{_lambda_.21} parent=1 // pred_region
      %64 = dma.done [#allocation7], 1024
    $region25: #{_lambda_.21} parent=1 // pred_fallthru
      _
    // Predicated region
    $region26: #{_lambda_.21} parent=1 // pred_check
      _
    $region27: #{_lambda_.21} parent=1 // pred_check_branch
      %66 = sbr.rel (0) target = $region29
    $region28: #{_lambda_.21} parent=1 // pred_region
      %67 = dma.done [#allocation7], 16
    $region29: #{_lambda_.21} parent=1 // pred_fallthru
      _
    // Predicated region
    $region30: #{_lambda_.21} parent=1 // pred_check
      _
    $region31: #{_lambda_.21} parent=1 // pred_check_branch
      %69 = sbr.rel (0) target = $region33
    $region32: #{_lambda_.21} parent=1 // pred_region
      %70 = dma.done [#allocation10], 768
    $region33: #{_lambda_.21} parent=1 // pred_fallthru
      _
    %p72 = scmp.eq.s32.totalorder 0, 0
    // Predicated region
    $region34: #{_lambda_.21} parent=1 // pred_check
      %p73 = pneg %p72
    $region35: #{_lambda_.21} parent=1 // pred_check_branch
      %75 = sbr.rel (%p73) target = $region37
    $region36: #{_lambda_.21} parent=1 // pred_region
      %76 = vst [vmem:[#allocation2] sm:$0xff] 0.0
      %77 = vst [vmem:[#allocation2 + $0x8] sm:$0xff] 0.0
      %78 = vst [vmem:[#allocation2 + $0x10] sm:$0xff] 0.0
      %79 = vst [vmem:[#allocation2 + $0x18] sm:$0xff] 0.0
      %80 = vst [vmem:[#allocation2 + $0x20] sm:$0xff] 0.0
      %81 = vst [vmem:[#allocation2 + $0x28] sm:$0xff] 0.0
    $region37: #{_lambda_.21} parent=1 // pred_fallthru
      _
    %v82 = vld [vmem:[#allocation3] sm:$0xf]
    %v83 = vld [vmem:[#allocation3 + $0x4] sm:$0xf]
    %v84 = vld [vmem:[#allocation3 + $0x8] sm:$0xf]
    %v85 = vld [vmem:[#allocation3 + $0xc] sm:$0xf]
    %v86 = vld [vmem:[#allocation3 + $0x10] sm:$0xf]
    %v87 = vld [vmem:[#allocation3 + $0x14] sm:$0xf]
    %v88 = vld [vmem:[#allocation2] sm:$0xff]
    %v89 = vld [vmem:[#allocation2 + $0x8] sm:$0xff]
    %v90 = vld [vmem:[#allocation2 + $0x10] sm:$0xff]
    %v91 = vld [vmem:[#allocation2 + $0x18] sm:$0xff]
    %v92 = vld [vmem:[#allocation2 + $0x20] sm:$0xff]
    %v93 = vld [vmem:[#allocation2 + $0x28] sm:$0xff]
    %v94 = vld [vmem:[#allocation6] sm:$0xf]
    %v95 = vld [vmem:[#allocation6 + $0x4] sm:$0xf]
    %v96 = vld [vmem:[#allocation6 + $0x8] sm:$0xf]
    %v97 = vld [vmem:[#allocation6 + $0xc] sm:$0xf]
    %v98 = vld [vmem:[#allocation6 + $0x10] sm:$0xf]
    %v99 = vld [vmem:[#allocation6 + $0x14] sm:$0xf]
    %v100 = vld [vmem:[#allocation6 + $0x18] sm:$0xf]
    %v101 = vld [vmem:[#allocation6 + $0x1c] sm:$0xf]
    %v102 = vld [vmem:[#allocation6 + $0x20] sm:$0xf]
    %v103 = vld [vmem:[#allocation6 + $0x24] sm:$0xf]
    %v104 = vld [vmem:[#allocation6 + $0x28] sm:$0xf]
    %v105 = vld [vmem:[#allocation6 + $0x2c] sm:$0xf]
    %v106 = vld [vmem:[#allocation6 + $0x30] sm:$0xf]
    %v107 = vld [vmem:[#allocation6 + $0x34] sm:$0xf]
    %v108 = vld [vmem:[#allocation6 + $0x38] sm:$0xf]
    %v109 = vld [vmem:[#allocation6 + $0x3c] sm:$0xf]
    %v116 = vunpack.c.l.b16 %v82
    %v117 = vunpack.c.l.b16 %v83
    %v118 = vunpack.c.l.b16 %v84
    %v119 = vunpack.c.l.b16 %v85
    %v120 = vunpack.c.l.b16 %v86
    %v121 = vunpack.c.l.b16 %v87
    %v122 = vpack.c.b16 %v117, %v116
    %v123 = vpack.c.b16 %v119, %v118
    %v124 = vpack.c.b16 %v121, %v120
    %v144 = vunpack.c.l.b16 %v94
    %v145 = vunpack.c.l.b16 %v95
    %v146 = vunpack.c.l.b16 %v96
    %v147 = vunpack.c.l.b16 %v97
    %v148 = vunpack.c.l.b16 %v98
    %v149 = vunpack.c.l.b16 %v99
    %v150 = vunpack.c.l.b16 %v100
    %v151 = vunpack.c.l.b16 %v101
    %v152 = vunpack.c.l.b16 %v102
    %v153 = vunpack.c.l.b16 %v103
    %v154 = vunpack.c.l.b16 %v104
    %v155 = vunpack.c.l.b16 %v105
    %v156 = vunpack.c.l.b16 %v106
    %v157 = vunpack.c.l.b16 %v107
    %v158 = vunpack.c.l.b16 %v108
    %v159 = vunpack.c.l.b16 %v109
    %v160 = vpack.c.b16 %v145, %v144
    %v161 = vpack.c.b16 %v147, %v146
    %v162 = vpack.c.b16 %v149, %v148
    %v163 = vpack.c.b16 %v151, %v150
    %v164 = vpack.c.b16 %v153, %v152
    %v165 = vpack.c.b16 %v155, %v154
    %v166 = vpack.c.b16 %v157, %v156
    %v167 = vpack.c.b16 %v159, %v158
    %176 = vmatprep.subr.bf16.mxu0 0
    %177 = vmatpush1.bf16.msra.mxu0 %v160
    %178 = vmatprep.subr.bf16.mxu0 0
    %179 = vmatpush1.bf16.msra.mxu0 %v161
    %180 = vmatprep.subr.bf16.mxu0 0
    %181 = vmatpush1.bf16.msra.mxu0 %v162
    %182 = vmatprep.subr.bf16.mxu0 0
    %183 = vmatpush1.bf16.msra.mxu0 %v163
    %184 = vmatprep.subr.bf16.mxu0 0
    %185 = vmatpush1.bf16.msra.mxu0 %v164
    %186 = vmatprep.subr.bf16.mxu0 0
    %187 = vmatpush1.bf16.msra.mxu0 %v165
    %188 = vmatprep.subr.bf16.mxu0 0
    %189 = vmatpush1.bf16.msra.mxu0 %v166
    %190 = vmatprep.subr.bf16.mxu0 0
    %191 = vmatpush1.bf16.msra.mxu0 %v167
    %192 = vmatprep.subr.bf16.mxu0 0
    %193 = vmatpush1.bf16.msra.mxu0 0
    %194 = vmatprep.subr.bf16.mxu0 0
    %195 = vmatpush1.bf16.msra.mxu0 0
    %196 = vmatprep.subr.bf16.mxu0 0
    %197 = vmatpush1.bf16.msra.mxu0 0
    %198 = vmatprep.subr.bf16.mxu0 0
    %199 = vmatpush1.bf16.msra.mxu0 0
    %200 = vmatprep.subr.bf16.mxu0 0
    %201 = vmatpush1.bf16.msra.mxu0 0
    %202 = vmatprep.subr.bf16.mxu0 0
    %203 = vmatpush1.bf16.msra.mxu0 0
    %204 = vmatprep.subr.bf16.mxu0 0
    %205 = vmatpush1.bf16.msra.mxu0 0
    %206 = vmatprep.subr.bf16.mxu0 0
    %207 = vmatpush1.bf16.msra.mxu0 0
    %208 = vmatprep.mubr.bf16.mxu0 0
    %209 = vmatmul.mubr.bf16.gmra.mrb[0].mxu0 %v122
    %v210 = vpop.f32.mrb[0].mxu0
    %v211 = vadd.f32 0.0, %v210
    %v212 = vpop.f32.mrb[0].mxu0
    %v213 = vpop.f32.mrb[0].mxu0
    %v214 = vadd.f32 0.0, %v213
    %v215 = vpop.f32.mrb[0].mxu0
    %216 = vmatprep.mubr.bf16.mxu0 0
    %217 = vmatmul.mubr.bf16.gmra.mrb[0].mxu0 %v123
    %v218 = vpop.f32.mrb[0].mxu0
    %v219 = vadd.f32 0.0, %v218
    %v220 = vpop.f32.mrb[0].mxu0
    %v221 = vpop.f32.mrb[0].mxu0
    %v222 = vadd.f32 0.0, %v221
    %v223 = vpop.f32.mrb[0].mxu0
    %224 = vmatprep.mubr.bf16.mxu0 0
    %225 = vmatmul.mubr.bf16.gmra.mrb[0].mxu0 %v124
    %v226 = vpop.f32.mrb[0].mxu0
    %v227 = vadd.f32 0.0, %v226
    %v228 = vpop.f32.mrb[0].mxu0
    %v229 = vpop.f32.mrb[0].mxu0
    %v230 = vadd.f32 0.0, %v229
    %v231 = vpop.f32.mrb[0].mxu0
    %232 = vdwg.mxu0
    %v233 = vadd.f32 %v88, %v211
    %v234 = vadd.f32 %v89, %v214
    %v235 = vadd.f32 %v90, %v219
    %v236 = vadd.f32 %v91, %v222
    %v237 = vadd.f32 %v92, %v227
    %v238 = vadd.f32 %v93, %v230
    %239 = vst [vmem:[#allocation2] sm:$0xff] %v233
    %240 = vst [vmem:[#allocation2 + $0x8] sm:$0xff] %v234
    %241 = vst [vmem:[#allocation2 + $0x10] sm:$0xff] %v235
    %242 = vst [vmem:[#allocation2 + $0x18] sm:$0xff] %v236
    %243 = vst [vmem:[#allocation2 + $0x20] sm:$0xff] %v237
    %244 = vst [vmem:[#allocation2 + $0x28] sm:$0xff] %v238
    // Predicated region
    $region38: #{_lambda_.21} parent=1 // pred_check
      %p245 = pneg %p72
    $region39: #{_lambda_.21} parent=1 // pred_check_branch
      %247 = sbr.rel (%p245) target = $region41
    $region40: #{_lambda_.21} parent=1 // pred_region
      %v248 = vld [vmem:[#allocation2] sm:$0xff]
      %v249 = vld [vmem:[#allocation2 + $0x8] sm:$0xff]
      %v250 = vld [vmem:[#allocation2 + $0x10] sm:$0xff]
      %v251 = vld [vmem:[#allocation2 + $0x18] sm:$0xff]
      %v252 = vld [vmem:[#allocation2 + $0x20] sm:$0xff]
      %v253 = vld [vmem:[#allocation2 + $0x28] sm:$0xff]
      %v254 = vld [vmem:[#allocation8] sm:$0x1]
      %v256 = vlaneseq
      %v257 = vshrl.u32 %v256, 7
      %v258 = vsub.s32 0, %v257
      %v259 = vrot.slane %v254, %v258
      %v261 = vadd.f32 %v248, %v259
      %v262 = vadd.f32 %v249, %v259
      %v263 = vadd.f32 %v250, %v259
      %v264 = vadd.f32 %v251, %v259
      %v265 = vadd.f32 %v252, %v259
      %v266 = vadd.f32 %v253, %v259
      %v267 = vld [vmem:[#allocation9] sm:$0xff]
      %v268 = vld [vmem:[#allocation9 + $0x8] sm:$0xff]
      %v269 = vld [vmem:[#allocation9 + $0x10] sm:$0xff]
      %v270 = vld [vmem:[#allocation9 + $0x18] sm:$0xff]
      %v271 = vld [vmem:[#allocation9 + $0x20] sm:$0xff]
      %v272 = vld [vmem:[#allocation9 + $0x28] sm:$0xff]
      %v273 = vadd.f32 %v261, %v267
      %v274 = vadd.f32 %v262, %v268
      %v275 = vadd.f32 %v263, %v269
      %v276 = vadd.f32 %v264, %v270
      %v277 = vadd.f32 %v265, %v271
      %v278 = vadd.f32 %v266, %v272
      %279 = vst [vmem:[#allocation11] sm:$0xff] %v273
      %280 = vst [vmem:[#allocation11 + $0x8] sm:$0xff] %v274
      %281 = vst [vmem:[#allocation11 + $0x10] sm:$0xff] %v275
      %282 = vst [vmem:[#allocation11 + $0x18] sm:$0xff] %v276
      %283 = vst [vmem:[#allocation11 + $0x20] sm:$0xff] %v277
      %284 = vst [vmem:[#allocation11 + $0x28] sm:$0xff] %v278
    $region41: #{_lambda_.21} parent=1 // pred_fallthru
      _
    // Predicated region
    $region42: #{_lambda_.21} parent=1 // pred_check
      _
    $region43: #{_lambda_.21} parent=1 // pred_check_branch
      %286 = sbr.rel (0) target = $region45
    $region44: #{_lambda_.21} parent=1 // pred_region
      %s288 = ssub.s32 768, 768
      %289 = vsyncadd [#allocation5], %s288
      %s290 = sshll.u32 [#allocation11], 4
      %s291 = int_to_ptr.vmem [resolvable:$true] %s290
      %296 = dma.vmem_to_hbm [thread:$0]  %s291, 768, %s4, [#allocation5], 128, 128, 8
    $region45: #{_lambda_.21} parent=1 // pred_fallthru
      _
    // Predicated region
    $region46: #{_lambda_.21} parent=1 // pred_check
      _
    $region47: #{_lambda_.21} parent=1 // pred_check_branch
      %298 = sbr.rel (0) target = $region49
    $region48: #{_lambda_.21} parent=1 // pred_region
      %299 = dma.done [#allocation5], 768
    $region49: #{_lambda_.21} parent=1 // pred_fallthru
      _
    %300 = vsyncpa [#allocation4], 1
    %301 = vsyncpa [#allocation7], 1
    %302 = vsyncpa [#allocation10], 1
    %303 = vsyncpa [#allocation5], 1

// kernel: _lambda_.20
$region0: #{_lambda_.20}
  #allocation0 [shape = 'u32[]', space=smem, size = 0x4, offset = 0x4, fixed_abs, tag = 'smem constant byte address 0x4 - core index']
  #allocation1 [shape = 'u32[144,128]{1,0:T(1,128)}', space=vmem, size = 0x12000, scoped, tag = 'internal scratch']
  #allocation2 [shape = 'f32[48,128]{1,0:T(8,128)}', space=vmem, size = 0x6000, scoped, tag = 'scratch operand']
  %s0 = inlined_call_operand.hbm [shape: f32[48,32], index: 0, kind: input, shape index: {}]
  %s1 = inlined_call_operand.hbm [shape: bf16[32,128], index: 1, kind: input, shape index: {}]
  %s2 = inlined_call_operand.hbm [shape: f32[1,128], index: 2, kind: input, shape index: {}]
  %s3 = inlined_call_operand.hbm [shape: f32[1,32], index: 3, kind: input, shape index: {}]
  %s4 = inlined_call_operand.hbm [shape: f32[1,32], index: 4, kind: input, shape index: {}]
  %s5 = inlined_call_operand.hbm [shape: bf16[48,128], index: 5, kind: output, shape index: {}]
  %s6 = sld [smem:[#allocation0]]
  $region58: #{_lambda_.20} parent=0
    _
  %s8 = ssub.s32 1, %s6
  %s9 = scalar_select 0, %s8, %s6
  $region1: #{_lambda_.20} parent=0
    #allocation3 [shape = 'u8[24576]{0}', space=vmem, size = 0x6000, scoped, tag = 'input window, operand 0, single buffered']
    #allocation4 [shape = 's32[1]{0}', space=sflag, size = 0x4, scoped, tag = 'scoped memory for _lambda_.20']
    #allocation5 [shape = 's32[1]{0}', space=sflag, size = 0x4, scoped, tag = 'scoped memory for _lambda_.20']
    #allocation6 [shape = 'u8[8192]{0}', space=vmem, size = 0x2000, scoped, tag = 'input window, operand 1, single buffered']
    #allocation7 [shape = 's32[1]{0}', space=sflag, size = 0x4, scoped, tag = 'scoped memory for _lambda_.20']
    #allocation8 [shape = 'u8[512]{0}', space=vmem, size = 0x400, scoped, tag = 'input window, operand 2, single buffered']
    #allocation9 [shape = 'u8[512]{0}', space=vmem, size = 0x400, scoped, tag = 'input window, operand 3, single buffered']
    #allocation10 [shape = 's32[1]{0}', space=sflag, size = 0x4, scoped, tag = 'scoped memory for _lambda_.20']
    #allocation11 [shape = 'u8[512]{0}', space=vmem, size = 0x400, scoped, tag = 'input window, operand 4, single buffered']
    #allocation12 [shape = 'u8[12288]{0}', space=vmem, size = 0x3000, scoped, tag = 'output window, operand 0, single buffered']
    %10 = vsyncpa [#allocation4], 0
    %11 = vsyncpa [#allocation7], 0
    %12 = vsyncpa [#allocation10], 0
    %13 = vsyncpa [#allocation5], 0
    // Predicated region
    $region2: #{_lambda_.20} parent=1 // pred_check
      _
    $region3: #{_lambda_.20} parent=1 // pred_check_branch
      %15 = sbr.rel (0) target = $region5
    $region4: #{_lambda_.20} parent=1 // pred_region
      %s17 = ssub.s32 768, 768
      %18 = vsyncadd [#allocation4], %s17
      %s19 = sshll.u32 [#allocation3], 4
      %s20 = int_to_ptr.vmem [resolvable:$true] %s19
      %25 = dma.hbm_to_vmem [thread:$0]  %s0, 768, %s20, [#allocation4], 128, 128, 8
    $region5: #{_lambda_.20} parent=1 // pred_fallthru
      _
    // Predicated region
    $region6: #{_lambda_.20} parent=1 // pred_check
      _
    $region7: #{_lambda_.20} parent=1 // pred_check_branch
      %27 = sbr.rel (0) target = $region9
    $region8: #{_lambda_.20} parent=1 // pred_region
      %s29 = ssub.s32 256, 256
      %30 = vsyncadd [#allocation7], %s29
      %s31 = sshll.u32 [#allocation6], 4
      %s32 = int_to_ptr.vmem [resolvable:$true] %s31
      %37 = dma.hbm_to_vmem [thread:$0]  %s1, 256, %s32, [#allocation7], 64, 64, 4
    $region9: #{_lambda_.20} parent=1 // pred_fallthru
      _
    // Predicated region
    $region10: #{_lambda_.20} parent=1 // pred_check
      _
    $region11: #{_lambda_.20} parent=1 // pred_check_branch
      %39 = sbr.rel (0) target = $region13
    $region12: #{_lambda_.20} parent=1 // pred_region
      %s41 = ssub.s32 16, 16
      %42 = vsyncadd [#allocation7], %s41
      %s44 = sshll.u32 [#allocation8], 4
      %s45 = int_to_ptr.vmem [resolvable:$true] %s44
      %47 = dma.hbm_to_vmem [thread:$0]  %s2, 16, %s45, [#allocation7]
    $region13: #{_lambda_.20} parent=1 // pred_fallthru
      _
    // Predicated region
    $region14: #{_lambda_.20} parent=1 // pred_check
      _
    $region15: #{_lambda_.20} parent=1 // pred_check_branch
      %49 = sbr.rel (0) target = $region17
    $region16: #{_lambda_.20} parent=1 // pred_region
      %s51 = ssub.s32 16, 16
      %52 = vsyncadd [#allocation10], %s51
      %s54 = sshll.u32 [#allocation9], 4
      %s55 = int_to_ptr.vmem [resolvable:$true] %s54
      %57 = dma.hbm_to_vmem [thread:$0]  %s3, 16, %s55, [#allocation10]
    $region17: #{_lambda_.20} parent=1 // pred_fallthru
      _
    // Predicated region
    $region18: #{_lambda_.20} parent=1 // pred_check
      _
    $region19: #{_lambda_.20} parent=1 // pred_check_branch
      %59 = sbr.rel (0) target = $region21
    $region20: #{_lambda_.20} parent=1 // pred_region
      %s61 = ssub.s32 16, 16
      %62 = vsyncadd [#allocation10], %s61
      %s64 = sshll.u32 [#allocation11], 4
      %s65 = int_to_ptr.vmem [resolvable:$true] %s64
      %67 = dma.hbm_to_vmem [thread:$0]  %s4, 16, %s65, [#allocation10]
    $region21: #{_lambda_.20} parent=1 // pred_fallthru
      _
    // Predicated region
    $region22: #{_lambda_.20} parent=1 // pred_check
      _
    $region23: #{_lambda_.20} parent=1 // pred_check_branch
      %69 = sbr.rel (0) target = $region25
    $region24: #{_lambda_.20} parent=1 // pred_region
      %70 = dma.done [#allocation4], 768
    $region25: #{_lambda_.20} parent=1 // pred_fallthru
      _
    // Predicated region
    $region26: #{_lambda_.20} parent=1 // pred_check
      _
    $region27: #{_lambda_.20} parent=1 // pred_check_branch
      %72 = sbr.rel (0) target = $region29
    $region28: #{_lambda_.20} parent=1 // pred_region
      %73 = dma.done [#allocation7], 256
    $region29: #{_lambda_.20} parent=1 // pred_fallthru
      _
    // Predicated region
    $region30: #{_lambda_.20} parent=1 // pred_check
      _
    $region31: #{_lambda_.20} parent=1 // pred_check_branch
      %75 = sbr.rel (0) target = $region33
    $region32: #{_lambda_.20} parent=1 // pred_region
      %76 = dma.done [#allocation7], 16
    $region33: #{_lambda_.20} parent=1 // pred_fallthru
      _
    // Predicated region
    $region34: #{_lambda_.20} parent=1 // pred_check
      _
    $region35: #{_lambda_.20} parent=1 // pred_check_branch
      %78 = sbr.rel (0) target = $region37
    $region36: #{_lambda_.20} parent=1 // pred_region
      %79 = dma.done [#allocation10], 16
    $region37: #{_lambda_.20} parent=1 // pred_fallthru
      _
    // Predicated region
    $region38: #{_lambda_.20} parent=1 // pred_check
      _
    $region39: #{_lambda_.20} parent=1 // pred_check_branch
      %81 = sbr.rel (0) target = $region41
    $region40: #{_lambda_.20} parent=1 // pred_region
      %82 = dma.done [#allocation10], 16
    $region41: #{_lambda_.20} parent=1 // pred_fallthru
      _
    %p84 = scmp.eq.s32.totalorder 0, 0
    // Predicated region
    $region42: #{_lambda_.20} parent=1 // pred_check
      %p85 = pneg %p84
    $region43: #{_lambda_.20} parent=1 // pred_check_branch
      %87 = sbr.rel (%p85) target = $region45
    $region44: #{_lambda_.20} parent=1 // pred_region
      %88 = vst [vmem:[#allocation2] sm:$0xff] 0.0
      %89 = vst [vmem:[#allocation2 + $0x8] sm:$0xff] 0.0
      %90 = vst [vmem:[#allocation2 + $0x10] sm:$0xff] 0.0
      %91 = vst [vmem:[#allocation2 + $0x18] sm:$0xff] 0.0
      %92 = vst [vmem:[#allocation2 + $0x20] sm:$0xff] 0.0
      %93 = vst [vmem:[#allocation2 + $0x28] sm:$0xff] 0.0
    $region45: #{_lambda_.20} parent=1 // pred_fallthru
      _
    %v94 = vld [vmem:[#allocation3] sm:$0xff]
    %v95 = vld [vmem:[#allocation3 + $0x8] sm:$0xff]
    %v96 = vld [vmem:[#allocation3 + $0x10] sm:$0xff]
    %v97 = vld [vmem:[#allocation3 + $0x18] sm:$0xff]
    %v98 = vld [vmem:[#allocation3 + $0x20] sm:$0xff]
    %v99 = vld [vmem:[#allocation3 + $0x28] sm:$0xff]
    %vm100 = vcmask 261120
    %v101 = vsel %vm100, %v94, 0.0
    %102 = vadd.xlane.f32.xlu0 %v101
    %v103 = vpop.xlane.xlu0 %102
    %v104 = vsel %vm100, %v95, 0.0
    %105 = vadd.xlane.f32.xlu0 %v104
    %v106 = vpop.xlane.xlu0 %105
    %v107 = vsel %vm100, %v96, 0.0
    %108 = vadd.xlane.f32.xlu0 %v107
    %v109 = vpop.xlane.xlu0 %108
    %v110 = vsel %vm100, %v97, 0.0
    %111 = vadd.xlane.f32.xlu0 %v110
    %v112 = vpop.xlane.xlu0 %111
    %v113 = vsel %vm100, %v98, 0.0
    %114 = vadd.xlane.f32.xlu0 %v113
    %v115 = vpop.xlane.xlu0 %114
    %v116 = vsel %vm100, %v99, 0.0
    %117 = vadd.xlane.f32.xlu0 %v116
    %v118 = vpop.xlane.xlu0 %117
    %v119 = vrcp.pop 32.0
    %v120 = vmul.f32 %v103, %v119
    %v121 = vmul.f32 %v106, %v119
    %v122 = vmul.f32 %v109, %v119
    %v123 = vmul.f32 %v112, %v119
    %v124 = vmul.f32 %v115, %v119
    %v125 = vmul.f32 %v118, %v119
    %v126 = vsub.f32 %v94, %v120
    %v127 = vsub.f32 %v95, %v121
    %v128 = vsub.f32 %v96, %v122
    %v129 = vsub.f32 %v97, %v123
    %v130 = vsub.f32 %v98, %v124
    %v131 = vsub.f32 %v99, %v125
    %v132 = vmul.f32 %v126, %v126
    %v133 = vmul.f32 %v127, %v127
    %v134 = vmul.f32 %v128, %v128
    %v135 = vmul.f32 %v129, %v129
    %v136 = vmul.f32 %v130, %v130
    %v137 = vmul.f32 %v131, %v131
    %v138 = vsel %vm100, %v132, 0.0
    %139 = vadd.xlane.f32.xlu0 %v138
    %v140 = vpop.xlane.xlu0 %139
    %v141 = vsel %vm100, %v133, 0.0
    %142 = vadd.xlane.f32.xlu0 %v141
    %v143 = vpop.xlane.xlu0 %142
    %v144 = vsel %vm100, %v134, 0.0
    %145 = vadd.xlane.f32.xlu0 %v144
    %v146 = vpop.xlane.xlu0 %145
    %v147 = vsel %vm100, %v135, 0.0
    %148 = vadd.xlane.f32.xlu0 %v147
    %v149 = vpop.xlane.xlu0 %148
    %v150 = vsel %vm100, %v136, 0.0
    %151 = vadd.xlane.f32.xlu0 %v150
    %v152 = vpop.xlane.xlu0 %151
    %v153 = vsel %vm100, %v137, 0.0
    %154 = vadd.xlane.f32.xlu0 %v153
    %v155 = vpop.xlane.xlu0 %154
    %v156 = vmul.f32 %v140, %v119
    %v157 = vmul.f32 %v143, %v119
    %v158 = vmul.f32 %v146, %v119
    %v159 = vmul.f32 %v149, %v119
    %v160 = vmul.f32 %v152, %v119
    %v161 = vmul.f32 %v155, %v119
    %v162 = vadd.f32 %v156, 1e-06
    %v163 = vadd.f32 %v157, 1e-06
    %v164 = vadd.f32 %v158, 1e-06
    %v165 = vadd.f32 %v159, 1e-06
    %v166 = vadd.f32 %v160, 1e-06
    %v167 = vadd.f32 %v161, 1e-06
    %v168 = vrsqrt.pop %v162
    %v169 = vrsqrt.pop %v163
    %v170 = vrsqrt.pop %v164
    %v171 = vrsqrt.pop %v165
    %v172 = vrsqrt.pop %v166
    %v173 = vrsqrt.pop %v167
    %v174 = vmul.f32 %v126, %v168
    %v175 = vmul.f32 %v127, %v169
    %v176 = vmul.f32 %v128, %v170
    %v177 = vmul.f32 %v129, %v171
    %v178 = vmul.f32 %v130, %v172
    %v179 = vmul.f32 %v131, %v173
    %v180 = vld [vmem:[#allocation9] sm:$0x1]
    %v182 = vlaneseq
    %v183 = vshrl.u32 %v182, 7
    %v184 = vsub.s32 0, %v183
    %v185 = vrot.slane %v180, %v184
    %v187 = vmul.f32 %v174, %v185
    %v188 = vmul.f32 %v175, %v185
    %v189 = vmul.f32 %v176, %v185
    %v190 = vmul.f32 %v177, %v185
    %v191 = vmul.f32 %v178, %v185
    %v192 = vmul.f32 %v179, %v185
    %v193 = vld [vmem:[#allocation11] sm:$0x1]
    %v195 = vlaneseq
    %v196 = vshrl.u32 %v195, 7
    %v197 = vsub.s32 0, %v196
    %v198 = vrot.slane %v193, %v197
    %v200 = vadd.f32 %v187, %v198
    %v201 = vadd.f32 %v188, %v198
    %v202 = vadd.f32 %v189, %v198
    %v203 = vadd.f32 %v190, %v198
    %v204 = vadd.f32 %v191, %v198
    %v205 = vadd.f32 %v192, %v198
    %v206 = vpack.c.bf16 %v201, %v200
    %v207 = vpack.c.bf16 %v203, %v202
    %v208 = vpack.c.bf16 %v205, %v204
    %v209 = vld [vmem:[#allocation2] sm:$0xff]
    %v210 = vld [vmem:[#allocation2 + $0x8] sm:$0xff]
    %v211 = vld [vmem:[#allocation2 + $0x10] sm:$0xff]
    %v212 = vld [vmem:[#allocation2 + $0x18] sm:$0xff]
    %v213 = vld [vmem:[#allocation2 + $0x20] sm:$0xff]
    %v214 = vld [vmem:[#allocation2 + $0x28] sm:$0xff]
    %v215 = vld [vmem:[#allocation6] sm:$0xf]
    %v216 = vld [vmem:[#allocation6 + $0x4] sm:$0xf]
    %v217 = vld [vmem:[#allocation6 + $0x8] sm:$0xf]
    %v218 = vld [vmem:[#allocation6 + $0xc] sm:$0xf]
    %v223 = vunpack.c.l.b16 %v215
    %v224 = vunpack.c.l.b16 %v216
    %v225 = vunpack.c.l.b16 %v217
    %v226 = vunpack.c.l.b16 %v218
    %v227 = vpack.c.b16 %v224, %v223
    %v228 = vpack.c.b16 %v226, %v225
    %v232 = vsel %vm100, %v206, 0
    %v235 = vsel %vm100, %v207, 0
    %v238 = vsel %vm100, %v208, 0
    %240 = vmatprep.subr.bf16.mxu0 0
    %241 = vmatpush1.bf16.msra.mxu0 %v227
    %242 = vmatprep.subr.bf16.mxu0 0
    %243 = vmatpush1.bf16.msra.mxu0 %v228
    %244 = vmatprep.subr.bf16.mxu0 0
    %245 = vmatpush1.bf16.msra.mxu0 0
    %246 = vmatprep.subr.bf16.mxu0 0
    %247 = vmatpush1.bf16.msra.mxu0 0
    %248 = vmatprep.subr.bf16.mxu0 0
    %249 = vmatpush1.bf16.msra.mxu0 0
    %250 = vmatprep.subr.bf16.mxu0 0
    %251 = vmatpush1.bf16.msra.mxu0 0
    %252 = vmatprep.subr.bf16.mxu0 0
    %253 = vmatpush1.bf16.msra.mxu0 0
    %254 = vmatprep.subr.bf16.mxu0 0
    %255 = vmatpush1.bf16.msra.mxu0 0
    %256 = vmatprep.subr.bf16.mxu0 0
    %257 = vmatpush1.bf16.msra.mxu0 0
    %258 = vmatprep.subr.bf16.mxu0 0
    %259 = vmatpush1.bf16.msra.mxu0 0
    %260 = vmatprep.subr.bf16.mxu0 0
    %261 = vmatpush1.bf16.msra.mxu0 0
    %262 = vmatprep.subr.bf16.mxu0 0
    %263 = vmatpush1.bf16.msra.mxu0 0
    %264 = vmatprep.subr.bf16.mxu0 0
    %265 = vmatpush1.bf16.msra.mxu0 0
    %266 = vmatprep.subr.bf16.mxu0 0
    %267 = vmatpush1.bf16.msra.mxu0 0
    %268 = vmatprep.subr.bf16.mxu0 0
    %269 = vmatpush1.bf16.msra.mxu0 0
    %270 = vmatprep.subr.bf16.mxu0 0
    %271 = vmatpush1.bf16.msra.mxu0 0
    %272 = vmatprep.mubr.bf16.mxu0 0
    %273 = vmatmul.mubr.bf16.gmra.mrb[0].mxu0 %v232
    %v274 = vpop.f32.mrb[0].mxu0
    %v275 = vadd.f32 0.0, %v274
    %v276 = vpop.f32.mrb[0].mxu0
    %v277 = vpop.f32.mrb[0].mxu0
    %v278 = vadd.f32 0.0, %v277
    %v279 = vpop.f32.mrb[0].mxu0
    %280 = vmatprep.mubr.bf16.mxu0 0
    %281 = vmatmul.mubr.bf16.gmra.mrb[0].mxu0 %v235
    %v282 = vpop.f32.mrb[0].mxu0
    %v283 = vadd.f32 0.0, %v282
    %v284 = vpop.f32.mrb[0].mxu0
    %v285 = vpop.f32.mrb[0].mxu0
    %v286 = vadd.f32 0.0, %v285
    %v287 = vpop.f32.mrb[0].mxu0
    %288 = vmatprep.mubr.bf16.mxu0 0
    %289 = vmatmul.mubr.bf16.gmra.mrb[0].mxu0 %v238
    %v290 = vpop.f32.mrb[0].mxu0
    %v291 = vadd.f32 0.0, %v290
    %v292 = vpop.f32.mrb[0].mxu0
    %v293 = vpop.f32.mrb[0].mxu0
    %v294 = vadd.f32 0.0, %v293
    %v295 = vpop.f32.mrb[0].mxu0
    %296 = vdwg.mxu0
    %v297 = vadd.f32 %v209, %v275
    %v298 = vadd.f32 %v210, %v278
    %v299 = vadd.f32 %v211, %v283
    %v300 = vadd.f32 %v212, %v286
    %v301 = vadd.f32 %v213, %v291
    %v302 = vadd.f32 %v214, %v294
    %303 = vst [vmem:[#allocation2] sm:$0xff] %v297
    %304 = vst [vmem:[#allocation2 + $0x8] sm:$0xff] %v298
    %305 = vst [vmem:[#allocation2 + $0x10] sm:$0xff] %v299
    %306 = vst [vmem:[#allocation2 + $0x18] sm:$0xff] %v300
    %307 = vst [vmem:[#allocation2 + $0x20] sm:$0xff] %v301
    %308 = vst [vmem:[#allocation2 + $0x28] sm:$0xff] %v302
    // Predicated region
    $region46: #{_lambda_.20} parent=1 // pred_check
      %p309 = pneg %p84
    $region47: #{_lambda_.20} parent=1 // pred_check_branch
      %311 = sbr.rel (%p309) target = $region49
    $region48: #{_lambda_.20} parent=1 // pred_region
      %v312 = vld [vmem:[#allocation2] sm:$0xff]
      %v313 = vld [vmem:[#allocation2 + $0x8] sm:$0xff]
      %v314 = vld [vmem:[#allocation2 + $0x10] sm:$0xff]
      %v315 = vld [vmem:[#allocation2 + $0x18] sm:$0xff]
      %v316 = vld [vmem:[#allocation2 + $0x20] sm:$0xff]
      %v317 = vld [vmem:[#allocation2 + $0x28] sm:$0xff]
      %v318 = vld [vmem:[#allocation8] sm:$0x1]
      %v320 = vlaneseq
      %v321 = vshrl.u32 %v320, 7
      %v322 = vsub.s32 0, %v321
      %v323 = vrot.slane %v318, %v322
      %v325 = vadd.f32 %v312, %v323
      %v326 = vadd.f32 %v313, %v323
      %v327 = vadd.f32 %v314, %v323
      %v328 = vadd.f32 %v315, %v323
      %v329 = vadd.f32 %v316, %v323
      %v330 = vadd.f32 %v317, %v323
      %v331 = vmul.f32 %v325, 0.5
      %v332 = vmul.f32 %v326, 0.5
      %v333 = vmul.f32 %v327, 0.5
      %v334 = vmul.f32 %v328, 0.5
      %v335 = vmul.f32 %v329, 0.5
      %v336 = vmul.f32 %v330, 0.5
      %v337 = vmul.f32 %v325, 0.044715
      %v338 = vmul.f32 %v326, 0.044715
      %v339 = vmul.f32 %v327, 0.044715
      %v340 = vmul.f32 %v328, 0.044715
      %v341 = vmul.f32 %v329, 0.044715
      %v342 = vmul.f32 %v330, 0.044715
      %v343 = vmul.f32 %v337, %v325
      %v344 = vmul.f32 %v338, %v326
      %v345 = vmul.f32 %v339, %v327
      %v346 = vmul.f32 %v340, %v328
      %v347 = vmul.f32 %v341, %v329
      %v348 = vmul.f32 %v342, %v330
      %v349 = vmul.f32 %v343, %v325
      %v350 = vmul.f32 %v344, %v326
      %v351 = vmul.f32 %v345, %v327
      %v352 = vmul.f32 %v346, %v328
      %v353 = vmul.f32 %v347, %v329
      %v354 = vmul.f32 %v348, %v330
      %v355 = vadd.f32 %v325, %v349
      %v356 = vadd.f32 %v326, %v350
      %v357 = vadd.f32 %v327, %v351
      %v358 = vadd.f32 %v328, %v352
      %v359 = vadd.f32 %v329, %v353
      %v360 = vadd.f32 %v330, %v354
      %v361 = vmul.f32 %v355, 0.7978846
      %v362 = vmul.f32 %v356, 0.7978846
      %v363 = vmul.f32 %v357, 0.7978846
      %v364 = vmul.f32 %v358, 0.7978846
      %v365 = vmul.f32 %v359, 0.7978846
      %v366 = vmul.f32 %v360, 0.7978846
      %v367 = vtanh.pop %v361
      %v368 = vtanh.pop %v362
      %v369 = vtanh.pop %v363
      %v370 = vtanh.pop %v364
      %v371 = vtanh.pop %v365
      %v372 = vtanh.pop %v366
      %v373 = vadd.f32 %v367, 1.0
      %v374 = vadd.f32 %v368, 1.0
      %v375 = vadd.f32 %v369, 1.0
      %v376 = vadd.f32 %v370, 1.0
      %v377 = vadd.f32 %v371, 1.0
      %v378 = vadd.f32 %v372, 1.0
      %v379 = vmul.f32 %v331, %v373
      %v380 = vmul.f32 %v332, %v374
      %v381 = vmul.f32 %v333, %v375
      %v382 = vmul.f32 %v334, %v376
      %v383 = vmul.f32 %v335, %v377
      %v384 = vmul.f32 %v336, %v378
      %v385 = vpack.c.bf16 %v380, %v379
      %v386 = vpack.c.bf16 %v382, %v381
      %v387 = vpack.c.bf16 %v384, %v383
      %v391 = vunpack.c.l.b16 %v385
      %v392 = vunpack.c.h.b16 %v385
      %v393 = vunpack.c.l.b16 %v386
      %v394 = vunpack.c.h.b16 %v386
      %v395 = vunpack.c.l.b16 %v387
      %v396 = vunpack.c.h.b16 %v387
      %v397 = vpack.c.b16 %v391, %v391
      %v398 = vpack.c.b16 %v392, %v392
      %v399 = vpack.c.b16 %v393, %v393
      %v400 = vpack.c.b16 %v394, %v394
      %v401 = vpack.c.b16 %v395, %v395
      %v402 = vpack.c.b16 %v396, %v396
      %409 = vst [vmem:[#allocation12] sm:$0xf] %v397
      %410 = vst [vmem:[#allocation12 + $0x4] sm:$0xf] %v398
      %411 = vst [vmem:[#allocation12 + $0x8] sm:$0xf] %v399
      %412 = vst [vmem:[#allocation12 + $0xc] sm:$0xf] %v400
      %413 = vst [vmem:[#allocation12 + $0x10] sm:$0xf] %v401
      %414 = vst [vmem:[#allocation12 + $0x14] sm:$0xf] %v402
    $region49: #{_lambda_.20} parent=1 // pred_fallthru
      _
    // Predicated region
    $region50: #{_lambda_.20} parent=1 // pred_check
      _
    $region51: #{_lambda_.20} parent=1 // pred_check_branch
      %416 = sbr.rel (0) target = $region53
    $region52: #{_lambda_.20} parent=1 // pred_region
      %s418 = ssub.s32 384, 384
      %419 = vsyncadd [#allocation5], %s418
      %s420 = sshll.u32 [#allocation12], 4
      %s421 = int_to_ptr.vmem [resolvable:$true] %s420
      %426 = dma.vmem_to_hbm [thread:$0]  %s421, 384, %s5, [#allocation5], 64, 64, 4
    $region53: #{_lambda_.20} parent=1 // pred_fallthru
      _
    // Predicated region
    $region54: #{_lambda_.20} parent=1 // pred_check
      _
    $region55: #{_lambda_.20} parent=1 // pred_check_branch
      %428 = sbr.rel (0) target = $region57
    $region56: #{_lambda_.20} parent=1 // pred_region
      %429 = dma.done [#allocation5], 384
    $region57: #{_lambda_.20} parent=1 // pred_fallthru
      _
    %430 = vsyncpa [#allocation4], 1
    %431 = vsyncpa [#allocation7], 1
    %432 = vsyncpa [#allocation10], 1
    %433 = vsyncpa [#allocation5], 1

// kernel: _lambda_.27
$region0: #{_lambda_.27}
  #allocation0 [shape = 'u32[]', space=smem, size = 0x4, offset = 0x4, fixed_abs, tag = 'smem constant byte address 0x4 - core index']
  #allocation1 [shape = 'u32[144,128]{1,0:T(1,128)}', space=vmem, size = 0x12000, scoped, tag = 'internal scratch']
  #allocation2 [shape = 'f32[32,128]{1,0:T(8,128)}', space=vmem, size = 0x4000, scoped, tag = 'scratch operand']
  %s0 = inlined_call_operand.hbm [shape: f32[32,32], index: 0, kind: input, shape index: {}]
  %s1 = inlined_call_operand.hbm [shape: bf16[32,128], index: 1, kind: input, shape index: {}]
  %s2 = inlined_call_operand.hbm [shape: f32[1,128], index: 2, kind: input, shape index: {}]
  %s3 = inlined_call_operand.hbm [shape: f32[1,32], index: 3, kind: input, shape index: {}]
  %s4 = inlined_call_operand.hbm [shape: f32[1,32], index: 4, kind: input, shape index: {}]
  %s5 = inlined_call_operand.hbm [shape: bf16[32,128], index: 5, kind: output, shape index: {}]
  %s6 = sld [smem:[#allocation0]]
  $region58: #{_lambda_.27} parent=0
    _
  %s8 = ssub.s32 1, %s6
  %s9 = scalar_select 0, %s8, %s6
  $region1: #{_lambda_.27} parent=0
    #allocation3 [shape = 'u8[16384]{0}', space=vmem, size = 0x4000, scoped, tag = 'input window, operand 0, single buffered']
    #allocation4 [shape = 's32[1]{0}', space=sflag, size = 0x4, scoped, tag = 'scoped memory for _lambda_.27']
    #allocation5 [shape = 's32[1]{0}', space=sflag, size = 0x4, scoped, tag = 'scoped memory for _lambda_.27']
    #allocation6 [shape = 'u8[8192]{0}', space=vmem, size = 0x2000, scoped, tag = 'input window, operand 1, single buffered']
    #allocation7 [shape = 's32[1]{0}', space=sflag, size = 0x4, scoped, tag = 'scoped memory for _lambda_.27']
    #allocation8 [shape = 'u8[512]{0}', space=vmem, size = 0x400, scoped, tag = 'input window, operand 2, single buffered']
    #allocation9 [shape = 'u8[512]{0}', space=vmem, size = 0x400, scoped, tag = 'input window, operand 3, single buffered']
    #allocation10 [shape = 's32[1]{0}', space=sflag, size = 0x4, scoped, tag = 'scoped memory for _lambda_.27']
    #allocation11 [shape = 'u8[512]{0}', space=vmem, size = 0x400, scoped, tag = 'input window, operand 4, single buffered']
    #allocation12 [shape = 'u8[8192]{0}', space=vmem, size = 0x2000, scoped, tag = 'output window, operand 0, single buffered']
    %10 = vsyncpa [#allocation4], 0
    %11 = vsyncpa [#allocation7], 0
    %12 = vsyncpa [#allocation10], 0
    %13 = vsyncpa [#allocation5], 0
    // Predicated region
    $region2: #{_lambda_.27} parent=1 // pred_check
      _
    $region3: #{_lambda_.27} parent=1 // pred_check_branch
      %15 = sbr.rel (0) target = $region5
    $region4: #{_lambda_.27} parent=1 // pred_region
      %s17 = ssub.s32 512, 512
      %18 = vsyncadd [#allocation4], %s17
      %s19 = sshll.u32 [#allocation3], 4
      %s20 = int_to_ptr.vmem [resolvable:$true] %s19
      %25 = dma.hbm_to_vmem [thread:$0]  %s0, 512, %s20, [#allocation4], 128, 128, 8
    $region5: #{_lambda_.27} parent=1 // pred_fallthru
      _
    // Predicated region
    $region6: #{_lambda_.27} parent=1 // pred_check
      _
    $region7: #{_lambda_.27} parent=1 // pred_check_branch
      %27 = sbr.rel (0) target = $region9
    $region8: #{_lambda_.27} parent=1 // pred_region
      %s29 = ssub.s32 256, 256
      %30 = vsyncadd [#allocation7], %s29
      %s31 = sshll.u32 [#allocation6], 4
      %s32 = int_to_ptr.vmem [resolvable:$true] %s31
      %37 = dma.hbm_to_vmem [thread:$0]  %s1, 256, %s32, [#allocation7], 64, 64, 4
    $region9: #{_lambda_.27} parent=1 // pred_fallthru
      _
    // Predicated region
    $region10: #{_lambda_.27} parent=1 // pred_check
      _
    $region11: #{_lambda_.27} parent=1 // pred_check_branch
      %39 = sbr.rel (0) target = $region13
    $region12: #{_lambda_.27} parent=1 // pred_region
      %s41 = ssub.s32 16, 16
      %42 = vsyncadd [#allocation7], %s41
      %s44 = sshll.u32 [#allocation8], 4
      %s45 = int_to_ptr.vmem [resolvable:$true] %s44
      %47 = dma.hbm_to_vmem [thread:$0]  %s2, 16, %s45, [#allocation7]
    $region13: #{_lambda_.27} parent=1 // pred_fallthru
      _
    // Predicated region
    $region14: #{_lambda_.27} parent=1 // pred_check
      _
    $region15: #{_lambda_.27} parent=1 // pred_check_branch
      %49 = sbr.rel (0) target = $region17
    $region16: #{_lambda_.27} parent=1 // pred_region
      %s51 = ssub.s32 16, 16
      %52 = vsyncadd [#allocation10], %s51
      %s54 = sshll.u32 [#allocation9], 4
      %s55 = int_to_ptr.vmem [resolvable:$true] %s54
      %57 = dma.hbm_to_vmem [thread:$0]  %s3, 16, %s55, [#allocation10]
    $region17: #{_lambda_.27} parent=1 // pred_fallthru
      _
    // Predicated region
    $region18: #{_lambda_.27} parent=1 // pred_check
      _
    $region19: #{_lambda_.27} parent=1 // pred_check_branch
      %59 = sbr.rel (0) target = $region21
    $region20: #{_lambda_.27} parent=1 // pred_region
      %s61 = ssub.s32 16, 16
      %62 = vsyncadd [#allocation10], %s61
      %s64 = sshll.u32 [#allocation11], 4
      %s65 = int_to_ptr.vmem [resolvable:$true] %s64
      %67 = dma.hbm_to_vmem [thread:$0]  %s4, 16, %s65, [#allocation10]
    $region21: #{_lambda_.27} parent=1 // pred_fallthru
      _
    // Predicated region
    $region22: #{_lambda_.27} parent=1 // pred_check
      _
    $region23: #{_lambda_.27} parent=1 // pred_check_branch
      %69 = sbr.rel (0) target = $region25
    $region24: #{_lambda_.27} parent=1 // pred_region
      %70 = dma.done [#allocation4], 512
    $region25: #{_lambda_.27} parent=1 // pred_fallthru
      _
    // Predicated region
    $region26: #{_lambda_.27} parent=1 // pred_check
      _
    $region27: #{_lambda_.27} parent=1 // pred_check_branch
      %72 = sbr.rel (0) target = $region29
    $region28: #{_lambda_.27} parent=1 // pred_region
      %73 = dma.done [#allocation7], 256
    $region29: #{_lambda_.27} parent=1 // pred_fallthru
      _
    // Predicated region
    $region30: #{_lambda_.27} parent=1 // pred_check
      _
    $region31: #{_lambda_.27} parent=1 // pred_check_branch
      %75 = sbr.rel (0) target = $region33
    $region32: #{_lambda_.27} parent=1 // pred_region
      %76 = dma.done [#allocation7], 16
    $region33: #{_lambda_.27} parent=1 // pred_fallthru
      _
    // Predicated region
    $region34: #{_lambda_.27} parent=1 // pred_check
      _
    $region35: #{_lambda_.27} parent=1 // pred_check_branch
      %78 = sbr.rel (0) target = $region37
    $region36: #{_lambda_.27} parent=1 // pred_region
      %79 = dma.done [#allocation10], 16
    $region37: #{_lambda_.27} parent=1 // pred_fallthru
      _
    // Predicated region
    $region38: #{_lambda_.27} parent=1 // pred_check
      _
    $region39: #{_lambda_.27} parent=1 // pred_check_branch
      %81 = sbr.rel (0) target = $region41
    $region40: #{_lambda_.27} parent=1 // pred_region
      %82 = dma.done [#allocation10], 16
    $region41: #{_lambda_.27} parent=1 // pred_fallthru
      _
    %p84 = scmp.eq.s32.totalorder 0, 0
    // Predicated region
    $region42: #{_lambda_.27} parent=1 // pred_check
      %p85 = pneg %p84
    $region43: #{_lambda_.27} parent=1 // pred_check_branch
      %87 = sbr.rel (%p85) target = $region45
    $region44: #{_lambda_.27} parent=1 // pred_region
      %88 = vst [vmem:[#allocation2] sm:$0xff] 0.0
      %89 = vst [vmem:[#allocation2 + $0x8] sm:$0xff] 0.0
      %90 = vst [vmem:[#allocation2 + $0x10] sm:$0xff] 0.0
      %91 = vst [vmem:[#allocation2 + $0x18] sm:$0xff] 0.0
    $region45: #{_lambda_.27} parent=1 // pred_fallthru
      _
    %v92 = vld [vmem:[#allocation3] sm:$0xff]
    %v93 = vld [vmem:[#allocation3 + $0x8] sm:$0xff]
    %v94 = vld [vmem:[#allocation3 + $0x10] sm:$0xff]
    %v95 = vld [vmem:[#allocation3 + $0x18] sm:$0xff]
    %vm96 = vcmask 261120
    %v97 = vsel %vm96, %v92, 0.0
    %98 = vadd.xlane.f32.xlu0 %v97
    %v99 = vpop.xlane.xlu0 %98
    %v100 = vsel %vm96, %v93, 0.0
    %101 = vadd.xlane.f32.xlu0 %v100
    %v102 = vpop.xlane.xlu0 %101
    %v103 = vsel %vm96, %v94, 0.0
    %104 = vadd.xlane.f32.xlu0 %v103
    %v105 = vpop.xlane.xlu0 %104
    %v106 = vsel %vm96, %v95, 0.0
    %107 = vadd.xlane.f32.xlu0 %v106
    %v108 = vpop.xlane.xlu0 %107
    %v109 = vrcp.pop 32.0
    %v110 = vmul.f32 %v99, %v109
    %v111 = vmul.f32 %v102, %v109
    %v112 = vmul.f32 %v105, %v109
    %v113 = vmul.f32 %v108, %v109
    %v114 = vsub.f32 %v92, %v110
    %v115 = vsub.f32 %v93, %v111
    %v116 = vsub.f32 %v94, %v112
    %v117 = vsub.f32 %v95, %v113
    %v118 = vmul.f32 %v114, %v114
    %v119 = vmul.f32 %v115, %v115
    %v120 = vmul.f32 %v116, %v116
    %v121 = vmul.f32 %v117, %v117
    %v122 = vsel %vm96, %v118, 0.0
    %123 = vadd.xlane.f32.xlu0 %v122
    %v124 = vpop.xlane.xlu0 %123
    %v125 = vsel %vm96, %v119, 0.0
    %126 = vadd.xlane.f32.xlu0 %v125
    %v127 = vpop.xlane.xlu0 %126
    %v128 = vsel %vm96, %v120, 0.0
    %129 = vadd.xlane.f32.xlu0 %v128
    %v130 = vpop.xlane.xlu0 %129
    %v131 = vsel %vm96, %v121, 0.0
    %132 = vadd.xlane.f32.xlu0 %v131
    %v133 = vpop.xlane.xlu0 %132
    %v134 = vmul.f32 %v124, %v109
    %v135 = vmul.f32 %v127, %v109
    %v136 = vmul.f32 %v130, %v109
    %v137 = vmul.f32 %v133, %v109
    %v138 = vadd.f32 %v134, 1e-06
    %v139 = vadd.f32 %v135, 1e-06
    %v140 = vadd.f32 %v136, 1e-06
    %v141 = vadd.f32 %v137, 1e-06
    %v142 = vrsqrt.pop %v138
    %v143 = vrsqrt.pop %v139
    %v144 = vrsqrt.pop %v140
    %v145 = vrsqrt.pop %v141
    %v146 = vmul.f32 %v114, %v142
    %v147 = vmul.f32 %v115, %v143
    %v148 = vmul.f32 %v116, %v144
    %v149 = vmul.f32 %v117, %v145
    %v150 = vld [vmem:[#allocation9] sm:$0x1]
    %v152 = vlaneseq
    %v153 = vshrl.u32 %v152, 7
    %v154 = vsub.s32 0, %v153
    %v155 = vrot.slane %v150, %v154
    %v157 = vmul.f32 %v146, %v155
    %v158 = vmul.f32 %v147, %v155
    %v159 = vmul.f32 %v148, %v155
    %v160 = vmul.f32 %v149, %v155
    %v161 = vld [vmem:[#allocation11] sm:$0x1]
    %v163 = vlaneseq
    %v164 = vshrl.u32 %v163, 7
    %v165 = vsub.s32 0, %v164
    %v166 = vrot.slane %v161, %v165
    %v168 = vadd.f32 %v157, %v166
    %v169 = vadd.f32 %v158, %v166
    %v170 = vadd.f32 %v159, %v166
    %v171 = vadd.f32 %v160, %v166
    %v172 = vpack.c.bf16 %v169, %v168
    %v173 = vpack.c.bf16 %v171, %v170
    %v174 = vld [vmem:[#allocation2] sm:$0xff]
    %v175 = vld [vmem:[#allocation2 + $0x8] sm:$0xff]
    %v176 = vld [vmem:[#allocation2 + $0x10] sm:$0xff]
    %v177 = vld [vmem:[#allocation2 + $0x18] sm:$0xff]
    %v178 = vld [vmem:[#allocation6] sm:$0xf]
    %v179 = vld [vmem:[#allocation6 + $0x4] sm:$0xf]
    %v180 = vld [vmem:[#allocation6 + $0x8] sm:$0xf]
    %v181 = vld [vmem:[#allocation6 + $0xc] sm:$0xf]
    %v186 = vunpack.c.l.b16 %v178
    %v187 = vunpack.c.l.b16 %v179
    %v188 = vunpack.c.l.b16 %v180
    %v189 = vunpack.c.l.b16 %v181
    %v190 = vpack.c.b16 %v187, %v186
    %v191 = vpack.c.b16 %v189, %v188
    %v195 = vsel %vm96, %v172, 0
    %v198 = vsel %vm96, %v173, 0
    %200 = vmatprep.subr.bf16.mxu0 0
    %201 = vmatpush1.bf16.msra.mxu0 %v190
    %202 = vmatprep.subr.bf16.mxu0 0
    %203 = vmatpush1.bf16.msra.mxu0 %v191
    %204 = vmatprep.subr.bf16.mxu0 0
    %205 = vmatpush1.bf16.msra.mxu0 0
    %206 = vmatprep.subr.bf16.mxu0 0
    %207 = vmatpush1.bf16.msra.mxu0 0
    %208 = vmatprep.subr.bf16.mxu0 0
    %209 = vmatpush1.bf16.msra.mxu0 0
    %210 = vmatprep.subr.bf16.mxu0 0
    %211 = vmatpush1.bf16.msra.mxu0 0
    %212 = vmatprep.subr.bf16.mxu0 0
    %213 = vmatpush1.bf16.msra.mxu0 0
    %214 = vmatprep.subr.bf16.mxu0 0
    %215 = vmatpush1.bf16.msra.mxu0 0
    %216 = vmatprep.subr.bf16.mxu0 0
    %217 = vmatpush1.bf16.msra.mxu0 0
    %218 = vmatprep.subr.bf16.mxu0 0
    %219 = vmatpush1.bf16.msra.mxu0 0
    %220 = vmatprep.subr.bf16.mxu0 0
    %221 = vmatpush1.bf16.msra.mxu0 0
    %222 = vmatprep.subr.bf16.mxu0 0
    %223 = vmatpush1.bf16.msra.mxu0 0
    %224 = vmatprep.subr.bf16.mxu0 0
    %225 = vmatpush1.bf16.msra.mxu0 0
    %226 = vmatprep.subr.bf16.mxu0 0
    %227 = vmatpush1.bf16.msra.mxu0 0
    %228 = vmatprep.subr.bf16.mxu0 0
    %229 = vmatpush1.bf16.msra.mxu0 0
    %230 = vmatprep.subr.bf16.mxu0 0
    %231 = vmatpush1.bf16.msra.mxu0 0
    %232 = vmatprep.mubr.bf16.mxu0 0
    %233 = vmatmul.mubr.bf16.gmra.mrb[0].mxu0 %v195
    %v234 = vpop.f32.mrb[0].mxu0
    %v235 = vadd.f32 0.0, %v234
    %v236 = vpop.f32.mrb[0].mxu0
    %v237 = vpop.f32.mrb[0].mxu0
    %v238 = vadd.f32 0.0, %v237
    %v239 = vpop.f32.mrb[0].mxu0
    %240 = vmatprep.mubr.bf16.mxu0 0
    %241 = vmatmul.mubr.bf16.gmra.mrb[0].mxu0 %v198
    %v242 = vpop.f32.mrb[0].mxu0
    %v243 = vadd.f32 0.0, %v242
    %v244 = vpop.f32.mrb[0].mxu0
    %v245 = vpop.f32.mrb[0].mxu0
    %v246 = vadd.f32 0.0, %v245
    %v247 = vpop.f32.mrb[0].mxu0
    %248 = vdwg.mxu0
    %v249 = vadd.f32 %v174, %v235
    %v250 = vadd.f32 %v175, %v238
    %v251 = vadd.f32 %v176, %v243
    %v252 = vadd.f32 %v177, %v246
    %253 = vst [vmem:[#allocation2] sm:$0xff] %v249
    %254 = vst [vmem:[#allocation2 + $0x8] sm:$0xff] %v250
    %255 = vst [vmem:[#allocation2 + $0x10] sm:$0xff] %v251
    %256 = vst [vmem:[#allocation2 + $0x18] sm:$0xff] %v252
    // Predicated region
    $region46: #{_lambda_.27} parent=1 // pred_check
      %p257 = pneg %p84
    $region47: #{_lambda_.27} parent=1 // pred_check_branch
      %259 = sbr.rel (%p257) target = $region49
    $region48: #{_lambda_.27} parent=1 // pred_region
      %v260 = vld [vmem:[#allocation2] sm:$0xff]
      %v261 = vld [vmem:[#allocation2 + $0x8] sm:$0xff]
      %v262 = vld [vmem:[#allocation2 + $0x10] sm:$0xff]
      %v263 = vld [vmem:[#allocation2 + $0x18] sm:$0xff]
      %v264 = vld [vmem:[#allocation8] sm:$0x1]
      %v266 = vlaneseq
      %v267 = vshrl.u32 %v266, 7
      %v268 = vsub.s32 0, %v267
      %v269 = vrot.slane %v264, %v268
      %v271 = vadd.f32 %v260, %v269
      %v272 = vadd.f32 %v261, %v269
      %v273 = vadd.f32 %v262, %v269
      %v274 = vadd.f32 %v263, %v269
      %v275 = vmax.f32 %v271, 0.0
      %v276 = vmax.f32 %v272, 0.0
      %v277 = vmax.f32 %v273, 0.0
      %v278 = vmax.f32 %v274, 0.0
      %v279 = vpack.c.bf16 %v276, %v275
      %v280 = vpack.c.bf16 %v278, %v277
      %v283 = vunpack.c.l.b16 %v279
      %v284 = vunpack.c.h.b16 %v279
      %v285 = vunpack.c.l.b16 %v280
      %v286 = vunpack.c.h.b16 %v280
      %v287 = vpack.c.b16 %v283, %v283
      %v288 = vpack.c.b16 %v284, %v284
      %v289 = vpack.c.b16 %v285, %v285
      %v290 = vpack.c.b16 %v286, %v286
      %295 = vst [vmem:[#allocation12] sm:$0xf] %v287
      %296 = vst [vmem:[#allocation12 + $0x4] sm:$0xf] %v288
      %297 = vst [vmem:[#allocation12 + $0x8] sm:$0xf] %v289
      %298 = vst [vmem:[#allocation12 + $0xc] sm:$0xf] %v290
    $region49: #{_lambda_.27} parent=1 // pred_fallthru
      _
    // Predicated region
    $region50: #{_lambda_.27} parent=1 // pred_check
      _
    $region51: #{_lambda_.27} parent=1 // pred_check_branch
      %300 = sbr.rel (0) target = $region53
    $region52: #{_lambda_.27} parent=1 // pred_region
      %s302 = ssub.s32 256, 256
      %303 = vsyncadd [#allocation5], %s302
      %s304 = sshll.u32 [#allocation12], 4
      %s305 = int_to_ptr.vmem [resolvable:$true] %s304
      %310 = dma.vmem_to_hbm [thread:$0]  %s305, 256, %s5, [#allocation5], 64, 64, 4
    $region53: #{_lambda_.27} parent=1 // pred_fallthru
      _
    // Predicated region
    $region54: #{_lambda_.27} parent=1 // pred_check
      _
    $region55: #{_lambda_.27} parent=1 // pred_check_branch
      %312 = sbr.rel (0) target = $region57
    $region56: #{_lambda_.27} parent=1 // pred_region
      %313 = dma.done [#allocation5], 256
    $region57: #{_lambda_.27} parent=1 // pred_fallthru
      _
    %314 = vsyncpa [#allocation4], 1
    %315 = vsyncpa [#allocation7], 1
    %316 = vsyncpa [#allocation10], 1
    %317 = vsyncpa [#allocation5], 1

// kernel: _lambda_.28
$region0: #{_lambda_.28}
  #allocation0 [shape = 'u32[]', space=smem, size = 0x4, offset = 0x4, fixed_abs, tag = 'smem constant byte address 0x4 - core index']
  #allocation1 [shape = 'u32[144,128]{1,0:T(1,128)}', space=vmem, size = 0x12000, scoped, tag = 'internal scratch']
  #allocation2 [shape = 'f32[128,128]{1,0:T(8,128)}', space=vmem, size = 0x10000, scoped, tag = 'scratch operand']
  %s0 = inlined_call_operand.hbm [shape: bf16[128,32], index: 0, kind: input, shape index: {}]
  %s1 = inlined_call_operand.hbm [shape: bf16[32,128], index: 1, kind: input, shape index: {}]
  %s2 = inlined_call_operand.hbm [shape: f32[1,128], index: 2, kind: input, shape index: {}]
  %s3 = inlined_call_operand.hbm [shape: bf16[128,128], index: 3, kind: output, shape index: {}]
  %s4 = sld [smem:[#allocation0]]
  $region42: #{_lambda_.28} parent=0
    _
  %s6 = ssub.s32 1, %s4
  %s7 = scalar_select 0, %s6, %s4
  $region1: #{_lambda_.28} parent=0
    #allocation3 [shape = 'u8[32768]{0}', space=vmem, size = 0x8000, scoped, tag = 'input window, operand 0, single buffered']
    #allocation4 [shape = 's32[1]{0}', space=sflag, size = 0x4, scoped, tag = 'scoped memory for _lambda_.28']
    #allocation5 [shape = 's32[1]{0}', space=sflag, size = 0x4, scoped, tag = 'scoped memory for _lambda_.28']
    #allocation6 [shape = 'u8[8192]{0}', space=vmem, size = 0x2000, scoped, tag = 'input window, operand 1, single buffered']
    #allocation7 [shape = 's32[1]{0}', space=sflag, size = 0x4, scoped, tag = 'scoped memory for _lambda_.28']
    #allocation8 [shape = 'u8[512]{0}', space=vmem, size = 0x400, scoped, tag = 'input window, operand 2, single buffered']
    #allocation9 [shape = 'u8[32768]{0}', space=vmem, size = 0x8000, scoped, tag = 'output window, operand 0, single buffered']
    %8 = vsyncpa [#allocation4], 0
    %9 = vsyncpa [#allocation7], 0
    %10 = vsyncpa [#allocation5], 0
    // Predicated region
    $region2: #{_lambda_.28} parent=1 // pred_check
      _
    $region3: #{_lambda_.28} parent=1 // pred_check_branch
      %12 = sbr.rel (0) target = $region5
    $region4: #{_lambda_.28} parent=1 // pred_region
      %s14 = ssub.s32 1024, 1024
      %15 = vsyncadd [#allocation4], %s14
      %s16 = sshll.u32 [#allocation3], 4
      %s17 = int_to_ptr.vmem [resolvable:$true] %s16
      %22 = dma.hbm_to_vmem [thread:$0]  %s0, 1024, %s17, [#allocation4], 64, 64, 4
    $region5: #{_lambda_.28} parent=1 // pred_fallthru
      _
    // Predicated region
    $region6: #{_lambda_.28} parent=1 // pred_check
      _
    $region7: #{_lambda_.28} parent=1 // pred_check_branch
      %24 = sbr.rel (0) target = $region9
    $region8: #{_lambda_.28} parent=1 // pred_region
      %s26 = ssub.s32 256, 256
      %27 = vsyncadd [#allocation7], %s26
      %s28 = sshll.u32 [#allocation6], 4
      %s29 = int_to_ptr.vmem [resolvable:$true] %s28
      %34 = dma.hbm_to_vmem [thread:$0]  %s1, 256, %s29, [#allocation7], 64, 64, 4
    $region9: #{_lambda_.28} parent=1 // pred_fallthru
      _
    // Predicated region
    $region10: #{_lambda_.28} parent=1 // pred_check
      _
    $region11: #{_lambda_.28} parent=1 // pred_check_branch
      %36 = sbr.rel (0) target = $region13
    $region12: #{_lambda_.28} parent=1 // pred_region
      %s38 = ssub.s32 16, 16
      %39 = vsyncadd [#allocation7], %s38
      %s41 = sshll.u32 [#allocation8], 4
      %s42 = int_to_ptr.vmem [resolvable:$true] %s41
      %44 = dma.hbm_to_vmem [thread:$0]  %s2, 16, %s42, [#allocation7]
    $region13: #{_lambda_.28} parent=1 // pred_fallthru
      _
    // Predicated region
    $region14: #{_lambda_.28} parent=1 // pred_check
      _
    $region15: #{_lambda_.28} parent=1 // pred_check_branch
      %46 = sbr.rel (0) target = $region17
    $region16: #{_lambda_.28} parent=1 // pred_region
      %47 = dma.done [#allocation4], 1024
    $region17: #{_lambda_.28} parent=1 // pred_fallthru
      _
    // Predicated region
    $region18: #{_lambda_.28} parent=1 // pred_check
      _
    $region19: #{_lambda_.28} parent=1 // pred_check_branch
      %49 = sbr.rel (0) target = $region21
    $region20: #{_lambda_.28} parent=1 // pred_region
      %50 = dma.done [#allocation7], 256
    $region21: #{_lambda_.28} parent=1 // pred_fallthru
      _
    // Predicated region
    $region22: #{_lambda_.28} parent=1 // pred_check
      _
    $region23: #{_lambda_.28} parent=1 // pred_check_branch
      %52 = sbr.rel (0) target = $region25
    $region24: #{_lambda_.28} parent=1 // pred_region
      %53 = dma.done [#allocation7], 16
    $region25: #{_lambda_.28} parent=1 // pred_fallthru
      _
    %p55 = scmp.eq.s32.totalorder 0, 0
    // Predicated region
    $region26: #{_lambda_.28} parent=1 // pred_check
      %p56 = pneg %p55
    $region27: #{_lambda_.28} parent=1 // pred_check_branch
      %58 = sbr.rel (%p56) target = $region29
    $region28: #{_lambda_.28} parent=1 // pred_region
      %59 = vst [vmem:[#allocation2] sm:$0xff] 0.0
      %60 = vst [vmem:[#allocation2 + $0x8] sm:$0xff] 0.0
      %61 = vst [vmem:[#allocation2 + $0x10] sm:$0xff] 0.0
      %62 = vst [vmem:[#allocation2 + $0x18] sm:$0xff] 0.0
      %63 = vst [vmem:[#allocation2 + $0x20] sm:$0xff] 0.0
      %64 = vst [vmem:[#allocation2 + $0x28] sm:$0xff] 0.0
      %65 = vst [vmem:[#allocation2 + $0x30] sm:$0xff] 0.0
      %66 = vst [vmem:[#allocation2 + $0x38] sm:$0xff] 0.0
      %67 = vst [vmem:[#allocation2 + $0x40] sm:$0xff] 0.0
      %68 = vst [vmem:[#allocation2 + $0x48] sm:$0xff] 0.0
      %69 = vst [vmem:[#allocation2 + $0x50] sm:$0xff] 0.0
      %70 = vst [vmem:[#allocation2 + $0x58] sm:$0xff] 0.0
      %71 = vst [vmem:[#allocation2 + $0x60] sm:$0xff] 0.0
      %72 = vst [vmem:[#allocation2 + $0x68] sm:$0xff] 0.0
      %73 = vst [vmem:[#allocation2 + $0x70] sm:$0xff] 0.0
      %74 = vst [vmem:[#allocation2 + $0x78] sm:$0xff] 0.0
    $region29: #{_lambda_.28} parent=1 // pred_fallthru
      _
    %v75 = vld [vmem:[#allocation3] sm:$0xf]
    %v76 = vld [vmem:[#allocation3 + $0x4] sm:$0xf]
    %v77 = vld [vmem:[#allocation3 + $0x8] sm:$0xf]
    %v78 = vld [vmem:[#allocation3 + $0xc] sm:$0xf]
    %v79 = vld [vmem:[#allocation3 + $0x10] sm:$0xf]
    %v80 = vld [vmem:[#allocation3 + $0x14] sm:$0xf]
    %v81 = vld [vmem:[#allocation3 + $0x18] sm:$0xf]
    %v82 = vld [vmem:[#allocation3 + $0x1c] sm:$0xf]
    %v83 = vld [vmem:[#allocation3 + $0x20] sm:$0xf]
    %v84 = vld [vmem:[#allocation3 + $0x24] sm:$0xf]
    %v85 = vld [vmem:[#allocation3 + $0x28] sm:$0xf]
    %v86 = vld [vmem:[#allocation3 + $0x2c] sm:$0xf]
    %v87 = vld [vmem:[#allocation3 + $0x30] sm:$0xf]
    %v88 = vld [vmem:[#allocation3 + $0x34] sm:$0xf]
    %v89 = vld [vmem:[#allocation3 + $0x38] sm:$0xf]
    %v90 = vld [vmem:[#allocation3 + $0x3c] sm:$0xf]
    %v91 = vld [vmem:[#allocation2] sm:$0xff]
    %v92 = vld [vmem:[#allocation2 + $0x8] sm:$0xff]
    %v93 = vld [vmem:[#allocation2 + $0x10] sm:$0xff]
    %v94 = vld [vmem:[#allocation2 + $0x18] sm:$0xff]
    %v95 = vld [vmem:[#allocation2 + $0x20] sm:$0xff]
    %v96 = vld [vmem:[#allocation2 + $0x28] sm:$0xff]
    %v97 = vld [vmem:[#allocation2 + $0x30] sm:$0xff]
    %v98 = vld [vmem:[#allocation2 + $0x38] sm:$0xff]
    %v99 = vld [vmem:[#allocation2 + $0x40] sm:$0xff]
    %v100 = vld [vmem:[#allocation2 + $0x48] sm:$0xff]
    %v101 = vld [vmem:[#allocation2 + $0x50] sm:$0xff]
    %v102 = vld [vmem:[#allocation2 + $0x58] sm:$0xff]
    %v103 = vld [vmem:[#allocation2 + $0x60] sm:$0xff]
    %v104 = vld [vmem:[#allocation2 + $0x68] sm:$0xff]
    %v105 = vld [vmem:[#allocation2 + $0x70] sm:$0xff]
    %v106 = vld [vmem:[#allocation2 + $0x78] sm:$0xff]
    %v107 = vld [vmem:[#allocation6] sm:$0xf]
    %v108 = vld [vmem:[#allocation6 + $0x4] sm:$0xf]
    %v109 = vld [vmem:[#allocation6 + $0x8] sm:$0xf]
    %v110 = vld [vmem:[#allocation6 + $0xc] sm:$0xf]
    %v127 = vunpack.c.l.b16 %v75
    %v128 = vunpack.c.l.b16 %v76
    %v129 = vunpack.c.l.b16 %v77
    %v130 = vunpack.c.l.b16 %v78
    %v131 = vunpack.c.l.b16 %v79
    %v132 = vunpack.c.l.b16 %v80
    %v133 = vunpack.c.l.b16 %v81
    %v134 = vunpack.c.l.b16 %v82
    %v135 = vunpack.c.l.b16 %v83
    %v136 = vunpack.c.l.b16 %v84
    %v137 = vunpack.c.l.b16 %v85
    %v138 = vunpack.c.l.b16 %v86
    %v139 = vunpack.c.l.b16 %v87
    %v140 = vunpack.c.l.b16 %v88
    %v141 = vunpack.c.l.b16 %v89
    %v142 = vunpack.c.l.b16 %v90
    %v143 = vpack.c.b16 %v128, %v127
    %v144 = vpack.c.b16 %v130, %v129
    %v145 = vpack.c.b16 %v132, %v131
    %v146 = vpack.c.b16 %v134, %v133
    %v147 = vpack.c.b16 %v136, %v135
    %v148 = vpack.c.b16 %v138, %v137
    %v149 = vpack.c.b16 %v140, %v139
    %v150 = vpack.c.b16 %v142, %v141
    %v155 = vunpack.c.l.b16 %v107
    %v156 = vunpack.c.l.b16 %v108
    %v157 = vunpack.c.l.b16 %v109
    %v158 = vunpack.c.l.b16 %v110
    %v159 = vpack.c.b16 %v156, %v155
    %v160 = vpack.c.b16 %v158, %v157
    %vm163 = vcmask 261120
    %v165 = vsel %vm163, %v143, 0
    %v168 = vsel %vm163, %v144, 0
    %v171 = vsel %vm163, %v145, 0
    %v174 = vsel %vm163, %v146, 0
    %v177 = vsel %vm163, %v147, 0
    %v180 = vsel %vm163, %v148, 0
    %v183 = vsel %vm163, %v149, 0
    %v186 = vsel %vm163, %v150, 0
    %188 = vmatprep.subr.bf16.mxu0 0
    %189 = vmatpush1.bf16.msra.mxu0 %v159
    %190 = vmatprep.subr.bf16.mxu0 0
    %191 = vmatpush1.bf16.msra.mxu0 %v160
    %192 = vmatprep.subr.bf16.mxu0 0
    %193 = vmatpush1.bf16.msra.mxu0 0
    %194 = vmatprep.subr.bf16.mxu0 0
    %195 = vmatpush1.bf16.msra.mxu0 0
    %196 = vmatprep.subr.bf16.mxu0 0
    %197 = vmatpush1.bf16.msra.mxu0 0
    %198 = vmatprep.subr.bf16.mxu0 0
    %199 = vmatpush1.bf16.msra.mxu0 0
    %200 = vmatprep.subr.bf16.mxu0 0
    %201 = vmatpush1.bf16.msra.mxu0 0
    %202 = vmatprep.subr.bf16.mxu0 0
    %203 = vmatpush1.bf16.msra.mxu0 0
    %204 = vmatprep.subr.bf16.mxu0 0
    %205 = vmatpush1.bf16.msra.mxu0 0
    %206 = vmatprep.subr.bf16.mxu0 0
    %207 = vmatpush1.bf16.msra.mxu0 0
    %208 = vmatprep.subr.bf16.mxu0 0
    %209 = vmatpush1.bf16.msra.mxu0 0
    %210 = vmatprep.subr.bf16.mxu0 0
    %211 = vmatpush1.bf16.msra.mxu0 0
    %212 = vmatprep.subr.bf16.mxu0 0
    %213 = vmatpush1.bf16.msra.mxu0 0
    %214 = vmatprep.subr.bf16.mxu0 0
    %215 = vmatpush1.bf16.msra.mxu0 0
    %216 = vmatprep.subr.bf16.mxu0 0
    %217 = vmatpush1.bf16.msra.mxu0 0
    %218 = vmatprep.subr.bf16.mxu0 0
    %219 = vmatpush1.bf16.msra.mxu0 0
    %220 = vmatprep.mubr.bf16.mxu0 0
    %221 = vmatmul.mubr.bf16.gmra.mrb[0].mxu0 %v165
    %v222 = vpop.f32.mrb[0].mxu0
    %v223 = vadd.f32 0.0, %v222
    %v224 = vpop.f32.mrb[0].mxu0
    %v225 = vpop.f32.mrb[0].mxu0
    %v226 = vadd.f32 0.0, %v225
    %v227 = vpop.f32.mrb[0].mxu0
    %228 = vmatprep.mubr.bf16.mxu0 0
    %229 = vmatmul.mubr.bf16.gmra.mrb[0].mxu0 %v168
    %v230 = vpop.f32.mrb[0].mxu0
    %v231 = vadd.f32 0.0, %v230
    %v232 = vpop.f32.mrb[0].mxu0
    %v233 = vpop.f32.mrb[0].mxu0
    %v234 = vadd.f32 0.0, %v233
    %v235 = vpop.f32.mrb[0].mxu0
    %236 = vmatprep.mubr.bf16.mxu0 0
    %237 = vmatmul.mubr.bf16.gmra.mrb[0].mxu0 %v171
    %v238 = vpop.f32.mrb[0].mxu0
    %v239 = vadd.f32 0.0, %v238
    %v240 = vpop.f32.mrb[0].mxu0
    %v241 = vpop.f32.mrb[0].mxu0
    %v242 = vadd.f32 0.0, %v241
    %v243 = vpop.f32.mrb[0].mxu0
    %244 = vmatprep.mubr.bf16.mxu0 0
    %245 = vmatmul.mubr.bf16.gmra.mrb[0].mxu0 %v174
    %v246 = vpop.f32.mrb[0].mxu0
    %v247 = vadd.f32 0.0, %v246
    %v248 = vpop.f32.mrb[0].mxu0
    %v249 = vpop.f32.mrb[0].mxu0
    %v250 = vadd.f32 0.0, %v249
    %v251 = vpop.f32.mrb[0].mxu0
    %252 = vmatprep.mubr.bf16.mxu0 0
    %253 = vmatmul.mubr.bf16.gmra.mrb[0].mxu0 %v177
    %v254 = vpop.f32.mrb[0].mxu0
    %v255 = vadd.f32 0.0, %v254
    %v256 = vpop.f32.mrb[0].mxu0
    %v257 = vpop.f32.mrb[0].mxu0
    %v258 = vadd.f32 0.0, %v257
    %v259 = vpop.f32.mrb[0].mxu0
    %260 = vmatprep.mubr.bf16.mxu0 0
    %261 = vmatmul.mubr.bf16.gmra.mrb[0].mxu0 %v180
    %v262 = vpop.f32.mrb[0].mxu0
    %v263 = vadd.f32 0.0, %v262
    %v264 = vpop.f32.mrb[0].mxu0
    %v265 = vpop.f32.mrb[0].mxu0
    %v266 = vadd.f32 0.0, %v265
    %v267 = vpop.f32.mrb[0].mxu0
    %268 = vmatprep.mubr.bf16.mxu0 0
    %269 = vmatmul.mubr.bf16.gmra.mrb[0].mxu0 %v183
    %v270 = vpop.f32.mrb[0].mxu0
    %v271 = vadd.f32 0.0, %v270
    %v272 = vpop.f32.mrb[0].mxu0
    %v273 = vpop.f32.mrb[0].mxu0
    %v274 = vadd.f32 0.0, %v273
    %v275 = vpop.f32.mrb[0].mxu0
    %276 = vmatprep.mubr.bf16.mxu0 0
    %277 = vmatmul.mubr.bf16.gmra.mrb[0].mxu0 %v186
    %v278 = vpop.f32.mrb[0].mxu0
    %v279 = vadd.f32 0.0, %v278
    %v280 = vpop.f32.mrb[0].mxu0
    %v281 = vpop.f32.mrb[0].mxu0
    %v282 = vadd.f32 0.0, %v281
    %v283 = vpop.f32.mrb[0].mxu0
    %284 = vdwg.mxu0
    %v285 = vadd.f32 %v91, %v223
    %v286 = vadd.f32 %v92, %v226
    %v287 = vadd.f32 %v93, %v231
    %v288 = vadd.f32 %v94, %v234
    %v289 = vadd.f32 %v95, %v239
    %v290 = vadd.f32 %v96, %v242
    %v291 = vadd.f32 %v97, %v247
    %v292 = vadd.f32 %v98, %v250
    %v293 = vadd.f32 %v99, %v255
    %v294 = vadd.f32 %v100, %v258
    %v295 = vadd.f32 %v101, %v263
    %v296 = vadd.f32 %v102, %v266
    %v297 = vadd.f32 %v103, %v271
    %v298 = vadd.f32 %v104, %v274
    %v299 = vadd.f32 %v105, %v279
    %v300 = vadd.f32 %v106, %v282
    %301 = vst [vmem:[#allocation2] sm:$0xff] %v285
    %302 = vst [vmem:[#allocation2 + $0x8] sm:$0xff] %v286
    %303 = vst [vmem:[#allocation2 + $0x10] sm:$0xff] %v287
    %304 = vst [vmem:[#allocation2 + $0x18] sm:$0xff] %v288
    %305 = vst [vmem:[#allocation2 + $0x20] sm:$0xff] %v289
    %306 = vst [vmem:[#allocation2 + $0x28] sm:$0xff] %v290
    %307 = vst [vmem:[#allocation2 + $0x30] sm:$0xff] %v291
    %308 = vst [vmem:[#allocation2 + $0x38] sm:$0xff] %v292
    %309 = vst [vmem:[#allocation2 + $0x40] sm:$0xff] %v293
    %310 = vst [vmem:[#allocation2 + $0x48] sm:$0xff] %v294
    %311 = vst [vmem:[#allocation2 + $0x50] sm:$0xff] %v295
    %312 = vst [vmem:[#allocation2 + $0x58] sm:$0xff] %v296
    %313 = vst [vmem:[#allocation2 + $0x60] sm:$0xff] %v297
    %314 = vst [vmem:[#allocation2 + $0x68] sm:$0xff] %v298
    %315 = vst [vmem:[#allocation2 + $0x70] sm:$0xff] %v299
    %316 = vst [vmem:[#allocation2 + $0x78] sm:$0xff] %v300
    // Predicated region
    $region30: #{_lambda_.28} parent=1 // pred_check
      %p317 = pneg %p55
    $region31: #{_lambda_.28} parent=1 // pred_check_branch
      %319 = sbr.rel (%p317) target = $region33
    $region32: #{_lambda_.28} parent=1 // pred_region
      %v320 = vld [vmem:[#allocation2] sm:$0xff]
      %v321 = vld [vmem:[#allocation2 + $0x8] sm:$0xff]
      %v322 = vld [vmem:[#allocation2 + $0x10] sm:$0xff]
      %v323 = vld [vmem:[#allocation2 + $0x18] sm:$0xff]
      %v324 = vld [vmem:[#allocation2 + $0x20] sm:$0xff]
      %v325 = vld [vmem:[#allocation2 + $0x28] sm:$0xff]
      %v326 = vld [vmem:[#allocation2 + $0x30] sm:$0xff]
      %v327 = vld [vmem:[#allocation2 + $0x38] sm:$0xff]
      %v328 = vld [vmem:[#allocation2 + $0x40] sm:$0xff]
      %v329 = vld [vmem:[#allocation2 + $0x48] sm:$0xff]
      %v330 = vld [vmem:[#allocation2 + $0x50] sm:$0xff]
      %v331 = vld [vmem:[#allocation2 + $0x58] sm:$0xff]
      %v332 = vld [vmem:[#allocation2 + $0x60] sm:$0xff]
      %v333 = vld [vmem:[#allocation2 + $0x68] sm:$0xff]
      %v334 = vld [vmem:[#allocation2 + $0x70] sm:$0xff]
      %v335 = vld [vmem:[#allocation2 + $0x78] sm:$0xff]
      %v336 = vld [vmem:[#allocation8] sm:$0x1]
      %v338 = vlaneseq
      %v339 = vshrl.u32 %v338, 7
      %v340 = vsub.s32 0, %v339
      %v341 = vrot.slane %v336, %v340
      %v343 = vadd.f32 %v320, %v341
      %v344 = vadd.f32 %v321, %v341
      %v345 = vadd.f32 %v322, %v341
      %v346 = vadd.f32 %v323, %v341
      %v347 = vadd.f32 %v324, %v341
      %v348 = vadd.f32 %v325, %v341
      %v349 = vadd.f32 %v326, %v341
      %v350 = vadd.f32 %v327, %v341
      %v351 = vadd.f32 %v328, %v341
      %v352 = vadd.f32 %v329, %v341
      %v353 = vadd.f32 %v330, %v341
      %v354 = vadd.f32 %v331, %v341
      %v355 = vadd.f32 %v332, %v341
      %v356 = vadd.f32 %v333, %v341
      %v357 = vadd.f32 %v334, %v341
      %v358 = vadd.f32 %v335, %v341
      %v359 = vmax.f32 %v343, 0.0
      %v360 = vmax.f32 %v344, 0.0
      %v361 = vmax.f32 %v345, 0.0
      %v362 = vmax.f32 %v346, 0.0
      %v363 = vmax.f32 %v347, 0.0
      %v364 = vmax.f32 %v348, 0.0
      %v365 = vmax.f32 %v349, 0.0
      %v366 = vmax.f32 %v350, 0.0
      %v367 = vmax.f32 %v351, 0.0
      %v368 = vmax.f32 %v352, 0.0
      %v369 = vmax.f32 %v353, 0.0
      %v370 = vmax.f32 %v354, 0.0
      %v371 = vmax.f32 %v355, 0.0
      %v372 = vmax.f32 %v356, 0.0
      %v373 = vmax.f32 %v357, 0.0
      %v374 = vmax.f32 %v358, 0.0
      %v375 = vpack.c.bf16 %v360, %v359
      %v376 = vpack.c.bf16 %v362, %v361
      %v377 = vpack.c.bf16 %v364, %v363
      %v378 = vpack.c.bf16 %v366, %v365
      %v379 = vpack.c.bf16 %v368, %v367
      %v380 = vpack.c.bf16 %v370, %v369
      %v381 = vpack.c.bf16 %v372, %v371
      %v382 = vpack.c.bf16 %v374, %v373
      %v391 = vunpack.c.l.b16 %v375
      %v392 = vunpack.c.h.b16 %v375
      %v393 = vunpack.c.l.b16 %v376
      %v394 = vunpack.c.h.b16 %v376
      %v395 = vunpack.c.l.b16 %v377
      %v396 = vunpack.c.h.b16 %v377
      %v397 = vunpack.c.l.b16 %v378
      %v398 = vunpack.c.h.b16 %v378
      %v399 = vunpack.c.l.b16 %v379
      %v400 = vunpack.c.h.b16 %v379
      %v401 = vunpack.c.l.b16 %v380
      %v402 = vunpack.c.h.b16 %v380
      %v403 = vunpack.c.l.b16 %v381
      %v404 = vunpack.c.h.b16 %v381
      %v405 = vunpack.c.l.b16 %v382
      %v406 = vunpack.c.h.b16 %v382
      %v407 = vpack.c.b16 %v391, %v391
      %v408 = vpack.c.b16 %v392, %v392
      %v409 = vpack.c.b16 %v393, %v393
      %v410 = vpack.c.b16 %v394, %v394
      %v411 = vpack.c.b16 %v395, %v395
      %v412 = vpack.c.b16 %v396, %v396
      %v413 = vpack.c.b16 %v397, %v397
      %v414 = vpack.c.b16 %v398, %v398
      %v415 = vpack.c.b16 %v399, %v399
      %v416 = vpack.c.b16 %v400, %v400
      %v417 = vpack.c.b16 %v401, %v401
      %v418 = vpack.c.b16 %v402, %v402
      %v419 = vpack.c.b16 %v403, %v403
      %v420 = vpack.c.b16 %v404, %v404
      %v421 = vpack.c.b16 %v405, %v405
      %v422 = vpack.c.b16 %v406, %v406
      %439 = vst [vmem:[#allocation9] sm:$0xf] %v407
      %440 = vst [vmem:[#allocation9 + $0x4] sm:$0xf] %v408
      %441 = vst [vmem:[#allocation9 + $0x8] sm:$0xf] %v409
      %442 = vst [vmem:[#allocation9 + $0xc] sm:$0xf] %v410
      %443 = vst [vmem:[#allocation9 + $0x10] sm:$0xf] %v411
      %444 = vst [vmem:[#allocation9 + $0x14] sm:$0xf] %v412
      %445 = vst [vmem:[#allocation9 + $0x18] sm:$0xf] %v413
      %446 = vst [vmem:[#allocation9 + $0x1c] sm:$0xf] %v414
      %447 = vst [vmem:[#allocation9 + $0x20] sm:$0xf] %v415
      %448 = vst [vmem:[#allocation9 + $0x24] sm:$0xf] %v416
      %449 = vst [vmem:[#allocation9 + $0x28] sm:$0xf] %v417
      %450 = vst [vmem:[#allocation9 + $0x2c] sm:$0xf] %v418
      %451 = vst [vmem:[#allocation9 + $0x30] sm:$0xf] %v419
      %452 = vst [vmem:[#allocation9 + $0x34] sm:$0xf] %v420
      %453 = vst [vmem:[#allocation9 + $0x38] sm:$0xf] %v421
      %454 = vst [vmem:[#allocation9 + $0x3c] sm:$0xf] %v422
    $region33: #{_lambda_.28} parent=1 // pred_fallthru
      _
    // Predicated region
    $region34: #{_lambda_.28} parent=1 // pred_check
      _
    $region35: #{_lambda_.28} parent=1 // pred_check_branch
      %456 = sbr.rel (0) target = $region37
    $region36: #{_lambda_.28} parent=1 // pred_region
      %s458 = ssub.s32 1024, 1024
      %459 = vsyncadd [#allocation5], %s458
      %s460 = sshll.u32 [#allocation9], 4
      %s461 = int_to_ptr.vmem [resolvable:$true] %s460
      %466 = dma.vmem_to_hbm [thread:$0]  %s461, 1024, %s3, [#allocation5], 64, 64, 4
    $region37: #{_lambda_.28} parent=1 // pred_fallthru
      _
    // Predicated region
    $region38: #{_lambda_.28} parent=1 // pred_check
      _
    $region39: #{_lambda_.28} parent=1 // pred_check_branch
      %468 = sbr.rel (0) target = $region41
    $region40: #{_lambda_.28} parent=1 // pred_region
      %469 = dma.done [#allocation5], 1024
    $region41: #{_lambda_.28} parent=1 // pred_fallthru
      _
    %470 = vsyncpa [#allocation4], 1
    %471 = vsyncpa [#allocation7], 1
    %472 = vsyncpa [#allocation5], 1

// kernel: _lambda_.29
$region0: #{_lambda_.29}
  #allocation0 [shape = 'u32[]', space=smem, size = 0x4, offset = 0x4, fixed_abs, tag = 'smem constant byte address 0x4 - core index']
  #allocation1 [shape = 'u32[144,128]{1,0:T(1,128)}', space=vmem, size = 0x12000, scoped, tag = 'internal scratch']
  #allocation2 [shape = 'f32[512,128]{1,0:T(8,128)}', space=vmem, size = 0x40000, scoped, tag = 'scratch operand']
  %s0 = inlined_call_operand.hbm [shape: bf16[512,16], index: 0, kind: input, shape index: {}]
  %s1 = inlined_call_operand.hbm [shape: bf16[16,128], index: 1, kind: input, shape index: {}]
  %s2 = inlined_call_operand.hbm [shape: f32[1,128], index: 2, kind: input, shape index: {}]
  %s3 = inlined_call_operand.hbm [shape: bf16[512,128], index: 3, kind: output, shape index: {}]
  %s4 = sld [smem:[#allocation0]]
  $region42: #{_lambda_.29} parent=0
    _
  %s6 = ssub.s32 1, %s4
  %s7 = scalar_select 0, %s6, %s4
  $region1: #{_lambda_.29} parent=0
    #allocation3 [shape = 'u8[131072]{0}', space=vmem, size = 0x20000, scoped, tag = 'input window, operand 0, single buffered']
    #allocation4 [shape = 's32[1]{0}', space=sflag, size = 0x4, scoped, tag = 'scoped memory for _lambda_.29']
    #allocation5 [shape = 's32[1]{0}', space=sflag, size = 0x4, scoped, tag = 'scoped memory for _lambda_.29']
    #allocation6 [shape = 'u8[4096]{0}', space=vmem, size = 0x1000, scoped, tag = 'input window, operand 1, single buffered']
    #allocation7 [shape = 's32[1]{0}', space=sflag, size = 0x4, scoped, tag = 'scoped memory for _lambda_.29']
    #allocation8 [shape = 'u8[512]{0}', space=vmem, size = 0x400, scoped, tag = 'input window, operand 2, single buffered']
    #allocation9 [shape = 'u8[131072]{0}', space=vmem, size = 0x20000, scoped, tag = 'output window, operand 0, single buffered']
    %8 = vsyncpa [#allocation4], 0
    %9 = vsyncpa [#allocation7], 0
    %10 = vsyncpa [#allocation5], 0
    // Predicated region
    $region2: #{_lambda_.29} parent=1 // pred_check
      _
    $region3: #{_lambda_.29} parent=1 // pred_check_branch
      %12 = sbr.rel (0) target = $region5
    $region4: #{_lambda_.29} parent=1 // pred_region
      %s14 = ssub.s32 4096, 4096
      %15 = vsyncadd [#allocation4], %s14
      %s16 = sshll.u32 [#allocation3], 4
      %s17 = int_to_ptr.vmem [resolvable:$true] %s16
      %22 = dma.hbm_to_vmem [thread:$0]  %s0, 4096, %s17, [#allocation4], 64, 64, 4
    $region5: #{_lambda_.29} parent=1 // pred_fallthru
      _
    // Predicated region
    $region6: #{_lambda_.29} parent=1 // pred_check
      _
    $region7: #{_lambda_.29} parent=1 // pred_check_branch
      %24 = sbr.rel (0) target = $region9
    $region8: #{_lambda_.29} parent=1 // pred_region
      %s26 = ssub.s32 128, 128
      %27 = vsyncadd [#allocation7], %s26
      %s28 = sshll.u32 [#allocation6], 4
      %s29 = int_to_ptr.vmem [resolvable:$true] %s28
      %34 = dma.hbm_to_vmem [thread:$0]  %s1, 128, %s29, [#allocation7], 64, 64, 4
    $region9: #{_lambda_.29} parent=1 // pred_fallthru
      _
    // Predicated region
    $region10: #{_lambda_.29} parent=1 // pred_check
      _
    $region11: #{_lambda_.29} parent=1 // pred_check_branch
      %36 = sbr.rel (0) target = $region13
    $region12: #{_lambda_.29} parent=1 // pred_region
      %s38 = ssub.s32 16, 16
      %39 = vsyncadd [#allocation7], %s38
      %s41 = sshll.u32 [#allocation8], 4
      %s42 = int_to_ptr.vmem [resolvable:$true] %s41
      %44 = dma.hbm_to_vmem [thread:$0]  %s2, 16, %s42, [#allocation7]
    $region13: #{_lambda_.29} parent=1 // pred_fallthru
      _
    // Predicated region
    $region14: #{_lambda_.29} parent=1 // pred_check
      _
    $region15: #{_lambda_.29} parent=1 // pred_check_branch
      %46 = sbr.rel (0) target = $region17
    $region16: #{_lambda_.29} parent=1 // pred_region
      %47 = dma.done [#allocation4], 4096
    $region17: #{_lambda_.29} parent=1 // pred_fallthru
      _
    // Predicated region
    $region18: #{_lambda_.29} parent=1 // pred_check
      _
    $region19: #{_lambda_.29} parent=1 // pred_check_branch
      %49 = sbr.rel (0) target = $region21
    $region20: #{_lambda_.29} parent=1 // pred_region
      %50 = dma.done [#allocation7], 128
    $region21: #{_lambda_.29} parent=1 // pred_fallthru
      _
    // Predicated region
    $region22: #{_lambda_.29} parent=1 // pred_check
      _
    $region23: #{_lambda_.29} parent=1 // pred_check_branch
      %52 = sbr.rel (0) target = $region25
    $region24: #{_lambda_.29} parent=1 // pred_region
      %53 = dma.done [#allocation7], 16
    $region25: #{_lambda_.29} parent=1 // pred_fallthru
      _
    %p55 = scmp.eq.s32.totalorder 0, 0
    // Predicated region
    $region26: #{_lambda_.29} parent=1 // pred_check
      %p56 = pneg %p55
    $region27: #{_lambda_.29} parent=1 // pred_check_branch
      %58 = sbr.rel (%p56) target = $region29
    $region28: #{_lambda_.29} parent=1 // pred_region
      %59 = vst [vmem:[#allocation2] sm:$0xff] 0.0
      %60 = vst [vmem:[#allocation2 + $0x8] sm:$0xff] 0.0
      %61 = vst [vmem:[#allocation2 + $0x10] sm:$0xff] 0.0
      %62 = vst [vmem:[#allocation2 + $0x18] sm:$0xff] 0.0
      %63 = vst [vmem:[#allocation2 + $0x20] sm:$0xff] 0.0
      %64 = vst [vmem:[#allocation2 + $0x28] sm:$0xff] 0.0
      %65 = vst [vmem:[#allocation2 + $0x30] sm:$0xff] 0.0
      %66 = vst [vmem:[#allocation2 + $0x38] sm:$0xff] 0.0
      %67 = vst [vmem:[#allocation2 + $0x40] sm:$0xff] 0.0
      %68 = vst [vmem:[#allocation2 + $0x48] sm:$0xff] 0.0
      %69 = vst [vmem:[#allocation2 + $0x50] sm:$0xff] 0.0
      %70 = vst [vmem:[#allocation2 + $0x58] sm:$0xff] 0.0
      %71 = vst [vmem:[#allocation2 + $0x60] sm:$0xff] 0.0
      %72 = vst [vmem:[#allocation2 + $0x68] sm:$0xff] 0.0
      %73 = vst [vmem:[#allocation2 + $0x70] sm:$0xff] 0.0
      %74 = vst [vmem:[#allocation2 + $0x78] sm:$0xff] 0.0
      %75 = vst [vmem:[#allocation2 + $0x80] sm:$0xff] 0.0
      %76 = vst [vmem:[#allocation2 + $0x88] sm:$0xff] 0.0
      %77 = vst [vmem:[#allocation2 + $0x90] sm:$0xff] 0.0
      %78 = vst [vmem:[#allocation2 + $0x98] sm:$0xff] 0.0
      %79 = vst [vmem:[#allocation2 + $0xa0] sm:$0xff] 0.0
      %80 = vst [vmem:[#allocation2 + $0xa8] sm:$0xff] 0.0
      %81 = vst [vmem:[#allocation2 + $0xb0] sm:$0xff] 0.0
      %82 = vst [vmem:[#allocation2 + $0xb8] sm:$0xff] 0.0
      %83 = vst [vmem:[#allocation2 + $0xc0] sm:$0xff] 0.0
      %84 = vst [vmem:[#allocation2 + $0xc8] sm:$0xff] 0.0
      %85 = vst [vmem:[#allocation2 + $0xd0] sm:$0xff] 0.0
      %86 = vst [vmem:[#allocation2 + $0xd8] sm:$0xff] 0.0
      %87 = vst [vmem:[#allocation2 + $0xe0] sm:$0xff] 0.0
      %88 = vst [vmem:[#allocation2 + $0xe8] sm:$0xff] 0.0
      %89 = vst [vmem:[#allocation2 + $0xf0] sm:$0xff] 0.0
      %90 = vst [vmem:[#allocation2 + $0xf8] sm:$0xff] 0.0
      %91 = vst [vmem:[#allocation2 + $0x100] sm:$0xff] 0.0
      %92 = vst [vmem:[#allocation2 + $0x108] sm:$0xff] 0.0
      %93 = vst [vmem:[#allocation2 + $0x110] sm:$0xff] 0.0
      %94 = vst [vmem:[#allocation2 + $0x118] sm:$0xff] 0.0
      %95 = vst [vmem:[#allocation2 + $0x120] sm:$0xff] 0.0
      %96 = vst [vmem:[#allocation2 + $0x128] sm:$0xff] 0.0
      %97 = vst [vmem:[#allocation2 + $0x130] sm:$0xff] 0.0
      %98 = vst [vmem:[#allocation2 + $0x138] sm:$0xff] 0.0
      %99 = vst [vmem:[#allocation2 + $0x140] sm:$0xff] 0.0
      %100 = vst [vmem:[#allocation2 + $0x148] sm:$0xff] 0.0
      %101 = vst [vmem:[#allocation2 + $0x150] sm:$0xff] 0.0
      %102 = vst [vmem:[#allocation2 + $0x158] sm:$0xff] 0.0
      %103 = vst [vmem:[#allocation2 + $0x160] sm:$0xff] 0.0
      %104 = vst [vmem:[#allocation2 + $0x168] sm:$0xff] 0.0
      %105 = vst [vmem:[#allocation2 + $0x170] sm:$0xff] 0.0
      %106 = vst [vmem:[#allocation2 + $0x178] sm:$0xff] 0.0
      %107 = vst [vmem:[#allocation2 + $0x180] sm:$0xff] 0.0
      %108 = vst [vmem:[#allocation2 + $0x188] sm:$0xff] 0.0
      %109 = vst [vmem:[#allocation2 + $0x190] sm:$0xff] 0.0
      %110 = vst [vmem:[#allocation2 + $0x198] sm:$0xff] 0.0
      %111 = vst [vmem:[#allocation2 + $0x1a0] sm:$0xff] 0.0
      %112 = vst [vmem:[#allocation2 + $0x1a8] sm:$0xff] 0.0
      %113 = vst [vmem:[#allocation2 + $0x1b0] sm:$0xff] 0.0
      %114 = vst [vmem:[#allocation2 + $0x1b8] sm:$0xff] 0.0
      %115 = vst [vmem:[#allocation2 + $0x1c0] sm:$0xff] 0.0
      %116 = vst [vmem:[#allocation2 + $0x1c8] sm:$0xff] 0.0
      %117 = vst [vmem:[#allocation2 + $0x1d0] sm:$0xff] 0.0
      %118 = vst [vmem:[#allocation2 + $0x1d8] sm:$0xff] 0.0
      %119 = vst [vmem:[#allocation2 + $0x1e0] sm:$0xff] 0.0
      %120 = vst [vmem:[#allocation2 + $0x1e8] sm:$0xff] 0.0
      %121 = vst [vmem:[#allocation2 + $0x1f0] sm:$0xff] 0.0
      %122 = vst [vmem:[#allocation2 + $0x1f8] sm:$0xff] 0.0
    $region29: #{_lambda_.29} parent=1 // pred_fallthru
      _
    %v123 = vld [vmem:[#allocation3] sm:$0xf]
    %v124 = vld [vmem:[#allocation3 + $0x4] sm:$0xf]
    %v125 = vld [vmem:[#allocation3 + $0x8] sm:$0xf]
    %v126 = vld [vmem:[#allocation3 + $0xc] sm:$0xf]
    %v127 = vld [vmem:[#allocation3 + $0x10] sm:$0xf]
    %v128 = vld [vmem:[#allocation3 + $0x14] sm:$0xf]
    %v129 = vld [vmem:[#allocation3 + $0x18] sm:$0xf]
    %v130 = vld [vmem:[#allocation3 + $0x1c] sm:$0xf]
    %v131 = vld [vmem:[#allocation3 + $0x20] sm:$0xf]
    %v132 = vld [vmem:[#allocation3 + $0x24] sm:$0xf]
    %v133 = vld [vmem:[#allocation3 + $0x28] sm:$0xf]
    %v134 = vld [vmem:[#allocation3 + $0x2c] sm:$0xf]
    %v135 = vld [vmem:[#allocation3 + $0x30] sm:$0xf]
    %v136 = vld [vmem:[#allocation3 + $0x34] sm:$0xf]
    %v137 = vld [vmem:[#allocation3 + $0x38] sm:$0xf]
    %v138 = vld [vmem:[#allocation3 + $0x3c] sm:$0xf]
    %v139 = vld [vmem:[#allocation3 + $0x40] sm:$0xf]
    %v140 = vld [vmem:[#allocation3 + $0x44] sm:$0xf]
    %v141 = vld [vmem:[#allocation3 + $0x48] sm:$0xf]
    %v142 = vld [vmem:[#allocation3 + $0x4c] sm:$0xf]
    %v143 = vld [vmem:[#allocation3 + $0x50] sm:$0xf]
    %v144 = vld [vmem:[#allocation3 + $0x54] sm:$0xf]
    %v145 = vld [vmem:[#allocation3 + $0x58] sm:$0xf]
    %v146 = vld [vmem:[#allocation3 + $0x5c] sm:$0xf]
    %v147 = vld [vmem:[#allocation3 + $0x60] sm:$0xf]
    %v148 = vld [vmem:[#allocation3 + $0x64] sm:$0xf]
    %v149 = vld [vmem:[#allocation3 + $0x68] sm:$0xf]
    %v150 = vld [vmem:[#allocation3 + $0x6c] sm:$0xf]
    %v151 = vld [vmem:[#allocation3 + $0x70] sm:$0xf]
    %v152 = vld [vmem:[#allocation3 + $0x74] sm:$0xf]
    %v153 = vld [vmem:[#allocation3 + $0x78] sm:$0xf]
    %v154 = vld [vmem:[#allocation3 + $0x7c] sm:$0xf]
    %v155 = vld [vmem:[#allocation3 + $0x80] sm:$0xf]
    %v156 = vld [vmem:[#allocation3 + $0x84] sm:$0xf]
    %v157 = vld [vmem:[#allocation3 + $0x88] sm:$0xf]
    %v158 = vld [vmem:[#allocation3 + $0x8c] sm:$0xf]
    %v159 = vld [vmem:[#allocation3 + $0x90] sm:$0xf]
    %v160 = vld [vmem:[#allocation3 + $0x94] sm:$0xf]
    %v161 = vld [vmem:[#allocation3 + $0x98] sm:$0xf]
    %v162 = vld [vmem:[#allocation3 + $0x9c] sm:$0xf]
    %v163 = vld [vmem:[#allocation3 + $0xa0] sm:$0xf]
    %v164 = vld [vmem:[#allocation3 + $0xa4] sm:$0xf]
    %v165 = vld [vmem:[#allocation3 + $0xa8] sm:$0xf]
    %v166 = vld [vmem:[#allocation3 + $0xac] sm:$0xf]
    %v167 = vld [vmem:[#allocation3 + $0xb0] sm:$0xf]
    %v168 = vld [vmem:[#allocation3 + $0xb4] sm:$0xf]
    %v169 = vld [vmem:[#allocation3 + $0xb8] sm:$0xf]
    %v170 = vld [vmem:[#allocation3 + $0xbc] sm:$0xf]
    %v171 = vld [vmem:[#allocation3 + $0xc0] sm:$0xf]
    %v172 = vld [vmem:[#allocation3 + $0xc4] sm:$0xf]
    %v173 = vld [vmem:[#allocation3 + $0xc8] sm:$0xf]
    %v174 = vld [vmem:[#allocation3 + $0xcc] sm:$0xf]
    %v175 = vld [vmem:[#allocation3 + $0xd0] sm:$0xf]
    %v176 = vld [vmem:[#allocation3 + $0xd4] sm:$0xf]
    %v177 = vld [vmem:[#allocation3 + $0xd8] sm:$0xf]
    %v178 = vld [vmem:[#allocation3 + $0xdc] sm:$0xf]
    %v179 = vld [vmem:[#allocation3 + $0xe0] sm:$0xf]
    %v180 = vld [vmem:[#allocation3 + $0xe4] sm:$0xf]
    %v181 = vld [vmem:[#allocation3 + $0xe8] sm:$0xf]
    %v182 = vld [vmem:[#allocation3 + $0xec] sm:$0xf]
    %v183 = vld [vmem:[#allocation3 + $0xf0] sm:$0xf]
    %v184 = vld [vmem:[#allocation3 + $0xf4] sm:$0xf]
    %v185 = vld [vmem:[#allocation3 + $0xf8] sm:$0xf]
    %v186 = vld [vmem:[#allocation3 + $0xfc] sm:$0xf]
    %v187 = vld [vmem:[#allocation2] sm:$0xff]
    %v188 = vld [vmem:[#allocation2 + $0x8] sm:$0xff]
    %v189 = vld [vmem:[#allocation2 + $0x10] sm:$0xff]
    %v190 = vld [vmem:[#allocation2 + $0x18] sm:$0xff]
    %v191 = vld [vmem:[#allocation2 + $0x20] sm:$0xff]
    %v192 = vld [vmem:[#allocation2 + $0x28] sm:$0xff]
    %v193 = vld [vmem:[#allocation2 + $0x30] sm:$0xff]
    %v194 = vld [vmem:[#allocation2 + $0x38] sm:$0xff]
    %v195 = vld [vmem:[#allocation2 + $0x40] sm:$0xff]
    %v196 = vld [vmem:[#allocation2 + $0x48] sm:$0xff]
    %v197 = vld [vmem:[#allocation2 + $0x50] sm:$0xff]
    %v198 = vld [vmem:[#allocation2 + $0x58] sm:$0xff]
    %v199 = vld [vmem:[#allocation2 + $0x60] sm:$0xff]
    %v200 = vld [vmem:[#allocation2 + $0x68] sm:$0xff]
    %v201 = vld [vmem:[#allocation2 + $0x70] sm:$0xff]
    %v202 = vld [vmem:[#allocation2 + $0x78] sm:$0xff]
    %v203 = vld [vmem:[#allocation2 + $0x80] sm:$0xff]
    %v204 = vld [vmem:[#allocation2 + $0x88] sm:$0xff]
    %v205 = vld [vmem:[#allocation2 + $0x90] sm:$0xff]
    %v206 = vld [vmem:[#allocation2 + $0x98] sm:$0xff]
    %v207 = vld [vmem:[#allocation2 + $0xa0] sm:$0xff]
    %v208 = vld [vmem:[#allocation2 + $0xa8] sm:$0xff]
    %v209 = vld [vmem:[#allocation2 + $0xb0] sm:$0xff]
    %v210 = vld [vmem:[#allocation2 + $0xb8] sm:$0xff]
    %v211 = vld [vmem:[#allocation2 + $0xc0] sm:$0xff]
    %v212 = vld [vmem:[#allocation2 + $0xc8] sm:$0xff]
    %v213 = vld [vmem:[#allocation2 + $0xd0] sm:$0xff]
    %v214 = vld [vmem:[#allocation2 + $0xd8] sm:$0xff]
    %v215 = vld [vmem:[#allocation2 + $0xe0] sm:$0xff]
    %v216 = vld [vmem:[#allocation2 + $0xe8] sm:$0xff]
    %v217 = vld [vmem:[#allocation2 + $0xf0] sm:$0xff]
    %v218 = vld [vmem:[#allocation2 + $0xf8] sm:$0xff]
    %v219 = vld [vmem:[#allocation2 + $0x100] sm:$0xff]
    %v220 = vld [vmem:[#allocation2 + $0x108] sm:$0xff]
    %v221 = vld [vmem:[#allocation2 + $0x110] sm:$0xff]
    %v222 = vld [vmem:[#allocation2 + $0x118] sm:$0xff]
    %v223 = vld [vmem:[#allocation2 + $0x120] sm:$0xff]
    %v224 = vld [vmem:[#allocation2 + $0x128] sm:$0xff]
    %v225 = vld [vmem:[#allocation2 + $0x130] sm:$0xff]
    %v226 = vld [vmem:[#allocation2 + $0x138] sm:$0xff]
    %v227 = vld [vmem:[#allocation2 + $0x140] sm:$0xff]
    %v228 = vld [vmem:[#allocation2 + $0x148] sm:$0xff]
    %v229 = vld [vmem:[#allocation2 + $0x150] sm:$0xff]
    %v230 = vld [vmem:[#allocation2 + $0x158] sm:$0xff]
    %v231 = vld [vmem:[#allocation2 + $0x160] sm:$0xff]
    %v232 = vld [vmem:[#allocation2 + $0x168] sm:$0xff]
    %v233 = vld [vmem:[#allocation2 + $0x170] sm:$0xff]
    %v234 = vld [vmem:[#allocation2 + $0x178] sm:$0xff]
    %v235 = vld [vmem:[#allocation2 + $0x180] sm:$0xff]
    %v236 = vld [vmem:[#allocation2 + $0x188] sm:$0xff]
    %v237 = vld [vmem:[#allocation2 + $0x190] sm:$0xff]
    %v238 = vld [vmem:[#allocation2 + $0x198] sm:$0xff]
    %v239 = vld [vmem:[#allocation2 + $0x1a0] sm:$0xff]
    %v240 = vld [vmem:[#allocation2 + $0x1a8] sm:$0xff]
    %v241 = vld [vmem:[#allocation2 + $0x1b0] sm:$0xff]
    %v242 = vld [vmem:[#allocation2 + $0x1b8] sm:$0xff]
    %v243 = vld [vmem:[#allocation2 + $0x1c0] sm:$0xff]
    %v244 = vld [vmem:[#allocation2 + $0x1c8] sm:$0xff]
    %v245 = vld [vmem:[#allocation2 + $0x1d0] sm:$0xff]
    %v246 = vld [vmem:[#allocation2 + $0x1d8] sm:$0xff]
    %v247 = vld [vmem:[#allocation2 + $0x1e0] sm:$0xff]
    %v248 = vld [vmem:[#allocation2 + $0x1e8] sm:$0xff]
    %v249 = vld [vmem:[#allocation2 + $0x1f0] sm:$0xff]
    %v250 = vld [vmem:[#allocation2 + $0x1f8] sm:$0xff]
    %v251 = vld [vmem:[#allocation6] sm:$0xf]
    %v252 = vld [vmem:[#allocation6 + $0x4] sm:$0xf]
    %v317 = vunpack.c.l.b16 %v123
    %v318 = vunpack.c.l.b16 %v124
    %v319 = vunpack.c.l.b16 %v125
    %v320 = vunpack.c.l.b16 %v126
    %v321 = vunpack.c.l.b16 %v127
    %v322 = vunpack.c.l.b16 %v128
    %v323 = vunpack.c.l.b16 %v129
    %v324 = vunpack.c.l.b16 %v130
    %v325 = vunpack.c.l.b16 %v131
    %v326 = vunpack.c.l.b16 %v132
    %v327 = vunpack.c.l.b16 %v133
    %v328 = vunpack.c.l.b16 %v134
    %v329 = vunpack.c.l.b16 %v135
    %v330 = vunpack.c.l.b16 %v136
    %v331 = vunpack.c.l.b16 %v137
    %v332 = vunpack.c.l.b16 %v138
    %v333 = vunpack.c.l.b16 %v139
    %v334 = vunpack.c.l.b16 %v140
    %v335 = vunpack.c.l.b16 %v141
    %v336 = vunpack.c.l.b16 %v142
    %v337 = vunpack.c.l.b16 %v143
    %v338 = vunpack.c.l.b16 %v144
    %v339 = vunpack.c.l.b16 %v145
    %v340 = vunpack.c.l.b16 %v146
    %v341 = vunpack.c.l.b16 %v147
    %v342 = vunpack.c.l.b16 %v148
    %v343 = vunpack.c.l.b16 %v149
    %v344 = vunpack.c.l.b16 %v150
    %v345 = vunpack.c.l.b16 %v151
    %v346 = vunpack.c.l.b16 %v152
    %v347 = vunpack.c.l.b16 %v153
    %v348 = vunpack.c.l.b16 %v154
    %v349 = vunpack.c.l.b16 %v155
    %v350 = vunpack.c.l.b16 %v156
    %v351 = vunpack.c.l.b16 %v157
    %v352 = vunpack.c.l.b16 %v158
    %v353 = vunpack.c.l.b16 %v159
    %v354 = vunpack.c.l.b16 %v160
    %v355 = vunpack.c.l.b16 %v161
    %v356 = vunpack.c.l.b16 %v162
    %v357 = vunpack.c.l.b16 %v163
    %v358 = vunpack.c.l.b16 %v164
    %v359 = vunpack.c.l.b16 %v165
    %v360 = vunpack.c.l.b16 %v166
    %v361 = vunpack.c.l.b16 %v167
    %v362 = vunpack.c.l.b16 %v168
    %v363 = vunpack.c.l.b16 %v169
    %v364 = vunpack.c.l.b16 %v170
    %v365 = vunpack.c.l.b16 %v171
    %v366 = vunpack.c.l.b16 %v172
    %v367 = vunpack.c.l.b16 %v173
    %v368 = vunpack.c.l.b16 %v174
    %v369 = vunpack.c.l.b16 %v175
    %v370 = vunpack.c.l.b16 %v176
    %v371 = vunpack.c.l.b16 %v177
    %v372 = vunpack.c.l.b16 %v178
    %v373 = vunpack.c.l.b16 %v179
    %v374 = vunpack.c.l.b16 %v180
    %v375 = vunpack.c.l.b16 %v181
    %v376 = vunpack.c.l.b16 %v182
    %v377 = vunpack.c.l.b16 %v183
    %v378 = vunpack.c.l.b16 %v184
    %v379 = vunpack.c.l.b16 %v185
    %v380 = vunpack.c.l.b16 %v186
    %v381 = vpack.c.b16 %v318, %v317
    %v382 = vpack.c.b16 %v320, %v319
    %v383 = vpack.c.b16 %v322, %v321
    %v384 = vpack.c.b16 %v324, %v323
    %v385 = vpack.c.b16 %v326, %v325
    %v386 = vpack.c.b16 %v328, %v327
    %v387 = vpack.c.b16 %v330, %v329
    %v388 = vpack.c.b16 %v332, %v331
    %v389 = vpack.c.b16 %v334, %v333
    %v390 = vpack.c.b16 %v336, %v335
    %v391 = vpack.c.b16 %v338, %v337
    %v392 = vpack.c.b16 %v340, %v339
    %v393 = vpack.c.b16 %v342, %v341
    %v394 = vpack.c.b16 %v344, %v343
    %v395 = vpack.c.b16 %v346, %v345
    %v396 = vpack.c.b16 %v348, %v347
    %v397 = vpack.c.b16 %v350, %v349
    %v398 = vpack.c.b16 %v352, %v351
    %v399 = vpack.c.b16 %v354, %v353
    %v400 = vpack.c.b16 %v356, %v355
    %v401 = vpack.c.b16 %v358, %v357
    %v402 = vpack.c.b16 %v360, %v359
    %v403 = vpack.c.b16 %v362, %v361
    %v404 = vpack.c.b16 %v364, %v363
    %v405 = vpack.c.b16 %v366, %v365
    %v406 = vpack.c.b16 %v368, %v367
    %v407 = vpack.c.b16 %v370, %v369
    %v408 = vpack.c.b16 %v372, %v371
    %v409 = vpack.c.b16 %v374, %v373
    %v410 = vpack.c.b16 %v376, %v375
    %v411 = vpack.c.b16 %v378, %v377
    %v412 = vpack.c.b16 %v380, %v379
    %v415 = vunpack.c.l.b16 %v251
    %v416 = vunpack.c.l.b16 %v252
    %v417 = vpack.c.b16 %v416, %v415
    %vm419 = vcmask 130048
    %v421 = vsel %vm419, %v381, 0
    %v424 = vsel %vm419, %v382, 0
    %v427 = vsel %vm419, %v383, 0
    %v430 = vsel %vm419, %v384, 0
    %v433 = vsel %vm419, %v385, 0
    %v436 = vsel %vm419, %v386, 0
    %v439 = vsel %vm419, %v387, 0
    %v442 = vsel %vm419, %v388, 0
    %v445 = vsel %vm419, %v389, 0
    %v448 = vsel %vm419, %v390, 0
    %v451 = vsel %vm419, %v391, 0
    %v454 = vsel %vm419, %v392, 0
    %v457 = vsel %vm419, %v393, 0
    %v460 = vsel %vm419, %v394, 0
    %v463 = vsel %vm419, %v395, 0
    %v466 = vsel %vm419, %v396, 0
    %v469 = vsel %vm419, %v397, 0
    %v472 = vsel %vm419, %v398, 0
    %v475 = vsel %vm419, %v399, 0
    %v478 = vsel %vm419, %v400, 0
    %v481 = vsel %vm419, %v401, 0
    %v484 = vsel %vm419, %v402, 0
    %v487 = vsel %vm419, %v403, 0
    %v490 = vsel %vm419, %v404, 0
    %v493 = vsel %vm419, %v405, 0
    %v496 = vsel %vm419, %v406, 0
    %v499 = vsel %vm419, %v407, 0
    %v502 = vsel %vm419, %v408, 0
    %v505 = vsel %vm419, %v409, 0
    %v508 = vsel %vm419, %v410, 0
    %v511 = vsel %vm419, %v411, 0
    %v514 = vsel %vm419, %v412, 0
    %516 = vmatprep.subr.bf16.mxu0 0
    %517 = vmatpush1.bf16.msra.mxu0 %v417
    %518 = vmatprep.subr.bf16.mxu0 0
    %519 = vmatpush1.bf16.msra.mxu0 0
    %520 = vmatprep.subr.bf16.mxu0 0
    %521 = vmatpush1.bf16.msra.mxu0 0
    %522 = vmatprep.subr.bf16.mxu0 0
    %523 = vmatpush1.bf16.msra.mxu0 0
    %524 = vmatprep.subr.bf16.mxu0 0
    %525 = vmatpush1.bf16.msra.mxu0 0
    %526 = vmatprep.subr.bf16.mxu0 0
    %527 = vmatpush1.bf16.msra.mxu0 0
    %528 = vmatprep.subr.bf16.mxu0 0
    %529 = vmatpush1.bf16.msra.mxu0 0
    %530 = vmatprep.subr.bf16.mxu0 0
    %531 = vmatpush1.bf16.msra.mxu0 0
    %532 = vmatprep.subr.bf16.mxu0 0
    %533 = vmatpush1.bf16.msra.mxu0 0
    %534 = vmatprep.subr.bf16.mxu0 0
    %535 = vmatpush1.bf16.msra.mxu0 0
    %536 = vmatprep.subr.bf16.mxu0 0
    %537 = vmatpush1.bf16.msra.mxu0 0
    %538 = vmatprep.subr.bf16.mxu0 0
    %539 = vmatpush1.bf16.msra.mxu0 0
    %540 = vmatprep.subr.bf16.mxu0 0
    %541 = vmatpush1.bf16.msra.mxu0 0
    %542 = vmatprep.subr.bf16.mxu0 0
    %543 = vmatpush1.bf16.msra.mxu0 0
    %544 = vmatprep.subr.bf16.mxu0 0
    %545 = vmatpush1.bf16.msra.mxu0 0
    %546 = vmatprep.subr.bf16.mxu0 0
    %547 = vmatpush1.bf16.msra.mxu0 0
    %548 = vmatprep.mubr.bf16.mxu0 0
    %549 = vmatmul.mubr.bf16.gmra.mrb[0].mxu0 %v421
    %v550 = vpop.f32.mrb[0].mxu0
    %v551 = vadd.f32 0.0, %v550
    %v552 = vpop.f32.mrb[0].mxu0
    %v553 = vpop.f32.mrb[0].mxu0
    %v554 = vadd.f32 0.0, %v553
    %v555 = vpop.f32.mrb[0].mxu0
    %556 = vmatprep.mubr.bf16.mxu0 0
    %557 = vmatmul.mubr.bf16.gmra.mrb[0].mxu0 %v424
    %v558 = vpop.f32.mrb[0].mxu0
    %v559 = vadd.f32 0.0, %v558
    %v560 = vpop.f32.mrb[0].mxu0
    %v561 = vpop.f32.mrb[0].mxu0
    %v562 = vadd.f32 0.0, %v561
    %v563 = vpop.f32.mrb[0].mxu0
    %564 = vmatprep.mubr.bf16.mxu0 0
    %565 = vmatmul.mubr.bf16.gmra.mrb[0].mxu0 %v427
    %v566 = vpop.f32.mrb[0].mxu0
    %v567 = vadd.f32 0.0, %v566
    %v568 = vpop.f32.mrb[0].mxu0
    %v569 = vpop.f32.mrb[0].mxu0
    %v570 = vadd.f32 0.0, %v569
    %v571 = vpop.f32.mrb[0].mxu0
    %572 = vmatprep.mubr.bf16.mxu0 0
    %573 = vmatmul.mubr.bf16.gmra.mrb[0].mxu0 %v430
    %v574 = vpop.f32.mrb[0].mxu0
    %v575 = vadd.f32 0.0, %v574
    %v576 = vpop.f32.mrb[0].mxu0
    %v577 = vpop.f32.mrb[0].mxu0
    %v578 = vadd.f32 0.0, %v577
    %v579 = vpop.f32.mrb[0].mxu0
    %580 = vmatprep.mubr.bf16.mxu0 0
    %581 = vmatmul.mubr.bf16.gmra.mrb[0].mxu0 %v433
    %v582 = vpop.f32.mrb[0].mxu0
    %v583 = vadd.f32 0.0, %v582
    %v584 = vpop.f32.mrb[0].mxu0
    %v585 = vpop.f32.mrb[0].mxu0
    %v586 = vadd.f32 0.0, %v585
    %v587 = vpop.f32.mrb[0].mxu0
    %588 = vmatprep.mubr.bf16.mxu0 0
    %589 = vmatmul.mubr.bf16.gmra.mrb[0].mxu0 %v436
    %v590 = vpop.f32.mrb[0].mxu0
    %v591 = vadd.f32 0.0, %v590
    %v592 = vpop.f32.mrb[0].mxu0
    %v593 = vpop.f32.mrb[0].mxu0
    %v594 = vadd.f32 0.0, %v593
    %v595 = vpop.f32.mrb[0].mxu0
    %596 = vmatprep.mubr.bf16.mxu0 0
    %597 = vmatmul.mubr.bf16.gmra.mrb[0].mxu0 %v439
    %v598 = vpop.f32.mrb[0].mxu0
    %v599 = vadd.f32 0.0, %v598
    %v600 = vpop.f32.mrb[0].mxu0
    %v601 = vpop.f32.mrb[0].mxu0
    %v602 = vadd.f32 0.0, %v601
    %v603 = vpop.f32.mrb[0].mxu0
    %604 = vmatprep.mubr.bf16.mxu0 0
    %605 = vmatmul.mubr.bf16.gmra.mrb[0].mxu0 %v442
    %v606 = vpop.f32.mrb[0].mxu0
    %v607 = vadd.f32 0.0, %v606
    %v608 = vpop.f32.mrb[0].mxu0
    %v609 = vpop.f32.mrb[0].mxu0
    %v610 = vadd.f32 0.0, %v609
    %v611 = vpop.f32.mrb[0].mxu0
    %612 = vmatprep.mubr.bf16.mxu0 0
    %613 = vmatmul.mubr.bf16.gmra.mrb[0].mxu0 %v445
    %v614 = vpop.f32.mrb[0].mxu0
    %v615 = vadd.f32 0.0, %v614
    %v616 = vpop.f32.mrb[0].mxu0
    %v617 = vpop.f32.mrb[0].mxu0
    %v618 = vadd.f32 0.0, %v617
    %v619 = vpop.f32.mrb[0].mxu0
    %620 = vmatprep.mubr.bf16.mxu0 0
    %621 = vmatmul.mubr.bf16.gmra.mrb[0].mxu0 %v448
    %v622 = vpop.f32.mrb[0].mxu0
    %v623 = vadd.f32 0.0, %v622
    %v624 = vpop.f32.mrb[0].mxu0
    %v625 = vpop.f32.mrb[0].mxu0
    %v626 = vadd.f32 0.0, %v625
    %v627 = vpop.f32.mrb[0].mxu0
    %628 = vmatprep.mubr.bf16.mxu0 0
    %629 = vmatmul.mubr.bf16.gmra.mrb[0].mxu0 %v451
    %v630 = vpop.f32.mrb[0].mxu0
    %v631 = vadd.f32 0.0, %v630
    %v632 = vpop.f32.mrb[0].mxu0
    %v633 = vpop.f32.mrb[0].mxu0
    %v634 = vadd.f32 0.0, %v633
    %v635 = vpop.f32.mrb[0].mxu0
    %636 = vmatprep.mubr.bf16.mxu0 0
    %637 = vmatmul.mubr.bf16.gmra.mrb[0].mxu0 %v454
    %v638 = vpop.f32.mrb[0].mxu0
    %v639 = vadd.f32 0.0, %v638
    %v640 = vpop.f32.mrb[0].mxu0
    %v641 = vpop.f32.mrb[0].mxu0
    %v642 = vadd.f32 0.0, %v641
    %v643 = vpop.f32.mrb[0].mxu0
    %644 = vmatprep.mubr.bf16.mxu0 0
    %645 = vmatmul.mubr.bf16.gmra.mrb[0].mxu0 %v457
    %v646 = vpop.f32.mrb[0].mxu0
    %v647 = vadd.f32 0.0, %v646
    %v648 = vpop.f32.mrb[0].mxu0
    %v649 = vpop.f32.mrb[0].mxu0
    %v650 = vadd.f32 0.0, %v649
    %v651 = vpop.f32.mrb[0].mxu0
    %652 = vmatprep.mubr.bf16.mxu0 0
    %653 = vmatmul.mubr.bf16.gmra.mrb[0].mxu0 %v460
    %v654 = vpop.f32.mrb[0].mxu0
    %v655 = vadd.f32 0.0, %v654
    %v656 = vpop.f32.mrb[0].mxu0
    %v657 = vpop.f32.mrb[0].mxu0
    %v658 = vadd.f32 0.0, %v657
    %v659 = vpop.f32.mrb[0].mxu0
    %660 = vmatprep.mubr.bf16.mxu0 0
    %661 = vmatmul.mubr.bf16.gmra.mrb[0].mxu0 %v463
    %v662 = vpop.f32.mrb[0].mxu0
    %v663 = vadd.f32 0.0, %v662
    %v664 = vpop.f32.mrb[0].mxu0
    %v665 = vpop.f32.mrb[0].mxu0
    %v666 = vadd.f32 0.0, %v665
    %v667 = vpop.f32.mrb[0].mxu0
    %668 = vmatprep.mubr.bf16.mxu0 0
    %669 = vmatmul.mubr.bf16.gmra.mrb[0].mxu0 %v466
    %v670 = vpop.f32.mrb[0].mxu0
    %v671 = vadd.f32 0.0, %v670
    %v672 = vpop.f32.mrb[0].mxu0
    %v673 = vpop.f32.mrb[0].mxu0
    %v674 = vadd.f32 0.0, %v673
    %v675 = vpop.f32.mrb[0].mxu0
    %676 = vmatprep.mubr.bf16.mxu0 0
    %677 = vmatmul.mubr.bf16.gmra.mrb[0].mxu0 %v469
    %v678 = vpop.f32.mrb[0].mxu0
    %v679 = vadd.f32 0.0, %v678
    %v680 = vpop.f32.mrb[0].mxu0
    %v681 = vpop.f32.mrb[0].mxu0
    %v682 = vadd.f32 0.0, %v681
    %v683 = vpop.f32.mrb[0].mxu0
    %684 = vmatprep.mubr.bf16.mxu0 0
    %685 = vmatmul.mubr.bf16.gmra.mrb[0].mxu0 %v472
    %v686 = vpop.f32.mrb[0].mxu0
    %v687 = vadd.f32 0.0, %v686
    %v688 = vpop.f32.mrb[0].mxu0
    %v689 = vpop.f32.mrb[0].mxu0
    %v690 = vadd.f32 0.0, %v689
    %v691 = vpop.f32.mrb[0].mxu0
    %692 = vmatprep.mubr.bf16.mxu0 0
    %693 = vmatmul.mubr.bf16.gmra.mrb[0].mxu0 %v475
    %v694 = vpop.f32.mrb[0].mxu0
    %v695 = vadd.f32 0.0, %v694
    %v696 = vpop.f32.mrb[0].mxu0
    %v697 = vpop.f32.mrb[0].mxu0
    %v698 = vadd.f32 0.0, %v697
    %v699 = vpop.f32.mrb[0].mxu0
    %700 = vmatprep.mubr.bf16.mxu0 0
    %701 = vmatmul.mubr.bf16.gmra.mrb[0].mxu0 %v478
    %v702 = vpop.f32.mrb[0].mxu0
    %v703 = vadd.f32 0.0, %v702
    %v704 = vpop.f32.mrb[0].mxu0
    %v705 = vpop.f32.mrb[0].mxu0
    %v706 = vadd.f32 0.0, %v705
    %v707 = vpop.f32.mrb[0].mxu0
    %708 = vmatprep.mubr.bf16.mxu0 0
    %709 = vmatmul.mubr.bf16.gmra.mrb[0].mxu0 %v481
    %v710 = vpop.f32.mrb[0].mxu0
    %v711 = vadd.f32 0.0, %v710
    %v712 = vpop.f32.mrb[0].mxu0
    %v713 = vpop.f32.mrb[0].mxu0
    %v714 = vadd.f32 0.0, %v713
    %v715 = vpop.f32.mrb[0].mxu0
    %716 = vmatprep.mubr.bf16.mxu0 0
    %717 = vmatmul.mubr.bf16.gmra.mrb[0].mxu0 %v484
    %v718 = vpop.f32.mrb[0].mxu0
    %v719 = vadd.f32 0.0, %v718
    %v720 = vpop.f32.mrb[0].mxu0
    %v721 = vpop.f32.mrb[0].mxu0
    %v722 = vadd.f32 0.0, %v721
    %v723 = vpop.f32.mrb[0].mxu0
    %724 = vmatprep.mubr.bf16.mxu0 0
    %725 = vmatmul.mubr.bf16.gmra.mrb[0].mxu0 %v487
    %v726 = vpop.f32.mrb[0].mxu0
    %v727 = vadd.f32 0.0, %v726
    %v728 = vpop.f32.mrb[0].mxu0
    %v729 = vpop.f32.mrb[0].mxu0
    %v730 = vadd.f32 0.0, %v729
    %v731 = vpop.f32.mrb[0].mxu0
    %732 = vmatprep.mubr.bf16.mxu0 0
    %733 = vmatmul.mubr.bf16.gmra.mrb[0].mxu0 %v490
    %v734 = vpop.f32.mrb[0].mxu0
    %v735 = vadd.f32 0.0, %v734
    %v736 = vpop.f32.mrb[0].mxu0
    %v737 = vpop.f32.mrb[0].mxu0
    %v738 = vadd.f32 0.0, %v737
    %v739 = vpop.f32.mrb[0].mxu0
    %740 = vmatprep.mubr.bf16.mxu0 0
    %741 = vmatmul.mubr.bf16.gmra.mrb[0].mxu0 %v493
    %v742 = vpop.f32.mrb[0].mxu0
    %v743 = vadd.f32 0.0, %v742
    %v744 = vpop.f32.mrb[0].mxu0
    %v745 = vpop.f32.mrb[0].mxu0
    %v746 = vadd.f32 0.0, %v745
    %v747 = vpop.f32.mrb[0].mxu0
    %748 = vmatprep.mubr.bf16.mxu0 0
    %749 = vmatmul.mubr.bf16.gmra.mrb[0].mxu0 %v496
    %v750 = vpop.f32.mrb[0].mxu0
    %v751 = vadd.f32 0.0, %v750
    %v752 = vpop.f32.mrb[0].mxu0
    %v753 = vpop.f32.mrb[0].mxu0
    %v754 = vadd.f32 0.0, %v753
    %v755 = vpop.f32.mrb[0].mxu0
    %756 = vmatprep.mubr.bf16.mxu0 0
    %757 = vmatmul.mubr.bf16.gmra.mrb[0].mxu0 %v499
    %v758 = vpop.f32.mrb[0].mxu0
    %v759 = vadd.f32 0.0, %v758
    %v760 = vpop.f32.mrb[0].mxu0
    %v761 = vpop.f32.mrb[0].mxu0
    %v762 = vadd.f32 0.0, %v761
    %v763 = vpop.f32.mrb[0].mxu0
    %764 = vmatprep.mubr.bf16.mxu0 0
    %765 = vmatmul.mubr.bf16.gmra.mrb[0].mxu0 %v502
    %v766 = vpop.f32.mrb[0].mxu0
    %v767 = vadd.f32 0.0, %v766
    %v768 = vpop.f32.mrb[0].mxu0
    %v769 = vpop.f32.mrb[0].mxu0
    %v770 = vadd.f32 0.0, %v769
    %v771 = vpop.f32.mrb[0].mxu0
    %772 = vmatprep.mubr.bf16.mxu0 0
    %773 = vmatmul.mubr.bf16.gmra.mrb[0].mxu0 %v505
    %v774 = vpop.f32.mrb[0].mxu0
    %v775 = vadd.f32 0.0, %v774
    %v776 = vpop.f32.mrb[0].mxu0
    %v777 = vpop.f32.mrb[0].mxu0
    %v778 = vadd.f32 0.0, %v777
    %v779 = vpop.f32.mrb[0].mxu0
    %780 = vmatprep.mubr.bf16.mxu0 0
    %781 = vmatmul.mubr.bf16.gmra.mrb[0].mxu0 %v508
    %v782 = vpop.f32.mrb[0].mxu0
    %v783 = vadd.f32 0.0, %v782
    %v784 = vpop.f32.mrb[0].mxu0
    %v785 = vpop.f32.mrb[0].mxu0
    %v786 = vadd.f32 0.0, %v785
    %v787 = vpop.f32.mrb[0].mxu0
    %788 = vmatprep.mubr.bf16.mxu0 0
    %789 = vmatmul.mubr.bf16.gmra.mrb[0].mxu0 %v511
    %v790 = vpop.f32.mrb[0].mxu0
    %v791 = vadd.f32 0.0, %v790
    %v792 = vpop.f32.mrb[0].mxu0
    %v793 = vpop.f32.mrb[0].mxu0
    %v794 = vadd.f32 0.0, %v793
    %v795 = vpop.f32.mrb[0].mxu0
    %796 = vmatprep.mubr.bf16.mxu0 0
    %797 = vmatmul.mubr.bf16.gmra.mrb[0].mxu0 %v514
    %v798 = vpop.f32.mrb[0].mxu0
    %v799 = vadd.f32 0.0, %v798
    %v800 = vpop.f32.mrb[0].mxu0
    %v801 = vpop.f32.mrb[0].mxu0
    %v802 = vadd.f32 0.0, %v801
    %v803 = vpop.f32.mrb[0].mxu0
    %804 = vdwg.mxu0
    %v805 = vadd.f32 %v187, %v551
    %v806 = vadd.f32 %v188, %v554
    %v807 = vadd.f32 %v189, %v559
    %v808 = vadd.f32 %v190, %v562
    %v809 = vadd.f32 %v191, %v567
    %v810 = vadd.f32 %v192, %v570
    %v811 = vadd.f32 %v193, %v575
    %v812 = vadd.f32 %v194, %v578
    %v813 = vadd.f32 %v195, %v583
    %v814 = vadd.f32 %v196, %v586
    %v815 = vadd.f32 %v197, %v591
    %v816 = vadd.f32 %v198, %v594
    %v817 = vadd.f32 %v199, %v599
    %v818 = vadd.f32 %v200, %v602
    %v819 = vadd.f32 %v201, %v607
    %v820 = vadd.f32 %v202, %v610
    %v821 = vadd.f32 %v203, %v615
    %v822 = vadd.f32 %v204, %v618
    %v823 = vadd.f32 %v205, %v623
    %v824 = vadd.f32 %v206, %v626
    %v825 = vadd.f32 %v207, %v631
    %v826 = vadd.f32 %v208, %v634
    %v827 = vadd.f32 %v209, %v639
    %v828 = vadd.f32 %v210, %v642
    %v829 = vadd.f32 %v211, %v647
    %v830 = vadd.f32 %v212, %v650
    %v831 = vadd.f32 %v213, %v655
    %v832 = vadd.f32 %v214, %v658
    %v833 = vadd.f32 %v215, %v663
    %v834 = vadd.f32 %v216, %v666
    %v835 = vadd.f32 %v217, %v671
    %v836 = vadd.f32 %v218, %v674
    %v837 = vadd.f32 %v219, %v679
    %v838 = vadd.f32 %v220, %v682
    %v839 = vadd.f32 %v221, %v687
    %v840 = vadd.f32 %v222, %v690
    %v841 = vadd.f32 %v223, %v695
    %v842 = vadd.f32 %v224, %v698
    %v843 = vadd.f32 %v225, %v703
    %v844 = vadd.f32 %v226, %v706
    %v845 = vadd.f32 %v227, %v711
    %v846 = vadd.f32 %v228, %v714
    %v847 = vadd.f32 %v229, %v719
    %v848 = vadd.f32 %v230, %v722
    %v849 = vadd.f32 %v231, %v727
    %v850 = vadd.f32 %v232, %v730
    %v851 = vadd.f32 %v233, %v735
    %v852 = vadd.f32 %v234, %v738
    %v853 = vadd.f32 %v235, %v743
    %v854 = vadd.f32 %v236, %v746
    %v855 = vadd.f32 %v237, %v751
    %v856 = vadd.f32 %v238, %v754
    %v857 = vadd.f32 %v239, %v759
    %v858 = vadd.f32 %v240, %v762
    %v859 = vadd.f32 %v241, %v767
    %v860 = vadd.f32 %v242, %v770
    %v861 = vadd.f32 %v243, %v775
    %v862 = vadd.f32 %v244, %v778
    %v863 = vadd.f32 %v245, %v783
    %v864 = vadd.f32 %v246, %v786
    %v865 = vadd.f32 %v247, %v791
    %v866 = vadd.f32 %v248, %v794
    %v867 = vadd.f32 %v249, %v799
    %v868 = vadd.f32 %v250, %v802
    %869 = vst [vmem:[#allocation2] sm:$0xff] %v805
    %870 = vst [vmem:[#allocation2 + $0x8] sm:$0xff] %v806
    %871 = vst [vmem:[#allocation2 + $0x10] sm:$0xff] %v807
    %872 = vst [vmem:[#allocation2 + $0x18] sm:$0xff] %v808
    %873 = vst [vmem:[#allocation2 + $0x20] sm:$0xff] %v809
    %874 = vst [vmem:[#allocation2 + $0x28] sm:$0xff] %v810
    %875 = vst [vmem:[#allocation2 + $0x30] sm:$0xff] %v811
    %876 = vst [vmem:[#allocation2 + $0x38] sm:$0xff] %v812
    %877 = vst [vmem:[#allocation2 + $0x40] sm:$0xff] %v813
    %878 = vst [vmem:[#allocation2 + $0x48] sm:$0xff] %v814
    %879 = vst [vmem:[#allocation2 + $0x50] sm:$0xff] %v815
    %880 = vst [vmem:[#allocation2 + $0x58] sm:$0xff] %v816
    %881 = vst [vmem:[#allocation2 + $0x60] sm:$0xff] %v817
    %882 = vst [vmem:[#allocation2 + $0x68] sm:$0xff] %v818
    %883 = vst [vmem:[#allocation2 + $0x70] sm:$0xff] %v819
    %884 = vst [vmem:[#allocation2 + $0x78] sm:$0xff] %v820
    %885 = vst [vmem:[#allocation2 + $0x80] sm:$0xff] %v821
    %886 = vst [vmem:[#allocation2 + $0x88] sm:$0xff] %v822
    %887 = vst [vmem:[#allocation2 + $0x90] sm:$0xff] %v823
    %888 = vst [vmem:[#allocation2 + $0x98] sm:$0xff] %v824
    %889 = vst [vmem:[#allocation2 + $0xa0] sm:$0xff] %v825
    %890 = vst [vmem:[#allocation2 + $0xa8] sm:$0xff] %v826
    %891 = vst [vmem:[#allocation2 + $0xb0] sm:$0xff] %v827
    %892 = vst [vmem:[#allocation2 + $0xb8] sm:$0xff] %v828
    %893 = vst [vmem:[#allocation2 + $0xc0] sm:$0xff] %v829
    %894 = vst [vmem:[#allocation2 + $0xc8] sm:$0xff] %v830
    %895 = vst [vmem:[#allocation2 + $0xd0] sm:$0xff] %v831
    %896 = vst [vmem:[#allocation2 + $0xd8] sm:$0xff] %v832
    %897 = vst [vmem:[#allocation2 + $0xe0] sm:$0xff] %v833
    %898 = vst [vmem:[#allocation2 + $0xe8] sm:$0xff] %v834
    %899 = vst [vmem:[#allocation2 + $0xf0] sm:$0xff] %v835
    %900 = vst [vmem:[#allocation2 + $0xf8] sm:$0xff] %v836
    %901 = vst [vmem:[#allocation2 + $0x100] sm:$0xff] %v837
    %902 = vst [vmem:[#allocation2 + $0x108] sm:$0xff] %v838
    %903 = vst [vmem:[#allocation2 + $0x110] sm:$0xff] %v839
    %904 = vst [vmem:[#allocation2 + $0x118] sm:$0xff] %v840
    %905 = vst [vmem:[#allocation2 + $0x120] sm:$0xff] %v841
    %906 = vst [vmem:[#allocation2 + $0x128] sm:$0xff] %v842
    %907 = vst [vmem:[#allocation2 + $0x130] sm:$0xff] %v843
    %908 = vst [vmem:[#allocation2 + $0x138] sm:$0xff] %v844
    %909 = vst [vmem:[#allocation2 + $0x140] sm:$0xff] %v845
    %910 = vst [vmem:[#allocation2 + $0x148] sm:$0xff] %v846
    %911 = vst [vmem:[#allocation2 + $0x150] sm:$0xff] %v847
    %912 = vst [vmem:[#allocation2 + $0x158] sm:$0xff] %v848
    %913 = vst [vmem:[#allocation2 + $0x160] sm:$0xff] %v849
    %914 = vst [vmem:[#allocation2 + $0x168] sm:$0xff] %v850
    %915 = vst [vmem:[#allocation2 + $0x170] sm:$0xff] %v851
    %916 = vst [vmem:[#allocation2 + $0x178] sm:$0xff] %v852
    %917 = vst [vmem:[#allocation2 + $0x180] sm:$0xff] %v853
    %918 = vst [vmem:[#allocation2 + $0x188] sm:$0xff] %v854
    %919 = vst [vmem:[#allocation2 + $0x190] sm:$0xff] %v855
    %920 = vst [vmem:[#allocation2 + $0x198] sm:$0xff] %v856
    %921 = vst [vmem:[#allocation2 + $0x1a0] sm:$0xff] %v857
    %922 = vst [vmem:[#allocation2 + $0x1a8] sm:$0xff] %v858
    %923 = vst [vmem:[#allocation2 + $0x1b0] sm:$0xff] %v859
    %924 = vst [vmem:[#allocation2 + $0x1b8] sm:$0xff] %v860
    %925 = vst [vmem:[#allocation2 + $0x1c0] sm:$0xff] %v861
    %926 = vst [vmem:[#allocation2 + $0x1c8] sm:$0xff] %v862
    %927 = vst [vmem:[#allocation2 + $0x1d0] sm:$0xff] %v863
    %928 = vst [vmem:[#allocation2 + $0x1d8] sm:$0xff] %v864
    %929 = vst [vmem:[#allocation2 + $0x1e0] sm:$0xff] %v865
    %930 = vst [vmem:[#allocation2 + $0x1e8] sm:$0xff] %v866
    %931 = vst [vmem:[#allocation2 + $0x1f0] sm:$0xff] %v867
    %932 = vst [vmem:[#allocation2 + $0x1f8] sm:$0xff] %v868
    // Predicated region
    $region30: #{_lambda_.29} parent=1 // pred_check
      %p933 = pneg %p55
    $region31: #{_lambda_.29} parent=1 // pred_check_branch
      %935 = sbr.rel (%p933) target = $region33
    $region32: #{_lambda_.29} parent=1 // pred_region
      %v936 = vld [vmem:[#allocation2] sm:$0xff]
      %v937 = vld [vmem:[#allocation2 + $0x8] sm:$0xff]
      %v938 = vld [vmem:[#allocation2 + $0x10] sm:$0xff]
      %v939 = vld [vmem:[#allocation2 + $0x18] sm:$0xff]
      %v940 = vld [vmem:[#allocation2 + $0x20] sm:$0xff]
      %v941 = vld [vmem:[#allocation2 + $0x28] sm:$0xff]
      %v942 = vld [vmem:[#allocation2 + $0x30] sm:$0xff]
      %v943 = vld [vmem:[#allocation2 + $0x38] sm:$0xff]
      %v944 = vld [vmem:[#allocation2 + $0x40] sm:$0xff]
      %v945 = vld [vmem:[#allocation2 + $0x48] sm:$0xff]
      %v946 = vld [vmem:[#allocation2 + $0x50] sm:$0xff]
      %v947 = vld [vmem:[#allocation2 + $0x58] sm:$0xff]
      %v948 = vld [vmem:[#allocation2 + $0x60] sm:$0xff]
      %v949 = vld [vmem:[#allocation2 + $0x68] sm:$0xff]
      %v950 = vld [vmem:[#allocation2 + $0x70] sm:$0xff]
      %v951 = vld [vmem:[#allocation2 + $0x78] sm:$0xff]
      %v952 = vld [vmem:[#allocation2 + $0x80] sm:$0xff]
      %v953 = vld [vmem:[#allocation2 + $0x88] sm:$0xff]
      %v954 = vld [vmem:[#allocation2 + $0x90] sm:$0xff]
      %v955 = vld [vmem:[#allocation2 + $0x98] sm:$0xff]
      %v956 = vld [vmem:[#allocation2 + $0xa0] sm:$0xff]
      %v957 = vld [vmem:[#allocation2 + $0xa8] sm:$0xff]
      %v958 = vld [vmem:[#allocation2 + $0xb0] sm:$0xff]
      %v959 = vld [vmem:[#allocation2 + $0xb8] sm:$0xff]
      %v960 = vld [vmem:[#allocation2 + $0xc0] sm:$0xff]
      %v961 = vld [vmem:[#allocation2 + $0xc8] sm:$0xff]
      %v962 = vld [vmem:[#allocation2 + $0xd0] sm:$0xff]
      %v963 = vld [vmem:[#allocation2 + $0xd8] sm:$0xff]
      %v964 = vld [vmem:[#allocation2 + $0xe0] sm:$0xff]
      %v965 = vld [vmem:[#allocation2 + $0xe8] sm:$0xff]
      %v966 = vld [vmem:[#allocation2 + $0xf0] sm:$0xff]
      %v967 = vld [vmem:[#allocation2 + $0xf8] sm:$0xff]
      %v968 = vld [vmem:[#allocation2 + $0x100] sm:$0xff]
      %v969 = vld [vmem:[#allocation2 + $0x108] sm:$0xff]
      %v970 = vld [vmem:[#allocation2 + $0x110] sm:$0xff]
      %v971 = vld [vmem:[#allocation2 + $0x118] sm:$0xff]
      %v972 = vld [vmem:[#allocation2 + $0x120] sm:$0xff]
      %v973 = vld [vmem:[#allocation2 + $0x128] sm:$0xff]
      %v974 = vld [vmem:[#allocation2 + $0x130] sm:$0xff]
      %v975 = vld [vmem:[#allocation2 + $0x138] sm:$0xff]
      %v976 = vld [vmem:[#allocation2 + $0x140] sm:$0xff]
      %v977 = vld [vmem:[#allocation2 + $0x148] sm:$0xff]
      %v978 = vld [vmem:[#allocation2 + $0x150] sm:$0xff]
      %v979 = vld [vmem:[#allocation2 + $0x158] sm:$0xff]
      %v980 = vld [vmem:[#allocation2 + $0x160] sm:$0xff]
      %v981 = vld [vmem:[#allocation2 + $0x168] sm:$0xff]
      %v982 = vld [vmem:[#allocation2 + $0x170] sm:$0xff]
      %v983 = vld [vmem:[#allocation2 + $0x178] sm:$0xff]
      %v984 = vld [vmem:[#allocation2 + $0x180] sm:$0xff]
      %v985 = vld [vmem:[#allocation2 + $0x188] sm:$0xff]
      %v986 = vld [vmem:[#allocation2 + $0x190] sm:$0xff]
      %v987 = vld [vmem:[#allocation2 + $0x198] sm:$0xff]
      %v988 = vld [vmem:[#allocation2 + $0x1a0] sm:$0xff]
      %v989 = vld [vmem:[#allocation2 + $0x1a8] sm:$0xff]
      %v990 = vld [vmem:[#allocation2 + $0x1b0] sm:$0xff]
      %v991 = vld [vmem:[#allocation2 + $0x1b8] sm:$0xff]
      %v992 = vld [vmem:[#allocation2 + $0x1c0] sm:$0xff]
      %v993 = vld [vmem:[#allocation2 + $0x1c8] sm:$0xff]
      %v994 = vld [vmem:[#allocation2 + $0x1d0] sm:$0xff]
      %v995 = vld [vmem:[#allocation2 + $0x1d8] sm:$0xff]
      %v996 = vld [vmem:[#allocation2 + $0x1e0] sm:$0xff]
      %v997 = vld [vmem:[#allocation2 + $0x1e8] sm:$0xff]
      %v998 = vld [vmem:[#allocation2 + $0x1f0] sm:$0xff]
      %v999 = vld [vmem:[#allocation2 + $0x1f8] sm:$0xff]
      %v1000 = vld [vmem:[#allocation8] sm:$0x1]
      %v1002 = vlaneseq
      %v1003 = vshrl.u32 %v1002, 7
      %v1004 = vsub.s32 0, %v1003
      %v1005 = vrot.slane %v1000, %v1004
      %v1007 = vadd.f32 %v936, %v1005
      %v1008 = vadd.f32 %v937, %v1005
      %v1009 = vadd.f32 %v938, %v1005
      %v1010 = vadd.f32 %v939, %v1005
      %v1011 = vadd.f32 %v940, %v1005
      %v1012 = vadd.f32 %v941, %v1005
      %v1013 = vadd.f32 %v942, %v1005
      %v1014 = vadd.f32 %v943, %v1005
      %v1015 = vadd.f32 %v944, %v1005
      %v1016 = vadd.f32 %v945, %v1005
      %v1017 = vadd.f32 %v946, %v1005
      %v1018 = vadd.f32 %v947, %v1005
      %v1019 = vadd.f32 %v948, %v1005
      %v1020 = vadd.f32 %v949, %v1005
      %v1021 = vadd.f32 %v950, %v1005
      %v1022 = vadd.f32 %v951, %v1005
      %v1023 = vadd.f32 %v952, %v1005
      %v1024 = vadd.f32 %v953, %v1005
      %v1025 = vadd.f32 %v954, %v1005
      %v1026 = vadd.f32 %v955, %v1005
      %v1027 = vadd.f32 %v956, %v1005
      %v1028 = vadd.f32 %v957, %v1005
      %v1029 = vadd.f32 %v958, %v1005
      %v1030 = vadd.f32 %v959, %v1005
      %v1031 = vadd.f32 %v960, %v1005
      %v1032 = vadd.f32 %v961, %v1005
      %v1033 = vadd.f32 %v962, %v1005
      %v1034 = vadd.f32 %v963, %v1005
      %v1035 = vadd.f32 %v964, %v1005
      %v1036 = vadd.f32 %v965, %v1005
      %v1037 = vadd.f32 %v966, %v1005
      %v1038 = vadd.f32 %v967, %v1005
      %v1039 = vadd.f32 %v968, %v1005
      %v1040 = vadd.f32 %v969, %v1005
      %v1041 = vadd.f32 %v970, %v1005
      %v1042 = vadd.f32 %v971, %v1005
      %v1043 = vadd.f32 %v972, %v1005
      %v1044 = vadd.f32 %v973, %v1005
      %v1045 = vadd.f32 %v974, %v1005
      %v1046 = vadd.f32 %v975, %v1005
      %v1047 = vadd.f32 %v976, %v1005
      %v1048 = vadd.f32 %v977, %v1005
      %v1049 = vadd.f32 %v978, %v1005
      %v1050 = vadd.f32 %v979, %v1005
      %v1051 = vadd.f32 %v980, %v1005
      %v1052 = vadd.f32 %v981, %v1005
      %v1053 = vadd.f32 %v982, %v1005
      %v1054 = vadd.f32 %v983, %v1005
      %v1055 = vadd.f32 %v984, %v1005
      %v1056 = vadd.f32 %v985, %v1005
      %v1057 = vadd.f32 %v986, %v1005
      %v1058 = vadd.f32 %v987, %v1005
      %v1059 = vadd.f32 %v988, %v1005
      %v1060 = vadd.f32 %v989, %v1005
      %v1061 = vadd.f32 %v990, %v1005
      %v1062 = vadd.f32 %v991, %v1005
      %v1063 = vadd.f32 %v992, %v1005
      %v1064 = vadd.f32 %v993, %v1005
      %v1065 = vadd.f32 %v994, %v1005
      %v1066 = vadd.f32 %v995, %v1005
      %v1067 = vadd.f32 %v996, %v1005
      %v1068 = vadd.f32 %v997, %v1005
      %v1069 = vadd.f32 %v998, %v1005
      %v1070 = vadd.f32 %v999, %v1005
      %v1071 = vmax.f32 %v1007, 0.0
      %v1072 = vmax.f32 %v1008, 0.0
      %v1073 = vmax.f32 %v1009, 0.0
      %v1074 = vmax.f32 %v1010, 0.0
      %v1075 = vmax.f32 %v1011, 0.0
      %v1076 = vmax.f32 %v1012, 0.0
      %v1077 = vmax.f32 %v1013, 0.0
      %v1078 = vmax.f32 %v1014, 0.0
      %v1079 = vmax.f32 %v1015, 0.0
      %v1080 = vmax.f32 %v1016, 0.0
      %v1081 = vmax.f32 %v1017, 0.0
      %v1082 = vmax.f32 %v1018, 0.0
      %v1083 = vmax.f32 %v1019, 0.0
      %v1084 = vmax.f32 %v1020, 0.0
      %v1085 = vmax.f32 %v1021, 0.0
      %v1086 = vmax.f32 %v1022, 0.0
      %v1087 = vmax.f32 %v1023, 0.0
      %v1088 = vmax.f32 %v1024, 0.0
      %v1089 = vmax.f32 %v1025, 0.0
      %v1090 = vmax.f32 %v1026, 0.0
      %v1091 = vmax.f32 %v1027, 0.0
      %v1092 = vmax.f32 %v1028, 0.0
      %v1093 = vmax.f32 %v1029, 0.0
      %v1094 = vmax.f32 %v1030, 0.0
      %v1095 = vmax.f32 %v1031, 0.0
      %v1096 = vmax.f32 %v1032, 0.0
      %v1097 = vmax.f32 %v1033, 0.0
      %v1098 = vmax.f32 %v1034, 0.0
      %v1099 = vmax.f32 %v1035, 0.0
      %v1100 = vmax.f32 %v1036, 0.0
      %v1101 = vmax.f32 %v1037, 0.0
      %v1102 = vmax.f32 %v1038, 0.0
      %v1103 = vmax.f32 %v1039, 0.0
      %v1104 = vmax.f32 %v1040, 0.0
      %v1105 = vmax.f32 %v1041, 0.0
      %v1106 = vmax.f32 %v1042, 0.0
      %v1107 = vmax.f32 %v1043, 0.0
      %v1108 = vmax.f32 %v1044, 0.0
      %v1109 = vmax.f32 %v1045, 0.0
      %v1110 = vmax.f32 %v1046, 0.0
      %v1111 = vmax.f32 %v1047, 0.0
      %v1112 = vmax.f32 %v1048, 0.0
      %v1113 = vmax.f32 %v1049, 0.0
      %v1114 = vmax.f32 %v1050, 0.0
      %v1115 = vmax.f32 %v1051, 0.0
      %v1116 = vmax.f32 %v1052, 0.0
      %v1117 = vmax.f32 %v1053, 0.0
      %v1118 = vmax.f32 %v1054, 0.0
      %v1119 = vmax.f32 %v1055, 0.0
      %v1120 = vmax.f32 %v1056, 0.0
      %v1121 = vmax.f32 %v1057, 0.0
      %v1122 = vmax.f32 %v1058, 0.0
      %v1123 = vmax.f32 %v1059, 0.0
      %v1124 = vmax.f32 %v1060, 0.0
      %v1125 = vmax.f32 %v1061, 0.0
      %v1126 = vmax.f32 %v1062, 0.0
      %v1127 = vmax.f32 %v1063, 0.0
      %v1128 = vmax.f32 %v1064, 0.0
      %v1129 = vmax.f32 %v1065, 0.0
      %v1130 = vmax.f32 %v1066, 0.0
      %v1131 = vmax.f32 %v1067, 0.0
      %v1132 = vmax.f32 %v1068, 0.0
      %v1133 = vmax.f32 %v1069, 0.0
      %v1134 = vmax.f32 %v1070, 0.0
      %v1135 = vpack.c.bf16 %v1072, %v1071
      %v1136 = vpack.c.bf16 %v1074, %v1073
      %v1137 = vpack.c.bf16 %v1076, %v1075
      %v1138 = vpack.c.bf16 %v1078, %v1077
      %v1139 = vpack.c.bf16 %v1080, %v1079
      %v1140 = vpack.c.bf16 %v1082, %v1081
      %v1141 = vpack.c.bf16 %v1084, %v1083
      %v1142 = vpack.c.bf16 %v1086, %v1085
      %v1143 = vpack.c.bf16 %v1088, %v1087
      %v1144 = vpack.c.bf16 %v1090, %v1089
      %v1145 = vpack.c.bf16 %v1092, %v1091
      %v1146 = vpack.c.bf16 %v1094, %v1093
      %v1147 = vpack.c.bf16 %v1096, %v1095
      %v1148 = vpack.c.bf16 %v1098, %v1097
      %v1149 = vpack.c.bf16 %v1100, %v1099
      %v1150 = vpack.c.bf16 %v1102, %v1101
      %v1151 = vpack.c.bf16 %v1104, %v1103
      %v1152 = vpack.c.bf16 %v1106, %v1105
      %v1153 = vpack.c.bf16 %v1108, %v1107
      %v1154 = vpack.c.bf16 %v1110, %v1109
      %v1155 = vpack.c.bf16 %v1112, %v1111
      %v1156 = vpack.c.bf16 %v1114, %v1113
      %v1157 = vpack.c.bf16 %v1116, %v1115
      %v1158 = vpack.c.bf16 %v1118, %v1117
      %v1159 = vpack.c.bf16 %v1120, %v1119
      %v1160 = vpack.c.bf16 %v1122, %v1121
      %v1161 = vpack.c.bf16 %v1124, %v1123
      %v1162 = vpack.c.bf16 %v1126, %v1125
      %v1163 = vpack.c.bf16 %v1128, %v1127
      %v1164 = vpack.c.bf16 %v1130, %v1129
      %v1165 = vpack.c.bf16 %v1132, %v1131
      %v1166 = vpack.c.bf16 %v1134, %v1133
      %v1199 = vunpack.c.l.b16 %v1135
      %v1200 = vunpack.c.h.b16 %v1135
      %v1201 = vunpack.c.l.b16 %v1136
      %v1202 = vunpack.c.h.b16 %v1136
      %v1203 = vunpack.c.l.b16 %v1137
      %v1204 = vunpack.c.h.b16 %v1137
      %v1205 = vunpack.c.l.b16 %v1138
      %v1206 = vunpack.c.h.b16 %v1138
      %v1207 = vunpack.c.l.b16 %v1139
      %v1208 = vunpack.c.h.b16 %v1139
      %v1209 = vunpack.c.l.b16 %v1140
      %v1210 = vunpack.c.h.b16 %v1140
      %v1211 = vunpack.c.l.b16 %v1141
      %v1212 = vunpack.c.h.b16 %v1141
      %v1213 = vunpack.c.l.b16 %v1142
      %v1214 = vunpack.c.h.b16 %v1142
      %v1215 = vunpack.c.l.b16 %v1143
      %v1216 = vunpack.c.h.b16 %v1143
      %v1217 = vunpack.c.l.b16 %v1144
      %v1218 = vunpack.c.h.b16 %v1144
      %v1219 = vunpack.c.l.b16 %v1145
      %v1220 = vunpack.c.h.b16 %v1145
      %v1221 = vunpack.c.l.b16 %v1146
      %v1222 = vunpack.c.h.b16 %v1146
      %v1223 = vunpack.c.l.b16 %v1147
      %v1224 = vunpack.c.h.b16 %v1147
      %v1225 = vunpack.c.l.b16 %v1148
      %v1226 = vunpack.c.h.b16 %v1148
      %v1227 = vunpack.c.l.b16 %v1149
      %v1228 = vunpack.c.h.b16 %v1149
      %v1229 = vunpack.c.l.b16 %v1150
      %v1230 = vunpack.c.h.b16 %v1150
      %v1231 = vunpack.c.l.b16 %v1151
      %v1232 = vunpack.c.h.b16 %v1151
      %v1233 = vunpack.c.l.b16 %v1152
      %v1234 = vunpack.c.h.b16 %v1152
      %v1235 = vunpack.c.l.b16 %v1153
      %v1236 = vunpack.c.h.b16 %v1153
      %v1237 = vunpack.c.l.b16 %v1154
      %v1238 = vunpack.c.h.b16 %v1154
      %v1239 = vunpack.c.l.b16 %v1155
      %v1240 = vunpack.c.h.b16 %v1155
      %v1241 = vunpack.c.l.b16 %v1156
      %v1242 = vunpack.c.h.b16 %v1156
      %v1243 = vunpack.c.l.b16 %v1157
      %v1244 = vunpack.c.h.b16 %v1157
      %v1245 = vunpack.c.l.b16 %v1158
      %v1246 = vunpack.c.h.b16 %v1158
      %v1247 = vunpack.c.l.b16 %v1159
      %v1248 = vunpack.c.h.b16 %v1159
      %v1249 = vunpack.c.l.b16 %v1160
      %v1250 = vunpack.c.h.b16 %v1160
      %v1251 = vunpack.c.l.b16 %v1161
      %v1252 = vunpack.c.h.b16 %v1161
      %v1253 = vunpack.c.l.b16 %v1162
      %v1254 = vunpack.c.h.b16 %v1162
      %v1255 = vunpack.c.l.b16 %v1163
      %v1256 = vunpack.c.h.b16 %v1163
      %v1257 = vunpack.c.l.b16 %v1164
      %v1258 = vunpack.c.h.b16 %v1164
      %v1259 = vunpack.c.l.b16 %v1165
      %v1260 = vunpack.c.h.b16 %v1165
      %v1261 = vunpack.c.l.b16 %v1166
      %v1262 = vunpack.c.h.b16 %v1166
      %v1263 = vpack.c.b16 %v1199, %v1199
      %v1264 = vpack.c.b16 %v1200, %v1200
      %v1265 = vpack.c.b16 %v1201, %v1201
      %v1266 = vpack.c.b16 %v1202, %v1202
      %v1267 = vpack.c.b16 %v1203, %v1203
      %v1268 = vpack.c.b16 %v1204, %v1204
      %v1269 = vpack.c.b16 %v1205, %v1205
      %v1270 = vpack.c.b16 %v1206, %v1206
      %v1271 = vpack.c.b16 %v1207, %v1207
      %v1272 = vpack.c.b16 %v1208, %v1208
      %v1273 = vpack.c.b16 %v1209, %v1209
      %v1274 = vpack.c.b16 %v1210, %v1210
      %v1275 = vpack.c.b16 %v1211, %v1211
      %v1276 = vpack.c.b16 %v1212, %v1212
      %v1277 = vpack.c.b16 %v1213, %v1213
      %v1278 = vpack.c.b16 %v1214, %v1214
      %v1279 = vpack.c.b16 %v1215, %v1215
      %v1280 = vpack.c.b16 %v1216, %v1216
      %v1281 = vpack.c.b16 %v1217, %v1217
      %v1282 = vpack.c.b16 %v1218, %v1218
      %v1283 = vpack.c.b16 %v1219, %v1219
      %v1284 = vpack.c.b16 %v1220, %v1220
      %v1285 = vpack.c.b16 %v1221, %v1221
      %v1286 = vpack.c.b16 %v1222, %v1222
      %v1287 = vpack.c.b16 %v1223, %v1223
      %v1288 = vpack.c.b16 %v1224, %v1224
      %v1289 = vpack.c.b16 %v1225, %v1225
      %v1290 = vpack.c.b16 %v1226, %v1226
      %v1291 = vpack.c.b16 %v1227, %v1227
      %v1292 = vpack.c.b16 %v1228, %v1228
      %v1293 = vpack.c.b16 %v1229, %v1229
      %v1294 = vpack.c.b16 %v1230, %v1230
      %v1295 = vpack.c.b16 %v1231, %v1231
      %v1296 = vpack.c.b16 %v1232, %v1232
      %v1297 = vpack.c.b16 %v1233, %v1233
      %v1298 = vpack.c.b16 %v1234, %v1234
      %v1299 = vpack.c.b16 %v1235, %v1235
      %v1300 = vpack.c.b16 %v1236, %v1236
      %v1301 = vpack.c.b16 %v1237, %v1237
      %v1302 = vpack.c.b16 %v1238, %v1238
      %v1303 = vpack.c.b16 %v1239, %v1239
      %v1304 = vpack.c.b16 %v1240, %v1240
      %v1305 = vpack.c.b16 %v1241, %v1241
      %v1306 = vpack.c.b16 %v1242, %v1242
      %v1307 = vpack.c.b16 %v1243, %v1243
      %v1308 = vpack.c.b16 %v1244, %v1244
      %v1309 = vpack.c.b16 %v1245, %v1245
      %v1310 = vpack.c.b16 %v1246, %v1246
      %v1311 = vpack.c.b16 %v1247, %v1247
      %v1312 = vpack.c.b16 %v1248, %v1248
      %v1313 = vpack.c.b16 %v1249, %v1249
      %v1314 = vpack.c.b16 %v1250, %v1250
      %v1315 = vpack.c.b16 %v1251, %v1251
      %v1316 = vpack.c.b16 %v1252, %v1252
      %v1317 = vpack.c.b16 %v1253, %v1253
      %v1318 = vpack.c.b16 %v1254, %v1254
      %v1319 = vpack.c.b16 %v1255, %v1255
      %v1320 = vpack.c.b16 %v1256, %v1256
      %v1321 = vpack.c.b16 %v1257, %v1257
      %v1322 = vpack.c.b16 %v1258, %v1258
      %v1323 = vpack.c.b16 %v1259, %v1259
      %v1324 = vpack.c.b16 %v1260, %v1260
      %v1325 = vpack.c.b16 %v1261, %v1261
      %v1326 = vpack.c.b16 %v1262, %v1262
      %1391 = vst [vmem:[#allocation9] sm:$0xf] %v1263
      %1392 = vst [vmem:[#allocation9 + $0x4] sm:$0xf] %v1264
      %1393 = vst [vmem:[#allocation9 + $0x8] sm:$0xf] %v1265
      %1394 = vst [vmem:[#allocation9 + $0xc] sm:$0xf] %v1266
      %1395 = vst [vmem:[#allocation9 + $0x10] sm:$0xf] %v1267
      %1396 = vst [vmem:[#allocation9 + $0x14] sm:$0xf] %v1268
      %1397 = vst [vmem:[#allocation9 + $0x18] sm:$0xf] %v1269
      %1398 = vst [vmem:[#allocation9 + $0x1c] sm:$0xf] %v1270
      %1399 = vst [vmem:[#allocation9 + $0x20] sm:$0xf] %v1271
      %1400 = vst [vmem:[#allocation9 + $0x24] sm:$0xf] %v1272
      %1401 = vst [vmem:[#allocation9 + $0x28] sm:$0xf] %v1273
      %1402 = vst [vmem:[#allocation9 + $0x2c] sm:$0xf] %v1274
      %1403 = vst [vmem:[#allocation9 + $0x30] sm:$0xf] %v1275
      %1404 = vst [vmem:[#allocation9 + $0x34] sm:$0xf] %v1276
      %1405 = vst [vmem:[#allocation9 + $0x38] sm:$0xf] %v1277
      %1406 = vst [vmem:[#allocation9 + $0x3c] sm:$0xf] %v1278
      %1407 = vst [vmem:[#allocation9 + $0x40] sm:$0xf] %v1279
      %1408 = vst [vmem:[#allocation9 + $0x44] sm:$0xf] %v1280
      %1409 = vst [vmem:[#allocation9 + $0x48] sm:$0xf] %v1281
      %1410 = vst [vmem:[#allocation9 + $0x4c] sm:$0xf] %v1282
      %1411 = vst [vmem:[#allocation9 + $0x50] sm:$0xf] %v1283
      %1412 = vst [vmem:[#allocation9 + $0x54] sm:$0xf] %v1284
      %1413 = vst [vmem:[#allocation9 + $0x58] sm:$0xf] %v1285
      %1414 = vst [vmem:[#allocation9 + $0x5c] sm:$0xf] %v1286
      %1415 = vst [vmem:[#allocation9 + $0x60] sm:$0xf] %v1287
      %1416 = vst [vmem:[#allocation9 + $0x64] sm:$0xf] %v1288
      %1417 = vst [vmem:[#allocation9 + $0x68] sm:$0xf] %v1289
      %1418 = vst [vmem:[#allocation9 + $0x6c] sm:$0xf] %v1290
      %1419 = vst [vmem:[#allocation9 + $0x70] sm:$0xf] %v1291
      %1420 = vst [vmem:[#allocation9 + $0x74] sm:$0xf] %v1292
      %1421 = vst [vmem:[#allocation9 + $0x78] sm:$0xf] %v1293
      %1422 = vst [vmem:[#allocation9 + $0x7c] sm:$0xf] %v1294
      %1423 = vst [vmem:[#allocation9 + $0x80] sm:$0xf] %v1295
      %1424 = vst [vmem:[#allocation9 + $0x84] sm:$0xf] %v1296
      %1425 = vst [vmem:[#allocation9 + $0x88] sm:$0xf] %v1297
      %1426 = vst [vmem:[#allocation9 + $0x8c] sm:$0xf] %v1298
      %1427 = vst [vmem:[#allocation9 + $0x90] sm:$0xf] %v1299
      %1428 = vst [vmem:[#allocation9 + $0x94] sm:$0xf] %v1300
      %1429 = vst [vmem:[#allocation9 + $0x98] sm:$0xf] %v1301
      %1430 = vst [vmem:[#allocation9 + $0x9c] sm:$0xf] %v1302
      %1431 = vst [vmem:[#allocation9 + $0xa0] sm:$0xf] %v1303
      %1432 = vst [vmem:[#allocation9 + $0xa4] sm:$0xf] %v1304
      %1433 = vst [vmem:[#allocation9 + $0xa8] sm:$0xf] %v1305
      %1434 = vst [vmem:[#allocation9 + $0xac] sm:$0xf] %v1306
      %1435 = vst [vmem:[#allocation9 + $0xb0] sm:$0xf] %v1307
      %1436 = vst [vmem:[#allocation9 + $0xb4] sm:$0xf] %v1308
      %1437 = vst [vmem:[#allocation9 + $0xb8] sm:$0xf] %v1309
      %1438 = vst [vmem:[#allocation9 + $0xbc] sm:$0xf] %v1310
      %1439 = vst [vmem:[#allocation9 + $0xc0] sm:$0xf] %v1311
      %1440 = vst [vmem:[#allocation9 + $0xc4] sm:$0xf] %v1312
      %1441 = vst [vmem:[#allocation9 + $0xc8] sm:$0xf] %v1313
      %1442 = vst [vmem:[#allocation9 + $0xcc] sm:$0xf] %v1314
      %1443 = vst [vmem:[#allocation9 + $0xd0] sm:$0xf] %v1315
      %1444 = vst [vmem:[#allocation9 + $0xd4] sm:$0xf] %v1316
      %1445 = vst [vmem:[#allocation9 + $0xd8] sm:$0xf] %v1317
      %1446 = vst [vmem:[#allocation9 + $0xdc] sm:$0xf] %v1318
      %1447 = vst [vmem:[#allocation9 + $0xe0] sm:$0xf] %v1319
      %1448 = vst [vmem:[#allocation9 + $0xe4] sm:$0xf] %v1320
      %1449 = vst [vmem:[#allocation9 + $0xe8] sm:$0xf] %v1321
      %1450 = vst [vmem:[#allocation9 + $0xec] sm:$0xf] %v1322
      %1451 = vst [vmem:[#allocation9 + $0xf0] sm:$0xf] %v1323
      %1452 = vst [vmem:[#allocation9 + $0xf4] sm:$0xf] %v1324
      %1453 = vst [vmem:[#allocation9 + $0xf8] sm:$0xf] %v1325
      %1454 = vst [vmem:[#allocation9 + $0xfc] sm:$0xf] %v1326
    $region33: #{_lambda_.29} parent=1 // pred_fallthru
      _
    // Predicated region
    $region34: #{_lambda_.29} parent=1 // pred_check
      _
    $region35: #{_lambda_.29} parent=1 // pred_check_branch
      %1456 = sbr.rel (0) target = $region37
    $region36: #{_lambda_.29} parent=1 // pred_region
      %s1458 = ssub.s32 4096, 4096
      %1459 = vsyncadd [#allocation5], %s1458
      %s1460 = sshll.u32 [#allocation9], 4
      %s1461 = int_to_ptr.vmem [resolvable:$true] %s1460
      %1466 = dma.vmem_to_hbm [thread:$0]  %s1461, 4096, %s3, [#allocation5], 64, 64, 4
    $region37: #{_lambda_.29} parent=1 // pred_fallthru
      _
    // Predicated region
    $region38: #{_lambda_.29} parent=1 // pred_check
      _
    $region39: #{_lambda_.29} parent=1 // pred_check_branch
      %1468 = sbr.rel (0) target = $region41
    $region40: #{_lambda_.29} parent=1 // pred_region
      %1469 = dma.done [#allocation5], 4096
    $region41: #{_lambda_.29} parent=1 // pred_fallthru
      _
    %1470 = vsyncpa [#allocation4], 1
    %1471 = vsyncpa [#allocation7], 1
    %1472 = vsyncpa [#allocation5], 1

// kernel: _lambda_.30
$region0: #{_lambda_.30}
  #allocation0 [shape = 'u32[]', space=smem, size = 0x4, offset = 0x4, fixed_abs, tag = 'smem constant byte address 0x4 - core index']
  #allocation1 [shape = 'u32[144,128]{1,0:T(1,128)}', space=vmem, size = 0x12000, scoped, tag = 'internal scratch']
  #allocation2 [shape = 'f32[512,128]{1,0:T(8,128)}', space=vmem, size = 0x40000, scoped, tag = 'scratch operand']
  %s0 = inlined_call_operand.hbm [shape: bf16[2048,8], index: 0, kind: input, shape index: {}]
  %s1 = inlined_call_operand.hbm [shape: bf16[8,128], index: 1, kind: input, shape index: {}]
  %s2 = inlined_call_operand.hbm [shape: f32[1,128], index: 2, kind: input, shape index: {}]
  %s3 = inlined_call_operand.hbm [shape: bf16[2048,128], index: 3, kind: output, shape index: {}]
  %s4 = sld [smem:[#allocation0]]
  $region65: #{_lambda_.30} parent=0
    _
  %s6 = ssub.s32 1, %s4
  %s7 = scalar_select 0, %s6, %s4
  $region1: #{_lambda_.30} parent=0
    #allocation3 [shape = 'u8[262144]{0}', space=vmem, size = 0x40000, scoped, tag = 'input window, operand 0']
    #allocation4 [shape = 's32[2]{0}', space=sflag, size = 0x8, scoped, tag = 'scoped memory for _lambda_.30']
    #allocation5 [shape = 's32[2]{0}', space=sflag, size = 0x8, scoped, tag = 'scoped memory for _lambda_.30']
    #allocation6 [shape = 'u8[2048]{0}', space=vmem, size = 0x800, scoped, tag = 'input window, operand 1, single buffered']
    #allocation7 [shape = 's32[1]{0}', space=sflag, size = 0x4, scoped, tag = 'scoped memory for _lambda_.30']
    #allocation8 [shape = 'u8[512]{0}', space=vmem, size = 0x400, scoped, tag = 'input window, operand 2, single buffered']
    #allocation9 [shape = 'u8[262144]{0}', space=vmem, size = 0x40000, scoped, tag = 'output window, operand 0']
    %8 = vsyncpa [#allocation4], 0
    %s9 = scalar_lea.sflag [#allocation4], 1
    %10 = vsyncpa %s9, 0
    %11 = vsyncpa [#allocation7], 0
    %12 = vsyncpa [#allocation5], 0
    %s13 = scalar_lea.sflag [#allocation5], 1
    %14 = vsyncpa %s13, 0
    loop: start=0, step=1, limit=6
    $region2: #{_lambda_.30} parent=1 // loop_pre_header
      _
    $region3: #{_lambda_.30} parent=1 // loop_header
      %s16 = sphi 0, %s20
      %p17 = scmp.ge.s32.totalorder %s16, 6
      %s23 = sphi 0, %s42
      %s24 = sphi 0, %s38
      %s25 = sphi 0, %s34
      %s26 = sphi 0, %s23
      %s27 = sphi 0, %s24
      %s28 = sphi 0, %s25
      %s29 = sphi 0, %s26
      %s30 = sphi 0, %s27
      %s31 = sphi 0, %s28
      %s47 = sphi 0, %s49
      %s50 = sphi 0, %s47
      %s51 = sphi 0, %s50
      %s67 = sphi 0, %s51
      %s75 = sphi 0, %s77
      %s78 = sphi 0, %s75
      %s79 = sphi 0, %s78
      %s95 = sphi 0, %s79
      %s101 = sphi 0, %s103
      %s104 = sphi 0, %s101
      %s105 = sphi 0, %s104
      %s121 = sphi 0, %s105
      %s129 = sphi 0, %s131
      %s132 = sphi 0, %s129
      %s133 = sphi 0, %s132
      %s149 = sphi 0, %s133
    $region4: #{_lambda_.30} parent=1 // loop_header_branch
      %19 = sbr.rel (%p17) target = $region8
    $region5: #{_lambda_.30} parent=1 // loop_body
      %s21 = ssub.s32 %s16, 1
      %s22 = ssub.s32 %s16, 2
      %s32 = sadd.s32 1, %s25
      %p33 = scmp.ge.s32.totalorder %s32, 1
      %s34 = scalar_select %p33, 0, %s32
      %s35 = sadd.s32 1, %s24
      %s36 = scalar_select %p33, %s35, %s24
      %p37 = scmp.ge.s32.totalorder %s36, 1
      %s38 = scalar_select %p37, 0, %s36
      %s39 = sadd.s32 1, %s23
      %s40 = scalar_select %p37, %s39, %s23
      %p41 = scmp.ge.s32.totalorder %s40, 4
      %s42 = scalar_select %p41, 0, %s40
      %s43 = ssub.s32 %s23, %s42
      %s44 = ssub.s32 %s25, %s34
      %s45 = sor.u32 %s43, %s44
      %p46 = scmp.eq.s32.totalorder %s45, 0
      %s48 = sadd.s32 %s47, 1
      %s49 = scalar_select %p46, %s47, %s48
      %p52 = pneg %p46
      %p53 = scmp.eq.s32.totalorder %s16, 3
      %p54 = por %p52, %p53
      %p55 = scmp.ne.s32.totalorder %s47, %s50
      %p56 = scmp.eq.s32.totalorder %s16, 0
      %p57 = por %p55, %p56
      %p58 = scmp.ne.s32.totalorder %s47, %s50
      %p59 = scmp.eq.s32.totalorder %s21, 3
      %p60 = por %p58, %p59
      %p61 = scmp.ne.s32.totalorder %s50, %s51
      %p62 = scmp.eq.s32.totalorder %s21, 0
      %p63 = por %p61, %p62
      %p64 = scmp.ne.s32.totalorder %s50, %s51
      %p65 = scmp.eq.s32.totalorder %s22, 3
      %p66 = por %p64, %p65
      %p68 = scmp.ne.s32.totalorder %s51, %s67
      %p69 = scmp.eq.s32.totalorder %s22, 0
      %p70 = por %p68, %p69
      %s71 = ssub.s32 %s25, %s34
      %s72 = ssub.s32 %s24, %s38
      %s73 = sor.u32 %s71, %s72
      %p74 = scmp.eq.s32.totalorder %s73, 0
      %s76 = sadd.s32 %s75, 1
      %s77 = scalar_select %p74, %s75, %s76
      %p80 = pneg %p74
      %p81 = scmp.eq.s32.totalorder %s16, 3
      %p82 = por %p80, %p81
      %p83 = scmp.ne.s32.totalorder %s75, %s78
      %p84 = scmp.eq.s32.totalorder %s16, 0
      %p85 = por %p83, %p84
      %p86 = scmp.ne.s32.totalorder %s75, %s78
      %p87 = scmp.eq.s32.totalorder %s21, 3
      %p88 = por %p86, %p87
      %p89 = scmp.ne.s32.totalorder %s78, %s79
      %p90 = scmp.eq.s32.totalorder %s21, 0
      %p91 = por %p89, %p90
      %p92 = scmp.ne.s32.totalorder %s78, %s79
      %p93 = scmp.eq.s32.totalorder %s22, 3
      %p94 = por %p92, %p93
      %p96 = scmp.ne.s32.totalorder %s79, %s95
      %p97 = scmp.eq.s32.totalorder %s22, 0
      %p98 = por %p96, %p97
      %s99 = ssub.s32 %s24, %s38
      %p100 = scmp.eq.s32.totalorder %s99, 0
      %s102 = sadd.s32 %s101, 1
      %s103 = scalar_select %p100, %s101, %s102
      %p106 = pneg %p100
      %p107 = scmp.eq.s32.totalorder %s16, 3
      %p108 = por %p106, %p107
      %p109 = scmp.ne.s32.totalorder %s101, %s104
      %p110 = scmp.eq.s32.totalorder %s16, 0
      %p111 = por %p109, %p110
      %p112 = scmp.ne.s32.totalorder %s101, %s104
      %p113 = scmp.eq.s32.totalorder %s21, 3
      %p114 = por %p112, %p113
      %p115 = scmp.ne.s32.totalorder %s104, %s105
      %p116 = scmp.eq.s32.totalorder %s21, 0
      %p117 = por %p115, %p116
      %p118 = scmp.ne.s32.totalorder %s104, %s105
      %p119 = scmp.eq.s32.totalorder %s22, 3
      %p120 = por %p118, %p119
      %p122 = scmp.ne.s32.totalorder %s105, %s121
      %p123 = scmp.eq.s32.totalorder %s22, 0
      %p124 = por %p122, %p123
      %s125 = ssub.s32 %s23, %s42
      %s126 = ssub.s32 %s24, %s38
      %s127 = sor.u32 %s125, %s126
      %p128 = scmp.eq.s32.totalorder %s127, 0
      %s130 = sadd.s32 %s129, 1
      %s131 = scalar_select %p128, %s129, %s130
      %p134 = pneg %p128
      %p135 = scmp.eq.s32.totalorder %s16, 3
      %p136 = por %p134, %p135
      %p137 = scmp.ne.s32.totalorder %s129, %s132
      %p138 = scmp.eq.s32.totalorder %s16, 0
      %p139 = por %p137, %p138
      %p140 = scmp.ne.s32.totalorder %s129, %s132
      %p141 = scmp.eq.s32.totalorder %s21, 3
      %p142 = por %p140, %p141
      %p143 = scmp.ne.s32.totalorder %s132, %s133
      %p144 = scmp.eq.s32.totalorder %s21, 0
      %p145 = por %p143, %p144
      %p146 = scmp.ne.s32.totalorder %s132, %s133
      %p147 = scmp.eq.s32.totalorder %s22, 3
      %p148 = por %p146, %p147
      %p150 = scmp.ne.s32.totalorder %s133, %s149
      %p151 = scmp.eq.s32.totalorder %s22, 0
      %p152 = por %p150, %p151
      %p153 = scmp.le.s32.totalorder 1, %s16
      %p154 = scmp.lt.s32.totalorder %s16, 5
      %p155 = pnand %p153, %p154
      %p156 = pneg %p155
      // Predicated region
      $region9: #{_lambda_.30} parent=5 // pred_check
        _
      $region10: #{_lambda_.30} parent=5 // pred_check_branch
        %158 = sbr.rel (%p155) target = $region12
      $region11: #{_lambda_.30} parent=5 // pred_region
        %s159 = ssub.s32 %s16, 1
        // Predicated region
        $region13: #{_lambda_.30} parent=11 // pred_check
          %p160 = pneg %p91
        $region14: #{_lambda_.30} parent=11 // pred_check_branch
          %162 = sbr.rel (%p160) target = $region16
        $region15: #{_lambda_.30} parent=11 // pred_region
          %s164 = ssub.s32 64, 64
          %165 = vsyncadd [#allocation7], %s164
          %s166 = sadd.s32 %s27, %s28
          %s167 = smul.addr %s166, 64
          %s168 = scalar_lea.hbm %s1, %s167
          %s170 = sshll.u32 [#allocation6], 4
          %s171 = int_to_ptr.vmem [resolvable:$true] %s170
          %173 = dma.hbm_to_vmem [thread:$0]  %s168, 64, %s171, [#allocation7]
        $region16: #{_lambda_.30} parent=11 // pred_fallthru
          _
        // Predicated region
        $region17: #{_lambda_.30} parent=11 // pred_check
          %p174 = pneg %p117
        $region18: #{_lambda_.30} parent=11 // pred_check_branch
          %176 = sbr.rel (%p174) target = $region20
        $region19: #{_lambda_.30} parent=11 // pred_region
          %s178 = ssub.s32 16, 16
          %179 = vsyncadd [#allocation7], %s178
          %s180 = smul.addr %s27, 16
          %s181 = scalar_lea.hbm %s2, %s180
          %s183 = sshll.u32 [#allocation8], 4
          %s184 = int_to_ptr.vmem [resolvable:$true] %s183
          %186 = dma.hbm_to_vmem [thread:$0]  %s181, 16, %s184, [#allocation7]
        $region20: #{_lambda_.30} parent=11 // pred_fallthru
          _
      $region12: #{_lambda_.30} parent=5 // pred_fallthru
        _
      %p187 = scmp.lt.s32.totalorder %s16, 4
      // Predicated region
      $region21: #{_lambda_.30} parent=5 // pred_check
        %p188 = pneg %p187
      $region22: #{_lambda_.30} parent=5 // pred_check_branch
        %190 = sbr.rel (%p188) target = $region24
      $region23: #{_lambda_.30} parent=5 // pred_region
        // Predicated region
        $region25: #{_lambda_.30} parent=23 // pred_check
          %p191 = pneg %p57
        $region26: #{_lambda_.30} parent=23 // pred_check_branch
          %193 = sbr.rel (%p191) target = $region28
        $region27: #{_lambda_.30} parent=23 // pred_region
          %s194 = sand.u32 %s47, 1
          %s195 = scalar_lea.sflag [#allocation4], %s194
          %s196 = sand.u32 %s47, 1
          %s197 = smul.addr %s196, 256
          %s198 = scalar_lea.vmem [#allocation3], %s197
          %s199 = smul.u32 64, %s23
          %s201 = ssub.s32 4096, 4096
          %202 = vsyncadd %s195, %s201
          %s203 = sadd.s32 %s25, %s199
          %s204 = smul.addr %s203, 64
          %s205 = scalar_lea.hbm %s0, %s204
          %s206 = sshll.u32 %s198, 4
          %s207 = int_to_ptr.vmem [resolvable:$true] %s206
          %212 = dma.hbm_to_vmem [thread:$0]  %s205, 4096, %s207, %s195, 64, 64, 4
        $region28: #{_lambda_.30} parent=23 // pred_fallthru
          _
      $region24: #{_lambda_.30} parent=5 // pred_fallthru
        _
      %p213 = scmp.le.s32.totalorder 1, %s16
      %p214 = scmp.lt.s32.totalorder %s16, 5
      %p215 = pnand %p213, %p214
      %p216 = pneg %p215
      // Predicated region
      $region29: #{_lambda_.30} parent=5 // pred_check
        _
      $region30: #{_lambda_.30} parent=5 // pred_check_branch
        %218 = sbr.rel (%p215) target = $region32
      $region31: #{_lambda_.30} parent=5 // pred_region
        %s219 = ssub.s32 %s16, 1
        %s220 = sand.u32 %s50, 1
        %s221 = scalar_lea.sflag [#allocation4], %s220
        %s222 = sand.u32 %s50, 1
        %s223 = smul.addr %s222, 256
        %s224 = scalar_lea.vmem [#allocation3], %s223
        // Predicated region
        $region33: #{_lambda_.30} parent=31 // pred_check
          %p225 = pneg %p63
        $region34: #{_lambda_.30} parent=31 // pred_check_branch
          %227 = sbr.rel (%p225) target = $region36
        $region35: #{_lambda_.30} parent=31 // pred_region
          %228 = dma.done %s221, 4096
        $region36: #{_lambda_.30} parent=31 // pred_fallthru
          _
        // Predicated region
        $region37: #{_lambda_.30} parent=31 // pred_check
          %p229 = pneg %p91
        $region38: #{_lambda_.30} parent=31 // pred_check_branch
          %231 = sbr.rel (%p229) target = $region40
        $region39: #{_lambda_.30} parent=31 // pred_region
          %232 = dma.done [#allocation7], 64
        $region40: #{_lambda_.30} parent=31 // pred_fallthru
          _
        // Predicated region
        $region41: #{_lambda_.30} parent=31 // pred_check
          %p233 = pneg %p117
        $region42: #{_lambda_.30} parent=31 // pred_check_branch
          %235 = sbr.rel (%p233) target = $region44
        $region43: #{_lambda_.30} parent=31 // pred_region
          %236 = dma.done [#allocation7], 16
        $region44: #{_lambda_.30} parent=31 // pred_fallthru
          _
        %s237 = sand.u32 %s50, 1
        %s238 = scalar_lea.sflag [#allocation4], %s237
        %s239 = sand.u32 %s50, 1
        %s240 = smul.addr %s239, 256
        %s241 = scalar_lea.vmem [#allocation3], %s240
        %p242 = pneg %p63
        %p243 = pneg %p60
        %p244 = pneg %p91
        %p245 = pneg %p88
        %p246 = pneg %p117
        %p247 = pneg %p114
        %p248 = pneg %p145
        %p249 = pneg %p142
        %s250 = sand.u32 %s132, 1
        %s251 = scalar_lea.sflag [#allocation5], %s250
        %s252 = sand.u32 %s132, 1
        %s253 = smul.addr %s252, 256
        %s254 = scalar_lea.vmem [#allocation9], %s253
        %s255 = smul.u32 64, %s26
        %s256 = smul.u32 64, %s26
        %p258 = scmp.eq.s32.totalorder %s28, 0
        // Predicated region
        $region45: #{_lambda_.30} parent=31 // pred_check
          %p259 = pneg %p258
        $region46: #{_lambda_.30} parent=31 // pred_check_branch
          %261 = sbr.rel (%p259) target = $region48
        $region47: #{_lambda_.30} parent=31 // pred_region
          %262 = vst [vmem:[#allocation2] sm:$0xff] 0.0
          %263 = vst [vmem:[#allocation2 + $0x8] sm:$0xff] 0.0
          %264 = vst [vmem:[#allocation2 + $0x10] sm:$0xff] 0.0
          %265 = vst [vmem:[#allocation2 + $0x18] sm:$0xff] 0.0
          %266 = vst [vmem:[#allocation2 + $0x20] sm:$0xff] 0.0
          %267 = vst [vmem:[#allocation2 + $0x28] sm:$0xff] 0.0
          %268 = vst [vmem:[#allocation2 + $0x30] sm:$0xff] 0.0
          %269 = vst [vmem:[#allocation2 + $0x38] sm:$0xff] 0.0
          %270 = vst [vmem:[#allocation2 + $0x40] sm:$0xff] 0.0
          %271 = vst [vmem:[#allocation2 + $0x48] sm:$0xff] 0.0
          %272 = vst [vmem:[#allocation2 + $0x50] sm:$0xff] 0.0
          %273 = vst [vmem:[#allocation2 + $0x58] sm:$0xff] 0.0
          %274 = vst [vmem:[#allocation2 + $0x60] sm:$0xff] 0.0
          %275 = vst [vmem:[#allocation2 + $0x68] sm:$0xff] 0.0
          %276 = vst [vmem:[#allocation2 + $0x70] sm:$0xff] 0.0
          %277 = vst [vmem:[#allocation2 + $0x78] sm:$0xff] 0.0
          %278 = vst [vmem:[#allocation2 + $0x80] sm:$0xff] 0.0
          %279 = vst [vmem:[#allocation2 + $0x88] sm:$0xff] 0.0
          %280 = vst [vmem:[#allocation2 + $0x90] sm:$0xff] 0.0
          %281 = vst [vmem:[#allocation2 + $0x98] sm:$0xff] 0.0
          %282 = vst [vmem:[#allocation2 + $0xa0] sm:$0xff] 0.0
          %283 = vst [vmem:[#allocation2 + $0xa8] sm:$0xff] 0.0
          %284 = vst [vmem:[#allocation2 + $0xb0] sm:$0xff] 0.0
          %285 = vst [vmem:[#allocation2 + $0xb8] sm:$0xff] 0.0
          %286 = vst [vmem:[#allocation2 + $0xc0] sm:$0xff] 0.0
          %287 = vst [vmem:[#allocation2 + $0xc8] sm:$0xff] 0.0
          %288 = vst [vmem:[#allocation2 + $0xd0] sm:$0xff] 0.0
          %289 = vst [vmem:[#allocation2 + $0xd8] sm:$0xff] 0.0
          %290 = vst [vmem:[#allocation2 + $0xe0] sm:$0xff] 0.0
          %291 = vst [vmem:[#allocation2 + $0xe8] sm:$0xff] 0.0
          %292 = vst [vmem:[#allocation2 + $0xf0] sm:$0xff] 0.0
          %293 = vst [vmem:[#allocation2 + $0xf8] sm:$0xff] 0.0
          %294 = vst [vmem:[#allocation2 + $0x100] sm:$0xff] 0.0
          %295 = vst [vmem:[#allocation2 + $0x108] sm:$0xff] 0.0
          %296 = vst [vmem:[#allocation2 + $0x110] sm:$0xff] 0.0
          %297 = vst [vmem:[#allocation2 + $0x118] sm:$0xff] 0.0
          %298 = vst [vmem:[#allocation2 + $0x120] sm:$0xff] 0.0
          %299 = vst [vmem:[#allocation2 + $0x128] sm:$0xff] 0.0
          %300 = vst [vmem:[#allocation2 + $0x130] sm:$0xff] 0.0
          %301 = vst [vmem:[#allocation2 + $0x138] sm:$0xff] 0.0
          %302 = vst [vmem:[#allocation2 + $0x140] sm:$0xff] 0.0
          %303 = vst [vmem:[#allocation2 + $0x148] sm:$0xff] 0.0
          %304 = vst [vmem:[#allocation2 + $0x150] sm:$0xff] 0.0
          %305 = vst [vmem:[#allocation2 + $0x158] sm:$0xff] 0.0
          %306 = vst [vmem:[#allocation2 + $0x160] sm:$0xff] 0.0
          %307 = vst [vmem:[#allocation2 + $0x168] sm:$0xff] 0.0
          %308 = vst [vmem:[#allocation2 + $0x170] sm:$0xff] 0.0
          %309 = vst [vmem:[#allocation2 + $0x178] sm:$0xff] 0.0
          %310 = vst [vmem:[#allocation2 + $0x180] sm:$0xff] 0.0
          %311 = vst [vmem:[#allocation2 + $0x188] sm:$0xff] 0.0
          %312 = vst [vmem:[#allocation2 + $0x190] sm:$0xff] 0.0
          %313 = vst [vmem:[#allocation2 + $0x198] sm:$0xff] 0.0
          %314 = vst [vmem:[#allocation2 + $0x1a0] sm:$0xff] 0.0
          %315 = vst [vmem:[#allocation2 + $0x1a8] sm:$0xff] 0.0
          %316 = vst [vmem:[#allocation2 + $0x1b0] sm:$0xff] 0.0
          %317 = vst [vmem:[#allocation2 + $0x1b8] sm:$0xff] 0.0
          %318 = vst [vmem:[#allocation2 + $0x1c0] sm:$0xff] 0.0
          %319 = vst [vmem:[#allocation2 + $0x1c8] sm:$0xff] 0.0
          %320 = vst [vmem:[#allocation2 + $0x1d0] sm:$0xff] 0.0
          %321 = vst [vmem:[#allocation2 + $0x1d8] sm:$0xff] 0.0
          %322 = vst [vmem:[#allocation2 + $0x1e0] sm:$0xff] 0.0
          %323 = vst [vmem:[#allocation2 + $0x1e8] sm:$0xff] 0.0
          %324 = vst [vmem:[#allocation2 + $0x1f0] sm:$0xff] 0.0
          %325 = vst [vmem:[#allocation2 + $0x1f8] sm:$0xff] 0.0
        $region48: #{_lambda_.30} parent=31 // pred_fallthru
          _
        %v326 = vld [vmem:[%s224] sm:$0xf]
        %v327 = vld [vmem:[%s224 + $0x4] sm:$0xf]
        %v328 = vld [vmem:[%s224 + $0x8] sm:$0xf]
        %v329 = vld [vmem:[%s224 + $0xc] sm:$0xf]
        %v330 = vld [vmem:[%s224 + $0x10] sm:$0xf]
        %v331 = vld [vmem:[%s224 + $0x14] sm:$0xf]
        %v332 = vld [vmem:[%s224 + $0x18] sm:$0xf]
        %v333 = vld [vmem:[%s224 + $0x1c] sm:$0xf]
        %v334 = vld [vmem:[%s224 + $0x20] sm:$0xf]
        %v335 = vld [vmem:[%s224 + $0x24] sm:$0xf]
        %v336 = vld [vmem:[%s224 + $0x28] sm:$0xf]
        %v337 = vld [vmem:[%s224 + $0x2c] sm:$0xf]
        %v338 = vld [vmem:[%s224 + $0x30] sm:$0xf]
        %v339 = vld [vmem:[%s224 + $0x34] sm:$0xf]
        %v340 = vld [vmem:[%s224 + $0x38] sm:$0xf]
        %v341 = vld [vmem:[%s224 + $0x3c] sm:$0xf]
        %v342 = vld [vmem:[%s224 + $0x40] sm:$0xf]
        %v343 = vld [vmem:[%s224 + $0x44] sm:$0xf]
        %v344 = vld [vmem:[%s224 + $0x48] sm:$0xf]
        %v345 = vld [vmem:[%s224 + $0x4c] sm:$0xf]
        %v346 = vld [vmem:[%s224 + $0x50] sm:$0xf]
        %v347 = vld [vmem:[%s224 + $0x54] sm:$0xf]
        %v348 = vld [vmem:[%s224 + $0x58] sm:$0xf]
        %v349 = vld [vmem:[%s224 + $0x5c] sm:$0xf]
        %v350 = vld [vmem:[%s224 + $0x60] sm:$0xf]
        %v351 = vld [vmem:[%s224 + $0x64] sm:$0xf]
        %v352 = vld [vmem:[%s224 + $0x68] sm:$0xf]
        %v353 = vld [vmem:[%s224 + $0x6c] sm:$0xf]
        %v354 = vld [vmem:[%s224 + $0x70] sm:$0xf]
        %v355 = vld [vmem:[%s224 + $0x74] sm:$0xf]
        %v356 = vld [vmem:[%s224 + $0x78] sm:$0xf]
        %v357 = vld [vmem:[%s224 + $0x7c] sm:$0xf]
        %v358 = vld [vmem:[%s224 + $0x80] sm:$0xf]
        %v359 = vld [vmem:[%s224 + $0x84] sm:$0xf]
        %v360 = vld [vmem:[%s224 + $0x88] sm:$0xf]
        %v361 = vld [vmem:[%s224 + $0x8c] sm:$0xf]
        %v362 = vld [vmem:[%s224 + $0x90] sm:$0xf]
        %v363 = vld [vmem:[%s224 + $0x94] sm:$0xf]
        %v364 = vld [vmem:[%s224 + $0x98] sm:$0xf]
        %v365 = vld [vmem:[%s224 + $0x9c] sm:$0xf]
        %v366 = vld [vmem:[%s224 + $0xa0] sm:$0xf]
        %v367 = vld [vmem:[%s224 + $0xa4] sm:$0xf]
        %v368 = vld [vmem:[%s224 + $0xa8] sm:$0xf]
        %v369 = vld [vmem:[%s224 + $0xac] sm:$0xf]
        %v370 = vld [vmem:[%s224 + $0xb0] sm:$0xf]
        %v371 = vld [vmem:[%s224 + $0xb4] sm:$0xf]
        %v372 = vld [vmem:[%s224 + $0xb8] sm:$0xf]
        %v373 = vld [vmem:[%s224 + $0xbc] sm:$0xf]
        %v374 = vld [vmem:[%s224 + $0xc0] sm:$0xf]
        %v375 = vld [vmem:[%s224 + $0xc4] sm:$0xf]
        %v376 = vld [vmem:[%s224 + $0xc8] sm:$0xf]
        %v377 = vld [vmem:[%s224 + $0xcc] sm:$0xf]
        %v378 = vld [vmem:[%s224 + $0xd0] sm:$0xf]
        %v379 = vld [vmem:[%s224 + $0xd4] sm:$0xf]
        %v380 = vld [vmem:[%s224 + $0xd8] sm:$0xf]
        %v381 = vld [vmem:[%s224 + $0xdc] sm:$0xf]
        %v382 = vld [vmem:[%s224 + $0xe0] sm:$0xf]
        %v383 = vld [vmem:[%s224 + $0xe4] sm:$0xf]
        %v384 = vld [vmem:[%s224 + $0xe8] sm:$0xf]
        %v385 = vld [vmem:[%s224 + $0xec] sm:$0xf]
        %v386 = vld [vmem:[%s224 + $0xf0] sm:$0xf]
        %v387 = vld [vmem:[%s224 + $0xf4] sm:$0xf]
        %v388 = vld [vmem:[%s224 + $0xf8] sm:$0xf]
        %v389 = vld [vmem:[%s224 + $0xfc] sm:$0xf]
        %v390 = vld [vmem:[#allocation2] sm:$0xff]
        %v391 = vld [vmem:[#allocation2 + $0x8] sm:$0xff]
        %v392 = vld [vmem:[#allocation2 + $0x10] sm:$0xff]
        %v393 = vld [vmem:[#allocation2 + $0x18] sm:$0xff]
        %v394 = vld [vmem:[#allocation2 + $0x20] sm:$0xff]
        %v395 = vld [vmem:[#allocation2 + $0x28] sm:$0xff]
        %v396 = vld [vmem:[#allocation2 + $0x30] sm:$0xff]
        %v397 = vld [vmem:[#allocation2 + $0x38] sm:$0xff]
        %v398 = vld [vmem:[#allocation2 + $0x40] sm:$0xff]
        %v399 = vld [vmem:[#allocation2 + $0x48] sm:$0xff]
        %v400 = vld [vmem:[#allocation2 + $0x50] sm:$0xff]
        %v401 = vld [vmem:[#allocation2 + $0x58] sm:$0xff]
        %v402 = vld [vmem:[#allocation2 + $0x60] sm:$0xff]
        %v403 = vld [vmem:[#allocation2 + $0x68] sm:$0xff]
        %v404 = vld [vmem:[#allocation2 + $0x70] sm:$0xff]
        %v405 = vld [vmem:[#allocation2 + $0x78] sm:$0xff]
        %v406 = vld [vmem:[#allocation2 + $0x80] sm:$0xff]
        %v407 = vld [vmem:[#allocation2 + $0x88] sm:$0xff]
        %v408 = vld [vmem:[#allocation2 + $0x90] sm:$0xff]
        %v409 = vld [vmem:[#allocation2 + $0x98] sm:$0xff]
        %v410 = vld [vmem:[#allocation2 + $0xa0] sm:$0xff]
        %v411 = vld [vmem:[#allocation2 + $0xa8] sm:$0xff]
        %v412 = vld [vmem:[#allocation2 + $0xb0] sm:$0xff]
        %v413 = vld [vmem:[#allocation2 + $0xb8] sm:$0xff]
        %v414 = vld [vmem:[#allocation2 + $0xc0] sm:$0xff]
        %v415 = vld [vmem:[#allocation2 + $0xc8] sm:$0xff]
        %v416 = vld [vmem:[#allocation2 + $0xd0] sm:$0xff]
        %v417 = vld [vmem:[#allocation2 + $0xd8] sm:$0xff]
        %v418 = vld [vmem:[#allocation2 + $0xe0] sm:$0xff]
        %v419 = vld [vmem:[#allocation2 + $0xe8] sm:$0xff]
        %v420 = vld [vmem:[#allocation2 + $0xf0] sm:$0xff]
        %v421 = vld [vmem:[#allocation2 + $0xf8] sm:$0xff]
        %v422 = vld [vmem:[#allocation2 + $0x100] sm:$0xff]
        %v423 = vld [vmem:[#allocation2 + $0x108] sm:$0xff]
        %v424 = vld [vmem:[#allocation2 + $0x110] sm:$0xff]
        %v425 = vld [vmem:[#allocation2 + $0x118] sm:$0xff]
        %v426 = vld [vmem:[#allocation2 + $0x120] sm:$0xff]
        %v427 = vld [vmem:[#allocation2 + $0x128] sm:$0xff]
        %v428 = vld [vmem:[#allocation2 + $0x130] sm:$0xff]
        %v429 = vld [vmem:[#allocation2 + $0x138] sm:$0xff]
        %v430 = vld [vmem:[#allocation2 + $0x140] sm:$0xff]
        %v431 = vld [vmem:[#allocation2 + $0x148] sm:$0xff]
        %v432 = vld [vmem:[#allocation2 + $0x150] sm:$0xff]
        %v433 = vld [vmem:[#allocation2 + $0x158] sm:$0xff]
        %v434 = vld [vmem:[#allocation2 + $0x160] sm:$0xff]
        %v435 = vld [vmem:[#allocation2 + $0x168] sm:$0xff]
        %v436 = vld [vmem:[#allocation2 + $0x170] sm:$0xff]
        %v437 = vld [vmem:[#allocation2 + $0x178] sm:$0xff]
        %v438 = vld [vmem:[#allocation2 + $0x180] sm:$0xff]
        %v439 = vld [vmem:[#allocation2 + $0x188] sm:$0xff]
        %v440 = vld [vmem:[#allocation2 + $0x190] sm:$0xff]
        %v441 = vld [vmem:[#allocation2 + $0x198] sm:$0xff]
        %v442 = vld [vmem:[#allocation2 + $0x1a0] sm:$0xff]
        %v443 = vld [vmem:[#allocation2 + $0x1a8] sm:$0xff]
        %v444 = vld [vmem:[#allocation2 + $0x1b0] sm:$0xff]
        %v445 = vld [vmem:[#allocation2 + $0x1b8] sm:$0xff]
        %v446 = vld [vmem:[#allocation2 + $0x1c0] sm:$0xff]
        %v447 = vld [vmem:[#allocation2 + $0x1c8] sm:$0xff]
        %v448 = vld [vmem:[#allocation2 + $0x1d0] sm:$0xff]
        %v449 = vld [vmem:[#allocation2 + $0x1d8] sm:$0xff]
        %v450 = vld [vmem:[#allocation2 + $0x1e0] sm:$0xff]
        %v451 = vld [vmem:[#allocation2 + $0x1e8] sm:$0xff]
        %v452 = vld [vmem:[#allocation2 + $0x1f0] sm:$0xff]
        %v453 = vld [vmem:[#allocation2 + $0x1f8] sm:$0xff]
        %v454 = vld [vmem:[#allocation6] sm:$0xf]
        %v519 = vunpack.c.l.b16 %v326
        %v520 = vunpack.c.l.b16 %v327
        %v521 = vunpack.c.l.b16 %v328
        %v522 = vunpack.c.l.b16 %v329
        %v523 = vunpack.c.l.b16 %v330
        %v524 = vunpack.c.l.b16 %v331
        %v525 = vunpack.c.l.b16 %v332
        %v526 = vunpack.c.l.b16 %v333
        %v527 = vunpack.c.l.b16 %v334
        %v528 = vunpack.c.l.b16 %v335
        %v529 = vunpack.c.l.b16 %v336
        %v530 = vunpack.c.l.b16 %v337
        %v531 = vunpack.c.l.b16 %v338
        %v532 = vunpack.c.l.b16 %v339
        %v533 = vunpack.c.l.b16 %v340
        %v534 = vunpack.c.l.b16 %v341
        %v535 = vunpack.c.l.b16 %v342
        %v536 = vunpack.c.l.b16 %v343
        %v537 = vunpack.c.l.b16 %v344
        %v538 = vunpack.c.l.b16 %v345
        %v539 = vunpack.c.l.b16 %v346
        %v540 = vunpack.c.l.b16 %v347
        %v541 = vunpack.c.l.b16 %v348
        %v542 = vunpack.c.l.b16 %v349
        %v543 = vunpack.c.l.b16 %v350
        %v544 = vunpack.c.l.b16 %v351
        %v545 = vunpack.c.l.b16 %v352
        %v546 = vunpack.c.l.b16 %v353
        %v547 = vunpack.c.l.b16 %v354
        %v548 = vunpack.c.l.b16 %v355
        %v549 = vunpack.c.l.b16 %v356
        %v550 = vunpack.c.l.b16 %v357
        %v551 = vunpack.c.l.b16 %v358
        %v552 = vunpack.c.l.b16 %v359
        %v553 = vunpack.c.l.b16 %v360
        %v554 = vunpack.c.l.b16 %v361
        %v555 = vunpack.c.l.b16 %v362
        %v556 = vunpack.c.l.b16 %v363
        %v557 = vunpack.c.l.b16 %v364
        %v558 = vunpack.c.l.b16 %v365
        %v559 = vunpack.c.l.b16 %v366
        %v560 = vunpack.c.l.b16 %v367
        %v561 = vunpack.c.l.b16 %v368
        %v562 = vunpack.c.l.b16 %v369
        %v563 = vunpack.c.l.b16 %v370
        %v564 = vunpack.c.l.b16 %v371
        %v565 = vunpack.c.l.b16 %v372
        %v566 = vunpack.c.l.b16 %v373
        %v567 = vunpack.c.l.b16 %v374
        %v568 = vunpack.c.l.b16 %v375
        %v569 = vunpack.c.l.b16 %v376
        %v570 = vunpack.c.l.b16 %v377
        %v571 = vunpack.c.l.b16 %v378
        %v572 = vunpack.c.l.b16 %v379
        %v573 = vunpack.c.l.b16 %v380
        %v574 = vunpack.c.l.b16 %v381
        %v575 = vunpack.c.l.b16 %v382
        %v576 = vunpack.c.l.b16 %v383
        %v577 = vunpack.c.l.b16 %v384
        %v578 = vunpack.c.l.b16 %v385
        %v579 = vunpack.c.l.b16 %v386
        %v580 = vunpack.c.l.b16 %v387
        %v581 = vunpack.c.l.b16 %v388
        %v582 = vunpack.c.l.b16 %v389
        %v583 = vpack.c.b16 %v520, %v519
        %v584 = vpack.c.b16 %v522, %v521
        %v585 = vpack.c.b16 %v524, %v523
        %v586 = vpack.c.b16 %v526, %v525
        %v587 = vpack.c.b16 %v528, %v527
        %v588 = vpack.c.b16 %v530, %v529
        %v589 = vpack.c.b16 %v532, %v531
        %v590 = vpack.c.b16 %v534, %v533
        %v591 = vpack.c.b16 %v536, %v535
        %v592 = vpack.c.b16 %v538, %v537
        %v593 = vpack.c.b16 %v540, %v539
        %v594 = vpack.c.b16 %v542, %v541
        %v595 = vpack.c.b16 %v544, %v543
        %v596 = vpack.c.b16 %v546, %v545
        %v597 = vpack.c.b16 %v548, %v547
        %v598 = vpack.c.b16 %v550, %v549
        %v599 = vpack.c.b16 %v552, %v551
        %v600 = vpack.c.b16 %v554, %v553
        %v601 = vpack.c.b16 %v556, %v555
        %v602 = vpack.c.b16 %v558, %v557
        %v603 = vpack.c.b16 %v560, %v559
        %v604 = vpack.c.b16 %v562, %v561
        %v605 = vpack.c.b16 %v564, %v563
        %v606 = vpack.c.b16 %v566, %v565
        %v607 = vpack.c.b16 %v568, %v567
        %v608 = vpack.c.b16 %v570, %v569
        %v609 = vpack.c.b16 %v572, %v571
        %v610 = vpack.c.b16 %v574, %v573
        %v611 = vpack.c.b16 %v576, %v575
        %v612 = vpack.c.b16 %v578, %v577
        %v613 = vpack.c.b16 %v580, %v579
        %v614 = vpack.c.b16 %v582, %v581
        %vm615 = vcmask 64512
        %v617 = vsel %vm615, %v583, 0
        %v620 = vsel %vm615, %v584, 0
        %v623 = vsel %vm615, %v585, 0
        %v626 = vsel %vm615, %v586, 0
        %v629 = vsel %vm615, %v587, 0
        %v632 = vsel %vm615, %v588, 0
        %v635 = vsel %vm615, %v589, 0
        %v638 = vsel %vm615, %v590, 0
        %v641 = vsel %vm615, %v591, 0
        %v644 = vsel %vm615, %v592, 0
        %v647 = vsel %vm615, %v593, 0
        %v650 = vsel %vm615, %v594, 0
        %v653 = vsel %vm615, %v595, 0
        %v656 = vsel %vm615, %v596, 0
        %v659 = vsel %vm615, %v597, 0
        %v662 = vsel %vm615, %v598, 0
        %v665 = vsel %vm615, %v599, 0
        %v668 = vsel %vm615, %v600, 0
        %v671 = vsel %vm615, %v601, 0
        %v674 = vsel %vm615, %v602, 0
        %v677 = vsel %vm615, %v603, 0
        %v680 = vsel %vm615, %v604, 0
        %v683 = vsel %vm615, %v605, 0
        %v686 = vsel %vm615, %v606, 0
        %v689 = vsel %vm615, %v607, 0
        %v692 = vsel %vm615, %v608, 0
        %v695 = vsel %vm615, %v609, 0
        %v698 = vsel %vm615, %v610, 0
        %v701 = vsel %vm615, %v611, 0
        %v704 = vsel %vm615, %v612, 0
        %v707 = vsel %vm615, %v613, 0
        %v710 = vsel %vm615, %v614, 0
        %vm712 = vcmask 1043456
        %v714 = vsel %vm712, %v454, 0
        %716 = vmatprep.subr.bf16.mxu0 0
        %717 = vmatpush1.bf16.msra.mxu0 %v714
        %718 = vmatprep.subr.bf16.mxu0 0
        %719 = vmatpush1.bf16.msra.mxu0 0
        %720 = vmatprep.subr.bf16.mxu0 0
        %721 = vmatpush1.bf16.msra.mxu0 0
        %722 = vmatprep.subr.bf16.mxu0 0
        %723 = vmatpush1.bf16.msra.mxu0 0
        %724 = vmatprep.subr.bf16.mxu0 0
        %725 = vmatpush1.bf16.msra.mxu0 0
        %726 = vmatprep.subr.bf16.mxu0 0
        %727 = vmatpush1.bf16.msra.mxu0 0
        %728 = vmatprep.subr.bf16.mxu0 0
        %729 = vmatpush1.bf16.msra.mxu0 0
        %730 = vmatprep.subr.bf16.mxu0 0
        %731 = vmatpush1.bf16.msra.mxu0 0
        %732 = vmatprep.subr.bf16.mxu0 0
        %733 = vmatpush1.bf16.msra.mxu0 0
        %734 = vmatprep.subr.bf16.mxu0 0
        %735 = vmatpush1.bf16.msra.mxu0 0
        %736 = vmatprep.subr.bf16.mxu0 0
        %737 = vmatpush1.bf16.msra.mxu0 0
        %738 = vmatprep.subr.bf16.mxu0 0
        %739 = vmatpush1.bf16.msra.mxu0 0
        %740 = vmatprep.subr.bf16.mxu0 0
        %741 = vmatpush1.bf16.msra.mxu0 0
        %742 = vmatprep.subr.bf16.mxu0 0
        %743 = vmatpush1.bf16.msra.mxu0 0
        %744 = vmatprep.subr.bf16.mxu0 0
        %745 = vmatpush1.bf16.msra.mxu0 0
        %746 = vmatprep.subr.bf16.mxu0 0
        %747 = vmatpush1.bf16.msra.mxu0 0
        %748 = vmatprep.mubr.bf16.mxu0 0
        %749 = vmatmul.mubr.bf16.gmra.mrb[0].mxu0 %v617
        %v750 = vpop.f32.mrb[0].mxu0
        %v751 = vadd.f32 0.0, %v750
        %v752 = vpop.f32.mrb[0].mxu0
        %v753 = vpop.f32.mrb[0].mxu0
        %v754 = vadd.f32 0.0, %v753
        %v755 = vpop.f32.mrb[0].mxu0
        %756 = vmatprep.mubr.bf16.mxu0 0
        %757 = vmatmul.mubr.bf16.gmra.mrb[0].mxu0 %v620
        %v758 = vpop.f32.mrb[0].mxu0
        %v759 = vadd.f32 0.0, %v758
        %v760 = vpop.f32.mrb[0].mxu0
        %v761 = vpop.f32.mrb[0].mxu0
        %v762 = vadd.f32 0.0, %v761
        %v763 = vpop.f32.mrb[0].mxu0
        %764 = vmatprep.mubr.bf16.mxu0 0
        %765 = vmatmul.mubr.bf16.gmra.mrb[0].mxu0 %v623
        %v766 = vpop.f32.mrb[0].mxu0
        %v767 = vadd.f32 0.0, %v766
        %v768 = vpop.f32.mrb[0].mxu0
        %v769 = vpop.f32.mrb[0].mxu0
        %v770 = vadd.f32 0.0, %v769
        %v771 = vpop.f32.mrb[0].mxu0
        %772 = vmatprep.mubr.bf16.mxu0 0
        %773 = vmatmul.mubr.bf16.gmra.mrb[0].mxu0 %v626
        %v774 = vpop.f32.mrb[0].mxu0
        %v775 = vadd.f32 0.0, %v774
        %v776 = vpop.f32.mrb[0].mxu0
        %v777 = vpop.f32.mrb[0].mxu0
        %v778 = vadd.f32 0.0, %v777
        %v779 = vpop.f32.mrb[0].mxu0
        %780 = vmatprep.mubr.bf16.mxu0 0
        %781 = vmatmul.mubr.bf16.gmra.mrb[0].mxu0 %v629
        %v782 = vpop.f32.mrb[0].mxu0
        %v783 = vadd.f32 0.0, %v782
        %v784 = vpop.f32.mrb[0].mxu0
        %v785 = vpop.f32.mrb[0].mxu0
        %v786 = vadd.f32 0.0, %v785
        %v787 = vpop.f32.mrb[0].mxu0
        %788 = vmatprep.mubr.bf16.mxu0 0
        %789 = vmatmul.mubr.bf16.gmra.mrb[0].mxu0 %v632
        %v790 = vpop.f32.mrb[0].mxu0
        %v791 = vadd.f32 0.0, %v790
        %v792 = vpop.f32.mrb[0].mxu0
        %v793 = vpop.f32.mrb[0].mxu0
        %v794 = vadd.f32 0.0, %v793
        %v795 = vpop.f32.mrb[0].mxu0
        %796 = vmatprep.mubr.bf16.mxu0 0
        %797 = vmatmul.mubr.bf16.gmra.mrb[0].mxu0 %v635
        %v798 = vpop.f32.mrb[0].mxu0
        %v799 = vadd.f32 0.0, %v798
        %v800 = vpop.f32.mrb[0].mxu0
        %v801 = vpop.f32.mrb[0].mxu0
        %v802 = vadd.f32 0.0, %v801
        %v803 = vpop.f32.mrb[0].mxu0
        %804 = vmatprep.mubr.bf16.mxu0 0
        %805 = vmatmul.mubr.bf16.gmra.mrb[0].mxu0 %v638
        %v806 = vpop.f32.mrb[0].mxu0
        %v807 = vadd.f32 0.0, %v806
        %v808 = vpop.f32.mrb[0].mxu0
        %v809 = vpop.f32.mrb[0].mxu0
        %v810 = vadd.f32 0.0, %v809
        %v811 = vpop.f32.mrb[0].mxu0
        %812 = vmatprep.mubr.bf16.mxu0 0
        %813 = vmatmul.mubr.bf16.gmra.mrb[0].mxu0 %v641
        %v814 = vpop.f32.mrb[0].mxu0
        %v815 = vadd.f32 0.0, %v814
        %v816 = vpop.f32.mrb[0].mxu0
        %v817 = vpop.f32.mrb[0].mxu0
        %v818 = vadd.f32 0.0, %v817
        %v819 = vpop.f32.mrb[0].mxu0
        %820 = vmatprep.mubr.bf16.mxu0 0
        %821 = vmatmul.mubr.bf16.gmra.mrb[0].mxu0 %v644
        %v822 = vpop.f32.mrb[0].mxu0
        %v823 = vadd.f32 0.0, %v822
        %v824 = vpop.f32.mrb[0].mxu0
        %v825 = vpop.f32.mrb[0].mxu0
        %v826 = vadd.f32 0.0, %v825
        %v827 = vpop.f32.mrb[0].mxu0
        %828 = vmatprep.mubr.bf16.mxu0 0
        %829 = vmatmul.mubr.bf16.gmra.mrb[0].mxu0 %v647
        %v830 = vpop.f32.mrb[0].mxu0
        %v831 = vadd.f32 0.0, %v830
        %v832 = vpop.f32.mrb[0].mxu0
        %v833 = vpop.f32.mrb[0].mxu0
        %v834 = vadd.f32 0.0, %v833
        %v835 = vpop.f32.mrb[0].mxu0
        %836 = vmatprep.mubr.bf16.mxu0 0
        %837 = vmatmul.mubr.bf16.gmra.mrb[0].mxu0 %v650
        %v838 = vpop.f32.mrb[0].mxu0
        %v839 = vadd.f32 0.0, %v838
        %v840 = vpop.f32.mrb[0].mxu0
        %v841 = vpop.f32.mrb[0].mxu0
        %v842 = vadd.f32 0.0, %v841
        %v843 = vpop.f32.mrb[0].mxu0
        %844 = vmatprep.mubr.bf16.mxu0 0
        %845 = vmatmul.mubr.bf16.gmra.mrb[0].mxu0 %v653
        %v846 = vpop.f32.mrb[0].mxu0
        %v847 = vadd.f32 0.0, %v846
        %v848 = vpop.f32.mrb[0].mxu0
        %v849 = vpop.f32.mrb[0].mxu0
        %v850 = vadd.f32 0.0, %v849
        %v851 = vpop.f32.mrb[0].mxu0
        %852 = vmatprep.mubr.bf16.mxu0 0
        %853 = vmatmul.mubr.bf16.gmra.mrb[0].mxu0 %v656
        %v854 = vpop.f32.mrb[0].mxu0
        %v855 = vadd.f32 0.0, %v854
        %v856 = vpop.f32.mrb[0].mxu0
        %v857 = vpop.f32.mrb[0].mxu0
        %v858 = vadd.f32 0.0, %v857
        %v859 = vpop.f32.mrb[0].mxu0
        %860 = vmatprep.mubr.bf16.mxu0 0
        %861 = vmatmul.mubr.bf16.gmra.mrb[0].mxu0 %v659
        %v862 = vpop.f32.mrb[0].mxu0
        %v863 = vadd.f32 0.0, %v862
        %v864 = vpop.f32.mrb[0].mxu0
        %v865 = vpop.f32.mrb[0].mxu0
        %v866 = vadd.f32 0.0, %v865
        %v867 = vpop.f32.mrb[0].mxu0
        %868 = vmatprep.mubr.bf16.mxu0 0
        %869 = vmatmul.mubr.bf16.gmra.mrb[0].mxu0 %v662
        %v870 = vpop.f32.mrb[0].mxu0
        %v871 = vadd.f32 0.0, %v870
        %v872 = vpop.f32.mrb[0].mxu0
        %v873 = vpop.f32.mrb[0].mxu0
        %v874 = vadd.f32 0.0, %v873
        %v875 = vpop.f32.mrb[0].mxu0
        %876 = vmatprep.mubr.bf16.mxu0 0
        %877 = vmatmul.mubr.bf16.gmra.mrb[0].mxu0 %v665
        %v878 = vpop.f32.mrb[0].mxu0
        %v879 = vadd.f32 0.0, %v878
        %v880 = vpop.f32.mrb[0].mxu0
        %v881 = vpop.f32.mrb[0].mxu0
        %v882 = vadd.f32 0.0, %v881
        %v883 = vpop.f32.mrb[0].mxu0
        %884 = vmatprep.mubr.bf16.mxu0 0
        %885 = vmatmul.mubr.bf16.gmra.mrb[0].mxu0 %v668
        %v886 = vpop.f32.mrb[0].mxu0
        %v887 = vadd.f32 0.0, %v886
        %v888 = vpop.f32.mrb[0].mxu0
        %v889 = vpop.f32.mrb[0].mxu0
        %v890 = vadd.f32 0.0, %v889
        %v891 = vpop.f32.mrb[0].mxu0
        %892 = vmatprep.mubr.bf16.mxu0 0
        %893 = vmatmul.mubr.bf16.gmra.mrb[0].mxu0 %v671
        %v894 = vpop.f32.mrb[0].mxu0
        %v895 = vadd.f32 0.0, %v894
        %v896 = vpop.f32.mrb[0].mxu0
        %v897 = vpop.f32.mrb[0].mxu0
        %v898 = vadd.f32 0.0, %v897
        %v899 = vpop.f32.mrb[0].mxu0
        %900 = vmatprep.mubr.bf16.mxu0 0
        %901 = vmatmul.mubr.bf16.gmra.mrb[0].mxu0 %v674
        %v902 = vpop.f32.mrb[0].mxu0
        %v903 = vadd.f32 0.0, %v902
        %v904 = vpop.f32.mrb[0].mxu0
        %v905 = vpop.f32.mrb[0].mxu0
        %v906 = vadd.f32 0.0, %v905
        %v907 = vpop.f32.mrb[0].mxu0
        %908 = vmatprep.mubr.bf16.mxu0 0
        %909 = vmatmul.mubr.bf16.gmra.mrb[0].mxu0 %v677
        %v910 = vpop.f32.mrb[0].mxu0
        %v911 = vadd.f32 0.0, %v910
        %v912 = vpop.f32.mrb[0].mxu0
        %v913 = vpop.f32.mrb[0].mxu0
        %v914 = vadd.f32 0.0, %v913
        %v915 = vpop.f32.mrb[0].mxu0
        %916 = vmatprep.mubr.bf16.mxu0 0
        %917 = vmatmul.mubr.bf16.gmra.mrb[0].mxu0 %v680
        %v918 = vpop.f32.mrb[0].mxu0
        %v919 = vadd.f32 0.0, %v918
        %v920 = vpop.f32.mrb[0].mxu0
        %v921 = vpop.f32.mrb[0].mxu0
        %v922 = vadd.f32 0.0, %v921
        %v923 = vpop.f32.mrb[0].mxu0
        %924 = vmatprep.mubr.bf16.mxu0 0
        %925 = vmatmul.mubr.bf16.gmra.mrb[0].mxu0 %v683
        %v926 = vpop.f32.mrb[0].mxu0
        %v927 = vadd.f32 0.0, %v926
        %v928 = vpop.f32.mrb[0].mxu0
        %v929 = vpop.f32.mrb[0].mxu0
        %v930 = vadd.f32 0.0, %v929
        %v931 = vpop.f32.mrb[0].mxu0
        %932 = vmatprep.mubr.bf16.mxu0 0
        %933 = vmatmul.mubr.bf16.gmra.mrb[0].mxu0 %v686
        %v934 = vpop.f32.mrb[0].mxu0
        %v935 = vadd.f32 0.0, %v934
        %v936 = vpop.f32.mrb[0].mxu0
        %v937 = vpop.f32.mrb[0].mxu0
        %v938 = vadd.f32 0.0, %v937
        %v939 = vpop.f32.mrb[0].mxu0
        %940 = vmatprep.mubr.bf16.mxu0 0
        %941 = vmatmul.mubr.bf16.gmra.mrb[0].mxu0 %v689
        %v942 = vpop.f32.mrb[0].mxu0
        %v943 = vadd.f32 0.0, %v942
        %v944 = vpop.f32.mrb[0].mxu0
        %v945 = vpop.f32.mrb[0].mxu0
        %v946 = vadd.f32 0.0, %v945
        %v947 = vpop.f32.mrb[0].mxu0
        %948 = vmatprep.mubr.bf16.mxu0 0
        %949 = vmatmul.mubr.bf16.gmra.mrb[0].mxu0 %v692
        %v950 = vpop.f32.mrb[0].mxu0
        %v951 = vadd.f32 0.0, %v950
        %v952 = vpop.f32.mrb[0].mxu0
        %v953 = vpop.f32.mrb[0].mxu0
        %v954 = vadd.f32 0.0, %v953
        %v955 = vpop.f32.mrb[0].mxu0
        %956 = vmatprep.mubr.bf16.mxu0 0
        %957 = vmatmul.mubr.bf16.gmra.mrb[0].mxu0 %v695
        %v958 = vpop.f32.mrb[0].mxu0
        %v959 = vadd.f32 0.0, %v958
        %v960 = vpop.f32.mrb[0].mxu0
        %v961 = vpop.f32.mrb[0].mxu0
        %v962 = vadd.f32 0.0, %v961
        %v963 = vpop.f32.mrb[0].mxu0
        %964 = vmatprep.mubr.bf16.mxu0 0
        %965 = vmatmul.mubr.bf16.gmra.mrb[0].mxu0 %v698
        %v966 = vpop.f32.mrb[0].mxu0
        %v967 = vadd.f32 0.0, %v966
        %v968 = vpop.f32.mrb[0].mxu0
        %v969 = vpop.f32.mrb[0].mxu0
        %v970 = vadd.f32 0.0, %v969
        %v971 = vpop.f32.mrb[0].mxu0
        %972 = vmatprep.mubr.bf16.mxu0 0
        %973 = vmatmul.mubr.bf16.gmra.mrb[0].mxu0 %v701
        %v974 = vpop.f32.mrb[0].mxu0
        %v975 = vadd.f32 0.0, %v974
        %v976 = vpop.f32.mrb[0].mxu0
        %v977 = vpop.f32.mrb[0].mxu0
        %v978 = vadd.f32 0.0, %v977
        %v979 = vpop.f32.mrb[0].mxu0
        %980 = vmatprep.mubr.bf16.mxu0 0
        %981 = vmatmul.mubr.bf16.gmra.mrb[0].mxu0 %v704
        %v982 = vpop.f32.mrb[0].mxu0
        %v983 = vadd.f32 0.0, %v982
        %v984 = vpop.f32.mrb[0].mxu0
        %v985 = vpop.f32.mrb[0].mxu0
        %v986 = vadd.f32 0.0, %v985
        %v987 = vpop.f32.mrb[0].mxu0
        %988 = vmatprep.mubr.bf16.mxu0 0
        %989 = vmatmul.mubr.bf16.gmra.mrb[0].mxu0 %v707
        %v990 = vpop.f32.mrb[0].mxu0
        %v991 = vadd.f32 0.0, %v990
        %v992 = vpop.f32.mrb[0].mxu0
        %v993 = vpop.f32.mrb[0].mxu0
        %v994 = vadd.f32 0.0, %v993
        %v995 = vpop.f32.mrb[0].mxu0
        %996 = vmatprep.mubr.bf16.mxu0 0
        %997 = vmatmul.mubr.bf16.gmra.mrb[0].mxu0 %v710
        %v998 = vpop.f32.mrb[0].mxu0
        %v999 = vadd.f32 0.0, %v998
        %v1000 = vpop.f32.mrb[0].mxu0
        %v1001 = vpop.f32.mrb[0].mxu0
        %v1002 = vadd.f32 0.0, %v1001
        %v1003 = vpop.f32.mrb[0].mxu0
        %1004 = vdwg.mxu0
        %v1005 = vadd.f32 %v390, %v751
        %v1006 = vadd.f32 %v391, %v754
        %v1007 = vadd.f32 %v392, %v759
        %v1008 = vadd.f32 %v393, %v762
        %v1009 = vadd.f32 %v394, %v767
        %v1010 = vadd.f32 %v395, %v770
        %v1011 = vadd.f32 %v396, %v775
        %v1012 = vadd.f32 %v397, %v778
        %v1013 = vadd.f32 %v398, %v783
        %v1014 = vadd.f32 %v399, %v786
        %v1015 = vadd.f32 %v400, %v791
        %v1016 = vadd.f32 %v401, %v794
        %v1017 = vadd.f32 %v402, %v799
        %v1018 = vadd.f32 %v403, %v802
        %v1019 = vadd.f32 %v404, %v807
        %v1020 = vadd.f32 %v405, %v810
        %v1021 = vadd.f32 %v406, %v815
        %v1022 = vadd.f32 %v407, %v818
        %v1023 = vadd.f32 %v408, %v823
        %v1024 = vadd.f32 %v409, %v826
        %v1025 = vadd.f32 %v410, %v831
        %v1026 = vadd.f32 %v411, %v834
        %v1027 = vadd.f32 %v412, %v839
        %v1028 = vadd.f32 %v413, %v842
        %v1029 = vadd.f32 %v414, %v847
        %v1030 = vadd.f32 %v415, %v850
        %v1031 = vadd.f32 %v416, %v855
        %v1032 = vadd.f32 %v417, %v858
        %v1033 = vadd.f32 %v418, %v863
        %v1034 = vadd.f32 %v419, %v866
        %v1035 = vadd.f32 %v420, %v871
        %v1036 = vadd.f32 %v421, %v874
        %v1037 = vadd.f32 %v422, %v879
        %v1038 = vadd.f32 %v423, %v882
        %v1039 = vadd.f32 %v424, %v887
        %v1040 = vadd.f32 %v425, %v890
        %v1041 = vadd.f32 %v426, %v895
        %v1042 = vadd.f32 %v427, %v898
        %v1043 = vadd.f32 %v428, %v903
        %v1044 = vadd.f32 %v429, %v906
        %v1045 = vadd.f32 %v430, %v911
        %v1046 = vadd.f32 %v431, %v914
        %v1047 = vadd.f32 %v432, %v919
        %v1048 = vadd.f32 %v433, %v922
        %v1049 = vadd.f32 %v434, %v927
        %v1050 = vadd.f32 %v435, %v930
        %v1051 = vadd.f32 %v436, %v935
        %v1052 = vadd.f32 %v437, %v938
        %v1053 = vadd.f32 %v438, %v943
        %v1054 = vadd.f32 %v439, %v946
        %v1055 = vadd.f32 %v440, %v951
        %v1056 = vadd.f32 %v441, %v954
        %v1057 = vadd.f32 %v442, %v959
        %v1058 = vadd.f32 %v443, %v962
        %v1059 = vadd.f32 %v444, %v967
        %v1060 = vadd.f32 %v445, %v970
        %v1061 = vadd.f32 %v446, %v975
        %v1062 = vadd.f32 %v447, %v978
        %v1063 = vadd.f32 %v448, %v983
        %v1064 = vadd.f32 %v449, %v986
        %v1065 = vadd.f32 %v450, %v991
        %v1066 = vadd.f32 %v451, %v994
        %v1067 = vadd.f32 %v452, %v999
        %v1068 = vadd.f32 %v453, %v1002
        %1069 = vst [vmem:[#allocation2] sm:$0xff] %v1005
        %1070 = vst [vmem:[#allocation2 + $0x8] sm:$0xff] %v1006
        %1071 = vst [vmem:[#allocation2 + $0x10] sm:$0xff] %v1007
        %1072 = vst [vmem:[#allocation2 + $0x18] sm:$0xff] %v1008
        %1073 = vst [vmem:[#allocation2 + $0x20] sm:$0xff] %v1009
        %1074 = vst [vmem:[#allocation2 + $0x28] sm:$0xff] %v1010
        %1075 = vst [vmem:[#allocation2 + $0x30] sm:$0xff] %v1011
        %1076 = vst [vmem:[#allocation2 + $0x38] sm:$0xff] %v1012
        %1077 = vst [vmem:[#allocation2 + $0x40] sm:$0xff] %v1013
        %1078 = vst [vmem:[#allocation2 + $0x48] sm:$0xff] %v1014
        %1079 = vst [vmem:[#allocation2 + $0x50] sm:$0xff] %v1015
        %1080 = vst [vmem:[#allocation2 + $0x58] sm:$0xff] %v1016
        %1081 = vst [vmem:[#allocation2 + $0x60] sm:$0xff] %v1017
        %1082 = vst [vmem:[#allocation2 + $0x68] sm:$0xff] %v1018
        %1083 = vst [vmem:[#allocation2 + $0x70] sm:$0xff] %v1019
        %1084 = vst [vmem:[#allocation2 + $0x78] sm:$0xff] %v1020
        %1085 = vst [vmem:[#allocation2 + $0x80] sm:$0xff] %v1021
        %1086 = vst [vmem:[#allocation2 + $0x88] sm:$0xff] %v1022
        %1087 = vst [vmem:[#allocation2 + $0x90] sm:$0xff] %v1023
        %1088 = vst [vmem:[#allocation2 + $0x98] sm:$0xff] %v1024
        %1089 = vst [vmem:[#allocation2 + $0xa0] sm:$0xff] %v1025
        %1090 = vst [vmem:[#allocation2 + $0xa8] sm:$0xff] %v1026
        %1091 = vst [vmem:[#allocation2 + $0xb0] sm:$0xff] %v1027
        %1092 = vst [vmem:[#allocation2 + $0xb8] sm:$0xff] %v1028
        %1093 = vst [vmem:[#allocation2 + $0xc0] sm:$0xff] %v1029
        %1094 = vst [vmem:[#allocation2 + $0xc8] sm:$0xff] %v1030
        %1095 = vst [vmem:[#allocation2 + $0xd0] sm:$0xff] %v1031
        %1096 = vst [vmem:[#allocation2 + $0xd8] sm:$0xff] %v1032
        %1097 = vst [vmem:[#allocation2 + $0xe0] sm:$0xff] %v1033
        %1098 = vst [vmem:[#allocation2 + $0xe8] sm:$0xff] %v1034
        %1099 = vst [vmem:[#allocation2 + $0xf0] sm:$0xff] %v1035
        %1100 = vst [vmem:[#allocation2 + $0xf8] sm:$0xff] %v1036
        %1101 = vst [vmem:[#allocation2 + $0x100] sm:$0xff] %v1037
        %1102 = vst [vmem:[#allocation2 + $0x108] sm:$0xff] %v1038
        %1103 = vst [vmem:[#allocation2 + $0x110] sm:$0xff] %v1039
        %1104 = vst [vmem:[#allocation2 + $0x118] sm:$0xff] %v1040
        %1105 = vst [vmem:[#allocation2 + $0x120] sm:$0xff] %v1041
        %1106 = vst [vmem:[#allocation2 + $0x128] sm:$0xff] %v1042
        %1107 = vst [vmem:[#allocation2 + $0x130] sm:$0xff] %v1043
        %1108 = vst [vmem:[#allocation2 + $0x138] sm:$0xff] %v1044
        %1109 = vst [vmem:[#allocation2 + $0x140] sm:$0xff] %v1045
        %1110 = vst [vmem:[#allocation2 + $0x148] sm:$0xff] %v1046
        %1111 = vst [vmem:[#allocation2 + $0x150] sm:$0xff] %v1047
        %1112 = vst [vmem:[#allocation2 + $0x158] sm:$0xff] %v1048
        %1113 = vst [vmem:[#allocation2 + $0x160] sm:$0xff] %v1049
        %1114 = vst [vmem:[#allocation2 + $0x168] sm:$0xff] %v1050
        %1115 = vst [vmem:[#allocation2 + $0x170] sm:$0xff] %v1051
        %1116 = vst [vmem:[#allocation2 + $0x178] sm:$0xff] %v1052
        %1117 = vst [vmem:[#allocation2 + $0x180] sm:$0xff] %v1053
        %1118 = vst [vmem:[#allocation2 + $0x188] sm:$0xff] %v1054
        %1119 = vst [vmem:[#allocation2 + $0x190] sm:$0xff] %v1055
        %1120 = vst [vmem:[#allocation2 + $0x198] sm:$0xff] %v1056
        %1121 = vst [vmem:[#allocation2 + $0x1a0] sm:$0xff] %v1057
        %1122 = vst [vmem:[#allocation2 + $0x1a8] sm:$0xff] %v1058
        %1123 = vst [vmem:[#allocation2 + $0x1b0] sm:$0xff] %v1059
        %1124 = vst [vmem:[#allocation2 + $0x1b8] sm:$0xff] %v1060
        %1125 = vst [vmem:[#allocation2 + $0x1c0] sm:$0xff] %v1061
        %1126 = vst [vmem:[#allocation2 + $0x1c8] sm:$0xff] %v1062
        %1127 = vst [vmem:[#allocation2 + $0x1d0] sm:$0xff] %v1063
        %1128 = vst [vmem:[#allocation2 + $0x1d8] sm:$0xff] %v1064
        %1129 = vst [vmem:[#allocation2 + $0x1e0] sm:$0xff] %v1065
        %1130 = vst [vmem:[#allocation2 + $0x1e8] sm:$0xff] %v1066
        %1131 = vst [vmem:[#allocation2 + $0x1f0] sm:$0xff] %v1067
        %1132 = vst [vmem:[#allocation2 + $0x1f8] sm:$0xff] %v1068
        // Predicated region
        $region49: #{_lambda_.30} parent=31 // pred_check
          %p1133 = pneg %p258
        $region50: #{_lambda_.30} parent=31 // pred_check_branch
          %1135 = sbr.rel (%p1133) target = $region52
        $region51: #{_lambda_.30} parent=31 // pred_region
          %v1136 = vld [vmem:[#allocation2] sm:$0xff]
          %v1137 = vld [vmem:[#allocation2 + $0x8] sm:$0xff]
          %v1138 = vld [vmem:[#allocation2 + $0x10] sm:$0xff]
          %v1139 = vld [vmem:[#allocation2 + $0x18] sm:$0xff]
          %v1140 = vld [vmem:[#allocation2 + $0x20] sm:$0xff]
          %v1141 = vld [vmem:[#allocation2 + $0x28] sm:$0xff]
          %v1142 = vld [vmem:[#allocation2 + $0x30] sm:$0xff]
          %v1143 = vld [vmem:[#allocation2 + $0x38] sm:$0xff]
          %v1144 = vld [vmem:[#allocation2 + $0x40] sm:$0xff]
          %v1145 = vld [vmem:[#allocation2 + $0x48] sm:$0xff]
          %v1146 = vld [vmem:[#allocation2 + $0x50] sm:$0xff]
          %v1147 = vld [vmem:[#allocation2 + $0x58] sm:$0xff]
          %v1148 = vld [vmem:[#allocation2 + $0x60] sm:$0xff]
          %v1149 = vld [vmem:[#allocation2 + $0x68] sm:$0xff]
          %v1150 = vld [vmem:[#allocation2 + $0x70] sm:$0xff]
          %v1151 = vld [vmem:[#allocation2 + $0x78] sm:$0xff]
          %v1152 = vld [vmem:[#allocation2 + $0x80] sm:$0xff]
          %v1153 = vld [vmem:[#allocation2 + $0x88] sm:$0xff]
          %v1154 = vld [vmem:[#allocation2 + $0x90] sm:$0xff]
          %v1155 = vld [vmem:[#allocation2 + $0x98] sm:$0xff]
          %v1156 = vld [vmem:[#allocation2 + $0xa0] sm:$0xff]
          %v1157 = vld [vmem:[#allocation2 + $0xa8] sm:$0xff]
          %v1158 = vld [vmem:[#allocation2 + $0xb0] sm:$0xff]
          %v1159 = vld [vmem:[#allocation2 + $0xb8] sm:$0xff]
          %v1160 = vld [vmem:[#allocation2 + $0xc0] sm:$0xff]
          %v1161 = vld [vmem:[#allocation2 + $0xc8] sm:$0xff]
          %v1162 = vld [vmem:[#allocation2 + $0xd0] sm:$0xff]
          %v1163 = vld [vmem:[#allocation2 + $0xd8] sm:$0xff]
          %v1164 = vld [vmem:[#allocation2 + $0xe0] sm:$0xff]
          %v1165 = vld [vmem:[#allocation2 + $0xe8] sm:$0xff]
          %v1166 = vld [vmem:[#allocation2 + $0xf0] sm:$0xff]
          %v1167 = vld [vmem:[#allocation2 + $0xf8] sm:$0xff]
          %v1168 = vld [vmem:[#allocation2 + $0x100] sm:$0xff]
          %v1169 = vld [vmem:[#allocation2 + $0x108] sm:$0xff]
          %v1170 = vld [vmem:[#allocation2 + $0x110] sm:$0xff]
          %v1171 = vld [vmem:[#allocation2 + $0x118] sm:$0xff]
          %v1172 = vld [vmem:[#allocation2 + $0x120] sm:$0xff]
          %v1173 = vld [vmem:[#allocation2 + $0x128] sm:$0xff]
          %v1174 = vld [vmem:[#allocation2 + $0x130] sm:$0xff]
          %v1175 = vld [vmem:[#allocation2 + $0x138] sm:$0xff]
          %v1176 = vld [vmem:[#allocation2 + $0x140] sm:$0xff]
          %v1177 = vld [vmem:[#allocation2 + $0x148] sm:$0xff]
          %v1178 = vld [vmem:[#allocation2 + $0x150] sm:$0xff]
          %v1179 = vld [vmem:[#allocation2 + $0x158] sm:$0xff]
          %v1180 = vld [vmem:[#allocation2 + $0x160] sm:$0xff]
          %v1181 = vld [vmem:[#allocation2 + $0x168] sm:$0xff]
          %v1182 = vld [vmem:[#allocation2 + $0x170] sm:$0xff]
          %v1183 = vld [vmem:[#allocation2 + $0x178] sm:$0xff]
          %v1184 = vld [vmem:[#allocation2 + $0x180] sm:$0xff]
          %v1185 = vld [vmem:[#allocation2 + $0x188] sm:$0xff]
          %v1186 = vld [vmem:[#allocation2 + $0x190] sm:$0xff]
          %v1187 = vld [vmem:[#allocation2 + $0x198] sm:$0xff]
          %v1188 = vld [vmem:[#allocation2 + $0x1a0] sm:$0xff]
          %v1189 = vld [vmem:[#allocation2 + $0x1a8] sm:$0xff]
          %v1190 = vld [vmem:[#allocation2 + $0x1b0] sm:$0xff]
          %v1191 = vld [vmem:[#allocation2 + $0x1b8] sm:$0xff]
          %v1192 = vld [vmem:[#allocation2 + $0x1c0] sm:$0xff]
          %v1193 = vld [vmem:[#allocation2 + $0x1c8] sm:$0xff]
          %v1194 = vld [vmem:[#allocation2 + $0x1d0] sm:$0xff]
          %v1195 = vld [vmem:[#allocation2 + $0x1d8] sm:$0xff]
          %v1196 = vld [vmem:[#allocation2 + $0x1e0] sm:$0xff]
          %v1197 = vld [vmem:[#allocation2 + $0x1e8] sm:$0xff]
          %v1198 = vld [vmem:[#allocation2 + $0x1f0] sm:$0xff]
          %v1199 = vld [vmem:[#allocation2 + $0x1f8] sm:$0xff]
          %v1200 = vld [vmem:[#allocation8] sm:$0x1]
          %v1202 = vlaneseq
          %v1203 = vshrl.u32 %v1202, 7
          %v1204 = vsub.s32 0, %v1203
          %v1205 = vrot.slane %v1200, %v1204
          %v1207 = vadd.f32 %v1136, %v1205
          %v1208 = vadd.f32 %v1137, %v1205
          %v1209 = vadd.f32 %v1138, %v1205
          %v1210 = vadd.f32 %v1139, %v1205
          %v1211 = vadd.f32 %v1140, %v1205
          %v1212 = vadd.f32 %v1141, %v1205
          %v1213 = vadd.f32 %v1142, %v1205
          %v1214 = vadd.f32 %v1143, %v1205
          %v1215 = vadd.f32 %v1144, %v1205
          %v1216 = vadd.f32 %v1145, %v1205
          %v1217 = vadd.f32 %v1146, %v1205
          %v1218 = vadd.f32 %v1147, %v1205
          %v1219 = vadd.f32 %v1148, %v1205
          %v1220 = vadd.f32 %v1149, %v1205
          %v1221 = vadd.f32 %v1150, %v1205
          %v1222 = vadd.f32 %v1151, %v1205
          %v1223 = vadd.f32 %v1152, %v1205
          %v1224 = vadd.f32 %v1153, %v1205
          %v1225 = vadd.f32 %v1154, %v1205
          %v1226 = vadd.f32 %v1155, %v1205
          %v1227 = vadd.f32 %v1156, %v1205
          %v1228 = vadd.f32 %v1157, %v1205
          %v1229 = vadd.f32 %v1158, %v1205
          %v1230 = vadd.f32 %v1159, %v1205
          %v1231 = vadd.f32 %v1160, %v1205
          %v1232 = vadd.f32 %v1161, %v1205
          %v1233 = vadd.f32 %v1162, %v1205
          %v1234 = vadd.f32 %v1163, %v1205
          %v1235 = vadd.f32 %v1164, %v1205
          %v1236 = vadd.f32 %v1165, %v1205
          %v1237 = vadd.f32 %v1166, %v1205
          %v1238 = vadd.f32 %v1167, %v1205
          %v1239 = vadd.f32 %v1168, %v1205
          %v1240 = vadd.f32 %v1169, %v1205
          %v1241 = vadd.f32 %v1170, %v1205
          %v1242 = vadd.f32 %v1171, %v1205
          %v1243 = vadd.f32 %v1172, %v1205
          %v1244 = vadd.f32 %v1173, %v1205
          %v1245 = vadd.f32 %v1174, %v1205
          %v1246 = vadd.f32 %v1175, %v1205
          %v1247 = vadd.f32 %v1176, %v1205
          %v1248 = vadd.f32 %v1177, %v1205
          %v1249 = vadd.f32 %v1178, %v1205
          %v1250 = vadd.f32 %v1179, %v1205
          %v1251 = vadd.f32 %v1180, %v1205
          %v1252 = vadd.f32 %v1181, %v1205
          %v1253 = vadd.f32 %v1182, %v1205
          %v1254 = vadd.f32 %v1183, %v1205
          %v1255 = vadd.f32 %v1184, %v1205
          %v1256 = vadd.f32 %v1185, %v1205
          %v1257 = vadd.f32 %v1186, %v1205
          %v1258 = vadd.f32 %v1187, %v1205
          %v1259 = vadd.f32 %v1188, %v1205
          %v1260 = vadd.f32 %v1189, %v1205
          %v1261 = vadd.f32 %v1190, %v1205
          %v1262 = vadd.f32 %v1191, %v1205
          %v1263 = vadd.f32 %v1192, %v1205
          %v1264 = vadd.f32 %v1193, %v1205
          %v1265 = vadd.f32 %v1194, %v1205
          %v1266 = vadd.f32 %v1195, %v1205
          %v1267 = vadd.f32 %v1196, %v1205
          %v1268 = vadd.f32 %v1197, %v1205
          %v1269 = vadd.f32 %v1198, %v1205
          %v1270 = vadd.f32 %v1199, %v1205
          %v1271 = vmax.f32 %v1207, 0.0
          %v1272 = vmax.f32 %v1208, 0.0
          %v1273 = vmax.f32 %v1209, 0.0
          %v1274 = vmax.f32 %v1210, 0.0
          %v1275 = vmax.f32 %v1211, 0.0
          %v1276 = vmax.f32 %v1212, 0.0
          %v1277 = vmax.f32 %v1213, 0.0
          %v1278 = vmax.f32 %v1214, 0.0
          %v1279 = vmax.f32 %v1215, 0.0
          %v1280 = vmax.f32 %v1216, 0.0
          %v1281 = vmax.f32 %v1217, 0.0
          %v1282 = vmax.f32 %v1218, 0.0
          %v1283 = vmax.f32 %v1219, 0.0
          %v1284 = vmax.f32 %v1220, 0.0
          %v1285 = vmax.f32 %v1221, 0.0
          %v1286 = vmax.f32 %v1222, 0.0
          %v1287 = vmax.f32 %v1223, 0.0
          %v1288 = vmax.f32 %v1224, 0.0
          %v1289 = vmax.f32 %v1225, 0.0
          %v1290 = vmax.f32 %v1226, 0.0
          %v1291 = vmax.f32 %v1227, 0.0
          %v1292 = vmax.f32 %v1228, 0.0
          %v1293 = vmax.f32 %v1229, 0.0
          %v1294 = vmax.f32 %v1230, 0.0
          %v1295 = vmax.f32 %v1231, 0.0
          %v1296 = vmax.f32 %v1232, 0.0
          %v1297 = vmax.f32 %v1233, 0.0
          %v1298 = vmax.f32 %v1234, 0.0
          %v1299 = vmax.f32 %v1235, 0.0
          %v1300 = vmax.f32 %v1236, 0.0
          %v1301 = vmax.f32 %v1237, 0.0
          %v1302 = vmax.f32 %v1238, 0.0
          %v1303 = vmax.f32 %v1239, 0.0
          %v1304 = vmax.f32 %v1240, 0.0
          %v1305 = vmax.f32 %v1241, 0.0
          %v1306 = vmax.f32 %v1242, 0.0
          %v1307 = vmax.f32 %v1243, 0.0
          %v1308 = vmax.f32 %v1244, 0.0
          %v1309 = vmax.f32 %v1245, 0.0
          %v1310 = vmax.f32 %v1246, 0.0
          %v1311 = vmax.f32 %v1247, 0.0
          %v1312 = vmax.f32 %v1248, 0.0
          %v1313 = vmax.f32 %v1249, 0.0
          %v1314 = vmax.f32 %v1250, 0.0
          %v1315 = vmax.f32 %v1251, 0.0
          %v1316 = vmax.f32 %v1252, 0.0
          %v1317 = vmax.f32 %v1253, 0.0
          %v1318 = vmax.f32 %v1254, 0.0
          %v1319 = vmax.f32 %v1255, 0.0
          %v1320 = vmax.f32 %v1256, 0.0
          %v1321 = vmax.f32 %v1257, 0.0
          %v1322 = vmax.f32 %v1258, 0.0
          %v1323 = vmax.f32 %v1259, 0.0
          %v1324 = vmax.f32 %v1260, 0.0
          %v1325 = vmax.f32 %v1261, 0.0
          %v1326 = vmax.f32 %v1262, 0.0
          %v1327 = vmax.f32 %v1263, 0.0
          %v1328 = vmax.f32 %v1264, 0.0
          %v1329 = vmax.f32 %v1265, 0.0
          %v1330 = vmax.f32 %v1266, 0.0
          %v1331 = vmax.f32 %v1267, 0.0
          %v1332 = vmax.f32 %v1268, 0.0
          %v1333 = vmax.f32 %v1269, 0.0
          %v1334 = vmax.f32 %v1270, 0.0
          %v1335 = vpack.c.bf16 %v1272, %v1271
          %v1336 = vpack.c.bf16 %v1274, %v1273
          %v1337 = vpack.c.bf16 %v1276, %v1275
          %v1338 = vpack.c.bf16 %v1278, %v1277
          %v1339 = vpack.c.bf16 %v1280, %v1279
          %v1340 = vpack.c.bf16 %v1282, %v1281
          %v1341 = vpack.c.bf16 %v1284, %v1283
          %v1342 = vpack.c.bf16 %v1286, %v1285
          %v1343 = vpack.c.bf16 %v1288, %v1287
          %v1344 = vpack.c.bf16 %v1290, %v1289
          %v1345 = vpack.c.bf16 %v1292, %v1291
          %v1346 = vpack.c.bf16 %v1294, %v1293
          %v1347 = vpack.c.bf16 %v1296, %v1295
          %v1348 = vpack.c.bf16 %v1298, %v1297
          %v1349 = vpack.c.bf16 %v1300, %v1299
          %v1350 = vpack.c.bf16 %v1302, %v1301
          %v1351 = vpack.c.bf16 %v1304, %v1303
          %v1352 = vpack.c.bf16 %v1306, %v1305
          %v1353 = vpack.c.bf16 %v1308, %v1307
          %v1354 = vpack.c.bf16 %v1310, %v1309
          %v1355 = vpack.c.bf16 %v1312, %v1311
          %v1356 = vpack.c.bf16 %v1314, %v1313
          %v1357 = vpack.c.bf16 %v1316, %v1315
          %v1358 = vpack.c.bf16 %v1318, %v1317
          %v1359 = vpack.c.bf16 %v1320, %v1319
          %v1360 = vpack.c.bf16 %v1322, %v1321
          %v1361 = vpack.c.bf16 %v1324, %v1323
          %v1362 = vpack.c.bf16 %v1326, %v1325
          %v1363 = vpack.c.bf16 %v1328, %v1327
          %v1364 = vpack.c.bf16 %v1330, %v1329
          %v1365 = vpack.c.bf16 %v1332, %v1331
          %v1366 = vpack.c.bf16 %v1334, %v1333
          %v1399 = vunpack.c.l.b16 %v1335
          %v1400 = vunpack.c.h.b16 %v1335
          %v1401 = vunpack.c.l.b16 %v1336
          %v1402 = vunpack.c.h.b16 %v1336
          %v1403 = vunpack.c.l.b16 %v1337
          %v1404 = vunpack.c.h.b16 %v1337
          %v1405 = vunpack.c.l.b16 %v1338
          %v1406 = vunpack.c.h.b16 %v1338
          %v1407 = vunpack.c.l.b16 %v1339
          %v1408 = vunpack.c.h.b16 %v1339
          %v1409 = vunpack.c.l.b16 %v1340
          %v1410 = vunpack.c.h.b16 %v1340
          %v1411 = vunpack.c.l.b16 %v1341
          %v1412 = vunpack.c.h.b16 %v1341
          %v1413 = vunpack.c.l.b16 %v1342
          %v1414 = vunpack.c.h.b16 %v1342
          %v1415 = vunpack.c.l.b16 %v1343
          %v1416 = vunpack.c.h.b16 %v1343
          %v1417 = vunpack.c.l.b16 %v1344
          %v1418 = vunpack.c.h.b16 %v1344
          %v1419 = vunpack.c.l.b16 %v1345
          %v1420 = vunpack.c.h.b16 %v1345
          %v1421 = vunpack.c.l.b16 %v1346
          %v1422 = vunpack.c.h.b16 %v1346
          %v1423 = vunpack.c.l.b16 %v1347
          %v1424 = vunpack.c.h.b16 %v1347
          %v1425 = vunpack.c.l.b16 %v1348
          %v1426 = vunpack.c.h.b16 %v1348
          %v1427 = vunpack.c.l.b16 %v1349
          %v1428 = vunpack.c.h.b16 %v1349
          %v1429 = vunpack.c.l.b16 %v1350
          %v1430 = vunpack.c.h.b16 %v1350
          %v1431 = vunpack.c.l.b16 %v1351
          %v1432 = vunpack.c.h.b16 %v1351
          %v1433 = vunpack.c.l.b16 %v1352
          %v1434 = vunpack.c.h.b16 %v1352
          %v1435 = vunpack.c.l.b16 %v1353
          %v1436 = vunpack.c.h.b16 %v1353
          %v1437 = vunpack.c.l.b16 %v1354
          %v1438 = vunpack.c.h.b16 %v1354
          %v1439 = vunpack.c.l.b16 %v1355
          %v1440 = vunpack.c.h.b16 %v1355
          %v1441 = vunpack.c.l.b16 %v1356
          %v1442 = vunpack.c.h.b16 %v1356
          %v1443 = vunpack.c.l.b16 %v1357
          %v1444 = vunpack.c.h.b16 %v1357
          %v1445 = vunpack.c.l.b16 %v1358
          %v1446 = vunpack.c.h.b16 %v1358
          %v1447 = vunpack.c.l.b16 %v1359
          %v1448 = vunpack.c.h.b16 %v1359
          %v1449 = vunpack.c.l.b16 %v1360
          %v1450 = vunpack.c.h.b16 %v1360
          %v1451 = vunpack.c.l.b16 %v1361
          %v1452 = vunpack.c.h.b16 %v1361
          %v1453 = vunpack.c.l.b16 %v1362
          %v1454 = vunpack.c.h.b16 %v1362
          %v1455 = vunpack.c.l.b16 %v1363
          %v1456 = vunpack.c.h.b16 %v1363
          %v1457 = vunpack.c.l.b16 %v1364
          %v1458 = vunpack.c.h.b16 %v1364
          %v1459 = vunpack.c.l.b16 %v1365
          %v1460 = vunpack.c.h.b16 %v1365
          %v1461 = vunpack.c.l.b16 %v1366
          %v1462 = vunpack.c.h.b16 %v1366
          %v1463 = vpack.c.b16 %v1399, %v1399
          %v1464 = vpack.c.b16 %v1400, %v1400
          %v1465 = vpack.c.b16 %v1401, %v1401
          %v1466 = vpack.c.b16 %v1402, %v1402
          %v1467 = vpack.c.b16 %v1403, %v1403
          %v1468 = vpack.c.b16 %v1404, %v1404
          %v1469 = vpack.c.b16 %v1405, %v1405
          %v1470 = vpack.c.b16 %v1406, %v1406
          %v1471 = vpack.c.b16 %v1407, %v1407
          %v1472 = vpack.c.b16 %v1408, %v1408
          %v1473 = vpack.c.b16 %v1409, %v1409
          %v1474 = vpack.c.b16 %v1410, %v1410
          %v1475 = vpack.c.b16 %v1411, %v1411
          %v1476 = vpack.c.b16 %v1412, %v1412
          %v1477 = vpack.c.b16 %v1413, %v1413
          %v1478 = vpack.c.b16 %v1414, %v1414
          %v1479 = vpack.c.b16 %v1415, %v1415
          %v1480 = vpack.c.b16 %v1416, %v1416
          %v1481 = vpack.c.b16 %v1417, %v1417
          %v1482 = vpack.c.b16 %v1418, %v1418
          %v1483 = vpack.c.b16 %v1419, %v1419
          %v1484 = vpack.c.b16 %v1420, %v1420
          %v1485 = vpack.c.b16 %v1421, %v1421
          %v1486 = vpack.c.b16 %v1422, %v1422
          %v1487 = vpack.c.b16 %v1423, %v1423
          %v1488 = vpack.c.b16 %v1424, %v1424
          %v1489 = vpack.c.b16 %v1425, %v1425
          %v1490 = vpack.c.b16 %v1426, %v1426
          %v1491 = vpack.c.b16 %v1427, %v1427
          %v1492 = vpack.c.b16 %v1428, %v1428
          %v1493 = vpack.c.b16 %v1429, %v1429
          %v1494 = vpack.c.b16 %v1430, %v1430
          %v1495 = vpack.c.b16 %v1431, %v1431
          %v1496 = vpack.c.b16 %v1432, %v1432
          %v1497 = vpack.c.b16 %v1433, %v1433
          %v1498 = vpack.c.b16 %v1434, %v1434
          %v1499 = vpack.c.b16 %v1435, %v1435
          %v1500 = vpack.c.b16 %v1436, %v1436
          %v1501 = vpack.c.b16 %v1437, %v1437
          %v1502 = vpack.c.b16 %v1438, %v1438
          %v1503 = vpack.c.b16 %v1439, %v1439
          %v1504 = vpack.c.b16 %v1440, %v1440
          %v1505 = vpack.c.b16 %v1441, %v1441
          %v1506 = vpack.c.b16 %v1442, %v1442
          %v1507 = vpack.c.b16 %v1443, %v1443
          %v1508 = vpack.c.b16 %v1444, %v1444
          %v1509 = vpack.c.b16 %v1445, %v1445
          %v1510 = vpack.c.b16 %v1446, %v1446
          %v1511 = vpack.c.b16 %v1447, %v1447
          %v1512 = vpack.c.b16 %v1448, %v1448
          %v1513 = vpack.c.b16 %v1449, %v1449
          %v1514 = vpack.c.b16 %v1450, %v1450
          %v1515 = vpack.c.b16 %v1451, %v1451
          %v1516 = vpack.c.b16 %v1452, %v1452
          %v1517 = vpack.c.b16 %v1453, %v1453
          %v1518 = vpack.c.b16 %v1454, %v1454
          %v1519 = vpack.c.b16 %v1455, %v1455
          %v1520 = vpack.c.b16 %v1456, %v1456
          %v1521 = vpack.c.b16 %v1457, %v1457
          %v1522 = vpack.c.b16 %v1458, %v1458
          %v1523 = vpack.c.b16 %v1459, %v1459
          %v1524 = vpack.c.b16 %v1460, %v1460
          %v1525 = vpack.c.b16 %v1461, %v1461
          %v1526 = vpack.c.b16 %v1462, %v1462
          %1591 = vst [vmem:[%s254] sm:$0xf] %v1463
          %1592 = vst [vmem:[%s254 + $0x4] sm:$0xf] %v1464
          %1593 = vst [vmem:[%s254 + $0x8] sm:$0xf] %v1465
          %1594 = vst [vmem:[%s254 + $0xc] sm:$0xf] %v1466
          %1595 = vst [vmem:[%s254 + $0x10] sm:$0xf] %v1467
          %1596 = vst [vmem:[%s254 + $0x14] sm:$0xf] %v1468
          %1597 = vst [vmem:[%s254 + $0x18] sm:$0xf] %v1469
          %1598 = vst [vmem:[%s254 + $0x1c] sm:$0xf] %v1470
          %1599 = vst [vmem:[%s254 + $0x20] sm:$0xf] %v1471
          %1600 = vst [vmem:[%s254 + $0x24] sm:$0xf] %v1472
          %1601 = vst [vmem:[%s254 + $0x28] sm:$0xf] %v1473
          %1602 = vst [vmem:[%s254 + $0x2c] sm:$0xf] %v1474
          %1603 = vst [vmem:[%s254 + $0x30] sm:$0xf] %v1475
          %1604 = vst [vmem:[%s254 + $0x34] sm:$0xf] %v1476
          %1605 = vst [vmem:[%s254 + $0x38] sm:$0xf] %v1477
          %1606 = vst [vmem:[%s254 + $0x3c] sm:$0xf] %v1478
          %1607 = vst [vmem:[%s254 + $0x40] sm:$0xf] %v1479
          %1608 = vst [vmem:[%s254 + $0x44] sm:$0xf] %v1480
          %1609 = vst [vmem:[%s254 + $0x48] sm:$0xf] %v1481
          %1610 = vst [vmem:[%s254 + $0x4c] sm:$0xf] %v1482
          %1611 = vst [vmem:[%s254 + $0x50] sm:$0xf] %v1483
          %1612 = vst [vmem:[%s254 + $0x54] sm:$0xf] %v1484
          %1613 = vst [vmem:[%s254 + $0x58] sm:$0xf] %v1485
          %1614 = vst [vmem:[%s254 + $0x5c] sm:$0xf] %v1486
          %1615 = vst [vmem:[%s254 + $0x60] sm:$0xf] %v1487
          %1616 = vst [vmem:[%s254 + $0x64] sm:$0xf] %v1488
          %1617 = vst [vmem:[%s254 + $0x68] sm:$0xf] %v1489
          %1618 = vst [vmem:[%s254 + $0x6c] sm:$0xf] %v1490
          %1619 = vst [vmem:[%s254 + $0x70] sm:$0xf] %v1491
          %1620 = vst [vmem:[%s254 + $0x74] sm:$0xf] %v1492
          %1621 = vst [vmem:[%s254 + $0x78] sm:$0xf] %v1493
          %1622 = vst [vmem:[%s254 + $0x7c] sm:$0xf] %v1494
          %1623 = vst [vmem:[%s254 + $0x80] sm:$0xf] %v1495
          %1624 = vst [vmem:[%s254 + $0x84] sm:$0xf] %v1496
          %1625 = vst [vmem:[%s254 + $0x88] sm:$0xf] %v1497
          %1626 = vst [vmem:[%s254 + $0x8c] sm:$0xf] %v1498
          %1627 = vst [vmem:[%s254 + $0x90] sm:$0xf] %v1499
          %1628 = vst [vmem:[%s254 + $0x94] sm:$0xf] %v1500
          %1629 = vst [vmem:[%s254 + $0x98] sm:$0xf] %v1501
          %1630 = vst [vmem:[%s254 + $0x9c] sm:$0xf] %v1502
          %1631 = vst [vmem:[%s254 + $0xa0] sm:$0xf] %v1503
          %1632 = vst [vmem:[%s254 + $0xa4] sm:$0xf] %v1504
          %1633 = vst [vmem:[%s254 + $0xa8] sm:$0xf] %v1505
          %1634 = vst [vmem:[%s254 + $0xac] sm:$0xf] %v1506
          %1635 = vst [vmem:[%s254 + $0xb0] sm:$0xf] %v1507
          %1636 = vst [vmem:[%s254 + $0xb4] sm:$0xf] %v1508
          %1637 = vst [vmem:[%s254 + $0xb8] sm:$0xf] %v1509
          %1638 = vst [vmem:[%s254 + $0xbc] sm:$0xf] %v1510
          %1639 = vst [vmem:[%s254 + $0xc0] sm:$0xf] %v1511
          %1640 = vst [vmem:[%s254 + $0xc4] sm:$0xf] %v1512
          %1641 = vst [vmem:[%s254 + $0xc8] sm:$0xf] %v1513
          %1642 = vst [vmem:[%s254 + $0xcc] sm:$0xf] %v1514
          %1643 = vst [vmem:[%s254 + $0xd0] sm:$0xf] %v1515
          %1644 = vst [vmem:[%s254 + $0xd4] sm:$0xf] %v1516
          %1645 = vst [vmem:[%s254 + $0xd8] sm:$0xf] %v1517
          %1646 = vst [vmem:[%s254 + $0xdc] sm:$0xf] %v1518
          %1647 = vst [vmem:[%s254 + $0xe0] sm:$0xf] %v1519
          %1648 = vst [vmem:[%s254 + $0xe4] sm:$0xf] %v1520
          %1649 = vst [vmem:[%s254 + $0xe8] sm:$0xf] %v1521
          %1650 = vst [vmem:[%s254 + $0xec] sm:$0xf] %v1522
          %1651 = vst [vmem:[%s254 + $0xf0] sm:$0xf] %v1523
          %1652 = vst [vmem:[%s254 + $0xf4] sm:$0xf] %v1524
          %1653 = vst [vmem:[%s254 + $0xf8] sm:$0xf] %v1525
          %1654 = vst [vmem:[%s254 + $0xfc] sm:$0xf] %v1526
        $region52: #{_lambda_.30} parent=31 // pred_fallthru
          _
        %s1655 = sand.u32 %s132, 1
        %s1656 = scalar_lea.sflag [#allocation5], %s1655
        %s1657 = sand.u32 %s132, 1
        %s1658 = smul.addr %s1657, 256
        %s1659 = scalar_lea.vmem [#allocation9], %s1658
        // Predicated region
        $region53: #{_lambda_.30} parent=31 // pred_check
          %p1660 = pneg %p142
        $region54: #{_lambda_.30} parent=31 // pred_check_branch
          %1662 = sbr.rel (%p1660) target = $region56
        $region55: #{_lambda_.30} parent=31 // pred_region
          %s1663 = smul.u32 64, %s26
          %s1665 = ssub.s32 4096, 4096
          %1666 = vsyncadd %s1656, %s1665
          %s1667 = sadd.s32 %s27, %s1663
          %s1668 = smul.addr %s1667, 64
          %s1669 = scalar_lea.hbm %s3, %s1668
          %s1670 = sshll.u32 %s1659, 4
          %s1671 = int_to_ptr.vmem [resolvable:$true] %s1670
          %1676 = dma.vmem_to_hbm [thread:$0]  %s1671, 4096, %s1669, %s1656, 64, 64, 4
        $region56: #{_lambda_.30} parent=31 // pred_fallthru
          _
      $region32: #{_lambda_.30} parent=5 // pred_fallthru
        _
      %p1677 = scmp.le.s32.totalorder 2, %s16
      // Predicated region
      $region57: #{_lambda_.30} parent=5 // pred_check
        %p1678 = pneg %p1677
      $region58: #{_lambda_.30} parent=5 // pred_check_branch
        %1680 = sbr.rel (%p1678) target = $region60
      $region59: #{_lambda_.30} parent=5 // pred_region
        %s1681 = ssub.s32 %s16, 2
        // Predicated region
        $region61: #{_lambda_.30} parent=59 // pred_check
          %p1682 = pneg %p148
        $region62: #{_lambda_.30} parent=59 // pred_check_branch
          %1684 = sbr.rel (%p1682) target = $region64
        $region63: #{_lambda_.30} parent=59 // pred_region
          %s1685 = sand.u32 %s133, 1
          %s1686 = scalar_lea.sflag [#allocation5], %s1685
          %s1687 = sand.u32 %s133, 1
          %s1688 = smul.addr %s1687, 256
          %s1689 = scalar_lea.vmem [#allocation9], %s1688
          %1690 = dma.done %s1686, 4096
        $region64: #{_lambda_.30} parent=59 // pred_fallthru
          _
      $region60: #{_lambda_.30} parent=5 // pred_fallthru
        _
    $region6: #{_lambda_.30} parent=1 // loop_footer
      %s20 = sadd.s32 1, %s16
    $region7: #{_lambda_.30} parent=1 // loop_footer_branch
      %15 = sbr.rel target = $region3
    $region8: #{_lambda_.30} parent=1 // loop_exit
      _
    %1691 = vsyncpa [#allocation4], 1
    %s1692 = scalar_lea.sflag [#allocation4], 1
    %1693 = vsyncpa %s1692, 1
    %1694 = vsyncpa [#allocation7], 1
    %1695 = vsyncpa [#allocation5], 1
    %s1696 = scalar_lea.sflag [#allocation5], 1
    %1697 = vsyncpa %s1696, 1

// kernel: _lambda_.31
$region0: #{_lambda_.31}
  #allocation0 [shape = 'u32[]', space=smem, size = 0x4, offset = 0x4, fixed_abs, tag = 'smem constant byte address 0x4 - core index']
  #allocation1 [shape = 'u32[144,128]{1,0:T(1,128)}', space=vmem, size = 0x12000, scoped, tag = 'internal scratch']
  #allocation2 [shape = 'f32[512,128]{1,0:T(8,128)}', space=vmem, size = 0x40000, scoped, tag = 'scratch operand']
  %s0 = inlined_call_operand.hbm [shape: bf16[8192,8], index: 0, kind: input, shape index: {}]
  %s1 = inlined_call_operand.hbm [shape: bf16[8,128], index: 1, kind: input, shape index: {}]
  %s2 = inlined_call_operand.hbm [shape: f32[1,128], index: 2, kind: input, shape index: {}]
  %s3 = inlined_call_operand.hbm [shape: f32[8192,128], index: 3, kind: output, shape index: {}]
  %s4 = sld [smem:[#allocation0]]
  $region65: #{_lambda_.31} parent=0
    _
  %s6 = ssub.s32 1, %s4
  %s7 = scalar_select 0, %s6, %s4
  $region1: #{_lambda_.31} parent=0
    #allocation3 [shape = 'u8[262144]{0}', space=vmem, size = 0x40000, scoped, tag = 'input window, operand 0']
    #allocation4 [shape = 's32[2]{0}', space=sflag, size = 0x8, scoped, tag = 'scoped memory for _lambda_.31']
    #allocation5 [shape = 's32[2]{0}', space=sflag, size = 0x8, scoped, tag = 'scoped memory for _lambda_.31']
    #allocation6 [shape = 'u8[2048]{0}', space=vmem, size = 0x800, scoped, tag = 'input window, operand 1, single buffered']
    #allocation7 [shape = 's32[1]{0}', space=sflag, size = 0x4, scoped, tag = 'scoped memory for _lambda_.31']
    #allocation8 [shape = 'u8[512]{0}', space=vmem, size = 0x400, scoped, tag = 'input window, operand 2, single buffered']
    #allocation9 [shape = 'u8[524288]{0}', space=vmem, size = 0x80000, scoped, tag = 'output window, operand 0']
    %8 = vsyncpa [#allocation4], 0
    %s9 = scalar_lea.sflag [#allocation4], 1
    %10 = vsyncpa %s9, 0
    %11 = vsyncpa [#allocation7], 0
    %12 = vsyncpa [#allocation5], 0
    %s13 = scalar_lea.sflag [#allocation5], 1
    %14 = vsyncpa %s13, 0
    loop: start=0, step=1, limit=18
    $region2: #{_lambda_.31} parent=1 // loop_pre_header
      _
    $region3: #{_lambda_.31} parent=1 // loop_header
      %s16 = sphi 0, %s20
      %p17 = scmp.ge.s32.totalorder %s16, 18
      %s23 = sphi 0, %s42
      %s24 = sphi 0, %s38
      %s25 = sphi 0, %s34
      %s26 = sphi 0, %s23
      %s27 = sphi 0, %s24
      %s28 = sphi 0, %s25
      %s29 = sphi 0, %s26
      %s30 = sphi 0, %s27
      %s31 = sphi 0, %s28
      %s47 = sphi 0, %s49
      %s50 = sphi 0, %s47
      %s51 = sphi 0, %s50
      %s67 = sphi 0, %s51
      %s75 = sphi 0, %s77
      %s78 = sphi 0, %s75
      %s79 = sphi 0, %s78
      %s95 = sphi 0, %s79
      %s101 = sphi 0, %s103
      %s104 = sphi 0, %s101
      %s105 = sphi 0, %s104
      %s121 = sphi 0, %s105
      %s129 = sphi 0, %s131
      %s132 = sphi 0, %s129
      %s133 = sphi 0, %s132
      %s149 = sphi 0, %s133
    $region4: #{_lambda_.31} parent=1 // loop_header_branch
      %19 = sbr.rel (%p17) target = $region8
    $region5: #{_lambda_.31} parent=1 // loop_body
      %s21 = ssub.s32 %s16, 1
      %s22 = ssub.s32 %s16, 2
      %s32 = sadd.s32 1, %s25
      %p33 = scmp.ge.s32.totalorder %s32, 1
      %s34 = scalar_select %p33, 0, %s32
      %s35 = sadd.s32 1, %s24
      %s36 = scalar_select %p33, %s35, %s24
      %p37 = scmp.ge.s32.totalorder %s36, 1
      %s38 = scalar_select %p37, 0, %s36
      %s39 = sadd.s32 1, %s23
      %s40 = scalar_select %p37, %s39, %s23
      %p41 = scmp.ge.s32.totalorder %s40, 16
      %s42 = scalar_select %p41, 0, %s40
      %s43 = ssub.s32 %s23, %s42
      %s44 = ssub.s32 %s25, %s34
      %s45 = sor.u32 %s43, %s44
      %p46 = scmp.eq.s32.totalorder %s45, 0
      %s48 = sadd.s32 %s47, 1
      %s49 = scalar_select %p46, %s47, %s48
      %p52 = pneg %p46
      %p53 = scmp.eq.s32.totalorder %s16, 15
      %p54 = por %p52, %p53
      %p55 = scmp.ne.s32.totalorder %s47, %s50
      %p56 = scmp.eq.s32.totalorder %s16, 0
      %p57 = por %p55, %p56
      %p58 = scmp.ne.s32.totalorder %s47, %s50
      %p59 = scmp.eq.s32.totalorder %s21, 15
      %p60 = por %p58, %p59
      %p61 = scmp.ne.s32.totalorder %s50, %s51
      %p62 = scmp.eq.s32.totalorder %s21, 0
      %p63 = por %p61, %p62
      %p64 = scmp.ne.s32.totalorder %s50, %s51
      %p65 = scmp.eq.s32.totalorder %s22, 15
      %p66 = por %p64, %p65
      %p68 = scmp.ne.s32.totalorder %s51, %s67
      %p69 = scmp.eq.s32.totalorder %s22, 0
      %p70 = por %p68, %p69
      %s71 = ssub.s32 %s25, %s34
      %s72 = ssub.s32 %s24, %s38
      %s73 = sor.u32 %s71, %s72
      %p74 = scmp.eq.s32.totalorder %s73, 0
      %s76 = sadd.s32 %s75, 1
      %s77 = scalar_select %p74, %s75, %s76
      %p80 = pneg %p74
      %p81 = scmp.eq.s32.totalorder %s16, 15
      %p82 = por %p80, %p81
      %p83 = scmp.ne.s32.totalorder %s75, %s78
      %p84 = scmp.eq.s32.totalorder %s16, 0
      %p85 = por %p83, %p84
      %p86 = scmp.ne.s32.totalorder %s75, %s78
      %p87 = scmp.eq.s32.totalorder %s21, 15
      %p88 = por %p86, %p87
      %p89 = scmp.ne.s32.totalorder %s78, %s79
      %p90 = scmp.eq.s32.totalorder %s21, 0
      %p91 = por %p89, %p90
      %p92 = scmp.ne.s32.totalorder %s78, %s79
      %p93 = scmp.eq.s32.totalorder %s22, 15
      %p94 = por %p92, %p93
      %p96 = scmp.ne.s32.totalorder %s79, %s95
      %p97 = scmp.eq.s32.totalorder %s22, 0
      %p98 = por %p96, %p97
      %s99 = ssub.s32 %s24, %s38
      %p100 = scmp.eq.s32.totalorder %s99, 0
      %s102 = sadd.s32 %s101, 1
      %s103 = scalar_select %p100, %s101, %s102
      %p106 = pneg %p100
      %p107 = scmp.eq.s32.totalorder %s16, 15
      %p108 = por %p106, %p107
      %p109 = scmp.ne.s32.totalorder %s101, %s104
      %p110 = scmp.eq.s32.totalorder %s16, 0
      %p111 = por %p109, %p110
      %p112 = scmp.ne.s32.totalorder %s101, %s104
      %p113 = scmp.eq.s32.totalorder %s21, 15
      %p114 = por %p112, %p113
      %p115 = scmp.ne.s32.totalorder %s104, %s105
      %p116 = scmp.eq.s32.totalorder %s21, 0
      %p117 = por %p115, %p116
      %p118 = scmp.ne.s32.totalorder %s104, %s105
      %p119 = scmp.eq.s32.totalorder %s22, 15
      %p120 = por %p118, %p119
      %p122 = scmp.ne.s32.totalorder %s105, %s121
      %p123 = scmp.eq.s32.totalorder %s22, 0
      %p124 = por %p122, %p123
      %s125 = ssub.s32 %s23, %s42
      %s126 = ssub.s32 %s24, %s38
      %s127 = sor.u32 %s125, %s126
      %p128 = scmp.eq.s32.totalorder %s127, 0
      %s130 = sadd.s32 %s129, 1
      %s131 = scalar_select %p128, %s129, %s130
      %p134 = pneg %p128
      %p135 = scmp.eq.s32.totalorder %s16, 15
      %p136 = por %p134, %p135
      %p137 = scmp.ne.s32.totalorder %s129, %s132
      %p138 = scmp.eq.s32.totalorder %s16, 0
      %p139 = por %p137, %p138
      %p140 = scmp.ne.s32.totalorder %s129, %s132
      %p141 = scmp.eq.s32.totalorder %s21, 15
      %p142 = por %p140, %p141
      %p143 = scmp.ne.s32.totalorder %s132, %s133
      %p144 = scmp.eq.s32.totalorder %s21, 0
      %p145 = por %p143, %p144
      %p146 = scmp.ne.s32.totalorder %s132, %s133
      %p147 = scmp.eq.s32.totalorder %s22, 15
      %p148 = por %p146, %p147
      %p150 = scmp.ne.s32.totalorder %s133, %s149
      %p151 = scmp.eq.s32.totalorder %s22, 0
      %p152 = por %p150, %p151
      %p153 = scmp.le.s32.totalorder 1, %s16
      %p154 = scmp.lt.s32.totalorder %s16, 17
      %p155 = pnand %p153, %p154
      %p156 = pneg %p155
      // Predicated region
      $region9: #{_lambda_.31} parent=5 // pred_check
        _
      $region10: #{_lambda_.31} parent=5 // pred_check_branch
        %158 = sbr.rel (%p155) target = $region12
      $region11: #{_lambda_.31} parent=5 // pred_region
        %s159 = ssub.s32 %s16, 1
        // Predicated region
        $region13: #{_lambda_.31} parent=11 // pred_check
          %p160 = pneg %p91
        $region14: #{_lambda_.31} parent=11 // pred_check_branch
          %162 = sbr.rel (%p160) target = $region16
        $region15: #{_lambda_.31} parent=11 // pred_region
          %s164 = ssub.s32 64, 64
          %165 = vsyncadd [#allocation7], %s164
          %s166 = sadd.s32 %s27, %s28
          %s167 = smul.addr %s166, 64
          %s168 = scalar_lea.hbm %s1, %s167
          %s170 = sshll.u32 [#allocation6], 4
          %s171 = int_to_ptr.vmem [resolvable:$true] %s170
          %173 = dma.hbm_to_vmem [thread:$0]  %s168, 64, %s171, [#allocation7]
        $region16: #{_lambda_.31} parent=11 // pred_fallthru
          _
        // Predicated region
        $region17: #{_lambda_.31} parent=11 // pred_check
          %p174 = pneg %p117
        $region18: #{_lambda_.31} parent=11 // pred_check_branch
          %176 = sbr.rel (%p174) target = $region20
        $region19: #{_lambda_.31} parent=11 // pred_region
          %s178 = ssub.s32 16, 16
          %179 = vsyncadd [#allocation7], %s178
          %s180 = smul.addr %s27, 16
          %s181 = scalar_lea.hbm %s2, %s180
          %s183 = sshll.u32 [#allocation8], 4
          %s184 = int_to_ptr.vmem [resolvable:$true] %s183
          %186 = dma.hbm_to_vmem [thread:$0]  %s181, 16, %s184, [#allocation7]
        $region20: #{_lambda_.31} parent=11 // pred_fallthru
          _
      $region12: #{_lambda_.31} parent=5 // pred_fallthru
        _
      %p187 = scmp.lt.s32.totalorder %s16, 16
      // Predicated region
      $region21: #{_lambda_.31} parent=5 // pred_check
        %p188 = pneg %p187
      $region22: #{_lambda_.31} parent=5 // pred_check_branch
        %190 = sbr.rel (%p188) target = $region24
      $region23: #{_lambda_.31} parent=5 // pred_region
        // Predicated region
        $region25: #{_lambda_.31} parent=23 // pred_check
          %p191 = pneg %p57
        $region26: #{_lambda_.31} parent=23 // pred_check_branch
          %193 = sbr.rel (%p191) target = $region28
        $region27: #{_lambda_.31} parent=23 // pred_region
          %s194 = sand.u32 %s47, 1
          %s195 = scalar_lea.sflag [#allocation4], %s194
          %s196 = sand.u32 %s47, 1
          %s197 = smul.addr %s196, 256
          %s198 = scalar_lea.vmem [#allocation3], %s197
          %s199 = smul.u32 64, %s23
          %s201 = ssub.s32 4096, 4096
          %202 = vsyncadd %s195, %s201
          %s203 = sadd.s32 %s25, %s199
          %s204 = smul.addr %s203, 64
          %s205 = scalar_lea.hbm %s0, %s204
          %s206 = sshll.u32 %s198, 4
          %s207 = int_to_ptr.vmem [resolvable:$true] %s206
          %212 = dma.hbm_to_vmem [thread:$0]  %s205, 4096, %s207, %s195, 64, 64, 4
        $region28: #{_lambda_.31} parent=23 // pred_fallthru
          _
      $region24: #{_lambda_.31} parent=5 // pred_fallthru
        _
      %p213 = scmp.le.s32.totalorder 1, %s16
      %p214 = scmp.lt.s32.totalorder %s16, 17
      %p215 = pnand %p213, %p214
      %p216 = pneg %p215
      // Predicated region
      $region29: #{_lambda_.31} parent=5 // pred_check
        _
      $region30: #{_lambda_.31} parent=5 // pred_check_branch
        %218 = sbr.rel (%p215) target = $region32
      $region31: #{_lambda_.31} parent=5 // pred_region
        %s219 = ssub.s32 %s16, 1
        %s220 = sand.u32 %s50, 1
        %s221 = scalar_lea.sflag [#allocation4], %s220
        %s222 = sand.u32 %s50, 1
        %s223 = smul.addr %s222, 256
        %s224 = scalar_lea.vmem [#allocation3], %s223
        // Predicated region
        $region33: #{_lambda_.31} parent=31 // pred_check
          %p225 = pneg %p63
        $region34: #{_lambda_.31} parent=31 // pred_check_branch
          %227 = sbr.rel (%p225) target = $region36
        $region35: #{_lambda_.31} parent=31 // pred_region
          %228 = dma.done %s221, 4096
        $region36: #{_lambda_.31} parent=31 // pred_fallthru
          _
        // Predicated region
        $region37: #{_lambda_.31} parent=31 // pred_check
          %p229 = pneg %p91
        $region38: #{_lambda_.31} parent=31 // pred_check_branch
          %231 = sbr.rel (%p229) target = $region40
        $region39: #{_lambda_.31} parent=31 // pred_region
          %232 = dma.done [#allocation7], 64
        $region40: #{_lambda_.31} parent=31 // pred_fallthru
          _
        // Predicated region
        $region41: #{_lambda_.31} parent=31 // pred_check
          %p233 = pneg %p117
        $region42: #{_lambda_.31} parent=31 // pred_check_branch
          %235 = sbr.rel (%p233) target = $region44
        $region43: #{_lambda_.31} parent=31 // pred_region
          %236 = dma.done [#allocation7], 16
        $region44: #{_lambda_.31} parent=31 // pred_fallthru
          _
        %s237 = sand.u32 %s50, 1
        %s238 = scalar_lea.sflag [#allocation4], %s237
        %s239 = sand.u32 %s50, 1
        %s240 = smul.addr %s239, 256
        %s241 = scalar_lea.vmem [#allocation3], %s240
        %p242 = pneg %p63
        %p243 = pneg %p60
        %p244 = pneg %p91
        %p245 = pneg %p88
        %p246 = pneg %p117
        %p247 = pneg %p114
        %p248 = pneg %p145
        %p249 = pneg %p142
        %s250 = sand.u32 %s132, 1
        %s251 = scalar_lea.sflag [#allocation5], %s250
        %s252 = sand.u32 %s132, 1
        %s253 = smul.addr %s252, 512
        %s254 = scalar_lea.vmem [#allocation9], %s253
        %s255 = smul.u32 64, %s26
        %s256 = smul.u32 64, %s26
        %p258 = scmp.eq.s32.totalorder %s28, 0
        // Predicated region
        $region45: #{_lambda_.31} parent=31 // pred_check
          %p259 = pneg %p258
        $region46: #{_lambda_.31} parent=31 // pred_check_branch
          %261 = sbr.rel (%p259) target = $region48
        $region47: #{_lambda_.31} parent=31 // pred_region
          %262 = vst [vmem:[#allocation2] sm:$0xff] 0.0
          %263 = vst [vmem:[#allocation2 + $0x8] sm:$0xff] 0.0
          %264 = vst [vmem:[#allocation2 + $0x10] sm:$0xff] 0.0
          %265 = vst [vmem:[#allocation2 + $0x18] sm:$0xff] 0.0
          %266 = vst [vmem:[#allocation2 + $0x20] sm:$0xff] 0.0
          %267 = vst [vmem:[#allocation2 + $0x28] sm:$0xff] 0.0
          %268 = vst [vmem:[#allocation2 + $0x30] sm:$0xff] 0.0
          %269 = vst [vmem:[#allocation2 + $0x38] sm:$0xff] 0.0
          %270 = vst [vmem:[#allocation2 + $0x40] sm:$0xff] 0.0
          %271 = vst [vmem:[#allocation2 + $0x48] sm:$0xff] 0.0
          %272 = vst [vmem:[#allocation2 + $0x50] sm:$0xff] 0.0
          %273 = vst [vmem:[#allocation2 + $0x58] sm:$0xff] 0.0
          %274 = vst [vmem:[#allocation2 + $0x60] sm:$0xff] 0.0
          %275 = vst [vmem:[#allocation2 + $0x68] sm:$0xff] 0.0
          %276 = vst [vmem:[#allocation2 + $0x70] sm:$0xff] 0.0
          %277 = vst [vmem:[#allocation2 + $0x78] sm:$0xff] 0.0
          %278 = vst [vmem:[#allocation2 + $0x80] sm:$0xff] 0.0
          %279 = vst [vmem:[#allocation2 + $0x88] sm:$0xff] 0.0
          %280 = vst [vmem:[#allocation2 + $0x90] sm:$0xff] 0.0
          %281 = vst [vmem:[#allocation2 + $0x98] sm:$0xff] 0.0
          %282 = vst [vmem:[#allocation2 + $0xa0] sm:$0xff] 0.0
          %283 = vst [vmem:[#allocation2 + $0xa8] sm:$0xff] 0.0
          %284 = vst [vmem:[#allocation2 + $0xb0] sm:$0xff] 0.0
          %285 = vst [vmem:[#allocation2 + $0xb8] sm:$0xff] 0.0
          %286 = vst [vmem:[#allocation2 + $0xc0] sm:$0xff] 0.0
          %287 = vst [vmem:[#allocation2 + $0xc8] sm:$0xff] 0.0
          %288 = vst [vmem:[#allocation2 + $0xd0] sm:$0xff] 0.0
          %289 = vst [vmem:[#allocation2 + $0xd8] sm:$0xff] 0.0
          %290 = vst [vmem:[#allocation2 + $0xe0] sm:$0xff] 0.0
          %291 = vst [vmem:[#allocation2 + $0xe8] sm:$0xff] 0.0
          %292 = vst [vmem:[#allocation2 + $0xf0] sm:$0xff] 0.0
          %293 = vst [vmem:[#allocation2 + $0xf8] sm:$0xff] 0.0
          %294 = vst [vmem:[#allocation2 + $0x100] sm:$0xff] 0.0
          %295 = vst [vmem:[#allocation2 + $0x108] sm:$0xff] 0.0
          %296 = vst [vmem:[#allocation2 + $0x110] sm:$0xff] 0.0
          %297 = vst [vmem:[#allocation2 + $0x118] sm:$0xff] 0.0
          %298 = vst [vmem:[#allocation2 + $0x120] sm:$0xff] 0.0
          %299 = vst [vmem:[#allocation2 + $0x128] sm:$0xff] 0.0
          %300 = vst [vmem:[#allocation2 + $0x130] sm:$0xff] 0.0
          %301 = vst [vmem:[#allocation2 + $0x138] sm:$0xff] 0.0
          %302 = vst [vmem:[#allocation2 + $0x140] sm:$0xff] 0.0
          %303 = vst [vmem:[#allocation2 + $0x148] sm:$0xff] 0.0
          %304 = vst [vmem:[#allocation2 + $0x150] sm:$0xff] 0.0
          %305 = vst [vmem:[#allocation2 + $0x158] sm:$0xff] 0.0
          %306 = vst [vmem:[#allocation2 + $0x160] sm:$0xff] 0.0
          %307 = vst [vmem:[#allocation2 + $0x168] sm:$0xff] 0.0
          %308 = vst [vmem:[#allocation2 + $0x170] sm:$0xff] 0.0
          %309 = vst [vmem:[#allocation2 + $0x178] sm:$0xff] 0.0
          %310 = vst [vmem:[#allocation2 + $0x180] sm:$0xff] 0.0
          %311 = vst [vmem:[#allocation2 + $0x188] sm:$0xff] 0.0
          %312 = vst [vmem:[#allocation2 + $0x190] sm:$0xff] 0.0
          %313 = vst [vmem:[#allocation2 + $0x198] sm:$0xff] 0.0
          %314 = vst [vmem:[#allocation2 + $0x1a0] sm:$0xff] 0.0
          %315 = vst [vmem:[#allocation2 + $0x1a8] sm:$0xff] 0.0
          %316 = vst [vmem:[#allocation2 + $0x1b0] sm:$0xff] 0.0
          %317 = vst [vmem:[#allocation2 + $0x1b8] sm:$0xff] 0.0
          %318 = vst [vmem:[#allocation2 + $0x1c0] sm:$0xff] 0.0
          %319 = vst [vmem:[#allocation2 + $0x1c8] sm:$0xff] 0.0
          %320 = vst [vmem:[#allocation2 + $0x1d0] sm:$0xff] 0.0
          %321 = vst [vmem:[#allocation2 + $0x1d8] sm:$0xff] 0.0
          %322 = vst [vmem:[#allocation2 + $0x1e0] sm:$0xff] 0.0
          %323 = vst [vmem:[#allocation2 + $0x1e8] sm:$0xff] 0.0
          %324 = vst [vmem:[#allocation2 + $0x1f0] sm:$0xff] 0.0
          %325 = vst [vmem:[#allocation2 + $0x1f8] sm:$0xff] 0.0
        $region48: #{_lambda_.31} parent=31 // pred_fallthru
          _
        %v326 = vld [vmem:[%s224] sm:$0xf]
        %v327 = vld [vmem:[%s224 + $0x4] sm:$0xf]
        %v328 = vld [vmem:[%s224 + $0x8] sm:$0xf]
        %v329 = vld [vmem:[%s224 + $0xc] sm:$0xf]
        %v330 = vld [vmem:[%s224 + $0x10] sm:$0xf]
        %v331 = vld [vmem:[%s224 + $0x14] sm:$0xf]
        %v332 = vld [vmem:[%s224 + $0x18] sm:$0xf]
        %v333 = vld [vmem:[%s224 + $0x1c] sm:$0xf]
        %v334 = vld [vmem:[%s224 + $0x20] sm:$0xf]
        %v335 = vld [vmem:[%s224 + $0x24] sm:$0xf]
        %v336 = vld [vmem:[%s224 + $0x28] sm:$0xf]
        %v337 = vld [vmem:[%s224 + $0x2c] sm:$0xf]
        %v338 = vld [vmem:[%s224 + $0x30] sm:$0xf]
        %v339 = vld [vmem:[%s224 + $0x34] sm:$0xf]
        %v340 = vld [vmem:[%s224 + $0x38] sm:$0xf]
        %v341 = vld [vmem:[%s224 + $0x3c] sm:$0xf]
        %v342 = vld [vmem:[%s224 + $0x40] sm:$0xf]
        %v343 = vld [vmem:[%s224 + $0x44] sm:$0xf]
        %v344 = vld [vmem:[%s224 + $0x48] sm:$0xf]
        %v345 = vld [vmem:[%s224 + $0x4c] sm:$0xf]
        %v346 = vld [vmem:[%s224 + $0x50] sm:$0xf]
        %v347 = vld [vmem:[%s224 + $0x54] sm:$0xf]
        %v348 = vld [vmem:[%s224 + $0x58] sm:$0xf]
        %v349 = vld [vmem:[%s224 + $0x5c] sm:$0xf]
        %v350 = vld [vmem:[%s224 + $0x60] sm:$0xf]
        %v351 = vld [vmem:[%s224 + $0x64] sm:$0xf]
        %v352 = vld [vmem:[%s224 + $0x68] sm:$0xf]
        %v353 = vld [vmem:[%s224 + $0x6c] sm:$0xf]
        %v354 = vld [vmem:[%s224 + $0x70] sm:$0xf]
        %v355 = vld [vmem:[%s224 + $0x74] sm:$0xf]
        %v356 = vld [vmem:[%s224 + $0x78] sm:$0xf]
        %v357 = vld [vmem:[%s224 + $0x7c] sm:$0xf]
        %v358 = vld [vmem:[%s224 + $0x80] sm:$0xf]
        %v359 = vld [vmem:[%s224 + $0x84] sm:$0xf]
        %v360 = vld [vmem:[%s224 + $0x88] sm:$0xf]
        %v361 = vld [vmem:[%s224 + $0x8c] sm:$0xf]
        %v362 = vld [vmem:[%s224 + $0x90] sm:$0xf]
        %v363 = vld [vmem:[%s224 + $0x94] sm:$0xf]
        %v364 = vld [vmem:[%s224 + $0x98] sm:$0xf]
        %v365 = vld [vmem:[%s224 + $0x9c] sm:$0xf]
        %v366 = vld [vmem:[%s224 + $0xa0] sm:$0xf]
        %v367 = vld [vmem:[%s224 + $0xa4] sm:$0xf]
        %v368 = vld [vmem:[%s224 + $0xa8] sm:$0xf]
        %v369 = vld [vmem:[%s224 + $0xac] sm:$0xf]
        %v370 = vld [vmem:[%s224 + $0xb0] sm:$0xf]
        %v371 = vld [vmem:[%s224 + $0xb4] sm:$0xf]
        %v372 = vld [vmem:[%s224 + $0xb8] sm:$0xf]
        %v373 = vld [vmem:[%s224 + $0xbc] sm:$0xf]
        %v374 = vld [vmem:[%s224 + $0xc0] sm:$0xf]
        %v375 = vld [vmem:[%s224 + $0xc4] sm:$0xf]
        %v376 = vld [vmem:[%s224 + $0xc8] sm:$0xf]
        %v377 = vld [vmem:[%s224 + $0xcc] sm:$0xf]
        %v378 = vld [vmem:[%s224 + $0xd0] sm:$0xf]
        %v379 = vld [vmem:[%s224 + $0xd4] sm:$0xf]
        %v380 = vld [vmem:[%s224 + $0xd8] sm:$0xf]
        %v381 = vld [vmem:[%s224 + $0xdc] sm:$0xf]
        %v382 = vld [vmem:[%s224 + $0xe0] sm:$0xf]
        %v383 = vld [vmem:[%s224 + $0xe4] sm:$0xf]
        %v384 = vld [vmem:[%s224 + $0xe8] sm:$0xf]
        %v385 = vld [vmem:[%s224 + $0xec] sm:$0xf]
        %v386 = vld [vmem:[%s224 + $0xf0] sm:$0xf]
        %v387 = vld [vmem:[%s224 + $0xf4] sm:$0xf]
        %v388 = vld [vmem:[%s224 + $0xf8] sm:$0xf]
        %v389 = vld [vmem:[%s224 + $0xfc] sm:$0xf]
        %v390 = vld [vmem:[#allocation2] sm:$0xff]
        %v391 = vld [vmem:[#allocation2 + $0x8] sm:$0xff]
        %v392 = vld [vmem:[#allocation2 + $0x10] sm:$0xff]
        %v393 = vld [vmem:[#allocation2 + $0x18] sm:$0xff]
        %v394 = vld [vmem:[#allocation2 + $0x20] sm:$0xff]
        %v395 = vld [vmem:[#allocation2 + $0x28] sm:$0xff]
        %v396 = vld [vmem:[#allocation2 + $0x30] sm:$0xff]
        %v397 = vld [vmem:[#allocation2 + $0x38] sm:$0xff]
        %v398 = vld [vmem:[#allocation2 + $0x40] sm:$0xff]
        %v399 = vld [vmem:[#allocation2 + $0x48] sm:$0xff]
        %v400 = vld [vmem:[#allocation2 + $0x50] sm:$0xff]
        %v401 = vld [vmem:[#allocation2 + $0x58] sm:$0xff]
        %v402 = vld [vmem:[#allocation2 + $0x60] sm:$0xff]
        %v403 = vld [vmem:[#allocation2 + $0x68] sm:$0xff]
        %v404 = vld [vmem:[#allocation2 + $0x70] sm:$0xff]
        %v405 = vld [vmem:[#allocation2 + $0x78] sm:$0xff]
        %v406 = vld [vmem:[#allocation2 + $0x80] sm:$0xff]
        %v407 = vld [vmem:[#allocation2 + $0x88] sm:$0xff]
        %v408 = vld [vmem:[#allocation2 + $0x90] sm:$0xff]
        %v409 = vld [vmem:[#allocation2 + $0x98] sm:$0xff]
        %v410 = vld [vmem:[#allocation2 + $0xa0] sm:$0xff]
        %v411 = vld [vmem:[#allocation2 + $0xa8] sm:$0xff]
        %v412 = vld [vmem:[#allocation2 + $0xb0] sm:$0xff]
        %v413 = vld [vmem:[#allocation2 + $0xb8] sm:$0xff]
        %v414 = vld [vmem:[#allocation2 + $0xc0] sm:$0xff]
        %v415 = vld [vmem:[#allocation2 + $0xc8] sm:$0xff]
        %v416 = vld [vmem:[#allocation2 + $0xd0] sm:$0xff]
        %v417 = vld [vmem:[#allocation2 + $0xd8] sm:$0xff]
        %v418 = vld [vmem:[#allocation2 + $0xe0] sm:$0xff]
        %v419 = vld [vmem:[#allocation2 + $0xe8] sm:$0xff]
        %v420 = vld [vmem:[#allocation2 + $0xf0] sm:$0xff]
        %v421 = vld [vmem:[#allocation2 + $0xf8] sm:$0xff]
        %v422 = vld [vmem:[#allocation2 + $0x100] sm:$0xff]
        %v423 = vld [vmem:[#allocation2 + $0x108] sm:$0xff]
        %v424 = vld [vmem:[#allocation2 + $0x110] sm:$0xff]
        %v425 = vld [vmem:[#allocation2 + $0x118] sm:$0xff]
        %v426 = vld [vmem:[#allocation2 + $0x120] sm:$0xff]
        %v427 = vld [vmem:[#allocation2 + $0x128] sm:$0xff]
        %v428 = vld [vmem:[#allocation2 + $0x130] sm:$0xff]
        %v429 = vld [vmem:[#allocation2 + $0x138] sm:$0xff]
        %v430 = vld [vmem:[#allocation2 + $0x140] sm:$0xff]
        %v431 = vld [vmem:[#allocation2 + $0x148] sm:$0xff]
        %v432 = vld [vmem:[#allocation2 + $0x150] sm:$0xff]
        %v433 = vld [vmem:[#allocation2 + $0x158] sm:$0xff]
        %v434 = vld [vmem:[#allocation2 + $0x160] sm:$0xff]
        %v435 = vld [vmem:[#allocation2 + $0x168] sm:$0xff]
        %v436 = vld [vmem:[#allocation2 + $0x170] sm:$0xff]
        %v437 = vld [vmem:[#allocation2 + $0x178] sm:$0xff]
        %v438 = vld [vmem:[#allocation2 + $0x180] sm:$0xff]
        %v439 = vld [vmem:[#allocation2 + $0x188] sm:$0xff]
        %v440 = vld [vmem:[#allocation2 + $0x190] sm:$0xff]
        %v441 = vld [vmem:[#allocation2 + $0x198] sm:$0xff]
        %v442 = vld [vmem:[#allocation2 + $0x1a0] sm:$0xff]
        %v443 = vld [vmem:[#allocation2 + $0x1a8] sm:$0xff]
        %v444 = vld [vmem:[#allocation2 + $0x1b0] sm:$0xff]
        %v445 = vld [vmem:[#allocation2 + $0x1b8] sm:$0xff]
        %v446 = vld [vmem:[#allocation2 + $0x1c0] sm:$0xff]
        %v447 = vld [vmem:[#allocation2 + $0x1c8] sm:$0xff]
        %v448 = vld [vmem:[#allocation2 + $0x1d0] sm:$0xff]
        %v449 = vld [vmem:[#allocation2 + $0x1d8] sm:$0xff]
        %v450 = vld [vmem:[#allocation2 + $0x1e0] sm:$0xff]
        %v451 = vld [vmem:[#allocation2 + $0x1e8] sm:$0xff]
        %v452 = vld [vmem:[#allocation2 + $0x1f0] sm:$0xff]
        %v453 = vld [vmem:[#allocation2 + $0x1f8] sm:$0xff]
        %v454 = vld [vmem:[#allocation6] sm:$0xf]
        %v519 = vunpack.c.l.b16 %v326
        %v520 = vunpack.c.l.b16 %v327
        %v521 = vunpack.c.l.b16 %v328
        %v522 = vunpack.c.l.b16 %v329
        %v523 = vunpack.c.l.b16 %v330
        %v524 = vunpack.c.l.b16 %v331
        %v525 = vunpack.c.l.b16 %v332
        %v526 = vunpack.c.l.b16 %v333
        %v527 = vunpack.c.l.b16 %v334
        %v528 = vunpack.c.l.b16 %v335
        %v529 = vunpack.c.l.b16 %v336
        %v530 = vunpack.c.l.b16 %v337
        %v531 = vunpack.c.l.b16 %v338
        %v532 = vunpack.c.l.b16 %v339
        %v533 = vunpack.c.l.b16 %v340
        %v534 = vunpack.c.l.b16 %v341
        %v535 = vunpack.c.l.b16 %v342
        %v536 = vunpack.c.l.b16 %v343
        %v537 = vunpack.c.l.b16 %v344
        %v538 = vunpack.c.l.b16 %v345
        %v539 = vunpack.c.l.b16 %v346
        %v540 = vunpack.c.l.b16 %v347
        %v541 = vunpack.c.l.b16 %v348
        %v542 = vunpack.c.l.b16 %v349
        %v543 = vunpack.c.l.b16 %v350
        %v544 = vunpack.c.l.b16 %v351
        %v545 = vunpack.c.l.b16 %v352
        %v546 = vunpack.c.l.b16 %v353
        %v547 = vunpack.c.l.b16 %v354
        %v548 = vunpack.c.l.b16 %v355
        %v549 = vunpack.c.l.b16 %v356
        %v550 = vunpack.c.l.b16 %v357
        %v551 = vunpack.c.l.b16 %v358
        %v552 = vunpack.c.l.b16 %v359
        %v553 = vunpack.c.l.b16 %v360
        %v554 = vunpack.c.l.b16 %v361
        %v555 = vunpack.c.l.b16 %v362
        %v556 = vunpack.c.l.b16 %v363
        %v557 = vunpack.c.l.b16 %v364
        %v558 = vunpack.c.l.b16 %v365
        %v559 = vunpack.c.l.b16 %v366
        %v560 = vunpack.c.l.b16 %v367
        %v561 = vunpack.c.l.b16 %v368
        %v562 = vunpack.c.l.b16 %v369
        %v563 = vunpack.c.l.b16 %v370
        %v564 = vunpack.c.l.b16 %v371
        %v565 = vunpack.c.l.b16 %v372
        %v566 = vunpack.c.l.b16 %v373
        %v567 = vunpack.c.l.b16 %v374
        %v568 = vunpack.c.l.b16 %v375
        %v569 = vunpack.c.l.b16 %v376
        %v570 = vunpack.c.l.b16 %v377
        %v571 = vunpack.c.l.b16 %v378
        %v572 = vunpack.c.l.b16 %v379
        %v573 = vunpack.c.l.b16 %v380
        %v574 = vunpack.c.l.b16 %v381
        %v575 = vunpack.c.l.b16 %v382
        %v576 = vunpack.c.l.b16 %v383
        %v577 = vunpack.c.l.b16 %v384
        %v578 = vunpack.c.l.b16 %v385
        %v579 = vunpack.c.l.b16 %v386
        %v580 = vunpack.c.l.b16 %v387
        %v581 = vunpack.c.l.b16 %v388
        %v582 = vunpack.c.l.b16 %v389
        %v583 = vpack.c.b16 %v520, %v519
        %v584 = vpack.c.b16 %v522, %v521
        %v585 = vpack.c.b16 %v524, %v523
        %v586 = vpack.c.b16 %v526, %v525
        %v587 = vpack.c.b16 %v528, %v527
        %v588 = vpack.c.b16 %v530, %v529
        %v589 = vpack.c.b16 %v532, %v531
        %v590 = vpack.c.b16 %v534, %v533
        %v591 = vpack.c.b16 %v536, %v535
        %v592 = vpack.c.b16 %v538, %v537
        %v593 = vpack.c.b16 %v540, %v539
        %v594 = vpack.c.b16 %v542, %v541
        %v595 = vpack.c.b16 %v544, %v543
        %v596 = vpack.c.b16 %v546, %v545
        %v597 = vpack.c.b16 %v548, %v547
        %v598 = vpack.c.b16 %v550, %v549
        %v599 = vpack.c.b16 %v552, %v551
        %v600 = vpack.c.b16 %v554, %v553
        %v601 = vpack.c.b16 %v556, %v555
        %v602 = vpack.c.b16 %v558, %v557
        %v603 = vpack.c.b16 %v560, %v559
        %v604 = vpack.c.b16 %v562, %v561
        %v605 = vpack.c.b16 %v564, %v563
        %v606 = vpack.c.b16 %v566, %v565
        %v607 = vpack.c.b16 %v568, %v567
        %v608 = vpack.c.b16 %v570, %v569
        %v609 = vpack.c.b16 %v572, %v571
        %v610 = vpack.c.b16 %v574, %v573
        %v611 = vpack.c.b16 %v576, %v575
        %v612 = vpack.c.b16 %v578, %v577
        %v613 = vpack.c.b16 %v580, %v579
        %v614 = vpack.c.b16 %v582, %v581
        %vm615 = vcmask 64512
        %v617 = vsel %vm615, %v583, 0
        %v620 = vsel %vm615, %v584, 0
        %v623 = vsel %vm615, %v585, 0
        %v626 = vsel %vm615, %v586, 0
        %v629 = vsel %vm615, %v587, 0
        %v632 = vsel %vm615, %v588, 0
        %v635 = vsel %vm615, %v589, 0
        %v638 = vsel %vm615, %v590, 0
        %v641 = vsel %vm615, %v591, 0
        %v644 = vsel %vm615, %v592, 0
        %v647 = vsel %vm615, %v593, 0
        %v650 = vsel %vm615, %v594, 0
        %v653 = vsel %vm615, %v595, 0
        %v656 = vsel %vm615, %v596, 0
        %v659 = vsel %vm615, %v597, 0
        %v662 = vsel %vm615, %v598, 0
        %v665 = vsel %vm615, %v599, 0
        %v668 = vsel %vm615, %v600, 0
        %v671 = vsel %vm615, %v601, 0
        %v674 = vsel %vm615, %v602, 0
        %v677 = vsel %vm615, %v603, 0
        %v680 = vsel %vm615, %v604, 0
        %v683 = vsel %vm615, %v605, 0
        %v686 = vsel %vm615, %v606, 0
        %v689 = vsel %vm615, %v607, 0
        %v692 = vsel %vm615, %v608, 0
        %v695 = vsel %vm615, %v609, 0
        %v698 = vsel %vm615, %v610, 0
        %v701 = vsel %vm615, %v611, 0
        %v704 = vsel %vm615, %v612, 0
        %v707 = vsel %vm615, %v613, 0
        %v710 = vsel %vm615, %v614, 0
        %vm712 = vcmask 1043456
        %v714 = vsel %vm712, %v454, 0
        %716 = vmatprep.subr.bf16.mxu0 0
        %717 = vmatpush1.bf16.msra.mxu0 %v714
        %718 = vmatprep.subr.bf16.mxu0 0
        %719 = vmatpush1.bf16.msra.mxu0 0
        %720 = vmatprep.subr.bf16.mxu0 0
        %721 = vmatpush1.bf16.msra.mxu0 0
        %722 = vmatprep.subr.bf16.mxu0 0
        %723 = vmatpush1.bf16.msra.mxu0 0
        %724 = vmatprep.subr.bf16.mxu0 0
        %725 = vmatpush1.bf16.msra.mxu0 0
        %726 = vmatprep.subr.bf16.mxu0 0
        %727 = vmatpush1.bf16.msra.mxu0 0
        %728 = vmatprep.subr.bf16.mxu0 0
        %729 = vmatpush1.bf16.msra.mxu0 0
        %730 = vmatprep.subr.bf16.mxu0 0
        %731 = vmatpush1.bf16.msra.mxu0 0
        %732 = vmatprep.subr.bf16.mxu0 0
        %733 = vmatpush1.bf16.msra.mxu0 0
        %734 = vmatprep.subr.bf16.mxu0 0
        %735 = vmatpush1.bf16.msra.mxu0 0
        %736 = vmatprep.subr.bf16.mxu0 0
        %737 = vmatpush1.bf16.msra.mxu0 0
        %738 = vmatprep.subr.bf16.mxu0 0
        %739 = vmatpush1.bf16.msra.mxu0 0
        %740 = vmatprep.subr.bf16.mxu0 0
        %741 = vmatpush1.bf16.msra.mxu0 0
        %742 = vmatprep.subr.bf16.mxu0 0
        %743 = vmatpush1.bf16.msra.mxu0 0
        %744 = vmatprep.subr.bf16.mxu0 0
        %745 = vmatpush1.bf16.msra.mxu0 0
        %746 = vmatprep.subr.bf16.mxu0 0
        %747 = vmatpush1.bf16.msra.mxu0 0
        %748 = vmatprep.mubr.bf16.mxu0 0
        %749 = vmatmul.mubr.bf16.gmra.mrb[0].mxu0 %v617
        %v750 = vpop.f32.mrb[0].mxu0
        %v751 = vadd.f32 0.0, %v750
        %v752 = vpop.f32.mrb[0].mxu0
        %v753 = vpop.f32.mrb[0].mxu0
        %v754 = vadd.f32 0.0, %v753
        %v755 = vpop.f32.mrb[0].mxu0
        %756 = vmatprep.mubr.bf16.mxu0 0
        %757 = vmatmul.mubr.bf16.gmra.mrb[0].mxu0 %v620
        %v758 = vpop.f32.mrb[0].mxu0
        %v759 = vadd.f32 0.0, %v758
        %v760 = vpop.f32.mrb[0].mxu0
        %v761 = vpop.f32.mrb[0].mxu0
        %v762 = vadd.f32 0.0, %v761
        %v763 = vpop.f32.mrb[0].mxu0
        %764 = vmatprep.mubr.bf16.mxu0 0
        %765 = vmatmul.mubr.bf16.gmra.mrb[0].mxu0 %v623
        %v766 = vpop.f32.mrb[0].mxu0
        %v767 = vadd.f32 0.0, %v766
        %v768 = vpop.f32.mrb[0].mxu0
        %v769 = vpop.f32.mrb[0].mxu0
        %v770 = vadd.f32 0.0, %v769
        %v771 = vpop.f32.mrb[0].mxu0
        %772 = vmatprep.mubr.bf16.mxu0 0
        %773 = vmatmul.mubr.bf16.gmra.mrb[0].mxu0 %v626
        %v774 = vpop.f32.mrb[0].mxu0
        %v775 = vadd.f32 0.0, %v774
        %v776 = vpop.f32.mrb[0].mxu0
        %v777 = vpop.f32.mrb[0].mxu0
        %v778 = vadd.f32 0.0, %v777
        %v779 = vpop.f32.mrb[0].mxu0
        %780 = vmatprep.mubr.bf16.mxu0 0
        %781 = vmatmul.mubr.bf16.gmra.mrb[0].mxu0 %v629
        %v782 = vpop.f32.mrb[0].mxu0
        %v783 = vadd.f32 0.0, %v782
        %v784 = vpop.f32.mrb[0].mxu0
        %v785 = vpop.f32.mrb[0].mxu0
        %v786 = vadd.f32 0.0, %v785
        %v787 = vpop.f32.mrb[0].mxu0
        %788 = vmatprep.mubr.bf16.mxu0 0
        %789 = vmatmul.mubr.bf16.gmra.mrb[0].mxu0 %v632
        %v790 = vpop.f32.mrb[0].mxu0
        %v791 = vadd.f32 0.0, %v790
        %v792 = vpop.f32.mrb[0].mxu0
        %v793 = vpop.f32.mrb[0].mxu0
        %v794 = vadd.f32 0.0, %v793
        %v795 = vpop.f32.mrb[0].mxu0
        %796 = vmatprep.mubr.bf16.mxu0 0
        %797 = vmatmul.mubr.bf16.gmra.mrb[0].mxu0 %v635
        %v798 = vpop.f32.mrb[0].mxu0
        %v799 = vadd.f32 0.0, %v798
        %v800 = vpop.f32.mrb[0].mxu0
        %v801 = vpop.f32.mrb[0].mxu0
        %v802 = vadd.f32 0.0, %v801
        %v803 = vpop.f32.mrb[0].mxu0
        %804 = vmatprep.mubr.bf16.mxu0 0
        %805 = vmatmul.mubr.bf16.gmra.mrb[0].mxu0 %v638
        %v806 = vpop.f32.mrb[0].mxu0
        %v807 = vadd.f32 0.0, %v806
        %v808 = vpop.f32.mrb[0].mxu0
        %v809 = vpop.f32.mrb[0].mxu0
        %v810 = vadd.f32 0.0, %v809
        %v811 = vpop.f32.mrb[0].mxu0
        %812 = vmatprep.mubr.bf16.mxu0 0
        %813 = vmatmul.mubr.bf16.gmra.mrb[0].mxu0 %v641
        %v814 = vpop.f32.mrb[0].mxu0
        %v815 = vadd.f32 0.0, %v814
        %v816 = vpop.f32.mrb[0].mxu0
        %v817 = vpop.f32.mrb[0].mxu0
        %v818 = vadd.f32 0.0, %v817
        %v819 = vpop.f32.mrb[0].mxu0
        %820 = vmatprep.mubr.bf16.mxu0 0
        %821 = vmatmul.mubr.bf16.gmra.mrb[0].mxu0 %v644
        %v822 = vpop.f32.mrb[0].mxu0
        %v823 = vadd.f32 0.0, %v822
        %v824 = vpop.f32.mrb[0].mxu0
        %v825 = vpop.f32.mrb[0].mxu0
        %v826 = vadd.f32 0.0, %v825
        %v827 = vpop.f32.mrb[0].mxu0
        %828 = vmatprep.mubr.bf16.mxu0 0
        %829 = vmatmul.mubr.bf16.gmra.mrb[0].mxu0 %v647
        %v830 = vpop.f32.mrb[0].mxu0
        %v831 = vadd.f32 0.0, %v830
        %v832 = vpop.f32.mrb[0].mxu0
        %v833 = vpop.f32.mrb[0].mxu0
        %v834 = vadd.f32 0.0, %v833
        %v835 = vpop.f32.mrb[0].mxu0
        %836 = vmatprep.mubr.bf16.mxu0 0
        %837 = vmatmul.mubr.bf16.gmra.mrb[0].mxu0 %v650
        %v838 = vpop.f32.mrb[0].mxu0
        %v839 = vadd.f32 0.0, %v838
        %v840 = vpop.f32.mrb[0].mxu0
        %v841 = vpop.f32.mrb[0].mxu0
        %v842 = vadd.f32 0.0, %v841
        %v843 = vpop.f32.mrb[0].mxu0
        %844 = vmatprep.mubr.bf16.mxu0 0
        %845 = vmatmul.mubr.bf16.gmra.mrb[0].mxu0 %v653
        %v846 = vpop.f32.mrb[0].mxu0
        %v847 = vadd.f32 0.0, %v846
        %v848 = vpop.f32.mrb[0].mxu0
        %v849 = vpop.f32.mrb[0].mxu0
        %v850 = vadd.f32 0.0, %v849
        %v851 = vpop.f32.mrb[0].mxu0
        %852 = vmatprep.mubr.bf16.mxu0 0
        %853 = vmatmul.mubr.bf16.gmra.mrb[0].mxu0 %v656
        %v854 = vpop.f32.mrb[0].mxu0
        %v855 = vadd.f32 0.0, %v854
        %v856 = vpop.f32.mrb[0].mxu0
        %v857 = vpop.f32.mrb[0].mxu0
        %v858 = vadd.f32 0.0, %v857
        %v859 = vpop.f32.mrb[0].mxu0
        %860 = vmatprep.mubr.bf16.mxu0 0
        %861 = vmatmul.mubr.bf16.gmra.mrb[0].mxu0 %v659
        %v862 = vpop.f32.mrb[0].mxu0
        %v863 = vadd.f32 0.0, %v862
        %v864 = vpop.f32.mrb[0].mxu0
        %v865 = vpop.f32.mrb[0].mxu0
        %v866 = vadd.f32 0.0, %v865
        %v867 = vpop.f32.mrb[0].mxu0
        %868 = vmatprep.mubr.bf16.mxu0 0
        %869 = vmatmul.mubr.bf16.gmra.mrb[0].mxu0 %v662
        %v870 = vpop.f32.mrb[0].mxu0
        %v871 = vadd.f32 0.0, %v870
        %v872 = vpop.f32.mrb[0].mxu0
        %v873 = vpop.f32.mrb[0].mxu0
        %v874 = vadd.f32 0.0, %v873
        %v875 = vpop.f32.mrb[0].mxu0
        %876 = vmatprep.mubr.bf16.mxu0 0
        %877 = vmatmul.mubr.bf16.gmra.mrb[0].mxu0 %v665
        %v878 = vpop.f32.mrb[0].mxu0
        %v879 = vadd.f32 0.0, %v878
        %v880 = vpop.f32.mrb[0].mxu0
        %v881 = vpop.f32.mrb[0].mxu0
        %v882 = vadd.f32 0.0, %v881
        %v883 = vpop.f32.mrb[0].mxu0
        %884 = vmatprep.mubr.bf16.mxu0 0
        %885 = vmatmul.mubr.bf16.gmra.mrb[0].mxu0 %v668
        %v886 = vpop.f32.mrb[0].mxu0
        %v887 = vadd.f32 0.0, %v886
        %v888 = vpop.f32.mrb[0].mxu0
        %v889 = vpop.f32.mrb[0].mxu0
        %v890 = vadd.f32 0.0, %v889
        %v891 = vpop.f32.mrb[0].mxu0
        %892 = vmatprep.mubr.bf16.mxu0 0
        %893 = vmatmul.mubr.bf16.gmra.mrb[0].mxu0 %v671
        %v894 = vpop.f32.mrb[0].mxu0
        %v895 = vadd.f32 0.0, %v894
        %v896 = vpop.f32.mrb[0].mxu0
        %v897 = vpop.f32.mrb[0].mxu0
        %v898 = vadd.f32 0.0, %v897
        %v899 = vpop.f32.mrb[0].mxu0
        %900 = vmatprep.mubr.bf16.mxu0 0
        %901 = vmatmul.mubr.bf16.gmra.mrb[0].mxu0 %v674
        %v902 = vpop.f32.mrb[0].mxu0
        %v903 = vadd.f32 0.0, %v902
        %v904 = vpop.f32.mrb[0].mxu0
        %v905 = vpop.f32.mrb[0].mxu0
        %v906 = vadd.f32 0.0, %v905
        %v907 = vpop.f32.mrb[0].mxu0
        %908 = vmatprep.mubr.bf16.mxu0 0
        %909 = vmatmul.mubr.bf16.gmra.mrb[0].mxu0 %v677
        %v910 = vpop.f32.mrb[0].mxu0
        %v911 = vadd.f32 0.0, %v910
        %v912 = vpop.f32.mrb[0].mxu0
        %v913 = vpop.f32.mrb[0].mxu0
        %v914 = vadd.f32 0.0, %v913
        %v915 = vpop.f32.mrb[0].mxu0
        %916 = vmatprep.mubr.bf16.mxu0 0
        %917 = vmatmul.mubr.bf16.gmra.mrb[0].mxu0 %v680
        %v918 = vpop.f32.mrb[0].mxu0
        %v919 = vadd.f32 0.0, %v918
        %v920 = vpop.f32.mrb[0].mxu0
        %v921 = vpop.f32.mrb[0].mxu0
        %v922 = vadd.f32 0.0, %v921
        %v923 = vpop.f32.mrb[0].mxu0
        %924 = vmatprep.mubr.bf16.mxu0 0
        %925 = vmatmul.mubr.bf16.gmra.mrb[0].mxu0 %v683
        %v926 = vpop.f32.mrb[0].mxu0
        %v927 = vadd.f32 0.0, %v926
        %v928 = vpop.f32.mrb[0].mxu0
        %v929 = vpop.f32.mrb[0].mxu0
        %v930 = vadd.f32 0.0, %v929
        %v931 = vpop.f32.mrb[0].mxu0
        %932 = vmatprep.mubr.bf16.mxu0 0
        %933 = vmatmul.mubr.bf16.gmra.mrb[0].mxu0 %v686
        %v934 = vpop.f32.mrb[0].mxu0
        %v935 = vadd.f32 0.0, %v934
        %v936 = vpop.f32.mrb[0].mxu0
        %v937 = vpop.f32.mrb[0].mxu0
        %v938 = vadd.f32 0.0, %v937
        %v939 = vpop.f32.mrb[0].mxu0
        %940 = vmatprep.mubr.bf16.mxu0 0
        %941 = vmatmul.mubr.bf16.gmra.mrb[0].mxu0 %v689
        %v942 = vpop.f32.mrb[0].mxu0
        %v943 = vadd.f32 0.0, %v942
        %v944 = vpop.f32.mrb[0].mxu0
        %v945 = vpop.f32.mrb[0].mxu0
        %v946 = vadd.f32 0.0, %v945
        %v947 = vpop.f32.mrb[0].mxu0
        %948 = vmatprep.mubr.bf16.mxu0 0
        %949 = vmatmul.mubr.bf16.gmra.mrb[0].mxu0 %v692
        %v950 = vpop.f32.mrb[0].mxu0
        %v951 = vadd.f32 0.0, %v950
        %v952 = vpop.f32.mrb[0].mxu0
        %v953 = vpop.f32.mrb[0].mxu0
        %v954 = vadd.f32 0.0, %v953
        %v955 = vpop.f32.mrb[0].mxu0
        %956 = vmatprep.mubr.bf16.mxu0 0
        %957 = vmatmul.mubr.bf16.gmra.mrb[0].mxu0 %v695
        %v958 = vpop.f32.mrb[0].mxu0
        %v959 = vadd.f32 0.0, %v958
        %v960 = vpop.f32.mrb[0].mxu0
        %v961 = vpop.f32.mrb[0].mxu0
        %v962 = vadd.f32 0.0, %v961
        %v963 = vpop.f32.mrb[0].mxu0
        %964 = vmatprep.mubr.bf16.mxu0 0
        %965 = vmatmul.mubr.bf16.gmra.mrb[0].mxu0 %v698
        %v966 = vpop.f32.mrb[0].mxu0
        %v967 = vadd.f32 0.0, %v966
        %v968 = vpop.f32.mrb[0].mxu0
        %v969 = vpop.f32.mrb[0].mxu0
        %v970 = vadd.f32 0.0, %v969
        %v971 = vpop.f32.mrb[0].mxu0
        %972 = vmatprep.mubr.bf16.mxu0 0
        %973 = vmatmul.mubr.bf16.gmra.mrb[0].mxu0 %v701
        %v974 = vpop.f32.mrb[0].mxu0
        %v975 = vadd.f32 0.0, %v974
        %v976 = vpop.f32.mrb[0].mxu0
        %v977 = vpop.f32.mrb[0].mxu0
        %v978 = vadd.f32 0.0, %v977
        %v979 = vpop.f32.mrb[0].mxu0
        %980 = vmatprep.mubr.bf16.mxu0 0
        %981 = vmatmul.mubr.bf16.gmra.mrb[0].mxu0 %v704
        %v982 = vpop.f32.mrb[0].mxu0
        %v983 = vadd.f32 0.0, %v982
        %v984 = vpop.f32.mrb[0].mxu0
        %v985 = vpop.f32.mrb[0].mxu0
        %v986 = vadd.f32 0.0, %v985
        %v987 = vpop.f32.mrb[0].mxu0
        %988 = vmatprep.mubr.bf16.mxu0 0
        %989 = vmatmul.mubr.bf16.gmra.mrb[0].mxu0 %v707
        %v990 = vpop.f32.mrb[0].mxu0
        %v991 = vadd.f32 0.0, %v990
        %v992 = vpop.f32.mrb[0].mxu0
        %v993 = vpop.f32.mrb[0].mxu0
        %v994 = vadd.f32 0.0, %v993
        %v995 = vpop.f32.mrb[0].mxu0
        %996 = vmatprep.mubr.bf16.mxu0 0
        %997 = vmatmul.mubr.bf16.gmra.mrb[0].mxu0 %v710
        %v998 = vpop.f32.mrb[0].mxu0
        %v999 = vadd.f32 0.0, %v998
        %v1000 = vpop.f32.mrb[0].mxu0
        %v1001 = vpop.f32.mrb[0].mxu0
        %v1002 = vadd.f32 0.0, %v1001
        %v1003 = vpop.f32.mrb[0].mxu0
        %1004 = vdwg.mxu0
        %v1005 = vadd.f32 %v390, %v751
        %v1006 = vadd.f32 %v391, %v754
        %v1007 = vadd.f32 %v392, %v759
        %v1008 = vadd.f32 %v393, %v762
        %v1009 = vadd.f32 %v394, %v767
        %v1010 = vadd.f32 %v395, %v770
        %v1011 = vadd.f32 %v396, %v775
        %v1012 = vadd.f32 %v397, %v778
        %v1013 = vadd.f32 %v398, %v783
        %v1014 = vadd.f32 %v399, %v786
        %v1015 = vadd.f32 %v400, %v791
        %v1016 = vadd.f32 %v401, %v794
        %v1017 = vadd.f32 %v402, %v799
        %v1018 = vadd.f32 %v403, %v802
        %v1019 = vadd.f32 %v404, %v807
        %v1020 = vadd.f32 %v405, %v810
        %v1021 = vadd.f32 %v406, %v815
        %v1022 = vadd.f32 %v407, %v818
        %v1023 = vadd.f32 %v408, %v823
        %v1024 = vadd.f32 %v409, %v826
        %v1025 = vadd.f32 %v410, %v831
        %v1026 = vadd.f32 %v411, %v834
        %v1027 = vadd.f32 %v412, %v839
        %v1028 = vadd.f32 %v413, %v842
        %v1029 = vadd.f32 %v414, %v847
        %v1030 = vadd.f32 %v415, %v850
        %v1031 = vadd.f32 %v416, %v855
        %v1032 = vadd.f32 %v417, %v858
        %v1033 = vadd.f32 %v418, %v863
        %v1034 = vadd.f32 %v419, %v866
        %v1035 = vadd.f32 %v420, %v871
        %v1036 = vadd.f32 %v421, %v874
        %v1037 = vadd.f32 %v422, %v879
        %v1038 = vadd.f32 %v423, %v882
        %v1039 = vadd.f32 %v424, %v887
        %v1040 = vadd.f32 %v425, %v890
        %v1041 = vadd.f32 %v426, %v895
        %v1042 = vadd.f32 %v427, %v898
        %v1043 = vadd.f32 %v428, %v903
        %v1044 = vadd.f32 %v429, %v906
        %v1045 = vadd.f32 %v430, %v911
        %v1046 = vadd.f32 %v431, %v914
        %v1047 = vadd.f32 %v432, %v919
        %v1048 = vadd.f32 %v433, %v922
        %v1049 = vadd.f32 %v434, %v927
        %v1050 = vadd.f32 %v435, %v930
        %v1051 = vadd.f32 %v436, %v935
        %v1052 = vadd.f32 %v437, %v938
        %v1053 = vadd.f32 %v438, %v943
        %v1054 = vadd.f32 %v439, %v946
        %v1055 = vadd.f32 %v440, %v951
        %v1056 = vadd.f32 %v441, %v954
        %v1057 = vadd.f32 %v442, %v959
        %v1058 = vadd.f32 %v443, %v962
        %v1059 = vadd.f32 %v444, %v967
        %v1060 = vadd.f32 %v445, %v970
        %v1061 = vadd.f32 %v446, %v975
        %v1062 = vadd.f32 %v447, %v978
        %v1063 = vadd.f32 %v448, %v983
        %v1064 = vadd.f32 %v449, %v986
        %v1065 = vadd.f32 %v450, %v991
        %v1066 = vadd.f32 %v451, %v994
        %v1067 = vadd.f32 %v452, %v999
        %v1068 = vadd.f32 %v453, %v1002
        %1069 = vst [vmem:[#allocation2] sm:$0xff] %v1005
        %1070 = vst [vmem:[#allocation2 + $0x8] sm:$0xff] %v1006
        %1071 = vst [vmem:[#allocation2 + $0x10] sm:$0xff] %v1007
        %1072 = vst [vmem:[#allocation2 + $0x18] sm:$0xff] %v1008
        %1073 = vst [vmem:[#allocation2 + $0x20] sm:$0xff] %v1009
        %1074 = vst [vmem:[#allocation2 + $0x28] sm:$0xff] %v1010
        %1075 = vst [vmem:[#allocation2 + $0x30] sm:$0xff] %v1011
        %1076 = vst [vmem:[#allocation2 + $0x38] sm:$0xff] %v1012
        %1077 = vst [vmem:[#allocation2 + $0x40] sm:$0xff] %v1013
        %1078 = vst [vmem:[#allocation2 + $0x48] sm:$0xff] %v1014
        %1079 = vst [vmem:[#allocation2 + $0x50] sm:$0xff] %v1015
        %1080 = vst [vmem:[#allocation2 + $0x58] sm:$0xff] %v1016
        %1081 = vst [vmem:[#allocation2 + $0x60] sm:$0xff] %v1017
        %1082 = vst [vmem:[#allocation2 + $0x68] sm:$0xff] %v1018
        %1083 = vst [vmem:[#allocation2 + $0x70] sm:$0xff] %v1019
        %1084 = vst [vmem:[#allocation2 + $0x78] sm:$0xff] %v1020
        %1085 = vst [vmem:[#allocation2 + $0x80] sm:$0xff] %v1021
        %1086 = vst [vmem:[#allocation2 + $0x88] sm:$0xff] %v1022
        %1087 = vst [vmem:[#allocation2 + $0x90] sm:$0xff] %v1023
        %1088 = vst [vmem:[#allocation2 + $0x98] sm:$0xff] %v1024
        %1089 = vst [vmem:[#allocation2 + $0xa0] sm:$0xff] %v1025
        %1090 = vst [vmem:[#allocation2 + $0xa8] sm:$0xff] %v1026
        %1091 = vst [vmem:[#allocation2 + $0xb0] sm:$0xff] %v1027
        %1092 = vst [vmem:[#allocation2 + $0xb8] sm:$0xff] %v1028
        %1093 = vst [vmem:[#allocation2 + $0xc0] sm:$0xff] %v1029
        %1094 = vst [vmem:[#allocation2 + $0xc8] sm:$0xff] %v1030
        %1095 = vst [vmem:[#allocation2 + $0xd0] sm:$0xff] %v1031
        %1096 = vst [vmem:[#allocation2 + $0xd8] sm:$0xff] %v1032
        %1097 = vst [vmem:[#allocation2 + $0xe0] sm:$0xff] %v1033
        %1098 = vst [vmem:[#allocation2 + $0xe8] sm:$0xff] %v1034
        %1099 = vst [vmem:[#allocation2 + $0xf0] sm:$0xff] %v1035
        %1100 = vst [vmem:[#allocation2 + $0xf8] sm:$0xff] %v1036
        %1101 = vst [vmem:[#allocation2 + $0x100] sm:$0xff] %v1037
        %1102 = vst [vmem:[#allocation2 + $0x108] sm:$0xff] %v1038
        %1103 = vst [vmem:[#allocation2 + $0x110] sm:$0xff] %v1039
        %1104 = vst [vmem:[#allocation2 + $0x118] sm:$0xff] %v1040
        %1105 = vst [vmem:[#allocation2 + $0x120] sm:$0xff] %v1041
        %1106 = vst [vmem:[#allocation2 + $0x128] sm:$0xff] %v1042
        %1107 = vst [vmem:[#allocation2 + $0x130] sm:$0xff] %v1043
        %1108 = vst [vmem:[#allocation2 + $0x138] sm:$0xff] %v1044
        %1109 = vst [vmem:[#allocation2 + $0x140] sm:$0xff] %v1045
        %1110 = vst [vmem:[#allocation2 + $0x148] sm:$0xff] %v1046
        %1111 = vst [vmem:[#allocation2 + $0x150] sm:$0xff] %v1047
        %1112 = vst [vmem:[#allocation2 + $0x158] sm:$0xff] %v1048
        %1113 = vst [vmem:[#allocation2 + $0x160] sm:$0xff] %v1049
        %1114 = vst [vmem:[#allocation2 + $0x168] sm:$0xff] %v1050
        %1115 = vst [vmem:[#allocation2 + $0x170] sm:$0xff] %v1051
        %1116 = vst [vmem:[#allocation2 + $0x178] sm:$0xff] %v1052
        %1117 = vst [vmem:[#allocation2 + $0x180] sm:$0xff] %v1053
        %1118 = vst [vmem:[#allocation2 + $0x188] sm:$0xff] %v1054
        %1119 = vst [vmem:[#allocation2 + $0x190] sm:$0xff] %v1055
        %1120 = vst [vmem:[#allocation2 + $0x198] sm:$0xff] %v1056
        %1121 = vst [vmem:[#allocation2 + $0x1a0] sm:$0xff] %v1057
        %1122 = vst [vmem:[#allocation2 + $0x1a8] sm:$0xff] %v1058
        %1123 = vst [vmem:[#allocation2 + $0x1b0] sm:$0xff] %v1059
        %1124 = vst [vmem:[#allocation2 + $0x1b8] sm:$0xff] %v1060
        %1125 = vst [vmem:[#allocation2 + $0x1c0] sm:$0xff] %v1061
        %1126 = vst [vmem:[#allocation2 + $0x1c8] sm:$0xff] %v1062
        %1127 = vst [vmem:[#allocation2 + $0x1d0] sm:$0xff] %v1063
        %1128 = vst [vmem:[#allocation2 + $0x1d8] sm:$0xff] %v1064
        %1129 = vst [vmem:[#allocation2 + $0x1e0] sm:$0xff] %v1065
        %1130 = vst [vmem:[#allocation2 + $0x1e8] sm:$0xff] %v1066
        %1131 = vst [vmem:[#allocation2 + $0x1f0] sm:$0xff] %v1067
        %1132 = vst [vmem:[#allocation2 + $0x1f8] sm:$0xff] %v1068
        // Predicated region
        $region49: #{_lambda_.31} parent=31 // pred_check
          %p1133 = pneg %p258
        $region50: #{_lambda_.31} parent=31 // pred_check_branch
          %1135 = sbr.rel (%p1133) target = $region52
        $region51: #{_lambda_.31} parent=31 // pred_region
          %v1136 = vld [vmem:[#allocation2] sm:$0xff]
          %v1137 = vld [vmem:[#allocation2 + $0x8] sm:$0xff]
          %v1138 = vld [vmem:[#allocation2 + $0x10] sm:$0xff]
          %v1139 = vld [vmem:[#allocation2 + $0x18] sm:$0xff]
          %v1140 = vld [vmem:[#allocation2 + $0x20] sm:$0xff]
          %v1141 = vld [vmem:[#allocation2 + $0x28] sm:$0xff]
          %v1142 = vld [vmem:[#allocation2 + $0x30] sm:$0xff]
          %v1143 = vld [vmem:[#allocation2 + $0x38] sm:$0xff]
          %v1144 = vld [vmem:[#allocation2 + $0x40] sm:$0xff]
          %v1145 = vld [vmem:[#allocation2 + $0x48] sm:$0xff]
          %v1146 = vld [vmem:[#allocation2 + $0x50] sm:$0xff]
          %v1147 = vld [vmem:[#allocation2 + $0x58] sm:$0xff]
          %v1148 = vld [vmem:[#allocation2 + $0x60] sm:$0xff]
          %v1149 = vld [vmem:[#allocation2 + $0x68] sm:$0xff]
          %v1150 = vld [vmem:[#allocation2 + $0x70] sm:$0xff]
          %v1151 = vld [vmem:[#allocation2 + $0x78] sm:$0xff]
          %v1152 = vld [vmem:[#allocation2 + $0x80] sm:$0xff]
          %v1153 = vld [vmem:[#allocation2 + $0x88] sm:$0xff]
          %v1154 = vld [vmem:[#allocation2 + $0x90] sm:$0xff]
          %v1155 = vld [vmem:[#allocation2 + $0x98] sm:$0xff]
          %v1156 = vld [vmem:[#allocation2 + $0xa0] sm:$0xff]
          %v1157 = vld [vmem:[#allocation2 + $0xa8] sm:$0xff]
          %v1158 = vld [vmem:[#allocation2 + $0xb0] sm:$0xff]
          %v1159 = vld [vmem:[#allocation2 + $0xb8] sm:$0xff]
          %v1160 = vld [vmem:[#allocation2 + $0xc0] sm:$0xff]
          %v1161 = vld [vmem:[#allocation2 + $0xc8] sm:$0xff]
          %v1162 = vld [vmem:[#allocation2 + $0xd0] sm:$0xff]
          %v1163 = vld [vmem:[#allocation2 + $0xd8] sm:$0xff]
          %v1164 = vld [vmem:[#allocation2 + $0xe0] sm:$0xff]
          %v1165 = vld [vmem:[#allocation2 + $0xe8] sm:$0xff]
          %v1166 = vld [vmem:[#allocation2 + $0xf0] sm:$0xff]
          %v1167 = vld [vmem:[#allocation2 + $0xf8] sm:$0xff]
          %v1168 = vld [vmem:[#allocation2 + $0x100] sm:$0xff]
          %v1169 = vld [vmem:[#allocation2 + $0x108] sm:$0xff]
          %v1170 = vld [vmem:[#allocation2 + $0x110] sm:$0xff]
          %v1171 = vld [vmem:[#allocation2 + $0x118] sm:$0xff]
          %v1172 = vld [vmem:[#allocation2 + $0x120] sm:$0xff]
          %v1173 = vld [vmem:[#allocation2 + $0x128] sm:$0xff]
          %v1174 = vld [vmem:[#allocation2 + $0x130] sm:$0xff]
          %v1175 = vld [vmem:[#allocation2 + $0x138] sm:$0xff]
          %v1176 = vld [vmem:[#allocation2 + $0x140] sm:$0xff]
          %v1177 = vld [vmem:[#allocation2 + $0x148] sm:$0xff]
          %v1178 = vld [vmem:[#allocation2 + $0x150] sm:$0xff]
          %v1179 = vld [vmem:[#allocation2 + $0x158] sm:$0xff]
          %v1180 = vld [vmem:[#allocation2 + $0x160] sm:$0xff]
          %v1181 = vld [vmem:[#allocation2 + $0x168] sm:$0xff]
          %v1182 = vld [vmem:[#allocation2 + $0x170] sm:$0xff]
          %v1183 = vld [vmem:[#allocation2 + $0x178] sm:$0xff]
          %v1184 = vld [vmem:[#allocation2 + $0x180] sm:$0xff]
          %v1185 = vld [vmem:[#allocation2 + $0x188] sm:$0xff]
          %v1186 = vld [vmem:[#allocation2 + $0x190] sm:$0xff]
          %v1187 = vld [vmem:[#allocation2 + $0x198] sm:$0xff]
          %v1188 = vld [vmem:[#allocation2 + $0x1a0] sm:$0xff]
          %v1189 = vld [vmem:[#allocation2 + $0x1a8] sm:$0xff]
          %v1190 = vld [vmem:[#allocation2 + $0x1b0] sm:$0xff]
          %v1191 = vld [vmem:[#allocation2 + $0x1b8] sm:$0xff]
          %v1192 = vld [vmem:[#allocation2 + $0x1c0] sm:$0xff]
          %v1193 = vld [vmem:[#allocation2 + $0x1c8] sm:$0xff]
          %v1194 = vld [vmem:[#allocation2 + $0x1d0] sm:$0xff]
          %v1195 = vld [vmem:[#allocation2 + $0x1d8] sm:$0xff]
          %v1196 = vld [vmem:[#allocation2 + $0x1e0] sm:$0xff]
          %v1197 = vld [vmem:[#allocation2 + $0x1e8] sm:$0xff]
          %v1198 = vld [vmem:[#allocation2 + $0x1f0] sm:$0xff]
          %v1199 = vld [vmem:[#allocation2 + $0x1f8] sm:$0xff]
          %v1200 = vld [vmem:[#allocation8] sm:$0x1]
          %v1202 = vlaneseq
          %v1203 = vshrl.u32 %v1202, 7
          %v1204 = vsub.s32 0, %v1203
          %v1205 = vrot.slane %v1200, %v1204
          %v1207 = vadd.f32 %v1136, %v1205
          %v1208 = vadd.f32 %v1137, %v1205
          %v1209 = vadd.f32 %v1138, %v1205
          %v1210 = vadd.f32 %v1139, %v1205
          %v1211 = vadd.f32 %v1140, %v1205
          %v1212 = vadd.f32 %v1141, %v1205
          %v1213 = vadd.f32 %v1142, %v1205
          %v1214 = vadd.f32 %v1143, %v1205
          %v1215 = vadd.f32 %v1144, %v1205
          %v1216 = vadd.f32 %v1145, %v1205
          %v1217 = vadd.f32 %v1146, %v1205
          %v1218 = vadd.f32 %v1147, %v1205
          %v1219 = vadd.f32 %v1148, %v1205
          %v1220 = vadd.f32 %v1149, %v1205
          %v1221 = vadd.f32 %v1150, %v1205
          %v1222 = vadd.f32 %v1151, %v1205
          %v1223 = vadd.f32 %v1152, %v1205
          %v1224 = vadd.f32 %v1153, %v1205
          %v1225 = vadd.f32 %v1154, %v1205
          %v1226 = vadd.f32 %v1155, %v1205
          %v1227 = vadd.f32 %v1156, %v1205
          %v1228 = vadd.f32 %v1157, %v1205
          %v1229 = vadd.f32 %v1158, %v1205
          %v1230 = vadd.f32 %v1159, %v1205
          %v1231 = vadd.f32 %v1160, %v1205
          %v1232 = vadd.f32 %v1161, %v1205
          %v1233 = vadd.f32 %v1162, %v1205
          %v1234 = vadd.f32 %v1163, %v1205
          %v1235 = vadd.f32 %v1164, %v1205
          %v1236 = vadd.f32 %v1165, %v1205
          %v1237 = vadd.f32 %v1166, %v1205
          %v1238 = vadd.f32 %v1167, %v1205
          %v1239 = vadd.f32 %v1168, %v1205
          %v1240 = vadd.f32 %v1169, %v1205
          %v1241 = vadd.f32 %v1170, %v1205
          %v1242 = vadd.f32 %v1171, %v1205
          %v1243 = vadd.f32 %v1172, %v1205
          %v1244 = vadd.f32 %v1173, %v1205
          %v1245 = vadd.f32 %v1174, %v1205
          %v1246 = vadd.f32 %v1175, %v1205
          %v1247 = vadd.f32 %v1176, %v1205
          %v1248 = vadd.f32 %v1177, %v1205
          %v1249 = vadd.f32 %v1178, %v1205
          %v1250 = vadd.f32 %v1179, %v1205
          %v1251 = vadd.f32 %v1180, %v1205
          %v1252 = vadd.f32 %v1181, %v1205
          %v1253 = vadd.f32 %v1182, %v1205
          %v1254 = vadd.f32 %v1183, %v1205
          %v1255 = vadd.f32 %v1184, %v1205
          %v1256 = vadd.f32 %v1185, %v1205
          %v1257 = vadd.f32 %v1186, %v1205
          %v1258 = vadd.f32 %v1187, %v1205
          %v1259 = vadd.f32 %v1188, %v1205
          %v1260 = vadd.f32 %v1189, %v1205
          %v1261 = vadd.f32 %v1190, %v1205
          %v1262 = vadd.f32 %v1191, %v1205
          %v1263 = vadd.f32 %v1192, %v1205
          %v1264 = vadd.f32 %v1193, %v1205
          %v1265 = vadd.f32 %v1194, %v1205
          %v1266 = vadd.f32 %v1195, %v1205
          %v1267 = vadd.f32 %v1196, %v1205
          %v1268 = vadd.f32 %v1197, %v1205
          %v1269 = vadd.f32 %v1198, %v1205
          %v1270 = vadd.f32 %v1199, %v1205
          %1271 = vst [vmem:[%s254] sm:$0xff] %v1207
          %1272 = vst [vmem:[%s254 + $0x8] sm:$0xff] %v1208
          %1273 = vst [vmem:[%s254 + $0x10] sm:$0xff] %v1209
          %1274 = vst [vmem:[%s254 + $0x18] sm:$0xff] %v1210
          %1275 = vst [vmem:[%s254 + $0x20] sm:$0xff] %v1211
          %1276 = vst [vmem:[%s254 + $0x28] sm:$0xff] %v1212
          %1277 = vst [vmem:[%s254 + $0x30] sm:$0xff] %v1213
          %1278 = vst [vmem:[%s254 + $0x38] sm:$0xff] %v1214
          %1279 = vst [vmem:[%s254 + $0x40] sm:$0xff] %v1215
          %1280 = vst [vmem:[%s254 + $0x48] sm:$0xff] %v1216
          %1281 = vst [vmem:[%s254 + $0x50] sm:$0xff] %v1217
          %1282 = vst [vmem:[%s254 + $0x58] sm:$0xff] %v1218
          %1283 = vst [vmem:[%s254 + $0x60] sm:$0xff] %v1219
          %1284 = vst [vmem:[%s254 + $0x68] sm:$0xff] %v1220
          %1285 = vst [vmem:[%s254 + $0x70] sm:$0xff] %v1221
          %1286 = vst [vmem:[%s254 + $0x78] sm:$0xff] %v1222
          %1287 = vst [vmem:[%s254 + $0x80] sm:$0xff] %v1223
          %1288 = vst [vmem:[%s254 + $0x88] sm:$0xff] %v1224
          %1289 = vst [vmem:[%s254 + $0x90] sm:$0xff] %v1225
          %1290 = vst [vmem:[%s254 + $0x98] sm:$0xff] %v1226
          %1291 = vst [vmem:[%s254 + $0xa0] sm:$0xff] %v1227
          %1292 = vst [vmem:[%s254 + $0xa8] sm:$0xff] %v1228
          %1293 = vst [vmem:[%s254 + $0xb0] sm:$0xff] %v1229
          %1294 = vst [vmem:[%s254 + $0xb8] sm:$0xff] %v1230
          %1295 = vst [vmem:[%s254 + $0xc0] sm:$0xff] %v1231
          %1296 = vst [vmem:[%s254 + $0xc8] sm:$0xff] %v1232
          %1297 = vst [vmem:[%s254 + $0xd0] sm:$0xff] %v1233
          %1298 = vst [vmem:[%s254 + $0xd8] sm:$0xff] %v1234
          %1299 = vst [vmem:[%s254 + $0xe0] sm:$0xff] %v1235
          %1300 = vst [vmem:[%s254 + $0xe8] sm:$0xff] %v1236
          %1301 = vst [vmem:[%s254 + $0xf0] sm:$0xff] %v1237
          %1302 = vst [vmem:[%s254 + $0xf8] sm:$0xff] %v1238
          %1303 = vst [vmem:[%s254 + $0x100] sm:$0xff] %v1239
          %1304 = vst [vmem:[%s254 + $0x108] sm:$0xff] %v1240
          %1305 = vst [vmem:[%s254 + $0x110] sm:$0xff] %v1241
          %1306 = vst [vmem:[%s254 + $0x118] sm:$0xff] %v1242
          %1307 = vst [vmem:[%s254 + $0x120] sm:$0xff] %v1243
          %1308 = vst [vmem:[%s254 + $0x128] sm:$0xff] %v1244
          %1309 = vst [vmem:[%s254 + $0x130] sm:$0xff] %v1245
          %1310 = vst [vmem:[%s254 + $0x138] sm:$0xff] %v1246
          %1311 = vst [vmem:[%s254 + $0x140] sm:$0xff] %v1247
          %1312 = vst [vmem:[%s254 + $0x148] sm:$0xff] %v1248
          %1313 = vst [vmem:[%s254 + $0x150] sm:$0xff] %v1249
          %1314 = vst [vmem:[%s254 + $0x158] sm:$0xff] %v1250
          %1315 = vst [vmem:[%s254 + $0x160] sm:$0xff] %v1251
          %1316 = vst [vmem:[%s254 + $0x168] sm:$0xff] %v1252
          %1317 = vst [vmem:[%s254 + $0x170] sm:$0xff] %v1253
          %1318 = vst [vmem:[%s254 + $0x178] sm:$0xff] %v1254
          %1319 = vst [vmem:[%s254 + $0x180] sm:$0xff] %v1255
          %1320 = vst [vmem:[%s254 + $0x188] sm:$0xff] %v1256
          %1321 = vst [vmem:[%s254 + $0x190] sm:$0xff] %v1257
          %1322 = vst [vmem:[%s254 + $0x198] sm:$0xff] %v1258
          %1323 = vst [vmem:[%s254 + $0x1a0] sm:$0xff] %v1259
          %1324 = vst [vmem:[%s254 + $0x1a8] sm:$0xff] %v1260
          %1325 = vst [vmem:[%s254 + $0x1b0] sm:$0xff] %v1261
          %1326 = vst [vmem:[%s254 + $0x1b8] sm:$0xff] %v1262
          %1327 = vst [vmem:[%s254 + $0x1c0] sm:$0xff] %v1263
          %1328 = vst [vmem:[%s254 + $0x1c8] sm:$0xff] %v1264
          %1329 = vst [vmem:[%s254 + $0x1d0] sm:$0xff] %v1265
          %1330 = vst [vmem:[%s254 + $0x1d8] sm:$0xff] %v1266
          %1331 = vst [vmem:[%s254 + $0x1e0] sm:$0xff] %v1267
          %1332 = vst [vmem:[%s254 + $0x1e8] sm:$0xff] %v1268
          %1333 = vst [vmem:[%s254 + $0x1f0] sm:$0xff] %v1269
          %1334 = vst [vmem:[%s254 + $0x1f8] sm:$0xff] %v1270
        $region52: #{_lambda_.31} parent=31 // pred_fallthru
          _
        %s1335 = sand.u32 %s132, 1
        %s1336 = scalar_lea.sflag [#allocation5], %s1335
        %s1337 = sand.u32 %s132, 1
        %s1338 = smul.addr %s1337, 512
        %s1339 = scalar_lea.vmem [#allocation9], %s1338
        // Predicated region
        $region53: #{_lambda_.31} parent=31 // pred_check
          %p1340 = pneg %p142
        $region54: #{_lambda_.31} parent=31 // pred_check_branch
          %1342 = sbr.rel (%p1340) target = $region56
        $region55: #{_lambda_.31} parent=31 // pred_region
          %s1343 = smul.u32 64, %s26
          %s1345 = ssub.s32 8192, 8192
          %1346 = vsyncadd %s1336, %s1345
          %s1347 = sadd.s32 %s27, %s1343
          %s1348 = smul.addr %s1347, 128
          %s1349 = scalar_lea.hbm %s3, %s1348
          %s1350 = sshll.u32 %s1339, 4
          %s1351 = int_to_ptr.vmem [resolvable:$true] %s1350
          %1356 = dma.vmem_to_hbm [thread:$0]  %s1351, 8192, %s1349, %s1336, 128, 128, 8
        $region56: #{_lambda_.31} parent=31 // pred_fallthru
          _
      $region32: #{_lambda_.31} parent=5 // pred_fallthru
        _
      %p1357 = scmp.le.s32.totalorder 2, %s16
      // Predicated region
      $region57: #{_lambda_.31} parent=5 // pred_check
        %p1358 = pneg %p1357
      $region58: #{_lambda_.31} parent=5 // pred_check_branch
        %1360 = sbr.rel (%p1358) target = $region60
      $region59: #{_lambda_.31} parent=5 // pred_region
        %s1361 = ssub.s32 %s16, 2
        // Predicated region
        $region61: #{_lambda_.31} parent=59 // pred_check
          %p1362 = pneg %p148
        $region62: #{_lambda_.31} parent=59 // pred_check_branch
          %1364 = sbr.rel (%p1362) target = $region64
        $region63: #{_lambda_.31} parent=59 // pred_region
          %s1365 = sand.u32 %s133, 1
          %s1366 = scalar_lea.sflag [#allocation5], %s1365
          %s1367 = sand.u32 %s133, 1
          %s1368 = smul.addr %s1367, 512
          %s1369 = scalar_lea.vmem [#allocation9], %s1368
          %1370 = dma.done %s1366, 8192
        $region64: #{_lambda_.31} parent=59 // pred_fallthru
          _
      $region60: #{_lambda_.31} parent=5 // pred_fallthru
        _
    $region6: #{_lambda_.31} parent=1 // loop_footer
      %s20 = sadd.s32 1, %s16
    $region7: #{_lambda_.31} parent=1 // loop_footer_branch
      %15 = sbr.rel target = $region3
    $region8: #{_lambda_.31} parent=1 // loop_exit
      _
    %1371 = vsyncpa [#allocation4], 1
    %s1372 = scalar_lea.sflag [#allocation4], 1
    %1373 = vsyncpa %s1372, 1
    %1374 = vsyncpa [#allocation7], 1
    %1375 = vsyncpa [#allocation5], 1
    %s1376 = scalar_lea.sflag [#allocation5], 1
    %1377 = vsyncpa %s1376, 1

</llo_original>
